<compile_context>
chip_gen: v7x
topology: tpu7x:2x2x1
jax: 0.10.0
libtpu: 0.0.40
codegen_flags: <defaults>
</compile_context>

<pallas_src>
import jax
import jax.numpy as jnp
from jax.experimental import pallas as pl
from jax.experimental.pallas import tpu as pltpu

LN_EPS = 1e-3  # nn.LayerNorm(512, eps=0.001)


def _round_up(x, m):
    return ((x + m - 1) // m) * m


def _ln_silu(x, gamma, beta):
    """Fused LayerNorm (f32 stats) + SiLU; returns bf16 for the next matmul.

    SiLU(x) = x * sigmoid(x) = x * (0.5 * tanh(0.5 * x) + 0.5): one EUP tanh
    instead of exp + reciprocal chain.
    """
    inv_n = 1.0 / x.shape[-1]
    s1 = jnp.sum(x, axis=-1, keepdims=True)
    s2 = jnp.sum(x * x, axis=-1, keepdims=True)
    mean = s1 * inv_n
    var = jnp.maximum(s2 * inv_n - mean * mean, 0.0)   # guard cancellation
    inv_std = jax.lax.rsqrt(var + LN_EPS)
    y = (x - mean) * inv_std * gamma + beta
    y = y * (0.5 * jnp.tanh(0.5 * y) + 0.5)
    return y.astype(jnp.bfloat16)


def _critic_kernel(post_ref, det_ref, w1_ref, w2_ref, w3_ref, ln_ref, b3_ref,
                   out_ref):
    # post tile: (TB, S) bf16, det tile: (TB, D) bf16.  Weights bf16,
    # LN params / bias f32.  ln_ref rows: [gamma1, beta1, gamma2, beta2].
    s_dim = post_ref.shape[-1]

    # Layer 1 as split-K: both K chunks are 128-aligned, static ref slices of
    # w1 are free views -> no concat and no padding waste.
    h = jnp.dot(post_ref[...], w1_ref[:s_dim, :],
                preferred_element_type=jnp.float32)
    h = h + jnp.dot(det_ref[...], w1_ref[s_dim:, :],
                    preferred_element_type=jnp.float32)
    h = _ln_silu(h, ln_ref[0:1, :], ln_ref[1:2, :])                  # (TB, H) bf16

    h = jnp.dot(h, w2_ref[...], preferred_element_type=jnp.float32)  # (TB, H) f32
    h = _ln_silu(h, ln_ref[2:3, :], ln_ref[3:4, :])                  # (TB, H) bf16

    out = jnp.dot(h, w3_ref[...], preferred_element_type=jnp.float32)
    out_ref[...] = out + b3_ref[...]


def critic_forward(posterior, deterministic, params, *, bins, tile_b=256):
    """JAX wrapper mirroring Critic.forward (no wrapper-side concat)."""
    w1, w2, w3, ln, b3 = params

    lead = posterior.shape[:-1]
    s_dim = posterior.shape[-1]
    d_dim = deterministic.shape[-1]
    post = posterior.reshape(-1, s_dim).astype(jnp.bfloat16)
    det = deterministic.reshape(-1, d_dim).astype(jnp.bfloat16)
    B = post.shape[0]
    H = w1.shape[1]
    n_pad = w3.shape[1]  # bins padded up to a multiple of 128

    # Batch tiling: multiple of 8 (sublane), capped at tile_b.  For B >= 256
    # make sure the grid has >=2 steps so the "parallel" axis can shard across
    # v7x's two TensorCores; tiny batches are weight-DMA bound so keep one tile.
    tb = min(tile_b, _round_up(B, 8))
    if B >= 256:
        tb = min(tb, _round_up(-(-B // 2), 8))
    b_pad = _round_up(B, tb)
    if b_pad != B:
        post = jnp.pad(post, ((0, b_pad - B), (0, 0)))
        det = jnp.pad(det, ((0, b_pad - B), (0, 0)))

    def build(weights_single_buffered):
        kw = {"pipeline_mode": pl.Buffered(1)} if weights_single_buffered else {}

        def resident(shape):  # constant index_map -> DMA'd once, VMEM-resident
            return pl.BlockSpec(shape, lambda i: (0, 0), **kw)

        return pl.pallas_call(
            _critic_kernel,
            out_shape=jax.ShapeDtypeStruct((b_pad, n_pad), jnp.float32),
            grid=(b_pad // tb,),
            in_specs=[
                pl.BlockSpec((tb, s_dim), lambda i: (i, 0)),
                pl.BlockSpec((tb, d_dim), lambda i: (i, 0)),
                resident((s_dim + d_dim, H)),
                resident((H, H)),
                resident((H, n_pad)),
                resident((4, H)),
                resident((1, n_pad)),
            ],
            out_specs=pl.BlockSpec((tb, n_pad), lambda i: (i, 0)),
            compiler_params=pltpu.CompilerParams(
                dimension_semantics=("parallel",),      # megacore sharding
                vmem_limit_bytes=16 * 1024 * 1024,      # actual use ~6 MiB
            ),
        )

    try:
        out = build(True)(post, det, w1, w2, w3, ln, b3)
    except Exception:
        # Fallback for JAX versions that reject single-buffered pipeline_mode.
        out = build(False)(post, det, w1, w2, w3, ln, b3)

    out = out[:B, :bins]
    return out.reshape(*lead, bins)


def _trunc_normal(key, shape, std):
    return std * jax.random.truncated_normal(key, -2.0, 2.0, shape, jnp.float32)


def make_params(key, stochastic_size, deterministic_size, bins, hidden=512,
                zero_init_last=False):
    """Weights stored transposed as (in, out) so the kernel computes x @ W^T.

    zero_init_last=True matches the module's uniform_init_weights(0.0) on the
    last Linear (all-zero); the demo uses a non-degenerate init so the
    correctness check exercises the full forward pass.
    """
    d_in = stochastic_size + deterministic_size
    k1, k2, k3 = jax.random.split(key, 3)

    def lin_std(fan_in, fan_out):
        return (2.0 / (fan_in + fan_out)) ** 0.5 / 0.8796256610342398

    w1 = _trunc_normal(k1, (d_in, hidden), lin_std(d_in, hidden))
    w2 = _trunc_normal(k2, (hidden, hidden), lin_std(hidden, hidden))
    if zero_init_last:
        w3 = jnp.zeros((hidden, bins), jnp.float32)
    else:
        w3 = _trunc_normal(k3, (hidden, bins), lin_std(hidden, bins))
    b3 = jnp.zeros((bins,), jnp.float32)

    # Pad last layer's output dim (255 -> 256): lane-dense matmul N and store.
    n_pad = _round_up(bins, 128)
    w3 = jnp.pad(w3, ((0, 0), (0, n_pad - bins)))
    b3 = jnp.pad(b3, (0, n_pad - bins)).reshape(1, n_pad)

    # LN params for both layers packed into one resident (4, H) f32 array:
    # rows = [gamma1, beta1, gamma2, beta2].
    ln = jnp.stack([
        jnp.ones((hidden,), jnp.float32), jnp.zeros((hidden,), jnp.float32),
        jnp.ones((hidden,), jnp.float32), jnp.zeros((hidden,), jnp.float32),
    ])

    # bf16 weights for MXU throughput / VMEM headroom; LN params & bias stay f32.
    return (w1.astype(jnp.bfloat16), w2.astype(jnp.bfloat16),
            w3.astype(jnp.bfloat16), ln, b3)


def _reference(posterior, deterministic, params, bins):
    """Pure-JAX reference (same bf16 matmul inputs, f32 everything else)."""
    w1, w2, w3, ln, b3 = params
    g1, be1, g2, be2 = ln[0], ln[1], ln[2], ln[3]
    x = jnp.concatenate([posterior, deterministic], axis=-1).astype(jnp.bfloat16)

    def ln_fn(h, g, b):
        m = h.mean(-1, keepdims=True)
        v = ((h - m) ** 2).mean(-1, keepdims=True)
        return (h - m) / jnp.sqrt(v + LN_EPS) * g + b

    h = jnp.dot(x, w1, preferred_element_type=jnp.float32)
    h = ln_fn(h, g1, be1)
    h = h * jax.nn.sigmoid(h)
    h = jnp.dot(h.astype(jnp.bfloat16), w2, preferred_element_type=jnp.float32)
    h = ln_fn(h, g2, be2)
    h = h * jax.nn.sigmoid(h)
    out = jnp.dot(h.astype(jnp.bfloat16), w3, preferred_element_type=jnp.float32) + b3
    return out[..., :bins]


if __name__ == "__main__":
    # Default Args: stochastic_size = 32*32 = 1024, deterministic_size = 512,
    # bins = 255, batch_size = 16.
    STOCHASTIC = 32 * 32
    DETERMINISTIC = 512
    BINS = 255
    B = 16

    key = jax.random.PRNGKey(0)
    kp, ka, kb = jax.random.split(key, 3)

    params = make_params(kp, STOCHASTIC, DETERMINISTIC, BINS)
    posterior = jax.random.normal(ka, (B, STOCHASTIC), jnp.float32)
    deterministic = jax.random.normal(kb, (B, DETERMINISTIC), jnp.float32)

    out = critic_forward(posterior, deterministic, params, bins=BINS)
    out = jax.block_until_ready(out)

    ref = _reference(posterior, deterministic, params, BINS)
    assert out.shape == (B, BINS), out.shape
    err = float(jnp.max(jnp.abs(out - ref)))
    assert err < 2e-3, err

    print("KERNEL_OK")
</pallas_src>

<mosaic_0001>
module attributes {stable_mosaic.version = 11 : i64} {
  func.func @_critic_kernel(%arg0: i32, %arg1: memref<16x1024xbf16, #tpu.memory_space<vmem>>, %arg2: memref<16x512xbf16, #tpu.memory_space<vmem>>, %arg3: memref<1536x512xbf16, #tpu.memory_space<vmem>>, %arg4: memref<512x512xbf16, #tpu.memory_space<vmem>>, %arg5: memref<512x256xbf16, #tpu.memory_space<vmem>>, %arg6: memref<4x512xf32, #tpu.memory_space<vmem>>, %arg7: memref<1x256xf32, #tpu.memory_space<vmem>>, %arg8: memref<16x256xf32, #tpu.memory_space<vmem>>) attributes {dimension_semantics = [#tpu.dimension_semantics<parallel>], iteration_bounds = array<i64: 1>, scalar_prefetch = 0 : i64, scratch_operands = 0 : i64, tpu.core_type = #tpu.core_type<tc>, window_params = [{transform_indices = @transform_0, window_bounds = array<i64: 16, 1024>}, {transform_indices = @transform_1, window_bounds = array<i64: 16, 512>}, {pipeline_mode = #tpu.pipeline_mode<synchronous>, transform_indices = @transform_2, window_bounds = array<i64: 1536, 512>}, {pipeline_mode = #tpu.pipeline_mode<synchronous>, transform_indices = @transform_3, window_bounds = array<i64: 512, 512>}, {pipeline_mode = #tpu.pipeline_mode<synchronous>, transform_indices = @transform_4, window_bounds = array<i64: 512, 256>}, {pipeline_mode = #tpu.pipeline_mode<synchronous>, transform_indices = @transform_5, window_bounds = array<i64: 4, 512>}, {pipeline_mode = #tpu.pipeline_mode<synchronous>, transform_indices = @transform_6, window_bounds = array<i64: 1, 256>}, {transform_indices = @transform_7, window_bounds = array<i64: 16, 256>}]} {
    %c0 = arith.constant 0 : index
    %c0_0 = arith.constant 0 : index
    %0 = vector.load %arg1[%c0, %c0_0] : memref<16x1024xbf16, #tpu.memory_space<vmem>>, vector<16x1024xbf16>
    %c0_1 = arith.constant 0 : index
    %c0_2 = arith.constant 0 : index
    %1 = vector.load %arg3[%c0_1, %c0_2] : memref<1536x512xbf16, #tpu.memory_space<vmem>>, vector<1024x512xbf16>
    %cst = arith.constant dense<0.000000e+00> : vector<16x512xf32>
    %2 = tpu.matmul %0, %1, %cst {dimension_numbers = #tpu.dot_dimension_numbers<[1], [0], [0], [1], [0, 0, 1, 1], [], []>} : vector<16x1024xbf16>, vector<1024x512xbf16>, vector<16x512xf32> -> vector<16x512xf32>
    %c0_3 = arith.constant 0 : index
    %c0_4 = arith.constant 0 : index
    %3 = vector.load %arg2[%c0_3, %c0_4] : memref<16x512xbf16, #tpu.memory_space<vmem>>, vector<16x512xbf16>
    %c1024 = arith.constant 1024 : index
    %c0_5 = arith.constant 0 : index
    %4 = vector.load %arg3[%c1024, %c0_5] : memref<1536x512xbf16, #tpu.memory_space<vmem>>, vector<512x512xbf16>
    %cst_6 = arith.constant dense<0.000000e+00> : vector<16x512xf32>
    %5 = tpu.matmul %3, %4, %cst_6 {dimension_numbers = #tpu.dot_dimension_numbers<[1], [0], [0], [1], [0, 0, 1, 1], [], []>} : vector<16x512xbf16>, vector<512x512xbf16>, vector<16x512xf32> -> vector<16x512xf32>
    %6 = arith.addf %2, %5 : vector<16x512xf32>
    %c0_7 = arith.constant 0 : index
    %c0_8 = arith.constant 0 : index
    %7 = vector.load %arg6[%c0_7, %c0_8] : memref<4x512xf32, #tpu.memory_space<vmem>>, vector<1x512xf32>
    %c1 = arith.constant 1 : index
    %c0_9 = arith.constant 0 : index
    %8 = vector.load %arg6[%c1, %c0_9] : memref<4x512xf32, #tpu.memory_space<vmem>>, vector<1x512xf32>
    %cst_10 = arith.constant dense<0.000000e+00> : vector<16xf32>
    %9 = vector.multi_reduction <add>, %6, %cst_10 [1] : vector<16x512xf32> to vector<16xf32>
    %10 = vector.shape_cast %9 : vector<16xf32> to vector<16x1xf32>
    %11 = arith.mulf %6, %6 : vector<16x512xf32>
    %cst_11 = arith.constant dense<0.000000e+00> : vector<16xf32>
    %12 = vector.multi_reduction <add>, %11, %cst_11 [1] : vector<16x512xf32> to vector<16xf32>
    %13 = vector.shape_cast %12 : vector<16xf32> to vector<16x1xf32>
    %cst_12 = arith.constant 0.001953125 : f32
    %14 = vector.broadcast %cst_12 : f32 to vector<16x1xf32>
    %15 = arith.mulf %10, %14 : vector<16x1xf32>
    %cst_13 = arith.constant 0.001953125 : f32
    %16 = vector.broadcast %cst_13 : f32 to vector<16x1xf32>
    %17 = arith.mulf %13, %16 : vector<16x1xf32>
    %18 = arith.mulf %15, %15 : vector<16x1xf32>
    %19 = arith.subf %17, %18 : vector<16x1xf32>
    %cst_14 = arith.constant 0.000000e+00 : f32
    %20 = vector.broadcast %cst_14 : f32 to vector<16x1xf32>
    %21 = arith.maximumf %19, %20 : vector<16x1xf32>
    %cst_15 = arith.constant 1.000000e-03 : f32
    %22 = vector.broadcast %cst_15 : f32 to vector<16x1xf32>
    %23 = arith.addf %21, %22 : vector<16x1xf32>
    %24 = math.rsqrt %23 : vector<16x1xf32>
    %25 = vector.broadcast %15 : vector<16x1xf32> to vector<16x512xf32>
    %26 = arith.subf %6, %25 : vector<16x512xf32>
    %27 = vector.broadcast %24 : vector<16x1xf32> to vector<16x512xf32>
    %28 = arith.mulf %26, %27 : vector<16x512xf32>
    %29 = vector.broadcast %7 : vector<1x512xf32> to vector<16x512xf32>
    %30 = arith.mulf %28, %29 : vector<16x512xf32>
    %31 = vector.broadcast %8 : vector<1x512xf32> to vector<16x512xf32>
    %32 = arith.addf %30, %31 : vector<16x512xf32>
    %cst_16 = arith.constant 5.000000e-01 : f32
    %33 = vector.broadcast %cst_16 : f32 to vector<16x512xf32>
    %34 = arith.mulf %33, %32 : vector<16x512xf32>
    %35 = math.tanh %34 : vector<16x512xf32>
    %cst_17 = arith.constant 5.000000e-01 : f32
    %36 = vector.broadcast %cst_17 : f32 to vector<16x512xf32>
    %37 = arith.mulf %36, %35 : vector<16x512xf32>
    %cst_18 = arith.constant 5.000000e-01 : f32
    %38 = vector.broadcast %cst_18 : f32 to vector<16x512xf32>
    %39 = arith.addf %37, %38 : vector<16x512xf32>
    %40 = arith.mulf %32, %39 : vector<16x512xf32>
    %41 = arith.truncf %40 : vector<16x512xf32> to vector<16x512xbf16>
    %c0_19 = arith.constant 0 : index
    %c0_20 = arith.constant 0 : index
    %42 = vector.load %arg4[%c0_19, %c0_20] : memref<512x512xbf16, #tpu.memory_space<vmem>>, vector<512x512xbf16>
    %cst_21 = arith.constant dense<0.000000e+00> : vector<16x512xf32>
    %43 = tpu.matmul %41, %42, %cst_21 {dimension_numbers = #tpu.dot_dimension_numbers<[1], [0], [0], [1], [0, 0, 1, 1], [], []>} : vector<16x512xbf16>, vector<512x512xbf16>, vector<16x512xf32> -> vector<16x512xf32>
    %c2 = arith.constant 2 : index
    %c0_22 = arith.constant 0 : index
    %44 = vector.load %arg6[%c2, %c0_22] : memref<4x512xf32, #tpu.memory_space<vmem>>, vector<1x512xf32>
    %c3 = arith.constant 3 : index
    %c0_23 = arith.constant 0 : index
    %45 = vector.load %arg6[%c3, %c0_23] : memref<4x512xf32, #tpu.memory_space<vmem>>, vector<1x512xf32>
    %cst_24 = arith.constant dense<0.000000e+00> : vector<16xf32>
    %46 = vector.multi_reduction <add>, %43, %cst_24 [1] : vector<16x512xf32> to vector<16xf32>
    %47 = vector.shape_cast %46 : vector<16xf32> to vector<16x1xf32>
    %48 = arith.mulf %43, %43 : vector<16x512xf32>
    %cst_25 = arith.constant dense<0.000000e+00> : vector<16xf32>
    %49 = vector.multi_reduction <add>, %48, %cst_25 [1] : vector<16x512xf32> to vector<16xf32>
    %50 = vector.shape_cast %49 : vector<16xf32> to vector<16x1xf32>
    %cst_26 = arith.constant 0.001953125 : f32
    %51 = vector.broadcast %cst_26 : f32 to vector<16x1xf32>
    %52 = arith.mulf %47, %51 : vector<16x1xf32>
    %cst_27 = arith.constant 0.001953125 : f32
    %53 = vector.broadcast %cst_27 : f32 to vector<16x1xf32>
    %54 = arith.mulf %50, %53 : vector<16x1xf32>
    %55 = arith.mulf %52, %52 : vector<16x1xf32>
    %56 = arith.subf %54, %55 : vector<16x1xf32>
    %cst_28 = arith.constant 0.000000e+00 : f32
    %57 = vector.broadcast %cst_28 : f32 to vector<16x1xf32>
    %58 = arith.maximumf %56, %57 : vector<16x1xf32>
    %cst_29 = arith.constant 1.000000e-03 : f32
    %59 = vector.broadcast %cst_29 : f32 to vector<16x1xf32>
    %60 = arith.addf %58, %59 : vector<16x1xf32>
    %61 = math.rsqrt %60 : vector<16x1xf32>
    %62 = vector.broadcast %52 : vector<16x1xf32> to vector<16x512xf32>
    %63 = arith.subf %43, %62 : vector<16x512xf32>
    %64 = vector.broadcast %61 : vector<16x1xf32> to vector<16x512xf32>
    %65 = arith.mulf %63, %64 : vector<16x512xf32>
    %66 = vector.broadcast %44 : vector<1x512xf32> to vector<16x512xf32>
    %67 = arith.mulf %65, %66 : vector<16x512xf32>
    %68 = vector.broadcast %45 : vector<1x512xf32> to vector<16x512xf32>
    %69 = arith.addf %67, %68 : vector<16x512xf32>
    %cst_30 = arith.constant 5.000000e-01 : f32
    %70 = vector.broadcast %cst_30 : f32 to vector<16x512xf32>
    %71 = arith.mulf %70, %69 : vector<16x512xf32>
    %72 = math.tanh %71 : vector<16x512xf32>
    %cst_31 = arith.constant 5.000000e-01 : f32
    %73 = vector.broadcast %cst_31 : f32 to vector<16x512xf32>
    %74 = arith.mulf %73, %72 : vector<16x512xf32>
    %cst_32 = arith.constant 5.000000e-01 : f32
    %75 = vector.broadcast %cst_32 : f32 to vector<16x512xf32>
    %76 = arith.addf %74, %75 : vector<16x512xf32>
    %77 = arith.mulf %69, %76 : vector<16x512xf32>
    %78 = arith.truncf %77 : vector<16x512xf32> to vector<16x512xbf16>
    %c0_33 = arith.constant 0 : index
    %c0_34 = arith.constant 0 : index
    %79 = vector.load %arg5[%c0_33, %c0_34] : memref<512x256xbf16, #tpu.memory_space<vmem>>, vector<512x256xbf16>
    %cst_35 = arith.constant dense<0.000000e+00> : vector<16x256xf32>
    %80 = tpu.matmul %78, %79, %cst_35 {dimension_numbers = #tpu.dot_dimension_numbers<[1], [0], [0], [1], [0, 0, 1, 1], [], []>} : vector<16x512xbf16>, vector<512x256xbf16>, vector<16x256xf32> -> vector<16x256xf32>
    %c0_36 = arith.constant 0 : index
    %c0_37 = arith.constant 0 : index
    %81 = vector.load %arg7[%c0_36, %c0_37] : memref<1x256xf32, #tpu.memory_space<vmem>>, vector<1x256xf32>
    %82 = vector.broadcast %81 : vector<1x256xf32> to vector<16x256xf32>
    %83 = arith.addf %80, %82 : vector<16x256xf32>
    %c0_38 = arith.constant 0 : index
    %c0_39 = arith.constant 0 : index
    %84 = vector.load %arg8[%c0_38, %c0_39] : memref<16x256xf32, #tpu.memory_space<vmem>>, vector<16x256xf32>
    tpu.vector_store %arg8[%c0_38, %c0_39], %83 {strides = array<i32>} : memref<16x256xf32, #tpu.memory_space<vmem>>, vector<16x256xf32>,
    return
  }
  func.func @transform_0(%arg0: i32) -> (i32, i32) {
    %c0_i32 = arith.constant 0 : i32
    %c0_i32_0 = arith.constant 0 : i32
    return %arg0, %c0_i32 : i32, i32
  }
  func.func @transform_1(%arg0: i32) -> (i32, i32) {
    %c0_i32 = arith.constant 0 : i32
    %c0_i32_0 = arith.constant 0 : i32
    return %arg0, %c0_i32 : i32, i32
  }
  func.func @transform_2(%arg0: i32) -> (i32, i32) {
    %c0_i32 = arith.constant 0 : i32
    %c0_i32_0 = arith.constant 0 : i32
    %c0_i32_1 = arith.constant 0 : i32
    return %c0_i32, %c0_i32_0 : i32, i32
  }
  func.func @transform_3(%arg0: i32) -> (i32, i32) {
    %c0_i32 = arith.constant 0 : i32
    %c0_i32_0 = arith.constant 0 : i32
    %c0_i32_1 = arith.constant 0 : i32
    return %c0_i32, %c0_i32_0 : i32, i32
  }
  func.func @transform_4(%arg0: i32) -> (i32, i32) {
    %c0_i32 = arith.constant 0 : i32
    %c0_i32_0 = arith.constant 0 : i32
    %c0_i32_1 = arith.constant 0 : i32
    return %c0_i32, %c0_i32_0 : i32, i32
  }
  func.func @transform_5(%arg0: i32) -> (i32, i32) {
    %c0_i32 = arith.constant 0 : i32
    %c0_i32_0 = arith.constant 0 : i32
    %c0_i32_1 = arith.constant 0 : i32
    return %c0_i32, %c0_i32_0 : i32, i32
  }
  func.func @transform_6(%arg0: i32) -> (i32, i32) {
    %c0_i32 = arith.constant 0 : i32
    %c0_i32_0 = arith.constant 0 : i32
    %c0_i32_1 = arith.constant 0 : i32
    return %c0_i32, %c0_i32_0 : i32, i32
  }
  func.func @transform_7(%arg0: i32) -> (i32, i32) {
    %c0_i32 = arith.constant 0 : i32
    %c0_i32_0 = arith.constant 0 : i32
    return %arg0, %c0_i32 : i32, i32
  }
}

module attributes {stable_mosaic.version = 11 : i64} {
  func.func @_critic_kernel(%arg0: i32, %arg1: memref<16x1024xbf16, #tpu.memory_space<vmem>>, %arg2: memref<16x512xbf16, #tpu.memory_space<vmem>>, %arg3: memref<1536x512xbf16, #tpu.memory_space<vmem>>, %arg4: memref<512x512xbf16, #tpu.memory_space<vmem>>, %arg5: memref<512x256xbf16, #tpu.memory_space<vmem>>, %arg6: memref<4x512xf32, #tpu.memory_space<vmem>>, %arg7: memref<1x256xf32, #tpu.memory_space<vmem>>, %arg8: memref<16x256xf32, #tpu.memory_space<vmem>>) attributes {dimension_semantics = [#tpu.dimension_semantics<parallel>], iteration_bounds = array<i64: 1>, scalar_prefetch = 0 : i64, scratch_operands = 0 : i64, tpu.core_type = #tpu.core_type<tc>, window_params = [{transform_indices = @transform_0, window_bounds = array<i64: 16, 1024>}, {transform_indices = @transform_1, window_bounds = array<i64: 16, 512>}, {pipeline_mode = #tpu.pipeline_mode<synchronous>, transform_indices = @transform_2, window_bounds = array<i64: 1536, 512>}, {pipeline_mode = #tpu.pipeline_mode<synchronous>, transform_indices = @transform_3, window_bounds = array<i64: 512, 512>}, {pipeline_mode = #tpu.pipeline_mode<synchronous>, transform_indices = @transform_4, window_bounds = array<i64: 512, 256>}, {pipeline_mode = #tpu.pipeline_mode<synchronous>, transform_indices = @transform_5, window_bounds = array<i64: 4, 512>}, {pipeline_mode = #tpu.pipeline_mode<synchronous>, transform_indices = @transform_6, window_bounds = array<i64: 1, 256>}, {transform_indices = @transform_7, window_bounds = array<i64: 16, 256>}]} {
    %c0 = arith.constant 0 : index
    %c0_0 = arith.constant 0 : index
    %0 = vector.load %arg1[%c0, %c0_0] : memref<16x1024xbf16, #tpu.memory_space<vmem>>, vector<16x1024xbf16>
    %c0_1 = arith.constant 0 : index
    %c0_2 = arith.constant 0 : index
    %1 = vector.load %arg3[%c0_1, %c0_2] : memref<1536x512xbf16, #tpu.memory_space<vmem>>, vector<1024x512xbf16>
    %cst = arith.constant dense<0.000000e+00> : vector<16x512xf32>
    %2 = tpu.matmul %0, %1, %cst {dimension_numbers = #tpu.dot_dimension_numbers<[1], [0], [0], [1], [0, 0, 1, 1], [], []>} : vector<16x1024xbf16>, vector<1024x512xbf16>, vector<16x512xf32> -> vector<16x512xf32>
    %c0_3 = arith.constant 0 : index
    %c0_4 = arith.constant 0 : index
    %3 = vector.load %arg2[%c0_3, %c0_4] : memref<16x512xbf16, #tpu.memory_space<vmem>>, vector<16x512xbf16>
    %c1024 = arith.constant 1024 : index
    %c0_5 = arith.constant 0 : index
    %4 = vector.load %arg3[%c1024, %c0_5] : memref<1536x512xbf16, #tpu.memory_space<vmem>>, vector<512x512xbf16>
    %cst_6 = arith.constant dense<0.000000e+00> : vector<16x512xf32>
    %5 = tpu.matmul %3, %4, %cst_6 {dimension_numbers = #tpu.dot_dimension_numbers<[1], [0], [0], [1], [0, 0, 1, 1], [], []>} : vector<16x512xbf16>, vector<512x512xbf16>, vector<16x512xf32> -> vector<16x512xf32>
    %6 = arith.addf %2, %5 : vector<16x512xf32>
    %c0_7 = arith.constant 0 : index
    %c0_8 = arith.constant 0 : index
    %7 = vector.load %arg6[%c0_7, %c0_8] : memref<4x512xf32, #tpu.memory_space<vmem>>, vector<1x512xf32>
    %c1 = arith.constant 1 : index
    %c0_9 = arith.constant 0 : index
    %8 = vector.load %arg6[%c1, %c0_9] : memref<4x512xf32, #tpu.memory_space<vmem>>, vector<1x512xf32>
    %cst_10 = arith.constant dense<0.000000e+00> : vector<16xf32>
    %9 = vector.multi_reduction <add>, %6, %cst_10 [1] : vector<16x512xf32> to vector<16xf32>
    %10 = vector.shape_cast %9 : vector<16xf32> to vector<16x1xf32>
    %11 = arith.mulf %6, %6 : vector<16x512xf32>
    %cst_11 = arith.constant dense<0.000000e+00> : vector<16xf32>
    %12 = vector.multi_reduction <add>, %11, %cst_11 [1] : vector<16x512xf32> to vector<16xf32>
    %13 = vector.shape_cast %12 : vector<16xf32> to vector<16x1xf32>
    %cst_12 = arith.constant 0.001953125 : f32
    %14 = vector.broadcast %cst_12 : f32 to vector<16x1xf32>
    %15 = arith.mulf %10, %14 : vector<16x1xf32>
    %cst_13 = arith.constant 0.001953125 : f32
    %16 = vector.broadcast %cst_13 : f32 to vector<16x1xf32>
    %17 = arith.mulf %13, %16 : vector<16x1xf32>
    %18 = arith.mulf %15, %15 : vector<16x1xf32>
    %19 = arith.subf %17, %18 : vector<16x1xf32>
    %cst_14 = arith.constant 0.000000e+00 : f32
    %20 = vector.broadcast %cst_14 : f32 to vector<16x1xf32>
    %21 = arith.maximumf %19, %20 : vector<16x1xf32>
    %cst_15 = arith.constant 1.000000e-03 : f32
    %22 = vector.broadcast %cst_15 : f32 to vector<16x1xf32>
    %23 = arith.addf %21, %22 : vector<16x1xf32>
    %24 = math.rsqrt %23 : vector<16x1xf32>
    %25 = vector.broadcast %15 : vector<16x1xf32> to vector<16x512xf32>
    %26 = arith.subf %6, %25 : vector<16x512xf32>
    %27 = vector.broadcast %24 : vector<16x1xf32> to vector<16x512xf32>
    %28 = arith.mulf %26, %27 : vector<16x512xf32>
    %29 = vector.broadcast %7 : vector<1x512xf32> to vector<16x512xf32>
    %30 = arith.mulf %28, %29 : vector<16x512xf32>
    %31 = vector.broadcast %8 : vector<1x512xf32> to vector<16x512xf32>
    %32 = arith.addf %30, %31 : vector<16x512xf32>
    %cst_16 = arith.constant 5.000000e-01 : f32
    %33 = vector.broadcast %cst_16 : f32 to vector<16x512xf32>
    %34 = arith.mulf %33, %32 : vector<16x512xf32>
    %35 = math.tanh %34 : vector<16x512xf32>
    %cst_17 = arith.constant 5.000000e-01 : f32
    %36 = vector.broadcast %cst_17 : f32 to vector<16x512xf32>
    %37 = arith.mulf %36, %35 : vector<16x512xf32>
    %cst_18 = arith.constant 5.000000e-01 : f32
    %38 = vector.broadcast %cst_18 : f32 to vector<16x512xf32>
    %39 = arith.addf %37, %38 : vector<16x512xf32>
    %40 = arith.mulf %32, %39 : vector<16x512xf32>
    %41 = arith.truncf %40 : vector<16x512xf32> to vector<16x512xbf16>
    %c0_19 = arith.constant 0 : index
    %c0_20 = arith.constant 0 : index
    %42 = vector.load %arg4[%c0_19, %c0_20] : memref<512x512xbf16, #tpu.memory_space<vmem>>, vector<512x512xbf16>
    %cst_21 = arith.constant dense<0.000000e+00> : vector<16x512xf32>
    %43 = tpu.matmul %41, %42, %cst_21 {dimension_numbers = #tpu.dot_dimension_numbers<[1], [0], [0], [1], [0, 0, 1, 1], [], []>} : vector<16x512xbf16>, vector<512x512xbf16>, vector<16x512xf32> -> vector<16x512xf32>
    %c2 = arith.constant 2 : index
    %c0_22 = arith.constant 0 : index
    %44 = vector.load %arg6[%c2, %c0_22] : memref<4x512xf32, #tpu.memory_space<vmem>>, vector<1x512xf32>
    %c3 = arith.constant 3 : index
    %c0_23 = arith.constant 0 : index
    %45 = vector.load %arg6[%c3, %c0_23] : memref<4x512xf32, #tpu.memory_space<vmem>>, vector<1x512xf32>
    %cst_24 = arith.constant dense<0.000000e+00> : vector<16xf32>
    %46 = vector.multi_reduction <add>, %43, %cst_24 [1] : vector<16x512xf32> to vector<16xf32>
    %47 = vector.shape_cast %46 : vector<16xf32> to vector<16x1xf32>
    %48 = arith.mulf %43, %43 : vector<16x512xf32>
    %cst_25 = arith.constant dense<0.000000e+00> : vector<16xf32>
    %49 = vector.multi_reduction <add>, %48, %cst_25 [1] : vector<16x512xf32> to vector<16xf32>
    %50 = vector.shape_cast %49 : vector<16xf32> to vector<16x1xf32>
    %cst_26 = arith.constant 0.001953125 : f32
    %51 = vector.broadcast %cst_26 : f32 to vector<16x1xf32>
    %52 = arith.mulf %47, %51 : vector<16x1xf32>
    %cst_27 = arith.constant 0.001953125 : f32
    %53 = vector.broadcast %cst_27 : f32 to vector<16x1xf32>
    %54 = arith.mulf %50, %53 : vector<16x1xf32>
    %55 = arith.mulf %52, %52 : vector<16x1xf32>
    %56 = arith.subf %54, %55 : vector<16x1xf32>
    %cst_28 = arith.constant 0.000000e+00 : f32
    %57 = vector.broadcast %cst_28 : f32 to vector<16x1xf32>
    %58 = arith.maximumf %56, %57 : vector<16x1xf32>
    %cst_29 = arith.constant 1.000000e-03 : f32
    %59 = vector.broadcast %cst_29 : f32 to vector<16x1xf32>
    %60 = arith.addf %58, %59 : vector<16x1xf32>
    %61 = math.rsqrt %60 : vector<16x1xf32>
    %62 = vector.broadcast %52 : vector<16x1xf32> to vector<16x512xf32>
    %63 = arith.subf %43, %62 : vector<16x512xf32>
    %64 = vector.broadcast %61 : vector<16x1xf32> to vector<16x512xf32>
    %65 = arith.mulf %63, %64 : vector<16x512xf32>
    %66 = vector.broadcast %44 : vector<1x512xf32> to vector<16x512xf32>
    %67 = arith.mulf %65, %66 : vector<16x512xf32>
    %68 = vector.broadcast %45 : vector<1x512xf32> to vector<16x512xf32>
    %69 = arith.addf %67, %68 : vector<16x512xf32>
    %cst_30 = arith.constant 5.000000e-01 : f32
    %70 = vector.broadcast %cst_30 : f32 to vector<16x512xf32>
    %71 = arith.mulf %70, %69 : vector<16x512xf32>
    %72 = math.tanh %71 : vector<16x512xf32>
    %cst_31 = arith.constant 5.000000e-01 : f32
    %73 = vector.broadcast %cst_31 : f32 to vector<16x512xf32>
    %74 = arith.mulf %73, %72 : vector<16x512xf32>
    %cst_32 = arith.constant 5.000000e-01 : f32
    %75 = vector.broadcast %cst_32 : f32 to vector<16x512xf32>
    %76 = arith.addf %74, %75 : vector<16x512xf32>
    %77 = arith.mulf %69, %76 : vector<16x512xf32>
    %78 = arith.truncf %77 : vector<16x512xf32> to vector<16x512xbf16>
    %c0_33 = arith.constant 0 : index
    %c0_34 = arith.constant 0 : index
    %79 = vector.load %arg5[%c0_33, %c0_34] : memref<512x256xbf16, #tpu.memory_space<vmem>>, vector<512x256xbf16>
    %cst_35 = arith.constant dense<0.000000e+00> : vector<16x256xf32>
    %80 = tpu.matmul %78, %79, %cst_35 {dimension_numbers = #tpu.dot_dimension_numbers<[1], [0], [0], [1], [0, 0, 1, 1], [], []>} : vector<16x512xbf16>, vector<512x256xbf16>, vector<16x256xf32> -> vector<16x256xf32>
    %c0_36 = arith.constant 0 : index
    %c0_37 = arith.constant 0 : index
    %81 = vector.load %arg7[%c0_36, %c0_37] : memref<1x256xf32, #tpu.memory_space<vmem>>, vector<1x256xf32>
    %82 = vector.broadcast %81 : vector<1x256xf32> to vector<16x256xf32>
    %83 = arith.addf %80, %82 : vector<16x256xf32>
    %c0_38 = arith.constant 0 : index
    %c0_39 = arith.constant 0 : index
    %84 = vector.load %arg8[%c0_38, %c0_39] : memref<16x256xf32, #tpu.memory_space<vmem>>, vector<16x256xf32>
    tpu.vector_store %arg8[%c0_38, %c0_39], %83 {strides = array<i32>} : memref<16x256xf32, #tpu.memory_space<vmem>>, vector<16x256xf32>,
    return
  }
  func.func @transform_0(%arg0: i32) -> (i32, i32) {
    %c0_i32 = arith.constant 0 : i32
    %c0_i32_0 = arith.constant 0 : i32
    return %arg0, %c0_i32 : i32, i32
  }
  func.func @transform_1(%arg0: i32) -> (i32, i32) {
    %c0_i32 = arith.constant 0 : i32
    %c0_i32_0 = arith.constant 0 : i32
    return %arg0, %c0_i32 : i32, i32
  }
  func.func @transform_2(%arg0: i32) -> (i32, i32) {
    %c0_i32 = arith.constant 0 : i32
    %c0_i32_0 = arith.constant 0 : i32
    %c0_i32_1 = arith.constant 0 : i32
    return %c0_i32, %c0_i32_0 : i32, i32
  }
  func.func @transform_3(%arg0: i32) -> (i32, i32) {
    %c0_i32 = arith.constant 0 : i32
    %c0_i32_0 = arith.constant 0 : i32
    %c0_i32_1 = arith.constant 0 : i32
    return %c0_i32, %c0_i32_0 : i32, i32
  }
  func.func @transform_4(%arg0: i32) -> (i32, i32) {
    %c0_i32 = arith.constant 0 : i32
    %c0_i32_0 = arith.constant 0 : i32
    %c0_i32_1 = arith.constant 0 : i32
    return %c0_i32, %c0_i32_0 : i32, i32
  }
  func.func @transform_5(%arg0: i32) -> (i32, i32) {
    %c0_i32 = arith.constant 0 : i32
    %c0_i32_0 = arith.constant 0 : i32
    %c0_i32_1 = arith.constant 0 : i32
    return %c0_i32, %c0_i32_0 : i32, i32
  }
  func.func @transform_6(%arg0: i32) -> (i32, i32) {
    %c0_i32 = arith.constant 0 : i32
    %c0_i32_0 = arith.constant 0 : i32
    %c0_i32_1 = arith.constant 0 : i32
    return %c0_i32, %c0_i32_0 : i32, i32
  }
  func.func @transform_7(%arg0: i32) -> (i32, i32) {
    %c0_i32 = arith.constant 0 : i32
    %c0_i32_0 = arith.constant 0 : i32
    return %arg0, %c0_i32 : i32, i32
  }
}

</mosaic_0001>

<llo_original>
// kernel: tpu_custom_call.1
$region0: #{tpu_custom_call.1}
  #allocation0 [shape = 'u32[]', space=smem, size = 0x4, offset = 0x4, fixed_abs, tag = 'smem constant byte address 0x4 - core index']
  #allocation1 [shape = 'u32[144,128]{1,0:T(1,128)}', space=vmem, size = 0x12000, scoped, tag = 'internal scratch']
  %s0 = inlined_call_operand.hbm [shape: bf16[16,1024], index: 0, kind: input, shape index: {}]
  %s1 = inlined_call_operand.hbm [shape: bf16[16,512], index: 1, kind: input, shape index: {}]
  %s2 = inlined_call_operand.hbm [shape: bf16[1536,512], index: 2, kind: input, shape index: {}]
  %s3 = inlined_call_operand.hbm [shape: bf16[512,512], index: 3, kind: input, shape index: {}]
  %s4 = inlined_call_operand.hbm [shape: bf16[512,256], index: 4, kind: input, shape index: {}]
  %s5 = inlined_call_operand.hbm [shape: f32[4,512], index: 5, kind: input, shape index: {}]
  %s6 = inlined_call_operand.hbm [shape: f32[1,256], index: 6, kind: input, shape index: {}]
  %s7 = inlined_call_operand.hbm [shape: f32[16,256], index: 7, kind: output, shape index: {}]
  %s8 = sld [smem:[#allocation0]]
  $region66: #{tpu_custom_call.1} parent=0
    _
  %s10 = ssub.s32 1, %s8
  %s11 = scalar_select 0, %s10, %s8
  $region1: #{tpu_custom_call.1} parent=0
    #allocation2 [shape = 'u8[32768]{0}', space=vmem, size = 0x8000, scoped, tag = 'input window, operand 0, single buffered']
    #allocation3 [shape = 's32[1]{0}', space=sflag, size = 0x4, scoped, tag = 'scoped memory for tpu_custom_call.1']
    #allocation4 [shape = 's32[1]{0}', space=sflag, size = 0x4, scoped, tag = 'scoped memory for tpu_custom_call.1']
    #allocation5 [shape = 'u8[16384]{0}', space=vmem, size = 0x4000, scoped, tag = 'input window, operand 1, single buffered']
    #allocation6 [shape = 's32[1]{0}', space=sflag, size = 0x4, scoped, tag = 'scoped memory for tpu_custom_call.1']
    #allocation7 [shape = 'u8[1572864]{0}', space=vmem, size = 0x180000, scoped, tag = 'input window, operand 2, single buffered']
    #allocation8 [shape = 'u8[524288]{0}', space=vmem, size = 0x80000, scoped, tag = 'input window, operand 3, single buffered']
    #allocation9 [shape = 's32[1]{0}', space=sflag, size = 0x4, scoped, tag = 'scoped memory for tpu_custom_call.1']
    #allocation10 [shape = 'u8[262144]{0}', space=vmem, size = 0x40000, scoped, tag = 'input window, operand 4, single buffered']
    #allocation11 [shape = 'u8[8192]{0}', space=vmem, size = 0x2000, scoped, tag = 'input window, operand 5, single buffered']
    #allocation12 [shape = 's32[1]{0}', space=sflag, size = 0x4, scoped, tag = 'scoped memory for tpu_custom_call.1']
    #allocation13 [shape = 'u8[1024]{0}', space=vmem, size = 0x400, scoped, tag = 'input window, operand 6, single buffered']
    #allocation14 [shape = 'u8[16384]{0}', space=vmem, size = 0x4000, scoped, tag = 'output window, operand 0, single buffered']
    %12 = vsyncpa [#allocation3], 0
    %13 = vsyncpa [#allocation6], 0
    %14 = vsyncpa [#allocation9], 0
    %15 = vsyncpa [#allocation12], 0
    %16 = vsyncpa [#allocation4], 0
    // Predicated region
    $region2: #{tpu_custom_call.1} parent=1 // pred_check
      _
    $region3: #{tpu_custom_call.1} parent=1 // pred_check_branch
      %18 = sbr.rel (0) target = $region5
    $region4: #{tpu_custom_call.1} parent=1 // pred_region
      %s20 = ssub.s32 1024, 1024
      %21 = vsyncadd [#allocation3], %s20
      %s22 = sshll.u32 [#allocation2], 4
      %s23 = int_to_ptr.vmem [resolvable:$true] %s22
      %28 = dma.hbm_to_vmem [thread:$0]  %s0, 1024, %s23, [#allocation3], 512, 512, 32
    $region5: #{tpu_custom_call.1} parent=1 // pred_fallthru
      _
    // Predicated region
    $region6: #{tpu_custom_call.1} parent=1 // pred_check
      _
    $region7: #{tpu_custom_call.1} parent=1 // pred_check_branch
      %30 = sbr.rel (0) target = $region9
    $region8: #{tpu_custom_call.1} parent=1 // pred_region
      %s32 = ssub.s32 512, 512
      %33 = vsyncadd [#allocation6], %s32
      %s34 = sshll.u32 [#allocation5], 4
      %s35 = int_to_ptr.vmem [resolvable:$true] %s34
      %40 = dma.hbm_to_vmem [thread:$0]  %s1, 512, %s35, [#allocation6], 256, 256, 16
    $region9: #{tpu_custom_call.1} parent=1 // pred_fallthru
      _
    // Predicated region
    $region10: #{tpu_custom_call.1} parent=1 // pred_check
      _
    $region11: #{tpu_custom_call.1} parent=1 // pred_check_branch
      %42 = sbr.rel (0) target = $region13
    $region12: #{tpu_custom_call.1} parent=1 // pred_region
      %s44 = ssub.s32 49152, 49152
      %45 = vsyncadd [#allocation6], %s44
      %s46 = sshll.u32 [#allocation7], 4
      %s47 = int_to_ptr.vmem [resolvable:$true] %s46
      %52 = dma.hbm_to_vmem [thread:$0]  %s2, 49152, %s47, [#allocation6], 256, 256, 16
    $region13: #{tpu_custom_call.1} parent=1 // pred_fallthru
      _
    // Predicated region
    $region14: #{tpu_custom_call.1} parent=1 // pred_check
      _
    $region15: #{tpu_custom_call.1} parent=1 // pred_check_branch
      %54 = sbr.rel (0) target = $region17
    $region16: #{tpu_custom_call.1} parent=1 // pred_region
      %s56 = ssub.s32 16384, 16384
      %57 = vsyncadd [#allocation9], %s56
      %s58 = sshll.u32 [#allocation8], 4
      %s59 = int_to_ptr.vmem [resolvable:$true] %s58
      %64 = dma.hbm_to_vmem [thread:$0]  %s3, 16384, %s59, [#allocation9], 256, 256, 16
    $region17: #{tpu_custom_call.1} parent=1 // pred_fallthru
      _
    // Predicated region
    $region18: #{tpu_custom_call.1} parent=1 // pred_check
      _
    $region19: #{tpu_custom_call.1} parent=1 // pred_check_branch
      %66 = sbr.rel (0) target = $region21
    $region20: #{tpu_custom_call.1} parent=1 // pred_region
      %s68 = ssub.s32 8192, 8192
      %69 = vsyncadd [#allocation9], %s68
      %s70 = sshll.u32 [#allocation10], 4
      %s71 = int_to_ptr.vmem [resolvable:$true] %s70
      %76 = dma.hbm_to_vmem [thread:$0]  %s4, 8192, %s71, [#allocation9], 128, 128, 8
    $region21: #{tpu_custom_call.1} parent=1 // pred_fallthru
      _
    // Predicated region
    $region22: #{tpu_custom_call.1} parent=1 // pred_check
      _
    $region23: #{tpu_custom_call.1} parent=1 // pred_check_branch
      %78 = sbr.rel (0) target = $region25
    $region24: #{tpu_custom_call.1} parent=1 // pred_region
      %s80 = ssub.s32 256, 256
      %81 = vsyncadd [#allocation12], %s80
      %s83 = sshll.u32 [#allocation11], 4
      %s84 = int_to_ptr.vmem [resolvable:$true] %s83
      %86 = dma.hbm_to_vmem [thread:$0]  %s5, 256, %s84, [#allocation12]
    $region25: #{tpu_custom_call.1} parent=1 // pred_fallthru
      _
    // Predicated region
    $region26: #{tpu_custom_call.1} parent=1 // pred_check
      _
    $region27: #{tpu_custom_call.1} parent=1 // pred_check_branch
      %88 = sbr.rel (0) target = $region29
    $region28: #{tpu_custom_call.1} parent=1 // pred_region
      %s90 = ssub.s32 32, 32
      %91 = vsyncadd [#allocation12], %s90
      %s93 = sshll.u32 [#allocation13], 4
      %s94 = int_to_ptr.vmem [resolvable:$true] %s93
      %96 = dma.hbm_to_vmem [thread:$0]  %s6, 32, %s94, [#allocation12]
    $region29: #{tpu_custom_call.1} parent=1 // pred_fallthru
      _
    // Predicated region
    $region30: #{tpu_custom_call.1} parent=1 // pred_check
      _
    $region31: #{tpu_custom_call.1} parent=1 // pred_check_branch
      %98 = sbr.rel (0) target = $region33
    $region32: #{tpu_custom_call.1} parent=1 // pred_region
      %99 = dma.done [#allocation3], 1024
    $region33: #{tpu_custom_call.1} parent=1 // pred_fallthru
      _
    // Predicated region
    $region34: #{tpu_custom_call.1} parent=1 // pred_check
      _
    $region35: #{tpu_custom_call.1} parent=1 // pred_check_branch
      %101 = sbr.rel (0) target = $region37
    $region36: #{tpu_custom_call.1} parent=1 // pred_region
      %102 = dma.done [#allocation6], 512
    $region37: #{tpu_custom_call.1} parent=1 // pred_fallthru
      _
    // Predicated region
    $region38: #{tpu_custom_call.1} parent=1 // pred_check
      _
    $region39: #{tpu_custom_call.1} parent=1 // pred_check_branch
      %104 = sbr.rel (0) target = $region41
    $region40: #{tpu_custom_call.1} parent=1 // pred_region
      %105 = dma.done [#allocation6], 49152
    $region41: #{tpu_custom_call.1} parent=1 // pred_fallthru
      _
    // Predicated region
    $region42: #{tpu_custom_call.1} parent=1 // pred_check
      _
    $region43: #{tpu_custom_call.1} parent=1 // pred_check_branch
      %107 = sbr.rel (0) target = $region45
    $region44: #{tpu_custom_call.1} parent=1 // pred_region
      %108 = dma.done [#allocation9], 16384
    $region45: #{tpu_custom_call.1} parent=1 // pred_fallthru
      _
    // Predicated region
    $region46: #{tpu_custom_call.1} parent=1 // pred_check
      _
    $region47: #{tpu_custom_call.1} parent=1 // pred_check_branch
      %110 = sbr.rel (0) target = $region49
    $region48: #{tpu_custom_call.1} parent=1 // pred_region
      %111 = dma.done [#allocation9], 8192
    $region49: #{tpu_custom_call.1} parent=1 // pred_fallthru
      _
    // Predicated region
    $region50: #{tpu_custom_call.1} parent=1 // pred_check
      _
    $region51: #{tpu_custom_call.1} parent=1 // pred_check_branch
      %113 = sbr.rel (0) target = $region53
    $region52: #{tpu_custom_call.1} parent=1 // pred_region
      %114 = dma.done [#allocation12], 256
    $region53: #{tpu_custom_call.1} parent=1 // pred_fallthru
      _
    // Predicated region
    $region54: #{tpu_custom_call.1} parent=1 // pred_check
      _
    $region55: #{tpu_custom_call.1} parent=1 // pred_check_branch
      %116 = sbr.rel (0) target = $region57
    $region56: #{tpu_custom_call.1} parent=1 // pred_region
      %117 = dma.done [#allocation12], 32
    $region57: #{tpu_custom_call.1} parent=1 // pred_fallthru
      _
    %v118 = vld [vmem:[#allocation2] sm:$0xff]
    %v119 = vld [vmem:[#allocation2 + $0x8] sm:$0xff]
    %v120 = vld [vmem:[#allocation2 + $0x10] sm:$0xff]
    %v121 = vld [vmem:[#allocation2 + $0x18] sm:$0xff]
    %v122 = vld [vmem:[#allocation2 + $0x20] sm:$0xff]
    %v123 = vld [vmem:[#allocation2 + $0x28] sm:$0xff]
    %v124 = vld [vmem:[#allocation2 + $0x30] sm:$0xff]
    %v125 = vld [vmem:[#allocation2 + $0x38] sm:$0xff]
    %v126 = vld [vmem:[#allocation7] sm:$0xff]
    %v127 = vld [vmem:[#allocation7 + $0x8] sm:$0xff]
    %v128 = vld [vmem:[#allocation7 + $0x10] sm:$0xff]
    %v129 = vld [vmem:[#allocation7 + $0x18] sm:$0xff]
    %v130 = vld [vmem:[#allocation7 + $0x20] sm:$0xff]
    %v131 = vld [vmem:[#allocation7 + $0x28] sm:$0xff]
    %v132 = vld [vmem:[#allocation7 + $0x30] sm:$0xff]
    %v133 = vld [vmem:[#allocation7 + $0x38] sm:$0xff]
    %v134 = vld [vmem:[#allocation7 + $0x40] sm:$0xff]
    %v135 = vld [vmem:[#allocation7 + $0x48] sm:$0xff]
    %v136 = vld [vmem:[#allocation7 + $0x50] sm:$0xff]
    %v137 = vld [vmem:[#allocation7 + $0x58] sm:$0xff]
    %v138 = vld [vmem:[#allocation7 + $0x60] sm:$0xff]
    %v139 = vld [vmem:[#allocation7 + $0x68] sm:$0xff]
    %v140 = vld [vmem:[#allocation7 + $0x70] sm:$0xff]
    %v141 = vld [vmem:[#allocation7 + $0x78] sm:$0xff]
    %v142 = vld [vmem:[#allocation7 + $0x80] sm:$0xff]
    %v143 = vld [vmem:[#allocation7 + $0x88] sm:$0xff]
    %v144 = vld [vmem:[#allocation7 + $0x90] sm:$0xff]
    %v145 = vld [vmem:[#allocation7 + $0x98] sm:$0xff]
    %v146 = vld [vmem:[#allocation7 + $0xa0] sm:$0xff]
    %v147 = vld [vmem:[#allocation7 + $0xa8] sm:$0xff]
    %v148 = vld [vmem:[#allocation7 + $0xb0] sm:$0xff]
    %v149 = vld [vmem:[#allocation7 + $0xb8] sm:$0xff]
    %v150 = vld [vmem:[#allocation7 + $0xc0] sm:$0xff]
    %v151 = vld [vmem:[#allocation7 + $0xc8] sm:$0xff]
    %v152 = vld [vmem:[#allocation7 + $0xd0] sm:$0xff]
    %v153 = vld [vmem:[#allocation7 + $0xd8] sm:$0xff]
    %v154 = vld [vmem:[#allocation7 + $0xe0] sm:$0xff]
    %v155 = vld [vmem:[#allocation7 + $0xe8] sm:$0xff]
    %v156 = vld [vmem:[#allocation7 + $0xf0] sm:$0xff]
    %v157 = vld [vmem:[#allocation7 + $0xf8] sm:$0xff]
    %v158 = vld [vmem:[#allocation7 + $0x100] sm:$0xff]
    %v159 = vld [vmem:[#allocation7 + $0x108] sm:$0xff]
    %v160 = vld [vmem:[#allocation7 + $0x110] sm:$0xff]
    %v161 = vld [vmem:[#allocation7 + $0x118] sm:$0xff]
    %v162 = vld [vmem:[#allocation7 + $0x120] sm:$0xff]
    %v163 = vld [vmem:[#allocation7 + $0x128] sm:$0xff]
    %v164 = vld [vmem:[#allocation7 + $0x130] sm:$0xff]
    %v165 = vld [vmem:[#allocation7 + $0x138] sm:$0xff]
    %v166 = vld [vmem:[#allocation7 + $0x140] sm:$0xff]
    %v167 = vld [vmem:[#allocation7 + $0x148] sm:$0xff]
    %v168 = vld [vmem:[#allocation7 + $0x150] sm:$0xff]
    %v169 = vld [vmem:[#allocation7 + $0x158] sm:$0xff]
    %v170 = vld [vmem:[#allocation7 + $0x160] sm:$0xff]
    %v171 = vld [vmem:[#allocation7 + $0x168] sm:$0xff]
    %v172 = vld [vmem:[#allocation7 + $0x170] sm:$0xff]
    %v173 = vld [vmem:[#allocation7 + $0x178] sm:$0xff]
    %v174 = vld [vmem:[#allocation7 + $0x180] sm:$0xff]
    %v175 = vld [vmem:[#allocation7 + $0x188] sm:$0xff]
    %v176 = vld [vmem:[#allocation7 + $0x190] sm:$0xff]
    %v177 = vld [vmem:[#allocation7 + $0x198] sm:$0xff]
    %v178 = vld [vmem:[#allocation7 + $0x1a0] sm:$0xff]
    %v179 = vld [vmem:[#allocation7 + $0x1a8] sm:$0xff]
    %v180 = vld [vmem:[#allocation7 + $0x1b0] sm:$0xff]
    %v181 = vld [vmem:[#allocation7 + $0x1b8] sm:$0xff]
    %v182 = vld [vmem:[#allocation7 + $0x1c0] sm:$0xff]
    %v183 = vld [vmem:[#allocation7 + $0x1c8] sm:$0xff]
    %v184 = vld [vmem:[#allocation7 + $0x1d0] sm:$0xff]
    %v185 = vld [vmem:[#allocation7 + $0x1d8] sm:$0xff]
    %v186 = vld [vmem:[#allocation7 + $0x1e0] sm:$0xff]
    %v187 = vld [vmem:[#allocation7 + $0x1e8] sm:$0xff]
    %v188 = vld [vmem:[#allocation7 + $0x1f0] sm:$0xff]
    %v189 = vld [vmem:[#allocation7 + $0x1f8] sm:$0xff]
    %v190 = vld [vmem:[#allocation7 + $0x200] sm:$0xff]
    %v191 = vld [vmem:[#allocation7 + $0x208] sm:$0xff]
    %v192 = vld [vmem:[#allocation7 + $0x210] sm:$0xff]
    %v193 = vld [vmem:[#allocation7 + $0x218] sm:$0xff]
    %v194 = vld [vmem:[#allocation7 + $0x220] sm:$0xff]
    %v195 = vld [vmem:[#allocation7 + $0x228] sm:$0xff]
    %v196 = vld [vmem:[#allocation7 + $0x230] sm:$0xff]
    %v197 = vld [vmem:[#allocation7 + $0x238] sm:$0xff]
    %v198 = vld [vmem:[#allocation7 + $0x240] sm:$0xff]
    %v199 = vld [vmem:[#allocation7 + $0x248] sm:$0xff]
    %v200 = vld [vmem:[#allocation7 + $0x250] sm:$0xff]
    %v201 = vld [vmem:[#allocation7 + $0x258] sm:$0xff]
    %v202 = vld [vmem:[#allocation7 + $0x260] sm:$0xff]
    %v203 = vld [vmem:[#allocation7 + $0x268] sm:$0xff]
    %v204 = vld [vmem:[#allocation7 + $0x270] sm:$0xff]
    %v205 = vld [vmem:[#allocation7 + $0x278] sm:$0xff]
    %v206 = vld [vmem:[#allocation7 + $0x280] sm:$0xff]
    %v207 = vld [vmem:[#allocation7 + $0x288] sm:$0xff]
    %v208 = vld [vmem:[#allocation7 + $0x290] sm:$0xff]
    %v209 = vld [vmem:[#allocation7 + $0x298] sm:$0xff]
    %v210 = vld [vmem:[#allocation7 + $0x2a0] sm:$0xff]
    %v211 = vld [vmem:[#allocation7 + $0x2a8] sm:$0xff]
    %v212 = vld [vmem:[#allocation7 + $0x2b0] sm:$0xff]
    %v213 = vld [vmem:[#allocation7 + $0x2b8] sm:$0xff]
    %v214 = vld [vmem:[#allocation7 + $0x2c0] sm:$0xff]
    %v215 = vld [vmem:[#allocation7 + $0x2c8] sm:$0xff]
    %v216 = vld [vmem:[#allocation7 + $0x2d0] sm:$0xff]
    %v217 = vld [vmem:[#allocation7 + $0x2d8] sm:$0xff]
    %v218 = vld [vmem:[#allocation7 + $0x2e0] sm:$0xff]
    %v219 = vld [vmem:[#allocation7 + $0x2e8] sm:$0xff]
    %v220 = vld [vmem:[#allocation7 + $0x2f0] sm:$0xff]
    %v221 = vld [vmem:[#allocation7 + $0x2f8] sm:$0xff]
    %v222 = vld [vmem:[#allocation7 + $0x300] sm:$0xff]
    %v223 = vld [vmem:[#allocation7 + $0x308] sm:$0xff]
    %v224 = vld [vmem:[#allocation7 + $0x310] sm:$0xff]
    %v225 = vld [vmem:[#allocation7 + $0x318] sm:$0xff]
    %v226 = vld [vmem:[#allocation7 + $0x320] sm:$0xff]
    %v227 = vld [vmem:[#allocation7 + $0x328] sm:$0xff]
    %v228 = vld [vmem:[#allocation7 + $0x330] sm:$0xff]
    %v229 = vld [vmem:[#allocation7 + $0x338] sm:$0xff]
    %v230 = vld [vmem:[#allocation7 + $0x340] sm:$0xff]
    %v231 = vld [vmem:[#allocation7 + $0x348] sm:$0xff]
    %v232 = vld [vmem:[#allocation7 + $0x350] sm:$0xff]
    %v233 = vld [vmem:[#allocation7 + $0x358] sm:$0xff]
    %v234 = vld [vmem:[#allocation7 + $0x360] sm:$0xff]
    %v235 = vld [vmem:[#allocation7 + $0x368] sm:$0xff]
    %v236 = vld [vmem:[#allocation7 + $0x370] sm:$0xff]
    %v237 = vld [vmem:[#allocation7 + $0x378] sm:$0xff]
    %v238 = vld [vmem:[#allocation7 + $0x380] sm:$0xff]
    %v239 = vld [vmem:[#allocation7 + $0x388] sm:$0xff]
    %v240 = vld [vmem:[#allocation7 + $0x390] sm:$0xff]
    %v241 = vld [vmem:[#allocation7 + $0x398] sm:$0xff]
    %v242 = vld [vmem:[#allocation7 + $0x3a0] sm:$0xff]
    %v243 = vld [vmem:[#allocation7 + $0x3a8] sm:$0xff]
    %v244 = vld [vmem:[#allocation7 + $0x3b0] sm:$0xff]
    %v245 = vld [vmem:[#allocation7 + $0x3b8] sm:$0xff]
    %v246 = vld [vmem:[#allocation7 + $0x3c0] sm:$0xff]
    %v247 = vld [vmem:[#allocation7 + $0x3c8] sm:$0xff]
    %v248 = vld [vmem:[#allocation7 + $0x3d0] sm:$0xff]
    %v249 = vld [vmem:[#allocation7 + $0x3d8] sm:$0xff]
    %v250 = vld [vmem:[#allocation7 + $0x3e0] sm:$0xff]
    %v251 = vld [vmem:[#allocation7 + $0x3e8] sm:$0xff]
    %v252 = vld [vmem:[#allocation7 + $0x3f0] sm:$0xff]
    %v253 = vld [vmem:[#allocation7 + $0x3f8] sm:$0xff]
    %v254 = vld [vmem:[#allocation7 + $0x400] sm:$0xff]
    %v255 = vld [vmem:[#allocation7 + $0x408] sm:$0xff]
    %v256 = vld [vmem:[#allocation7 + $0x410] sm:$0xff]
    %v257 = vld [vmem:[#allocation7 + $0x418] sm:$0xff]
    %v258 = vld [vmem:[#allocation7 + $0x420] sm:$0xff]
    %v259 = vld [vmem:[#allocation7 + $0x428] sm:$0xff]
    %v260 = vld [vmem:[#allocation7 + $0x430] sm:$0xff]
    %v261 = vld [vmem:[#allocation7 + $0x438] sm:$0xff]
    %v262 = vld [vmem:[#allocation7 + $0x440] sm:$0xff]
    %v263 = vld [vmem:[#allocation7 + $0x448] sm:$0xff]
    %v264 = vld [vmem:[#allocation7 + $0x450] sm:$0xff]
    %v265 = vld [vmem:[#allocation7 + $0x458] sm:$0xff]
    %v266 = vld [vmem:[#allocation7 + $0x460] sm:$0xff]
    %v267 = vld [vmem:[#allocation7 + $0x468] sm:$0xff]
    %v268 = vld [vmem:[#allocation7 + $0x470] sm:$0xff]
    %v269 = vld [vmem:[#allocation7 + $0x478] sm:$0xff]
    %v270 = vld [vmem:[#allocation7 + $0x480] sm:$0xff]
    %v271 = vld [vmem:[#allocation7 + $0x488] sm:$0xff]
    %v272 = vld [vmem:[#allocation7 + $0x490] sm:$0xff]
    %v273 = vld [vmem:[#allocation7 + $0x498] sm:$0xff]
    %v274 = vld [vmem:[#allocation7 + $0x4a0] sm:$0xff]
    %v275 = vld [vmem:[#allocation7 + $0x4a8] sm:$0xff]
    %v276 = vld [vmem:[#allocation7 + $0x4b0] sm:$0xff]
    %v277 = vld [vmem:[#allocation7 + $0x4b8] sm:$0xff]
    %v278 = vld [vmem:[#allocation7 + $0x4c0] sm:$0xff]
    %v279 = vld [vmem:[#allocation7 + $0x4c8] sm:$0xff]
    %v280 = vld [vmem:[#allocation7 + $0x4d0] sm:$0xff]
    %v281 = vld [vmem:[#allocation7 + $0x4d8] sm:$0xff]
    %v282 = vld [vmem:[#allocation7 + $0x4e0] sm:$0xff]
    %v283 = vld [vmem:[#allocation7 + $0x4e8] sm:$0xff]
    %v284 = vld [vmem:[#allocation7 + $0x4f0] sm:$0xff]
    %v285 = vld [vmem:[#allocation7 + $0x4f8] sm:$0xff]
    %v286 = vld [vmem:[#allocation7 + $0x500] sm:$0xff]
    %v287 = vld [vmem:[#allocation7 + $0x508] sm:$0xff]
    %v288 = vld [vmem:[#allocation7 + $0x510] sm:$0xff]
    %v289 = vld [vmem:[#allocation7 + $0x518] sm:$0xff]
    %v290 = vld [vmem:[#allocation7 + $0x520] sm:$0xff]
    %v291 = vld [vmem:[#allocation7 + $0x528] sm:$0xff]
    %v292 = vld [vmem:[#allocation7 + $0x530] sm:$0xff]
    %v293 = vld [vmem:[#allocation7 + $0x538] sm:$0xff]
    %v294 = vld [vmem:[#allocation7 + $0x540] sm:$0xff]
    %v295 = vld [vmem:[#allocation7 + $0x548] sm:$0xff]
    %v296 = vld [vmem:[#allocation7 + $0x550] sm:$0xff]
    %v297 = vld [vmem:[#allocation7 + $0x558] sm:$0xff]
    %v298 = vld [vmem:[#allocation7 + $0x560] sm:$0xff]
    %v299 = vld [vmem:[#allocation7 + $0x568] sm:$0xff]
    %v300 = vld [vmem:[#allocation7 + $0x570] sm:$0xff]
    %v301 = vld [vmem:[#allocation7 + $0x578] sm:$0xff]
    %v302 = vld [vmem:[#allocation7 + $0x580] sm:$0xff]
    %v303 = vld [vmem:[#allocation7 + $0x588] sm:$0xff]
    %v304 = vld [vmem:[#allocation7 + $0x590] sm:$0xff]
    %v305 = vld [vmem:[#allocation7 + $0x598] sm:$0xff]
    %v306 = vld [vmem:[#allocation7 + $0x5a0] sm:$0xff]
    %v307 = vld [vmem:[#allocation7 + $0x5a8] sm:$0xff]
    %v308 = vld [vmem:[#allocation7 + $0x5b0] sm:$0xff]
    %v309 = vld [vmem:[#allocation7 + $0x5b8] sm:$0xff]
    %v310 = vld [vmem:[#allocation7 + $0x5c0] sm:$0xff]
    %v311 = vld [vmem:[#allocation7 + $0x5c8] sm:$0xff]
    %v312 = vld [vmem:[#allocation7 + $0x5d0] sm:$0xff]
    %v313 = vld [vmem:[#allocation7 + $0x5d8] sm:$0xff]
    %v314 = vld [vmem:[#allocation7 + $0x5e0] sm:$0xff]
    %v315 = vld [vmem:[#allocation7 + $0x5e8] sm:$0xff]
    %v316 = vld [vmem:[#allocation7 + $0x5f0] sm:$0xff]
    %v317 = vld [vmem:[#allocation7 + $0x5f8] sm:$0xff]
    %v318 = vld [vmem:[#allocation7 + $0x600] sm:$0xff]
    %v319 = vld [vmem:[#allocation7 + $0x608] sm:$0xff]
    %v320 = vld [vmem:[#allocation7 + $0x610] sm:$0xff]
    %v321 = vld [vmem:[#allocation7 + $0x618] sm:$0xff]
    %v322 = vld [vmem:[#allocation7 + $0x620] sm:$0xff]
    %v323 = vld [vmem:[#allocation7 + $0x628] sm:$0xff]
    %v324 = vld [vmem:[#allocation7 + $0x630] sm:$0xff]
    %v325 = vld [vmem:[#allocation7 + $0x638] sm:$0xff]
    %v326 = vld [vmem:[#allocation7 + $0x640] sm:$0xff]
    %v327 = vld [vmem:[#allocation7 + $0x648] sm:$0xff]
    %v328 = vld [vmem:[#allocation7 + $0x650] sm:$0xff]
    %v329 = vld [vmem:[#allocation7 + $0x658] sm:$0xff]
    %v330 = vld [vmem:[#allocation7 + $0x660] sm:$0xff]
    %v331 = vld [vmem:[#allocation7 + $0x668] sm:$0xff]
    %v332 = vld [vmem:[#allocation7 + $0x670] sm:$0xff]
    %v333 = vld [vmem:[#allocation7 + $0x678] sm:$0xff]
    %v334 = vld [vmem:[#allocation7 + $0x680] sm:$0xff]
    %v335 = vld [vmem:[#allocation7 + $0x688] sm:$0xff]
    %v336 = vld [vmem:[#allocation7 + $0x690] sm:$0xff]
    %v337 = vld [vmem:[#allocation7 + $0x698] sm:$0xff]
    %v338 = vld [vmem:[#allocation7 + $0x6a0] sm:$0xff]
    %v339 = vld [vmem:[#allocation7 + $0x6a8] sm:$0xff]
    %v340 = vld [vmem:[#allocation7 + $0x6b0] sm:$0xff]
    %v341 = vld [vmem:[#allocation7 + $0x6b8] sm:$0xff]
    %v342 = vld [vmem:[#allocation7 + $0x6c0] sm:$0xff]
    %v343 = vld [vmem:[#allocation7 + $0x6c8] sm:$0xff]
    %v344 = vld [vmem:[#allocation7 + $0x6d0] sm:$0xff]
    %v345 = vld [vmem:[#allocation7 + $0x6d8] sm:$0xff]
    %v346 = vld [vmem:[#allocation7 + $0x6e0] sm:$0xff]
    %v347 = vld [vmem:[#allocation7 + $0x6e8] sm:$0xff]
    %v348 = vld [vmem:[#allocation7 + $0x6f0] sm:$0xff]
    %v349 = vld [vmem:[#allocation7 + $0x6f8] sm:$0xff]
    %v350 = vld [vmem:[#allocation7 + $0x700] sm:$0xff]
    %v351 = vld [vmem:[#allocation7 + $0x708] sm:$0xff]
    %v352 = vld [vmem:[#allocation7 + $0x710] sm:$0xff]
    %v353 = vld [vmem:[#allocation7 + $0x718] sm:$0xff]
    %v354 = vld [vmem:[#allocation7 + $0x720] sm:$0xff]
    %v355 = vld [vmem:[#allocation7 + $0x728] sm:$0xff]
    %v356 = vld [vmem:[#allocation7 + $0x730] sm:$0xff]
    %v357 = vld [vmem:[#allocation7 + $0x738] sm:$0xff]
    %v358 = vld [vmem:[#allocation7 + $0x740] sm:$0xff]
    %v359 = vld [vmem:[#allocation7 + $0x748] sm:$0xff]
    %v360 = vld [vmem:[#allocation7 + $0x750] sm:$0xff]
    %v361 = vld [vmem:[#allocation7 + $0x758] sm:$0xff]
    %v362 = vld [vmem:[#allocation7 + $0x760] sm:$0xff]
    %v363 = vld [vmem:[#allocation7 + $0x768] sm:$0xff]
    %v364 = vld [vmem:[#allocation7 + $0x770] sm:$0xff]
    %v365 = vld [vmem:[#allocation7 + $0x778] sm:$0xff]
    %v366 = vld [vmem:[#allocation7 + $0x780] sm:$0xff]
    %v367 = vld [vmem:[#allocation7 + $0x788] sm:$0xff]
    %v368 = vld [vmem:[#allocation7 + $0x790] sm:$0xff]
    %v369 = vld [vmem:[#allocation7 + $0x798] sm:$0xff]
    %v370 = vld [vmem:[#allocation7 + $0x7a0] sm:$0xff]
    %v371 = vld [vmem:[#allocation7 + $0x7a8] sm:$0xff]
    %v372 = vld [vmem:[#allocation7 + $0x7b0] sm:$0xff]
    %v373 = vld [vmem:[#allocation7 + $0x7b8] sm:$0xff]
    %v374 = vld [vmem:[#allocation7 + $0x7c0] sm:$0xff]
    %v375 = vld [vmem:[#allocation7 + $0x7c8] sm:$0xff]
    %v376 = vld [vmem:[#allocation7 + $0x7d0] sm:$0xff]
    %v377 = vld [vmem:[#allocation7 + $0x7d8] sm:$0xff]
    %v378 = vld [vmem:[#allocation7 + $0x7e0] sm:$0xff]
    %v379 = vld [vmem:[#allocation7 + $0x7e8] sm:$0xff]
    %v380 = vld [vmem:[#allocation7 + $0x7f0] sm:$0xff]
    %v381 = vld [vmem:[#allocation7 + $0x7f8] sm:$0xff]
    %v382 = vld [vmem:[#allocation5] sm:$0xff]
    %v383 = vld [vmem:[#allocation5 + $0x8] sm:$0xff]
    %v384 = vld [vmem:[#allocation5 + $0x10] sm:$0xff]
    %v385 = vld [vmem:[#allocation5 + $0x18] sm:$0xff]
    %v386 = vld [vmem:[#allocation7 + $0x800] sm:$0xff]
    %v387 = vld [vmem:[#allocation7 + $0x808] sm:$0xff]
    %v388 = vld [vmem:[#allocation7 + $0x810] sm:$0xff]
    %v389 = vld [vmem:[#allocation7 + $0x818] sm:$0xff]
    %v390 = vld [vmem:[#allocation7 + $0x820] sm:$0xff]
    %v391 = vld [vmem:[#allocation7 + $0x828] sm:$0xff]
    %v392 = vld [vmem:[#allocation7 + $0x830] sm:$0xff]
    %v393 = vld [vmem:[#allocation7 + $0x838] sm:$0xff]
    %v394 = vld [vmem:[#allocation7 + $0x840] sm:$0xff]
    %v395 = vld [vmem:[#allocation7 + $0x848] sm:$0xff]
    %v396 = vld [vmem:[#allocation7 + $0x850] sm:$0xff]
    %v397 = vld [vmem:[#allocation7 + $0x858] sm:$0xff]
    %v398 = vld [vmem:[#allocation7 + $0x860] sm:$0xff]
    %v399 = vld [vmem:[#allocation7 + $0x868] sm:$0xff]
    %v400 = vld [vmem:[#allocation7 + $0x870] sm:$0xff]
    %v401 = vld [vmem:[#allocation7 + $0x878] sm:$0xff]
    %v402 = vld [vmem:[#allocation7 + $0x880] sm:$0xff]
    %v403 = vld [vmem:[#allocation7 + $0x888] sm:$0xff]
    %v404 = vld [vmem:[#allocation7 + $0x890] sm:$0xff]
    %v405 = vld [vmem:[#allocation7 + $0x898] sm:$0xff]
    %v406 = vld [vmem:[#allocation7 + $0x8a0] sm:$0xff]
    %v407 = vld [vmem:[#allocation7 + $0x8a8] sm:$0xff]
    %v408 = vld [vmem:[#allocation7 + $0x8b0] sm:$0xff]
    %v409 = vld [vmem:[#allocation7 + $0x8b8] sm:$0xff]
    %v410 = vld [vmem:[#allocation7 + $0x8c0] sm:$0xff]
    %v411 = vld [vmem:[#allocation7 + $0x8c8] sm:$0xff]
    %v412 = vld [vmem:[#allocation7 + $0x8d0] sm:$0xff]
    %v413 = vld [vmem:[#allocation7 + $0x8d8] sm:$0xff]
    %v414 = vld [vmem:[#allocation7 + $0x8e0] sm:$0xff]
    %v415 = vld [vmem:[#allocation7 + $0x8e8] sm:$0xff]
    %v416 = vld [vmem:[#allocation7 + $0x8f0] sm:$0xff]
    %v417 = vld [vmem:[#allocation7 + $0x8f8] sm:$0xff]
    %v418 = vld [vmem:[#allocation7 + $0x900] sm:$0xff]
    %v419 = vld [vmem:[#allocation7 + $0x908] sm:$0xff]
    %v420 = vld [vmem:[#allocation7 + $0x910] sm:$0xff]
    %v421 = vld [vmem:[#allocation7 + $0x918] sm:$0xff]
    %v422 = vld [vmem:[#allocation7 + $0x920] sm:$0xff]
    %v423 = vld [vmem:[#allocation7 + $0x928] sm:$0xff]
    %v424 = vld [vmem:[#allocation7 + $0x930] sm:$0xff]
    %v425 = vld [vmem:[#allocation7 + $0x938] sm:$0xff]
    %v426 = vld [vmem:[#allocation7 + $0x940] sm:$0xff]
    %v427 = vld [vmem:[#allocation7 + $0x948] sm:$0xff]
    %v428 = vld [vmem:[#allocation7 + $0x950] sm:$0xff]
    %v429 = vld [vmem:[#allocation7 + $0x958] sm:$0xff]
    %v430 = vld [vmem:[#allocation7 + $0x960] sm:$0xff]
    %v431 = vld [vmem:[#allocation7 + $0x968] sm:$0xff]
    %v432 = vld [vmem:[#allocation7 + $0x970] sm:$0xff]
    %v433 = vld [vmem:[#allocation7 + $0x978] sm:$0xff]
    %v434 = vld [vmem:[#allocation7 + $0x980] sm:$0xff]
    %v435 = vld [vmem:[#allocation7 + $0x988] sm:$0xff]
    %v436 = vld [vmem:[#allocation7 + $0x990] sm:$0xff]
    %v437 = vld [vmem:[#allocation7 + $0x998] sm:$0xff]
    %v438 = vld [vmem:[#allocation7 + $0x9a0] sm:$0xff]
    %v439 = vld [vmem:[#allocation7 + $0x9a8] sm:$0xff]
    %v440 = vld [vmem:[#allocation7 + $0x9b0] sm:$0xff]
    %v441 = vld [vmem:[#allocation7 + $0x9b8] sm:$0xff]
    %v442 = vld [vmem:[#allocation7 + $0x9c0] sm:$0xff]
    %v443 = vld [vmem:[#allocation7 + $0x9c8] sm:$0xff]
    %v444 = vld [vmem:[#allocation7 + $0x9d0] sm:$0xff]
    %v445 = vld [vmem:[#allocation7 + $0x9d8] sm:$0xff]
    %v446 = vld [vmem:[#allocation7 + $0x9e0] sm:$0xff]
    %v447 = vld [vmem:[#allocation7 + $0x9e8] sm:$0xff]
    %v448 = vld [vmem:[#allocation7 + $0x9f0] sm:$0xff]
    %v449 = vld [vmem:[#allocation7 + $0x9f8] sm:$0xff]
    %v450 = vld [vmem:[#allocation7 + $0xa00] sm:$0xff]
    %v451 = vld [vmem:[#allocation7 + $0xa08] sm:$0xff]
    %v452 = vld [vmem:[#allocation7 + $0xa10] sm:$0xff]
    %v453 = vld [vmem:[#allocation7 + $0xa18] sm:$0xff]
    %v454 = vld [vmem:[#allocation7 + $0xa20] sm:$0xff]
    %v455 = vld [vmem:[#allocation7 + $0xa28] sm:$0xff]
    %v456 = vld [vmem:[#allocation7 + $0xa30] sm:$0xff]
    %v457 = vld [vmem:[#allocation7 + $0xa38] sm:$0xff]
    %v458 = vld [vmem:[#allocation7 + $0xa40] sm:$0xff]
    %v459 = vld [vmem:[#allocation7 + $0xa48] sm:$0xff]
    %v460 = vld [vmem:[#allocation7 + $0xa50] sm:$0xff]
    %v461 = vld [vmem:[#allocation7 + $0xa58] sm:$0xff]
    %v462 = vld [vmem:[#allocation7 + $0xa60] sm:$0xff]
    %v463 = vld [vmem:[#allocation7 + $0xa68] sm:$0xff]
    %v464 = vld [vmem:[#allocation7 + $0xa70] sm:$0xff]
    %v465 = vld [vmem:[#allocation7 + $0xa78] sm:$0xff]
    %v466 = vld [vmem:[#allocation7 + $0xa80] sm:$0xff]
    %v467 = vld [vmem:[#allocation7 + $0xa88] sm:$0xff]
    %v468 = vld [vmem:[#allocation7 + $0xa90] sm:$0xff]
    %v469 = vld [vmem:[#allocation7 + $0xa98] sm:$0xff]
    %v470 = vld [vmem:[#allocation7 + $0xaa0] sm:$0xff]
    %v471 = vld [vmem:[#allocation7 + $0xaa8] sm:$0xff]
    %v472 = vld [vmem:[#allocation7 + $0xab0] sm:$0xff]
    %v473 = vld [vmem:[#allocation7 + $0xab8] sm:$0xff]
    %v474 = vld [vmem:[#allocation7 + $0xac0] sm:$0xff]
    %v475 = vld [vmem:[#allocation7 + $0xac8] sm:$0xff]
    %v476 = vld [vmem:[#allocation7 + $0xad0] sm:$0xff]
    %v477 = vld [vmem:[#allocation7 + $0xad8] sm:$0xff]
    %v478 = vld [vmem:[#allocation7 + $0xae0] sm:$0xff]
    %v479 = vld [vmem:[#allocation7 + $0xae8] sm:$0xff]
    %v480 = vld [vmem:[#allocation7 + $0xaf0] sm:$0xff]
    %v481 = vld [vmem:[#allocation7 + $0xaf8] sm:$0xff]
    %v482 = vld [vmem:[#allocation7 + $0xb00] sm:$0xff]
    %v483 = vld [vmem:[#allocation7 + $0xb08] sm:$0xff]
    %v484 = vld [vmem:[#allocation7 + $0xb10] sm:$0xff]
    %v485 = vld [vmem:[#allocation7 + $0xb18] sm:$0xff]
    %v486 = vld [vmem:[#allocation7 + $0xb20] sm:$0xff]
    %v487 = vld [vmem:[#allocation7 + $0xb28] sm:$0xff]
    %v488 = vld [vmem:[#allocation7 + $0xb30] sm:$0xff]
    %v489 = vld [vmem:[#allocation7 + $0xb38] sm:$0xff]
    %v490 = vld [vmem:[#allocation7 + $0xb40] sm:$0xff]
    %v491 = vld [vmem:[#allocation7 + $0xb48] sm:$0xff]
    %v492 = vld [vmem:[#allocation7 + $0xb50] sm:$0xff]
    %v493 = vld [vmem:[#allocation7 + $0xb58] sm:$0xff]
    %v494 = vld [vmem:[#allocation7 + $0xb60] sm:$0xff]
    %v495 = vld [vmem:[#allocation7 + $0xb68] sm:$0xff]
    %v496 = vld [vmem:[#allocation7 + $0xb70] sm:$0xff]
    %v497 = vld [vmem:[#allocation7 + $0xb78] sm:$0xff]
    %v498 = vld [vmem:[#allocation7 + $0xb80] sm:$0xff]
    %v499 = vld [vmem:[#allocation7 + $0xb88] sm:$0xff]
    %v500 = vld [vmem:[#allocation7 + $0xb90] sm:$0xff]
    %v501 = vld [vmem:[#allocation7 + $0xb98] sm:$0xff]
    %v502 = vld [vmem:[#allocation7 + $0xba0] sm:$0xff]
    %v503 = vld [vmem:[#allocation7 + $0xba8] sm:$0xff]
    %v504 = vld [vmem:[#allocation7 + $0xbb0] sm:$0xff]
    %v505 = vld [vmem:[#allocation7 + $0xbb8] sm:$0xff]
    %v506 = vld [vmem:[#allocation7 + $0xbc0] sm:$0xff]
    %v507 = vld [vmem:[#allocation7 + $0xbc8] sm:$0xff]
    %v508 = vld [vmem:[#allocation7 + $0xbd0] sm:$0xff]
    %v509 = vld [vmem:[#allocation7 + $0xbd8] sm:$0xff]
    %v510 = vld [vmem:[#allocation7 + $0xbe0] sm:$0xff]
    %v511 = vld [vmem:[#allocation7 + $0xbe8] sm:$0xff]
    %v512 = vld [vmem:[#allocation7 + $0xbf0] sm:$0xff]
    %v513 = vld [vmem:[#allocation7 + $0xbf8] sm:$0xff]
    %v518 = vunpack.c.l.b16 %v382
    %v519 = vunpack.c.h.b16 %v382
    %v520 = vunpack.c.l.b16 %v383
    %v521 = vunpack.c.h.b16 %v383
    %v522 = vunpack.c.l.b16 %v384
    %v523 = vunpack.c.h.b16 %v384
    %v524 = vunpack.c.l.b16 %v385
    %v525 = vunpack.c.h.b16 %v385
    %v526 = vpack.c.b16 %v522, %v518
    %v527 = vpack.c.b16 %v523, %v519
    %v528 = vpack.c.b16 %v524, %v520
    %v529 = vpack.c.b16 %v525, %v521
    %v662 = vunpack.c.l.b16 %v386
    %v663 = vunpack.c.h.b16 %v386
    %v664 = vunpack.c.l.b16 %v387
    %v665 = vunpack.c.h.b16 %v387
    %v666 = vunpack.c.l.b16 %v388
    %v667 = vunpack.c.h.b16 %v388
    %v668 = vunpack.c.l.b16 %v389
    %v669 = vunpack.c.h.b16 %v389
    %v670 = vunpack.c.l.b16 %v390
    %v671 = vunpack.c.h.b16 %v390
    %v672 = vunpack.c.l.b16 %v391
    %v673 = vunpack.c.h.b16 %v391
    %v674 = vunpack.c.l.b16 %v392
    %v675 = vunpack.c.h.b16 %v392
    %v676 = vunpack.c.l.b16 %v393
    %v677 = vunpack.c.h.b16 %v393
    %v678 = vunpack.c.l.b16 %v394
    %v679 = vunpack.c.h.b16 %v394
    %v680 = vunpack.c.l.b16 %v395
    %v681 = vunpack.c.h.b16 %v395
    %v682 = vunpack.c.l.b16 %v396
    %v683 = vunpack.c.h.b16 %v396
    %v684 = vunpack.c.l.b16 %v397
    %v685 = vunpack.c.h.b16 %v397
    %v686 = vunpack.c.l.b16 %v398
    %v687 = vunpack.c.h.b16 %v398
    %v688 = vunpack.c.l.b16 %v399
    %v689 = vunpack.c.h.b16 %v399
    %v690 = vunpack.c.l.b16 %v400
    %v691 = vunpack.c.h.b16 %v400
    %v692 = vunpack.c.l.b16 %v401
    %v693 = vunpack.c.h.b16 %v401
    %v694 = vunpack.c.l.b16 %v402
    %v695 = vunpack.c.h.b16 %v402
    %v696 = vunpack.c.l.b16 %v403
    %v697 = vunpack.c.h.b16 %v403
    %v698 = vunpack.c.l.b16 %v404
    %v699 = vunpack.c.h.b16 %v404
    %v700 = vunpack.c.l.b16 %v405
    %v701 = vunpack.c.h.b16 %v405
    %v702 = vunpack.c.l.b16 %v406
    %v703 = vunpack.c.h.b16 %v406
    %v704 = vunpack.c.l.b16 %v407
    %v705 = vunpack.c.h.b16 %v407
    %v706 = vunpack.c.l.b16 %v408
    %v707 = vunpack.c.h.b16 %v408
    %v708 = vunpack.c.l.b16 %v409
    %v709 = vunpack.c.h.b16 %v409
    %v710 = vunpack.c.l.b16 %v410
    %v711 = vunpack.c.h.b16 %v410
    %v712 = vunpack.c.l.b16 %v411
    %v713 = vunpack.c.h.b16 %v411
    %v714 = vunpack.c.l.b16 %v412
    %v715 = vunpack.c.h.b16 %v412
    %v716 = vunpack.c.l.b16 %v413
    %v717 = vunpack.c.h.b16 %v413
    %v718 = vunpack.c.l.b16 %v414
    %v719 = vunpack.c.h.b16 %v414
    %v720 = vunpack.c.l.b16 %v415
    %v721 = vunpack.c.h.b16 %v415
    %v722 = vunpack.c.l.b16 %v416
    %v723 = vunpack.c.h.b16 %v416
    %v724 = vunpack.c.l.b16 %v417
    %v725 = vunpack.c.h.b16 %v417
    %v726 = vunpack.c.l.b16 %v418
    %v727 = vunpack.c.h.b16 %v418
    %v728 = vunpack.c.l.b16 %v419
    %v729 = vunpack.c.h.b16 %v419
    %v730 = vunpack.c.l.b16 %v420
    %v731 = vunpack.c.h.b16 %v420
    %v732 = vunpack.c.l.b16 %v421
    %v733 = vunpack.c.h.b16 %v421
    %v734 = vunpack.c.l.b16 %v422
    %v735 = vunpack.c.h.b16 %v422
    %v736 = vunpack.c.l.b16 %v423
    %v737 = vunpack.c.h.b16 %v423
    %v738 = vunpack.c.l.b16 %v424
    %v739 = vunpack.c.h.b16 %v424
    %v740 = vunpack.c.l.b16 %v425
    %v741 = vunpack.c.h.b16 %v425
    %v742 = vunpack.c.l.b16 %v426
    %v743 = vunpack.c.h.b16 %v426
    %v744 = vunpack.c.l.b16 %v427
    %v745 = vunpack.c.h.b16 %v427
    %v746 = vunpack.c.l.b16 %v428
    %v747 = vunpack.c.h.b16 %v428
    %v748 = vunpack.c.l.b16 %v429
    %v749 = vunpack.c.h.b16 %v429
    %v750 = vunpack.c.l.b16 %v430
    %v751 = vunpack.c.h.b16 %v430
    %v752 = vunpack.c.l.b16 %v431
    %v753 = vunpack.c.h.b16 %v431
    %v754 = vunpack.c.l.b16 %v432
    %v755 = vunpack.c.h.b16 %v432
    %v756 = vunpack.c.l.b16 %v433
    %v757 = vunpack.c.h.b16 %v433
    %v758 = vunpack.c.l.b16 %v434
    %v759 = vunpack.c.h.b16 %v434
    %v760 = vunpack.c.l.b16 %v435
    %v761 = vunpack.c.h.b16 %v435
    %v762 = vunpack.c.l.b16 %v436
    %v763 = vunpack.c.h.b16 %v436
    %v764 = vunpack.c.l.b16 %v437
    %v765 = vunpack.c.h.b16 %v437
    %v766 = vunpack.c.l.b16 %v438
    %v767 = vunpack.c.h.b16 %v438
    %v768 = vunpack.c.l.b16 %v439
    %v769 = vunpack.c.h.b16 %v439
    %v770 = vunpack.c.l.b16 %v440
    %v771 = vunpack.c.h.b16 %v440
    %v772 = vunpack.c.l.b16 %v441
    %v773 = vunpack.c.h.b16 %v441
    %v774 = vunpack.c.l.b16 %v442
    %v775 = vunpack.c.h.b16 %v442
    %v776 = vunpack.c.l.b16 %v443
    %v777 = vunpack.c.h.b16 %v443
    %v778 = vunpack.c.l.b16 %v444
    %v779 = vunpack.c.h.b16 %v444
    %v780 = vunpack.c.l.b16 %v445
    %v781 = vunpack.c.h.b16 %v445
    %v782 = vunpack.c.l.b16 %v446
    %v783 = vunpack.c.h.b16 %v446
    %v784 = vunpack.c.l.b16 %v447
    %v785 = vunpack.c.h.b16 %v447
    %v786 = vunpack.c.l.b16 %v448
    %v787 = vunpack.c.h.b16 %v448
    %v788 = vunpack.c.l.b16 %v449
    %v789 = vunpack.c.h.b16 %v449
    %v790 = vunpack.c.l.b16 %v450
    %v791 = vunpack.c.h.b16 %v450
    %v792 = vunpack.c.l.b16 %v451
    %v793 = vunpack.c.h.b16 %v451
    %v794 = vunpack.c.l.b16 %v452
    %v795 = vunpack.c.h.b16 %v452
    %v796 = vunpack.c.l.b16 %v453
    %v797 = vunpack.c.h.b16 %v453
    %v798 = vunpack.c.l.b16 %v454
    %v799 = vunpack.c.h.b16 %v454
    %v800 = vunpack.c.l.b16 %v455
    %v801 = vunpack.c.h.b16 %v455
    %v802 = vunpack.c.l.b16 %v456
    %v803 = vunpack.c.h.b16 %v456
    %v804 = vunpack.c.l.b16 %v457
    %v805 = vunpack.c.h.b16 %v457
    %v806 = vunpack.c.l.b16 %v458
    %v807 = vunpack.c.h.b16 %v458
    %v808 = vunpack.c.l.b16 %v459
    %v809 = vunpack.c.h.b16 %v459
    %v810 = vunpack.c.l.b16 %v460
    %v811 = vunpack.c.h.b16 %v460
    %v812 = vunpack.c.l.b16 %v461
    %v813 = vunpack.c.h.b16 %v461
    %v814 = vunpack.c.l.b16 %v462
    %v815 = vunpack.c.h.b16 %v462
    %v816 = vunpack.c.l.b16 %v463
    %v817 = vunpack.c.h.b16 %v463
    %v818 = vunpack.c.l.b16 %v464
    %v819 = vunpack.c.h.b16 %v464
    %v820 = vunpack.c.l.b16 %v465
    %v821 = vunpack.c.h.b16 %v465
    %v822 = vunpack.c.l.b16 %v466
    %v823 = vunpack.c.h.b16 %v466
    %v824 = vunpack.c.l.b16 %v467
    %v825 = vunpack.c.h.b16 %v467
    %v826 = vunpack.c.l.b16 %v468
    %v827 = vunpack.c.h.b16 %v468
    %v828 = vunpack.c.l.b16 %v469
    %v829 = vunpack.c.h.b16 %v469
    %v830 = vunpack.c.l.b16 %v470
    %v831 = vunpack.c.h.b16 %v470
    %v832 = vunpack.c.l.b16 %v471
    %v833 = vunpack.c.h.b16 %v471
    %v834 = vunpack.c.l.b16 %v472
    %v835 = vunpack.c.h.b16 %v472
    %v836 = vunpack.c.l.b16 %v473
    %v837 = vunpack.c.h.b16 %v473
    %v838 = vunpack.c.l.b16 %v474
    %v839 = vunpack.c.h.b16 %v474
    %v840 = vunpack.c.l.b16 %v475
    %v841 = vunpack.c.h.b16 %v475
    %v842 = vunpack.c.l.b16 %v476
    %v843 = vunpack.c.h.b16 %v476
    %v844 = vunpack.c.l.b16 %v477
    %v845 = vunpack.c.h.b16 %v477
    %v846 = vunpack.c.l.b16 %v478
    %v847 = vunpack.c.h.b16 %v478
    %v848 = vunpack.c.l.b16 %v479
    %v849 = vunpack.c.h.b16 %v479
    %v850 = vunpack.c.l.b16 %v480
    %v851 = vunpack.c.h.b16 %v480
    %v852 = vunpack.c.l.b16 %v481
    %v853 = vunpack.c.h.b16 %v481
    %v854 = vunpack.c.l.b16 %v482
    %v855 = vunpack.c.h.b16 %v482
    %v856 = vunpack.c.l.b16 %v483
    %v857 = vunpack.c.h.b16 %v483
    %v858 = vunpack.c.l.b16 %v484
    %v859 = vunpack.c.h.b16 %v484
    %v860 = vunpack.c.l.b16 %v485
    %v861 = vunpack.c.h.b16 %v485
    %v862 = vunpack.c.l.b16 %v486
    %v863 = vunpack.c.h.b16 %v486
    %v864 = vunpack.c.l.b16 %v487
    %v865 = vunpack.c.h.b16 %v487
    %v866 = vunpack.c.l.b16 %v488
    %v867 = vunpack.c.h.b16 %v488
    %v868 = vunpack.c.l.b16 %v489
    %v869 = vunpack.c.h.b16 %v489
    %v870 = vunpack.c.l.b16 %v490
    %v871 = vunpack.c.h.b16 %v490
    %v872 = vunpack.c.l.b16 %v491
    %v873 = vunpack.c.h.b16 %v491
    %v874 = vunpack.c.l.b16 %v492
    %v875 = vunpack.c.h.b16 %v492
    %v876 = vunpack.c.l.b16 %v493
    %v877 = vunpack.c.h.b16 %v493
    %v878 = vunpack.c.l.b16 %v494
    %v879 = vunpack.c.h.b16 %v494
    %v880 = vunpack.c.l.b16 %v495
    %v881 = vunpack.c.h.b16 %v495
    %v882 = vunpack.c.l.b16 %v496
    %v883 = vunpack.c.h.b16 %v496
    %v884 = vunpack.c.l.b16 %v497
    %v885 = vunpack.c.h.b16 %v497
    %v886 = vunpack.c.l.b16 %v498
    %v887 = vunpack.c.h.b16 %v498
    %v888 = vunpack.c.l.b16 %v499
    %v889 = vunpack.c.h.b16 %v499
    %v890 = vunpack.c.l.b16 %v500
    %v891 = vunpack.c.h.b16 %v500
    %v892 = vunpack.c.l.b16 %v501
    %v893 = vunpack.c.h.b16 %v501
    %v894 = vunpack.c.l.b16 %v502
    %v895 = vunpack.c.h.b16 %v502
    %v896 = vunpack.c.l.b16 %v503
    %v897 = vunpack.c.h.b16 %v503
    %v898 = vunpack.c.l.b16 %v504
    %v899 = vunpack.c.h.b16 %v504
    %v900 = vunpack.c.l.b16 %v505
    %v901 = vunpack.c.h.b16 %v505
    %v902 = vunpack.c.l.b16 %v506
    %v903 = vunpack.c.h.b16 %v506
    %v904 = vunpack.c.l.b16 %v507
    %v905 = vunpack.c.h.b16 %v507
    %v906 = vunpack.c.l.b16 %v508
    %v907 = vunpack.c.h.b16 %v508
    %v908 = vunpack.c.l.b16 %v509
    %v909 = vunpack.c.h.b16 %v509
    %v910 = vunpack.c.l.b16 %v510
    %v911 = vunpack.c.h.b16 %v510
    %v912 = vunpack.c.l.b16 %v511
    %v913 = vunpack.c.h.b16 %v511
    %v914 = vunpack.c.l.b16 %v512
    %v915 = vunpack.c.h.b16 %v512
    %v916 = vunpack.c.l.b16 %v513
    %v917 = vunpack.c.h.b16 %v513
    %v918 = vpack.c.b16 %v666, %v662
    %v919 = vpack.c.b16 %v667, %v663
    %v920 = vpack.c.b16 %v668, %v664
    %v921 = vpack.c.b16 %v669, %v665
    %v922 = vpack.c.b16 %v674, %v670
    %v923 = vpack.c.b16 %v675, %v671
    %v924 = vpack.c.b16 %v676, %v672
    %v925 = vpack.c.b16 %v677, %v673
    %v926 = vpack.c.b16 %v682, %v678
    %v927 = vpack.c.b16 %v683, %v679
    %v928 = vpack.c.b16 %v684, %v680
    %v929 = vpack.c.b16 %v685, %v681
    %v930 = vpack.c.b16 %v690, %v686
    %v931 = vpack.c.b16 %v691, %v687
    %v932 = vpack.c.b16 %v692, %v688
    %v933 = vpack.c.b16 %v693, %v689
    %v934 = vpack.c.b16 %v698, %v694
    %v935 = vpack.c.b16 %v699, %v695
    %v936 = vpack.c.b16 %v700, %v696
    %v937 = vpack.c.b16 %v701, %v697
    %v938 = vpack.c.b16 %v706, %v702
    %v939 = vpack.c.b16 %v707, %v703
    %v940 = vpack.c.b16 %v708, %v704
    %v941 = vpack.c.b16 %v709, %v705
    %v942 = vpack.c.b16 %v714, %v710
    %v943 = vpack.c.b16 %v715, %v711
    %v944 = vpack.c.b16 %v716, %v712
    %v945 = vpack.c.b16 %v717, %v713
    %v946 = vpack.c.b16 %v722, %v718
    %v947 = vpack.c.b16 %v723, %v719
    %v948 = vpack.c.b16 %v724, %v720
    %v949 = vpack.c.b16 %v725, %v721
    %v950 = vpack.c.b16 %v730, %v726
    %v951 = vpack.c.b16 %v731, %v727
    %v952 = vpack.c.b16 %v732, %v728
    %v953 = vpack.c.b16 %v733, %v729
    %v954 = vpack.c.b16 %v738, %v734
    %v955 = vpack.c.b16 %v739, %v735
    %v956 = vpack.c.b16 %v740, %v736
    %v957 = vpack.c.b16 %v741, %v737
    %v958 = vpack.c.b16 %v746, %v742
    %v959 = vpack.c.b16 %v747, %v743
    %v960 = vpack.c.b16 %v748, %v744
    %v961 = vpack.c.b16 %v749, %v745
    %v962 = vpack.c.b16 %v754, %v750
    %v963 = vpack.c.b16 %v755, %v751
    %v964 = vpack.c.b16 %v756, %v752
    %v965 = vpack.c.b16 %v757, %v753
    %v966 = vpack.c.b16 %v762, %v758
    %v967 = vpack.c.b16 %v763, %v759
    %v968 = vpack.c.b16 %v764, %v760
    %v969 = vpack.c.b16 %v765, %v761
    %v970 = vpack.c.b16 %v770, %v766
    %v971 = vpack.c.b16 %v771, %v767
    %v972 = vpack.c.b16 %v772, %v768
    %v973 = vpack.c.b16 %v773, %v769
    %v974 = vpack.c.b16 %v778, %v774
    %v975 = vpack.c.b16 %v779, %v775
    %v976 = vpack.c.b16 %v780, %v776
    %v977 = vpack.c.b16 %v781, %v777
    %v978 = vpack.c.b16 %v786, %v782
    %v979 = vpack.c.b16 %v787, %v783
    %v980 = vpack.c.b16 %v788, %v784
    %v981 = vpack.c.b16 %v789, %v785
    %v982 = vpack.c.b16 %v794, %v790
    %v983 = vpack.c.b16 %v795, %v791
    %v984 = vpack.c.b16 %v796, %v792
    %v985 = vpack.c.b16 %v797, %v793
    %v986 = vpack.c.b16 %v802, %v798
    %v987 = vpack.c.b16 %v803, %v799
    %v988 = vpack.c.b16 %v804, %v800
    %v989 = vpack.c.b16 %v805, %v801
    %v990 = vpack.c.b16 %v810, %v806
    %v991 = vpack.c.b16 %v811, %v807
    %v992 = vpack.c.b16 %v812, %v808
    %v993 = vpack.c.b16 %v813, %v809
    %v994 = vpack.c.b16 %v818, %v814
    %v995 = vpack.c.b16 %v819, %v815
    %v996 = vpack.c.b16 %v820, %v816
    %v997 = vpack.c.b16 %v821, %v817
    %v998 = vpack.c.b16 %v826, %v822
    %v999 = vpack.c.b16 %v827, %v823
    %v1000 = vpack.c.b16 %v828, %v824
    %v1001 = vpack.c.b16 %v829, %v825
    %v1002 = vpack.c.b16 %v834, %v830
    %v1003 = vpack.c.b16 %v835, %v831
    %v1004 = vpack.c.b16 %v836, %v832
    %v1005 = vpack.c.b16 %v837, %v833
    %v1006 = vpack.c.b16 %v842, %v838
    %v1007 = vpack.c.b16 %v843, %v839
    %v1008 = vpack.c.b16 %v844, %v840
    %v1009 = vpack.c.b16 %v845, %v841
    %v1010 = vpack.c.b16 %v850, %v846
    %v1011 = vpack.c.b16 %v851, %v847
    %v1012 = vpack.c.b16 %v852, %v848
    %v1013 = vpack.c.b16 %v853, %v849
    %v1014 = vpack.c.b16 %v858, %v854
    %v1015 = vpack.c.b16 %v859, %v855
    %v1016 = vpack.c.b16 %v860, %v856
    %v1017 = vpack.c.b16 %v861, %v857
    %v1018 = vpack.c.b16 %v866, %v862
    %v1019 = vpack.c.b16 %v867, %v863
    %v1020 = vpack.c.b16 %v868, %v864
    %v1021 = vpack.c.b16 %v869, %v865
    %v1022 = vpack.c.b16 %v874, %v870
    %v1023 = vpack.c.b16 %v875, %v871
    %v1024 = vpack.c.b16 %v876, %v872
    %v1025 = vpack.c.b16 %v877, %v873
    %v1026 = vpack.c.b16 %v882, %v878
    %v1027 = vpack.c.b16 %v883, %v879
    %v1028 = vpack.c.b16 %v884, %v880
    %v1029 = vpack.c.b16 %v885, %v881
    %v1030 = vpack.c.b16 %v890, %v886
    %v1031 = vpack.c.b16 %v891, %v887
    %v1032 = vpack.c.b16 %v892, %v888
    %v1033 = vpack.c.b16 %v893, %v889
    %v1034 = vpack.c.b16 %v898, %v894
    %v1035 = vpack.c.b16 %v899, %v895
    %v1036 = vpack.c.b16 %v900, %v896
    %v1037 = vpack.c.b16 %v901, %v897
    %v1038 = vpack.c.b16 %v906, %v902
    %v1039 = vpack.c.b16 %v907, %v903
    %v1040 = vpack.c.b16 %v908, %v904
    %v1041 = vpack.c.b16 %v909, %v905
    %v1042 = vpack.c.b16 %v914, %v910
    %v1043 = vpack.c.b16 %v915, %v911
    %v1044 = vpack.c.b16 %v916, %v912
    %v1045 = vpack.c.b16 %v917, %v913
    %1174 = vmatprep.subr.bf16.mxu0 %v919
    %1175 = vmatpush1.bf16.msra.mxu0 %v918
    %1176 = vmatprep.subr.bf16.mxu0 %v923
    %1177 = vmatpush1.bf16.msra.mxu0 %v922
    %1178 = vmatprep.subr.bf16.mxu0 %v927
    %1179 = vmatpush1.bf16.msra.mxu0 %v926
    %1180 = vmatprep.subr.bf16.mxu0 %v931
    %1181 = vmatpush1.bf16.msra.mxu0 %v930
    %1182 = vmatprep.subr.bf16.mxu0 %v935
    %1183 = vmatpush1.bf16.msra.mxu0 %v934
    %1184 = vmatprep.subr.bf16.mxu0 %v939
    %1185 = vmatpush1.bf16.msra.mxu0 %v938
    %1186 = vmatprep.subr.bf16.mxu0 %v943
    %1187 = vmatpush1.bf16.msra.mxu0 %v942
    %1188 = vmatprep.subr.bf16.mxu0 %v947
    %1189 = vmatpush1.bf16.msra.mxu0 %v946
    %1190 = vmatprep.subr.bf16.mxu0 %v951
    %1191 = vmatpush1.bf16.msra.mxu0 %v950
    %1192 = vmatprep.subr.bf16.mxu0 %v955
    %1193 = vmatpush1.bf16.msra.mxu0 %v954
    %1194 = vmatprep.subr.bf16.mxu0 %v959
    %1195 = vmatpush1.bf16.msra.mxu0 %v958
    %1196 = vmatprep.subr.bf16.mxu0 %v963
    %1197 = vmatpush1.bf16.msra.mxu0 %v962
    %1198 = vmatprep.subr.bf16.mxu0 %v967
    %1199 = vmatpush1.bf16.msra.mxu0 %v966
    %1200 = vmatprep.subr.bf16.mxu0 %v971
    %1201 = vmatpush1.bf16.msra.mxu0 %v970
    %1202 = vmatprep.subr.bf16.mxu0 %v975
    %1203 = vmatpush1.bf16.msra.mxu0 %v974
    %1204 = vmatprep.subr.bf16.mxu0 %v979
    %1205 = vmatpush1.bf16.msra.mxu0 %v978
    %1206 = vmatprep.mubr.bf16.mxu0 %v527
    %1207 = vmatmul.mubr.bf16.gmra.mrb[0].mxu0 %v526
    %v1208 = vpop.f32.mrb[0].mxu0
    %v1209 = vadd.f32 0.0, %v1208
    %v1210 = vpop.f32.mrb[0].mxu0
    %v1211 = vadd.f32 0.0, %v1210
    %v1212 = vpop.f32.mrb[0].mxu0
    %v1213 = vadd.f32 0.0, %v1212
    %v1214 = vpop.f32.mrb[0].mxu0
    %v1215 = vadd.f32 0.0, %v1214
    %1216 = vdwg.mxu0
    %1217 = vmatprep.subr.bf16.mxu0 %v983
    %1218 = vmatpush1.bf16.msra.mxu0 %v982
    %1219 = vmatprep.subr.bf16.mxu0 %v987
    %1220 = vmatpush1.bf16.msra.mxu0 %v986
    %1221 = vmatprep.subr.bf16.mxu0 %v991
    %1222 = vmatpush1.bf16.msra.mxu0 %v990
    %1223 = vmatprep.subr.bf16.mxu0 %v995
    %1224 = vmatpush1.bf16.msra.mxu0 %v994
    %1225 = vmatprep.subr.bf16.mxu0 %v999
    %1226 = vmatpush1.bf16.msra.mxu0 %v998
    %1227 = vmatprep.subr.bf16.mxu0 %v1003
    %1228 = vmatpush1.bf16.msra.mxu0 %v1002
    %1229 = vmatprep.subr.bf16.mxu0 %v1007
    %1230 = vmatpush1.bf16.msra.mxu0 %v1006
    %1231 = vmatprep.subr.bf16.mxu0 %v1011
    %1232 = vmatpush1.bf16.msra.mxu0 %v1010
    %1233 = vmatprep.subr.bf16.mxu0 %v1015
    %1234 = vmatpush1.bf16.msra.mxu0 %v1014
    %1235 = vmatprep.subr.bf16.mxu0 %v1019
    %1236 = vmatpush1.bf16.msra.mxu0 %v1018
    %1237 = vmatprep.subr.bf16.mxu0 %v1023
    %1238 = vmatpush1.bf16.msra.mxu0 %v1022
    %1239 = vmatprep.subr.bf16.mxu0 %v1027
    %1240 = vmatpush1.bf16.msra.mxu0 %v1026
    %1241 = vmatprep.subr.bf16.mxu0 %v1031
    %1242 = vmatpush1.bf16.msra.mxu0 %v1030
    %1243 = vmatprep.subr.bf16.mxu0 %v1035
    %1244 = vmatpush1.bf16.msra.mxu0 %v1034
    %1245 = vmatprep.subr.bf16.mxu0 %v1039
    %1246 = vmatpush1.bf16.msra.mxu0 %v1038
    %1247 = vmatprep.subr.bf16.mxu0 %v1043
    %1248 = vmatpush1.bf16.msra.mxu0 %v1042
    %1249 = vmatprep.mubr.bf16.mxu0 %v529
    %1250 = vmatmul.mubr.bf16.gmra.mrb[0].mxu0 %v528
    %v1251 = vpop.f32.mrb[0].mxu0
    %v1252 = vadd.f32 %v1209, %v1251
    %v1253 = vpop.f32.mrb[0].mxu0
    %v1254 = vadd.f32 %v1211, %v1253
    %v1255 = vpop.f32.mrb[0].mxu0
    %v1256 = vadd.f32 %v1213, %v1255
    %v1257 = vpop.f32.mrb[0].mxu0
    %v1258 = vadd.f32 %v1215, %v1257
    %1259 = vdwg.mxu0
    %1260 = vmatprep.subr.bf16.mxu0 %v921
    %1261 = vmatpush1.bf16.msra.mxu0 %v920
    %1262 = vmatprep.subr.bf16.mxu0 %v925
    %1263 = vmatpush1.bf16.msra.mxu0 %v924
    %1264 = vmatprep.subr.bf16.mxu0 %v929
    %1265 = vmatpush1.bf16.msra.mxu0 %v928
    %1266 = vmatprep.subr.bf16.mxu0 %v933
    %1267 = vmatpush1.bf16.msra.mxu0 %v932
    %1268 = vmatprep.subr.bf16.mxu0 %v937
    %1269 = vmatpush1.bf16.msra.mxu0 %v936
    %1270 = vmatprep.subr.bf16.mxu0 %v941
    %1271 = vmatpush1.bf16.msra.mxu0 %v940
    %1272 = vmatprep.subr.bf16.mxu0 %v945
    %1273 = vmatpush1.bf16.msra.mxu0 %v944
    %1274 = vmatprep.subr.bf16.mxu0 %v949
    %1275 = vmatpush1.bf16.msra.mxu0 %v948
    %1276 = vmatprep.subr.bf16.mxu0 %v953
    %1277 = vmatpush1.bf16.msra.mxu0 %v952
    %1278 = vmatprep.subr.bf16.mxu0 %v957
    %1279 = vmatpush1.bf16.msra.mxu0 %v956
    %1280 = vmatprep.subr.bf16.mxu0 %v961
    %1281 = vmatpush1.bf16.msra.mxu0 %v960
    %1282 = vmatprep.subr.bf16.mxu0 %v965
    %1283 = vmatpush1.bf16.msra.mxu0 %v964
    %1284 = vmatprep.subr.bf16.mxu0 %v969
    %1285 = vmatpush1.bf16.msra.mxu0 %v968
    %1286 = vmatprep.subr.bf16.mxu0 %v973
    %1287 = vmatpush1.bf16.msra.mxu0 %v972
    %1288 = vmatprep.subr.bf16.mxu0 %v977
    %1289 = vmatpush1.bf16.msra.mxu0 %v976
    %1290 = vmatprep.subr.bf16.mxu0 %v981
    %1291 = vmatpush1.bf16.msra.mxu0 %v980
    %1292 = vmatprep.mubr.bf16.mxu0 %v527
    %1293 = vmatmul.mubr.bf16.gmra.mrb[0].mxu0 %v526
    %v1294 = vpop.f32.mrb[0].mxu0
    %v1295 = vadd.f32 0.0, %v1294
    %v1296 = vpop.f32.mrb[0].mxu0
    %v1297 = vadd.f32 0.0, %v1296
    %v1298 = vpop.f32.mrb[0].mxu0
    %v1299 = vadd.f32 0.0, %v1298
    %v1300 = vpop.f32.mrb[0].mxu0
    %v1301 = vadd.f32 0.0, %v1300
    %1302 = vdwg.mxu0
    %1303 = vmatprep.subr.bf16.mxu0 %v985
    %1304 = vmatpush1.bf16.msra.mxu0 %v984
    %1305 = vmatprep.subr.bf16.mxu0 %v989
    %1306 = vmatpush1.bf16.msra.mxu0 %v988
    %1307 = vmatprep.subr.bf16.mxu0 %v993
    %1308 = vmatpush1.bf16.msra.mxu0 %v992
    %1309 = vmatprep.subr.bf16.mxu0 %v997
    %1310 = vmatpush1.bf16.msra.mxu0 %v996
    %1311 = vmatprep.subr.bf16.mxu0 %v1001
    %1312 = vmatpush1.bf16.msra.mxu0 %v1000
    %1313 = vmatprep.subr.bf16.mxu0 %v1005
    %1314 = vmatpush1.bf16.msra.mxu0 %v1004
    %1315 = vmatprep.subr.bf16.mxu0 %v1009
    %1316 = vmatpush1.bf16.msra.mxu0 %v1008
    %1317 = vmatprep.subr.bf16.mxu0 %v1013
    %1318 = vmatpush1.bf16.msra.mxu0 %v1012
    %1319 = vmatprep.subr.bf16.mxu0 %v1017
    %1320 = vmatpush1.bf16.msra.mxu0 %v1016
    %1321 = vmatprep.subr.bf16.mxu0 %v1021
    %1322 = vmatpush1.bf16.msra.mxu0 %v1020
    %1323 = vmatprep.subr.bf16.mxu0 %v1025
    %1324 = vmatpush1.bf16.msra.mxu0 %v1024
    %1325 = vmatprep.subr.bf16.mxu0 %v1029
    %1326 = vmatpush1.bf16.msra.mxu0 %v1028
    %1327 = vmatprep.subr.bf16.mxu0 %v1033
    %1328 = vmatpush1.bf16.msra.mxu0 %v1032
    %1329 = vmatprep.subr.bf16.mxu0 %v1037
    %1330 = vmatpush1.bf16.msra.mxu0 %v1036
    %1331 = vmatprep.subr.bf16.mxu0 %v1041
    %1332 = vmatpush1.bf16.msra.mxu0 %v1040
    %1333 = vmatprep.subr.bf16.mxu0 %v1045
    %1334 = vmatpush1.bf16.msra.mxu0 %v1044
    %1335 = vmatprep.mubr.bf16.mxu0 %v529
    %1336 = vmatmul.mubr.bf16.gmra.mrb[0].mxu0 %v528
    %v1337 = vpop.f32.mrb[0].mxu0
    %v1338 = vadd.f32 %v1295, %v1337
    %v1339 = vpop.f32.mrb[0].mxu0
    %v1340 = vadd.f32 %v1297, %v1339
    %v1341 = vpop.f32.mrb[0].mxu0
    %v1342 = vadd.f32 %v1299, %v1341
    %v1343 = vpop.f32.mrb[0].mxu0
    %v1344 = vadd.f32 %v1301, %v1343
    %1345 = vdwg.mxu0
    %v1354 = vunpack.c.l.b16 %v118
    %v1355 = vunpack.c.h.b16 %v118
    %v1356 = vunpack.c.l.b16 %v119
    %v1357 = vunpack.c.h.b16 %v119
    %v1358 = vunpack.c.l.b16 %v120
    %v1359 = vunpack.c.h.b16 %v120
    %v1360 = vunpack.c.l.b16 %v121
    %v1361 = vunpack.c.h.b16 %v121
    %v1362 = vunpack.c.l.b16 %v122
    %v1363 = vunpack.c.h.b16 %v122
    %v1364 = vunpack.c.l.b16 %v123
    %v1365 = vunpack.c.h.b16 %v123
    %v1366 = vunpack.c.l.b16 %v124
    %v1367 = vunpack.c.h.b16 %v124
    %v1368 = vunpack.c.l.b16 %v125
    %v1369 = vunpack.c.h.b16 %v125
    %v1370 = vpack.c.b16 %v1362, %v1354
    %v1371 = vpack.c.b16 %v1363, %v1355
    %v1372 = vpack.c.b16 %v1364, %v1356
    %v1373 = vpack.c.b16 %v1365, %v1357
    %v1374 = vpack.c.b16 %v1366, %v1358
    %v1375 = vpack.c.b16 %v1367, %v1359
    %v1376 = vpack.c.b16 %v1368, %v1360
    %v1377 = vpack.c.b16 %v1369, %v1361
    %v1642 = vunpack.c.l.b16 %v126
    %v1643 = vunpack.c.h.b16 %v126
    %v1644 = vunpack.c.l.b16 %v127
    %v1645 = vunpack.c.h.b16 %v127
    %v1646 = vunpack.c.l.b16 %v128
    %v1647 = vunpack.c.h.b16 %v128
    %v1648 = vunpack.c.l.b16 %v129
    %v1649 = vunpack.c.h.b16 %v129
    %v1650 = vunpack.c.l.b16 %v130
    %v1651 = vunpack.c.h.b16 %v130
    %v1652 = vunpack.c.l.b16 %v131
    %v1653 = vunpack.c.h.b16 %v131
    %v1654 = vunpack.c.l.b16 %v132
    %v1655 = vunpack.c.h.b16 %v132
    %v1656 = vunpack.c.l.b16 %v133
    %v1657 = vunpack.c.h.b16 %v133
    %v1658 = vunpack.c.l.b16 %v134
    %v1659 = vunpack.c.h.b16 %v134
    %v1660 = vunpack.c.l.b16 %v135
    %v1661 = vunpack.c.h.b16 %v135
    %v1662 = vunpack.c.l.b16 %v136
    %v1663 = vunpack.c.h.b16 %v136
    %v1664 = vunpack.c.l.b16 %v137
    %v1665 = vunpack.c.h.b16 %v137
    %v1666 = vunpack.c.l.b16 %v138
    %v1667 = vunpack.c.h.b16 %v138
    %v1668 = vunpack.c.l.b16 %v139
    %v1669 = vunpack.c.h.b16 %v139
    %v1670 = vunpack.c.l.b16 %v140
    %v1671 = vunpack.c.h.b16 %v140
    %v1672 = vunpack.c.l.b16 %v141
    %v1673 = vunpack.c.h.b16 %v141
    %v1674 = vunpack.c.l.b16 %v142
    %v1675 = vunpack.c.h.b16 %v142
    %v1676 = vunpack.c.l.b16 %v143
    %v1677 = vunpack.c.h.b16 %v143
    %v1678 = vunpack.c.l.b16 %v144
    %v1679 = vunpack.c.h.b16 %v144
    %v1680 = vunpack.c.l.b16 %v145
    %v1681 = vunpack.c.h.b16 %v145
    %v1682 = vunpack.c.l.b16 %v146
    %v1683 = vunpack.c.h.b16 %v146
    %v1684 = vunpack.c.l.b16 %v147
    %v1685 = vunpack.c.h.b16 %v147
    %v1686 = vunpack.c.l.b16 %v148
    %v1687 = vunpack.c.h.b16 %v148
    %v1688 = vunpack.c.l.b16 %v149
    %v1689 = vunpack.c.h.b16 %v149
    %v1690 = vunpack.c.l.b16 %v150
    %v1691 = vunpack.c.h.b16 %v150
    %v1692 = vunpack.c.l.b16 %v151
    %v1693 = vunpack.c.h.b16 %v151
    %v1694 = vunpack.c.l.b16 %v152
    %v1695 = vunpack.c.h.b16 %v152
    %v1696 = vunpack.c.l.b16 %v153
    %v1697 = vunpack.c.h.b16 %v153
    %v1698 = vunpack.c.l.b16 %v154
    %v1699 = vunpack.c.h.b16 %v154
    %v1700 = vunpack.c.l.b16 %v155
    %v1701 = vunpack.c.h.b16 %v155
    %v1702 = vunpack.c.l.b16 %v156
    %v1703 = vunpack.c.h.b16 %v156
    %v1704 = vunpack.c.l.b16 %v157
    %v1705 = vunpack.c.h.b16 %v157
    %v1706 = vunpack.c.l.b16 %v158
    %v1707 = vunpack.c.h.b16 %v158
    %v1708 = vunpack.c.l.b16 %v159
    %v1709 = vunpack.c.h.b16 %v159
    %v1710 = vunpack.c.l.b16 %v160
    %v1711 = vunpack.c.h.b16 %v160
    %v1712 = vunpack.c.l.b16 %v161
    %v1713 = vunpack.c.h.b16 %v161
    %v1714 = vunpack.c.l.b16 %v162
    %v1715 = vunpack.c.h.b16 %v162
    %v1716 = vunpack.c.l.b16 %v163
    %v1717 = vunpack.c.h.b16 %v163
    %v1718 = vunpack.c.l.b16 %v164
    %v1719 = vunpack.c.h.b16 %v164
    %v1720 = vunpack.c.l.b16 %v165
    %v1721 = vunpack.c.h.b16 %v165
    %v1722 = vunpack.c.l.b16 %v166
    %v1723 = vunpack.c.h.b16 %v166
    %v1724 = vunpack.c.l.b16 %v167
    %v1725 = vunpack.c.h.b16 %v167
    %v1726 = vunpack.c.l.b16 %v168
    %v1727 = vunpack.c.h.b16 %v168
    %v1728 = vunpack.c.l.b16 %v169
    %v1729 = vunpack.c.h.b16 %v169
    %v1730 = vunpack.c.l.b16 %v170
    %v1731 = vunpack.c.h.b16 %v170
    %v1732 = vunpack.c.l.b16 %v171
    %v1733 = vunpack.c.h.b16 %v171
    %v1734 = vunpack.c.l.b16 %v172
    %v1735 = vunpack.c.h.b16 %v172
    %v1736 = vunpack.c.l.b16 %v173
    %v1737 = vunpack.c.h.b16 %v173
    %v1738 = vunpack.c.l.b16 %v174
    %v1739 = vunpack.c.h.b16 %v174
    %v1740 = vunpack.c.l.b16 %v175
    %v1741 = vunpack.c.h.b16 %v175
    %v1742 = vunpack.c.l.b16 %v176
    %v1743 = vunpack.c.h.b16 %v176
    %v1744 = vunpack.c.l.b16 %v177
    %v1745 = vunpack.c.h.b16 %v177
    %v1746 = vunpack.c.l.b16 %v178
    %v1747 = vunpack.c.h.b16 %v178
    %v1748 = vunpack.c.l.b16 %v179
    %v1749 = vunpack.c.h.b16 %v179
    %v1750 = vunpack.c.l.b16 %v180
    %v1751 = vunpack.c.h.b16 %v180
    %v1752 = vunpack.c.l.b16 %v181
    %v1753 = vunpack.c.h.b16 %v181
    %v1754 = vunpack.c.l.b16 %v182
    %v1755 = vunpack.c.h.b16 %v182
    %v1756 = vunpack.c.l.b16 %v183
    %v1757 = vunpack.c.h.b16 %v183
    %v1758 = vunpack.c.l.b16 %v184
    %v1759 = vunpack.c.h.b16 %v184
    %v1760 = vunpack.c.l.b16 %v185
    %v1761 = vunpack.c.h.b16 %v185
    %v1762 = vunpack.c.l.b16 %v186
    %v1763 = vunpack.c.h.b16 %v186
    %v1764 = vunpack.c.l.b16 %v187
    %v1765 = vunpack.c.h.b16 %v187
    %v1766 = vunpack.c.l.b16 %v188
    %v1767 = vunpack.c.h.b16 %v188
    %v1768 = vunpack.c.l.b16 %v189
    %v1769 = vunpack.c.h.b16 %v189
    %v1770 = vunpack.c.l.b16 %v190
    %v1771 = vunpack.c.h.b16 %v190
    %v1772 = vunpack.c.l.b16 %v191
    %v1773 = vunpack.c.h.b16 %v191
    %v1774 = vunpack.c.l.b16 %v192
    %v1775 = vunpack.c.h.b16 %v192
    %v1776 = vunpack.c.l.b16 %v193
    %v1777 = vunpack.c.h.b16 %v193
    %v1778 = vunpack.c.l.b16 %v194
    %v1779 = vunpack.c.h.b16 %v194
    %v1780 = vunpack.c.l.b16 %v195
    %v1781 = vunpack.c.h.b16 %v195
    %v1782 = vunpack.c.l.b16 %v196
    %v1783 = vunpack.c.h.b16 %v196
    %v1784 = vunpack.c.l.b16 %v197
    %v1785 = vunpack.c.h.b16 %v197
    %v1786 = vunpack.c.l.b16 %v198
    %v1787 = vunpack.c.h.b16 %v198
    %v1788 = vunpack.c.l.b16 %v199
    %v1789 = vunpack.c.h.b16 %v199
    %v1790 = vunpack.c.l.b16 %v200
    %v1791 = vunpack.c.h.b16 %v200
    %v1792 = vunpack.c.l.b16 %v201
    %v1793 = vunpack.c.h.b16 %v201
    %v1794 = vunpack.c.l.b16 %v202
    %v1795 = vunpack.c.h.b16 %v202
    %v1796 = vunpack.c.l.b16 %v203
    %v1797 = vunpack.c.h.b16 %v203
    %v1798 = vunpack.c.l.b16 %v204
    %v1799 = vunpack.c.h.b16 %v204
    %v1800 = vunpack.c.l.b16 %v205
    %v1801 = vunpack.c.h.b16 %v205
    %v1802 = vunpack.c.l.b16 %v206
    %v1803 = vunpack.c.h.b16 %v206
    %v1804 = vunpack.c.l.b16 %v207
    %v1805 = vunpack.c.h.b16 %v207
    %v1806 = vunpack.c.l.b16 %v208
    %v1807 = vunpack.c.h.b16 %v208
    %v1808 = vunpack.c.l.b16 %v209
    %v1809 = vunpack.c.h.b16 %v209
    %v1810 = vunpack.c.l.b16 %v210
    %v1811 = vunpack.c.h.b16 %v210
    %v1812 = vunpack.c.l.b16 %v211
    %v1813 = vunpack.c.h.b16 %v211
    %v1814 = vunpack.c.l.b16 %v212
    %v1815 = vunpack.c.h.b16 %v212
    %v1816 = vunpack.c.l.b16 %v213
    %v1817 = vunpack.c.h.b16 %v213
    %v1818 = vunpack.c.l.b16 %v214
    %v1819 = vunpack.c.h.b16 %v214
    %v1820 = vunpack.c.l.b16 %v215
    %v1821 = vunpack.c.h.b16 %v215
    %v1822 = vunpack.c.l.b16 %v216
    %v1823 = vunpack.c.h.b16 %v216
    %v1824 = vunpack.c.l.b16 %v217
    %v1825 = vunpack.c.h.b16 %v217
    %v1826 = vunpack.c.l.b16 %v218
    %v1827 = vunpack.c.h.b16 %v218
    %v1828 = vunpack.c.l.b16 %v219
    %v1829 = vunpack.c.h.b16 %v219
    %v1830 = vunpack.c.l.b16 %v220
    %v1831 = vunpack.c.h.b16 %v220
    %v1832 = vunpack.c.l.b16 %v221
    %v1833 = vunpack.c.h.b16 %v221
    %v1834 = vunpack.c.l.b16 %v222
    %v1835 = vunpack.c.h.b16 %v222
    %v1836 = vunpack.c.l.b16 %v223
    %v1837 = vunpack.c.h.b16 %v223
    %v1838 = vunpack.c.l.b16 %v224
    %v1839 = vunpack.c.h.b16 %v224
    %v1840 = vunpack.c.l.b16 %v225
    %v1841 = vunpack.c.h.b16 %v225
    %v1842 = vunpack.c.l.b16 %v226
    %v1843 = vunpack.c.h.b16 %v226
    %v1844 = vunpack.c.l.b16 %v227
    %v1845 = vunpack.c.h.b16 %v227
    %v1846 = vunpack.c.l.b16 %v228
    %v1847 = vunpack.c.h.b16 %v228
    %v1848 = vunpack.c.l.b16 %v229
    %v1849 = vunpack.c.h.b16 %v229
    %v1850 = vunpack.c.l.b16 %v230
    %v1851 = vunpack.c.h.b16 %v230
    %v1852 = vunpack.c.l.b16 %v231
    %v1853 = vunpack.c.h.b16 %v231
    %v1854 = vunpack.c.l.b16 %v232
    %v1855 = vunpack.c.h.b16 %v232
    %v1856 = vunpack.c.l.b16 %v233
    %v1857 = vunpack.c.h.b16 %v233
    %v1858 = vunpack.c.l.b16 %v234
    %v1859 = vunpack.c.h.b16 %v234
    %v1860 = vunpack.c.l.b16 %v235
    %v1861 = vunpack.c.h.b16 %v235
    %v1862 = vunpack.c.l.b16 %v236
    %v1863 = vunpack.c.h.b16 %v236
    %v1864 = vunpack.c.l.b16 %v237
    %v1865 = vunpack.c.h.b16 %v237
    %v1866 = vunpack.c.l.b16 %v238
    %v1867 = vunpack.c.h.b16 %v238
    %v1868 = vunpack.c.l.b16 %v239
    %v1869 = vunpack.c.h.b16 %v239
    %v1870 = vunpack.c.l.b16 %v240
    %v1871 = vunpack.c.h.b16 %v240
    %v1872 = vunpack.c.l.b16 %v241
    %v1873 = vunpack.c.h.b16 %v241
    %v1874 = vunpack.c.l.b16 %v242
    %v1875 = vunpack.c.h.b16 %v242
    %v1876 = vunpack.c.l.b16 %v243
    %v1877 = vunpack.c.h.b16 %v243
    %v1878 = vunpack.c.l.b16 %v244
    %v1879 = vunpack.c.h.b16 %v244
    %v1880 = vunpack.c.l.b16 %v245
    %v1881 = vunpack.c.h.b16 %v245
    %v1882 = vunpack.c.l.b16 %v246
    %v1883 = vunpack.c.h.b16 %v246
    %v1884 = vunpack.c.l.b16 %v247
    %v1885 = vunpack.c.h.b16 %v247
    %v1886 = vunpack.c.l.b16 %v248
    %v1887 = vunpack.c.h.b16 %v248
    %v1888 = vunpack.c.l.b16 %v249
    %v1889 = vunpack.c.h.b16 %v249
    %v1890 = vunpack.c.l.b16 %v250
    %v1891 = vunpack.c.h.b16 %v250
    %v1892 = vunpack.c.l.b16 %v251
    %v1893 = vunpack.c.h.b16 %v251
    %v1894 = vunpack.c.l.b16 %v252
    %v1895 = vunpack.c.h.b16 %v252
    %v1896 = vunpack.c.l.b16 %v253
    %v1897 = vunpack.c.h.b16 %v253
    %v1898 = vunpack.c.l.b16 %v254
    %v1899 = vunpack.c.h.b16 %v254
    %v1900 = vunpack.c.l.b16 %v255
    %v1901 = vunpack.c.h.b16 %v255
    %v1902 = vunpack.c.l.b16 %v256
    %v1903 = vunpack.c.h.b16 %v256
    %v1904 = vunpack.c.l.b16 %v257
    %v1905 = vunpack.c.h.b16 %v257
    %v1906 = vunpack.c.l.b16 %v258
    %v1907 = vunpack.c.h.b16 %v258
    %v1908 = vunpack.c.l.b16 %v259
    %v1909 = vunpack.c.h.b16 %v259
    %v1910 = vunpack.c.l.b16 %v260
    %v1911 = vunpack.c.h.b16 %v260
    %v1912 = vunpack.c.l.b16 %v261
    %v1913 = vunpack.c.h.b16 %v261
    %v1914 = vunpack.c.l.b16 %v262
    %v1915 = vunpack.c.h.b16 %v262
    %v1916 = vunpack.c.l.b16 %v263
    %v1917 = vunpack.c.h.b16 %v263
    %v1918 = vunpack.c.l.b16 %v264
    %v1919 = vunpack.c.h.b16 %v264
    %v1920 = vunpack.c.l.b16 %v265
    %v1921 = vunpack.c.h.b16 %v265
    %v1922 = vunpack.c.l.b16 %v266
    %v1923 = vunpack.c.h.b16 %v266
    %v1924 = vunpack.c.l.b16 %v267
    %v1925 = vunpack.c.h.b16 %v267
    %v1926 = vunpack.c.l.b16 %v268
    %v1927 = vunpack.c.h.b16 %v268
    %v1928 = vunpack.c.l.b16 %v269
    %v1929 = vunpack.c.h.b16 %v269
    %v1930 = vunpack.c.l.b16 %v270
    %v1931 = vunpack.c.h.b16 %v270
    %v1932 = vunpack.c.l.b16 %v271
    %v1933 = vunpack.c.h.b16 %v271
    %v1934 = vunpack.c.l.b16 %v272
    %v1935 = vunpack.c.h.b16 %v272
    %v1936 = vunpack.c.l.b16 %v273
    %v1937 = vunpack.c.h.b16 %v273
    %v1938 = vunpack.c.l.b16 %v274
    %v1939 = vunpack.c.h.b16 %v274
    %v1940 = vunpack.c.l.b16 %v275
    %v1941 = vunpack.c.h.b16 %v275
    %v1942 = vunpack.c.l.b16 %v276
    %v1943 = vunpack.c.h.b16 %v276
    %v1944 = vunpack.c.l.b16 %v277
    %v1945 = vunpack.c.h.b16 %v277
    %v1946 = vunpack.c.l.b16 %v278
    %v1947 = vunpack.c.h.b16 %v278
    %v1948 = vunpack.c.l.b16 %v279
    %v1949 = vunpack.c.h.b16 %v279
    %v1950 = vunpack.c.l.b16 %v280
    %v1951 = vunpack.c.h.b16 %v280
    %v1952 = vunpack.c.l.b16 %v281
    %v1953 = vunpack.c.h.b16 %v281
    %v1954 = vunpack.c.l.b16 %v282
    %v1955 = vunpack.c.h.b16 %v282
    %v1956 = vunpack.c.l.b16 %v283
    %v1957 = vunpack.c.h.b16 %v283
    %v1958 = vunpack.c.l.b16 %v284
    %v1959 = vunpack.c.h.b16 %v284
    %v1960 = vunpack.c.l.b16 %v285
    %v1961 = vunpack.c.h.b16 %v285
    %v1962 = vunpack.c.l.b16 %v286
    %v1963 = vunpack.c.h.b16 %v286
    %v1964 = vunpack.c.l.b16 %v287
    %v1965 = vunpack.c.h.b16 %v287
    %v1966 = vunpack.c.l.b16 %v288
    %v1967 = vunpack.c.h.b16 %v288
    %v1968 = vunpack.c.l.b16 %v289
    %v1969 = vunpack.c.h.b16 %v289
    %v1970 = vunpack.c.l.b16 %v290
    %v1971 = vunpack.c.h.b16 %v290
    %v1972 = vunpack.c.l.b16 %v291
    %v1973 = vunpack.c.h.b16 %v291
    %v1974 = vunpack.c.l.b16 %v292
    %v1975 = vunpack.c.h.b16 %v292
    %v1976 = vunpack.c.l.b16 %v293
    %v1977 = vunpack.c.h.b16 %v293
    %v1978 = vunpack.c.l.b16 %v294
    %v1979 = vunpack.c.h.b16 %v294
    %v1980 = vunpack.c.l.b16 %v295
    %v1981 = vunpack.c.h.b16 %v295
    %v1982 = vunpack.c.l.b16 %v296
    %v1983 = vunpack.c.h.b16 %v296
    %v1984 = vunpack.c.l.b16 %v297
    %v1985 = vunpack.c.h.b16 %v297
    %v1986 = vunpack.c.l.b16 %v298
    %v1987 = vunpack.c.h.b16 %v298
    %v1988 = vunpack.c.l.b16 %v299
    %v1989 = vunpack.c.h.b16 %v299
    %v1990 = vunpack.c.l.b16 %v300
    %v1991 = vunpack.c.h.b16 %v300
    %v1992 = vunpack.c.l.b16 %v301
    %v1993 = vunpack.c.h.b16 %v301
    %v1994 = vunpack.c.l.b16 %v302
    %v1995 = vunpack.c.h.b16 %v302
    %v1996 = vunpack.c.l.b16 %v303
    %v1997 = vunpack.c.h.b16 %v303
    %v1998 = vunpack.c.l.b16 %v304
    %v1999 = vunpack.c.h.b16 %v304
    %v2000 = vunpack.c.l.b16 %v305
    %v2001 = vunpack.c.h.b16 %v305
    %v2002 = vunpack.c.l.b16 %v306
    %v2003 = vunpack.c.h.b16 %v306
    %v2004 = vunpack.c.l.b16 %v307
    %v2005 = vunpack.c.h.b16 %v307
    %v2006 = vunpack.c.l.b16 %v308
    %v2007 = vunpack.c.h.b16 %v308
    %v2008 = vunpack.c.l.b16 %v309
    %v2009 = vunpack.c.h.b16 %v309
    %v2010 = vunpack.c.l.b16 %v310
    %v2011 = vunpack.c.h.b16 %v310
    %v2012 = vunpack.c.l.b16 %v311
    %v2013 = vunpack.c.h.b16 %v311
    %v2014 = vunpack.c.l.b16 %v312
    %v2015 = vunpack.c.h.b16 %v312
    %v2016 = vunpack.c.l.b16 %v313
    %v2017 = vunpack.c.h.b16 %v313
    %v2018 = vunpack.c.l.b16 %v314
    %v2019 = vunpack.c.h.b16 %v314
    %v2020 = vunpack.c.l.b16 %v315
    %v2021 = vunpack.c.h.b16 %v315
    %v2022 = vunpack.c.l.b16 %v316
    %v2023 = vunpack.c.h.b16 %v316
    %v2024 = vunpack.c.l.b16 %v317
    %v2025 = vunpack.c.h.b16 %v317
    %v2026 = vunpack.c.l.b16 %v318
    %v2027 = vunpack.c.h.b16 %v318
    %v2028 = vunpack.c.l.b16 %v319
    %v2029 = vunpack.c.h.b16 %v319
    %v2030 = vunpack.c.l.b16 %v320
    %v2031 = vunpack.c.h.b16 %v320
    %v2032 = vunpack.c.l.b16 %v321
    %v2033 = vunpack.c.h.b16 %v321
    %v2034 = vunpack.c.l.b16 %v322
    %v2035 = vunpack.c.h.b16 %v322
    %v2036 = vunpack.c.l.b16 %v323
    %v2037 = vunpack.c.h.b16 %v323
    %v2038 = vunpack.c.l.b16 %v324
    %v2039 = vunpack.c.h.b16 %v324
    %v2040 = vunpack.c.l.b16 %v325
    %v2041 = vunpack.c.h.b16 %v325
    %v2042 = vunpack.c.l.b16 %v326
    %v2043 = vunpack.c.h.b16 %v326
    %v2044 = vunpack.c.l.b16 %v327
    %v2045 = vunpack.c.h.b16 %v327
    %v2046 = vunpack.c.l.b16 %v328
    %v2047 = vunpack.c.h.b16 %v328
    %v2048 = vunpack.c.l.b16 %v329
    %v2049 = vunpack.c.h.b16 %v329
    %v2050 = vunpack.c.l.b16 %v330
    %v2051 = vunpack.c.h.b16 %v330
    %v2052 = vunpack.c.l.b16 %v331
    %v2053 = vunpack.c.h.b16 %v331
    %v2054 = vunpack.c.l.b16 %v332
    %v2055 = vunpack.c.h.b16 %v332
    %v2056 = vunpack.c.l.b16 %v333
    %v2057 = vunpack.c.h.b16 %v333
    %v2058 = vunpack.c.l.b16 %v334
    %v2059 = vunpack.c.h.b16 %v334
    %v2060 = vunpack.c.l.b16 %v335
    %v2061 = vunpack.c.h.b16 %v335
    %v2062 = vunpack.c.l.b16 %v336
    %v2063 = vunpack.c.h.b16 %v336
    %v2064 = vunpack.c.l.b16 %v337
    %v2065 = vunpack.c.h.b16 %v337
    %v2066 = vunpack.c.l.b16 %v338
    %v2067 = vunpack.c.h.b16 %v338
    %v2068 = vunpack.c.l.b16 %v339
    %v2069 = vunpack.c.h.b16 %v339
    %v2070 = vunpack.c.l.b16 %v340
    %v2071 = vunpack.c.h.b16 %v340
    %v2072 = vunpack.c.l.b16 %v341
    %v2073 = vunpack.c.h.b16 %v341
    %v2074 = vunpack.c.l.b16 %v342
    %v2075 = vunpack.c.h.b16 %v342
    %v2076 = vunpack.c.l.b16 %v343
    %v2077 = vunpack.c.h.b16 %v343
    %v2078 = vunpack.c.l.b16 %v344
    %v2079 = vunpack.c.h.b16 %v344
    %v2080 = vunpack.c.l.b16 %v345
    %v2081 = vunpack.c.h.b16 %v345
    %v2082 = vunpack.c.l.b16 %v346
    %v2083 = vunpack.c.h.b16 %v346
    %v2084 = vunpack.c.l.b16 %v347
    %v2085 = vunpack.c.h.b16 %v347
    %v2086 = vunpack.c.l.b16 %v348
    %v2087 = vunpack.c.h.b16 %v348
    %v2088 = vunpack.c.l.b16 %v349
    %v2089 = vunpack.c.h.b16 %v349
    %v2090 = vunpack.c.l.b16 %v350
    %v2091 = vunpack.c.h.b16 %v350
    %v2092 = vunpack.c.l.b16 %v351
    %v2093 = vunpack.c.h.b16 %v351
    %v2094 = vunpack.c.l.b16 %v352
    %v2095 = vunpack.c.h.b16 %v352
    %v2096 = vunpack.c.l.b16 %v353
    %v2097 = vunpack.c.h.b16 %v353
    %v2098 = vunpack.c.l.b16 %v354
    %v2099 = vunpack.c.h.b16 %v354
    %v2100 = vunpack.c.l.b16 %v355
    %v2101 = vunpack.c.h.b16 %v355
    %v2102 = vunpack.c.l.b16 %v356
    %v2103 = vunpack.c.h.b16 %v356
    %v2104 = vunpack.c.l.b16 %v357
    %v2105 = vunpack.c.h.b16 %v357
    %v2106 = vunpack.c.l.b16 %v358
    %v2107 = vunpack.c.h.b16 %v358
    %v2108 = vunpack.c.l.b16 %v359
    %v2109 = vunpack.c.h.b16 %v359
    %v2110 = vunpack.c.l.b16 %v360
    %v2111 = vunpack.c.h.b16 %v360
    %v2112 = vunpack.c.l.b16 %v361
    %v2113 = vunpack.c.h.b16 %v361
    %v2114 = vunpack.c.l.b16 %v362
    %v2115 = vunpack.c.h.b16 %v362
    %v2116 = vunpack.c.l.b16 %v363
    %v2117 = vunpack.c.h.b16 %v363
    %v2118 = vunpack.c.l.b16 %v364
    %v2119 = vunpack.c.h.b16 %v364
    %v2120 = vunpack.c.l.b16 %v365
    %v2121 = vunpack.c.h.b16 %v365
    %v2122 = vunpack.c.l.b16 %v366
    %v2123 = vunpack.c.h.b16 %v366
    %v2124 = vunpack.c.l.b16 %v367
    %v2125 = vunpack.c.h.b16 %v367
    %v2126 = vunpack.c.l.b16 %v368
    %v2127 = vunpack.c.h.b16 %v368
    %v2128 = vunpack.c.l.b16 %v369
    %v2129 = vunpack.c.h.b16 %v369
    %v2130 = vunpack.c.l.b16 %v370
    %v2131 = vunpack.c.h.b16 %v370
    %v2132 = vunpack.c.l.b16 %v371
    %v2133 = vunpack.c.h.b16 %v371
    %v2134 = vunpack.c.l.b16 %v372
    %v2135 = vunpack.c.h.b16 %v372
    %v2136 = vunpack.c.l.b16 %v373
    %v2137 = vunpack.c.h.b16 %v373
    %v2138 = vunpack.c.l.b16 %v374
    %v2139 = vunpack.c.h.b16 %v374
    %v2140 = vunpack.c.l.b16 %v375
    %v2141 = vunpack.c.h.b16 %v375
    %v2142 = vunpack.c.l.b16 %v376
    %v2143 = vunpack.c.h.b16 %v376
    %v2144 = vunpack.c.l.b16 %v377
    %v2145 = vunpack.c.h.b16 %v377
    %v2146 = vunpack.c.l.b16 %v378
    %v2147 = vunpack.c.h.b16 %v378
    %v2148 = vunpack.c.l.b16 %v379
    %v2149 = vunpack.c.h.b16 %v379
    %v2150 = vunpack.c.l.b16 %v380
    %v2151 = vunpack.c.h.b16 %v380
    %v2152 = vunpack.c.l.b16 %v381
    %v2153 = vunpack.c.h.b16 %v381
    %v2154 = vpack.c.b16 %v1646, %v1642
    %v2155 = vpack.c.b16 %v1647, %v1643
    %v2156 = vpack.c.b16 %v1648, %v1644
    %v2157 = vpack.c.b16 %v1649, %v1645
    %v2158 = vpack.c.b16 %v1654, %v1650
    %v2159 = vpack.c.b16 %v1655, %v1651
    %v2160 = vpack.c.b16 %v1656, %v1652
    %v2161 = vpack.c.b16 %v1657, %v1653
    %v2162 = vpack.c.b16 %v1662, %v1658
    %v2163 = vpack.c.b16 %v1663, %v1659
    %v2164 = vpack.c.b16 %v1664, %v1660
    %v2165 = vpack.c.b16 %v1665, %v1661
    %v2166 = vpack.c.b16 %v1670, %v1666
    %v2167 = vpack.c.b16 %v1671, %v1667
    %v2168 = vpack.c.b16 %v1672, %v1668
    %v2169 = vpack.c.b16 %v1673, %v1669
    %v2170 = vpack.c.b16 %v1678, %v1674
    %v2171 = vpack.c.b16 %v1679, %v1675
    %v2172 = vpack.c.b16 %v1680, %v1676
    %v2173 = vpack.c.b16 %v1681, %v1677
    %v2174 = vpack.c.b16 %v1686, %v1682
    %v2175 = vpack.c.b16 %v1687, %v1683
    %v2176 = vpack.c.b16 %v1688, %v1684
    %v2177 = vpack.c.b16 %v1689, %v1685
    %v2178 = vpack.c.b16 %v1694, %v1690
    %v2179 = vpack.c.b16 %v1695, %v1691
    %v2180 = vpack.c.b16 %v1696, %v1692
    %v2181 = vpack.c.b16 %v1697, %v1693
    %v2182 = vpack.c.b16 %v1702, %v1698
    %v2183 = vpack.c.b16 %v1703, %v1699
    %v2184 = vpack.c.b16 %v1704, %v1700
    %v2185 = vpack.c.b16 %v1705, %v1701
    %v2186 = vpack.c.b16 %v1710, %v1706
    %v2187 = vpack.c.b16 %v1711, %v1707
    %v2188 = vpack.c.b16 %v1712, %v1708
    %v2189 = vpack.c.b16 %v1713, %v1709
    %v2190 = vpack.c.b16 %v1718, %v1714
    %v2191 = vpack.c.b16 %v1719, %v1715
    %v2192 = vpack.c.b16 %v1720, %v1716
    %v2193 = vpack.c.b16 %v1721, %v1717
    %v2194 = vpack.c.b16 %v1726, %v1722
    %v2195 = vpack.c.b16 %v1727, %v1723
    %v2196 = vpack.c.b16 %v1728, %v1724
    %v2197 = vpack.c.b16 %v1729, %v1725
    %v2198 = vpack.c.b16 %v1734, %v1730
    %v2199 = vpack.c.b16 %v1735, %v1731
    %v2200 = vpack.c.b16 %v1736, %v1732
    %v2201 = vpack.c.b16 %v1737, %v1733
    %v2202 = vpack.c.b16 %v1742, %v1738
    %v2203 = vpack.c.b16 %v1743, %v1739
    %v2204 = vpack.c.b16 %v1744, %v1740
    %v2205 = vpack.c.b16 %v1745, %v1741
    %v2206 = vpack.c.b16 %v1750, %v1746
    %v2207 = vpack.c.b16 %v1751, %v1747
    %v2208 = vpack.c.b16 %v1752, %v1748
    %v2209 = vpack.c.b16 %v1753, %v1749
    %v2210 = vpack.c.b16 %v1758, %v1754
    %v2211 = vpack.c.b16 %v1759, %v1755
    %v2212 = vpack.c.b16 %v1760, %v1756
    %v2213 = vpack.c.b16 %v1761, %v1757
    %v2214 = vpack.c.b16 %v1766, %v1762
    %v2215 = vpack.c.b16 %v1767, %v1763
    %v2216 = vpack.c.b16 %v1768, %v1764
    %v2217 = vpack.c.b16 %v1769, %v1765
    %v2218 = vpack.c.b16 %v1774, %v1770
    %v2219 = vpack.c.b16 %v1775, %v1771
    %v2220 = vpack.c.b16 %v1776, %v1772
    %v2221 = vpack.c.b16 %v1777, %v1773
    %v2222 = vpack.c.b16 %v1782, %v1778
    %v2223 = vpack.c.b16 %v1783, %v1779
    %v2224 = vpack.c.b16 %v1784, %v1780
    %v2225 = vpack.c.b16 %v1785, %v1781
    %v2226 = vpack.c.b16 %v1790, %v1786
    %v2227 = vpack.c.b16 %v1791, %v1787
    %v2228 = vpack.c.b16 %v1792, %v1788
    %v2229 = vpack.c.b16 %v1793, %v1789
    %v2230 = vpack.c.b16 %v1798, %v1794
    %v2231 = vpack.c.b16 %v1799, %v1795
    %v2232 = vpack.c.b16 %v1800, %v1796
    %v2233 = vpack.c.b16 %v1801, %v1797
    %v2234 = vpack.c.b16 %v1806, %v1802
    %v2235 = vpack.c.b16 %v1807, %v1803
    %v2236 = vpack.c.b16 %v1808, %v1804
    %v2237 = vpack.c.b16 %v1809, %v1805
    %v2238 = vpack.c.b16 %v1814, %v1810
    %v2239 = vpack.c.b16 %v1815, %v1811
    %v2240 = vpack.c.b16 %v1816, %v1812
    %v2241 = vpack.c.b16 %v1817, %v1813
    %v2242 = vpack.c.b16 %v1822, %v1818
    %v2243 = vpack.c.b16 %v1823, %v1819
    %v2244 = vpack.c.b16 %v1824, %v1820
    %v2245 = vpack.c.b16 %v1825, %v1821
    %v2246 = vpack.c.b16 %v1830, %v1826
    %v2247 = vpack.c.b16 %v1831, %v1827
    %v2248 = vpack.c.b16 %v1832, %v1828
    %v2249 = vpack.c.b16 %v1833, %v1829
    %v2250 = vpack.c.b16 %v1838, %v1834
    %v2251 = vpack.c.b16 %v1839, %v1835
    %v2252 = vpack.c.b16 %v1840, %v1836
    %v2253 = vpack.c.b16 %v1841, %v1837
    %v2254 = vpack.c.b16 %v1846, %v1842
    %v2255 = vpack.c.b16 %v1847, %v1843
    %v2256 = vpack.c.b16 %v1848, %v1844
    %v2257 = vpack.c.b16 %v1849, %v1845
    %v2258 = vpack.c.b16 %v1854, %v1850
    %v2259 = vpack.c.b16 %v1855, %v1851
    %v2260 = vpack.c.b16 %v1856, %v1852
    %v2261 = vpack.c.b16 %v1857, %v1853
    %v2262 = vpack.c.b16 %v1862, %v1858
    %v2263 = vpack.c.b16 %v1863, %v1859
    %v2264 = vpack.c.b16 %v1864, %v1860
    %v2265 = vpack.c.b16 %v1865, %v1861
    %v2266 = vpack.c.b16 %v1870, %v1866
    %v2267 = vpack.c.b16 %v1871, %v1867
    %v2268 = vpack.c.b16 %v1872, %v1868
    %v2269 = vpack.c.b16 %v1873, %v1869
    %v2270 = vpack.c.b16 %v1878, %v1874
    %v2271 = vpack.c.b16 %v1879, %v1875
    %v2272 = vpack.c.b16 %v1880, %v1876
    %v2273 = vpack.c.b16 %v1881, %v1877
    %v2274 = vpack.c.b16 %v1886, %v1882
    %v2275 = vpack.c.b16 %v1887, %v1883
    %v2276 = vpack.c.b16 %v1888, %v1884
    %v2277 = vpack.c.b16 %v1889, %v1885
    %v2278 = vpack.c.b16 %v1894, %v1890
    %v2279 = vpack.c.b16 %v1895, %v1891
    %v2280 = vpack.c.b16 %v1896, %v1892
    %v2281 = vpack.c.b16 %v1897, %v1893
    %v2282 = vpack.c.b16 %v1902, %v1898
    %v2283 = vpack.c.b16 %v1903, %v1899
    %v2284 = vpack.c.b16 %v1904, %v1900
    %v2285 = vpack.c.b16 %v1905, %v1901
    %v2286 = vpack.c.b16 %v1910, %v1906
    %v2287 = vpack.c.b16 %v1911, %v1907
    %v2288 = vpack.c.b16 %v1912, %v1908
    %v2289 = vpack.c.b16 %v1913, %v1909
    %v2290 = vpack.c.b16 %v1918, %v1914
    %v2291 = vpack.c.b16 %v1919, %v1915
    %v2292 = vpack.c.b16 %v1920, %v1916
    %v2293 = vpack.c.b16 %v1921, %v1917
    %v2294 = vpack.c.b16 %v1926, %v1922
    %v2295 = vpack.c.b16 %v1927, %v1923
    %v2296 = vpack.c.b16 %v1928, %v1924
    %v2297 = vpack.c.b16 %v1929, %v1925
    %v2298 = vpack.c.b16 %v1934, %v1930
    %v2299 = vpack.c.b16 %v1935, %v1931
    %v2300 = vpack.c.b16 %v1936, %v1932
    %v2301 = vpack.c.b16 %v1937, %v1933
    %v2302 = vpack.c.b16 %v1942, %v1938
    %v2303 = vpack.c.b16 %v1943, %v1939
    %v2304 = vpack.c.b16 %v1944, %v1940
    %v2305 = vpack.c.b16 %v1945, %v1941
    %v2306 = vpack.c.b16 %v1950, %v1946
    %v2307 = vpack.c.b16 %v1951, %v1947
    %v2308 = vpack.c.b16 %v1952, %v1948
    %v2309 = vpack.c.b16 %v1953, %v1949
    %v2310 = vpack.c.b16 %v1958, %v1954
    %v2311 = vpack.c.b16 %v1959, %v1955
    %v2312 = vpack.c.b16 %v1960, %v1956
    %v2313 = vpack.c.b16 %v1961, %v1957
    %v2314 = vpack.c.b16 %v1966, %v1962
    %v2315 = vpack.c.b16 %v1967, %v1963
    %v2316 = vpack.c.b16 %v1968, %v1964
    %v2317 = vpack.c.b16 %v1969, %v1965
    %v2318 = vpack.c.b16 %v1974, %v1970
    %v2319 = vpack.c.b16 %v1975, %v1971
    %v2320 = vpack.c.b16 %v1976, %v1972
    %v2321 = vpack.c.b16 %v1977, %v1973
    %v2322 = vpack.c.b16 %v1982, %v1978
    %v2323 = vpack.c.b16 %v1983, %v1979
    %v2324 = vpack.c.b16 %v1984, %v1980
    %v2325 = vpack.c.b16 %v1985, %v1981
    %v2326 = vpack.c.b16 %v1990, %v1986
    %v2327 = vpack.c.b16 %v1991, %v1987
    %v2328 = vpack.c.b16 %v1992, %v1988
    %v2329 = vpack.c.b16 %v1993, %v1989
    %v2330 = vpack.c.b16 %v1998, %v1994
    %v2331 = vpack.c.b16 %v1999, %v1995
    %v2332 = vpack.c.b16 %v2000, %v1996
    %v2333 = vpack.c.b16 %v2001, %v1997
    %v2334 = vpack.c.b16 %v2006, %v2002
    %v2335 = vpack.c.b16 %v2007, %v2003
    %v2336 = vpack.c.b16 %v2008, %v2004
    %v2337 = vpack.c.b16 %v2009, %v2005
    %v2338 = vpack.c.b16 %v2014, %v2010
    %v2339 = vpack.c.b16 %v2015, %v2011
    %v2340 = vpack.c.b16 %v2016, %v2012
    %v2341 = vpack.c.b16 %v2017, %v2013
    %v2342 = vpack.c.b16 %v2022, %v2018
    %v2343 = vpack.c.b16 %v2023, %v2019
    %v2344 = vpack.c.b16 %v2024, %v2020
    %v2345 = vpack.c.b16 %v2025, %v2021
    %v2346 = vpack.c.b16 %v2030, %v2026
    %v2347 = vpack.c.b16 %v2031, %v2027
    %v2348 = vpack.c.b16 %v2032, %v2028
    %v2349 = vpack.c.b16 %v2033, %v2029
    %v2350 = vpack.c.b16 %v2038, %v2034
    %v2351 = vpack.c.b16 %v2039, %v2035
    %v2352 = vpack.c.b16 %v2040, %v2036
    %v2353 = vpack.c.b16 %v2041, %v2037
    %v2354 = vpack.c.b16 %v2046, %v2042
    %v2355 = vpack.c.b16 %v2047, %v2043
    %v2356 = vpack.c.b16 %v2048, %v2044
    %v2357 = vpack.c.b16 %v2049, %v2045
    %v2358 = vpack.c.b16 %v2054, %v2050
    %v2359 = vpack.c.b16 %v2055, %v2051
    %v2360 = vpack.c.b16 %v2056, %v2052
    %v2361 = vpack.c.b16 %v2057, %v2053
    %v2362 = vpack.c.b16 %v2062, %v2058
    %v2363 = vpack.c.b16 %v2063, %v2059
    %v2364 = vpack.c.b16 %v2064, %v2060
    %v2365 = vpack.c.b16 %v2065, %v2061
    %v2366 = vpack.c.b16 %v2070, %v2066
    %v2367 = vpack.c.b16 %v2071, %v2067
    %v2368 = vpack.c.b16 %v2072, %v2068
    %v2369 = vpack.c.b16 %v2073, %v2069
    %v2370 = vpack.c.b16 %v2078, %v2074
    %v2371 = vpack.c.b16 %v2079, %v2075
    %v2372 = vpack.c.b16 %v2080, %v2076
    %v2373 = vpack.c.b16 %v2081, %v2077
    %v2374 = vpack.c.b16 %v2086, %v2082
    %v2375 = vpack.c.b16 %v2087, %v2083
    %v2376 = vpack.c.b16 %v2088, %v2084
    %v2377 = vpack.c.b16 %v2089, %v2085
    %v2378 = vpack.c.b16 %v2094, %v2090
    %v2379 = vpack.c.b16 %v2095, %v2091
    %v2380 = vpack.c.b16 %v2096, %v2092
    %v2381 = vpack.c.b16 %v2097, %v2093
    %v2382 = vpack.c.b16 %v2102, %v2098
    %v2383 = vpack.c.b16 %v2103, %v2099
    %v2384 = vpack.c.b16 %v2104, %v2100
    %v2385 = vpack.c.b16 %v2105, %v2101
    %v2386 = vpack.c.b16 %v2110, %v2106
    %v2387 = vpack.c.b16 %v2111, %v2107
    %v2388 = vpack.c.b16 %v2112, %v2108
    %v2389 = vpack.c.b16 %v2113, %v2109
    %v2390 = vpack.c.b16 %v2118, %v2114
    %v2391 = vpack.c.b16 %v2119, %v2115
    %v2392 = vpack.c.b16 %v2120, %v2116
    %v2393 = vpack.c.b16 %v2121, %v2117
    %v2394 = vpack.c.b16 %v2126, %v2122
    %v2395 = vpack.c.b16 %v2127, %v2123
    %v2396 = vpack.c.b16 %v2128, %v2124
    %v2397 = vpack.c.b16 %v2129, %v2125
    %v2398 = vpack.c.b16 %v2134, %v2130
    %v2399 = vpack.c.b16 %v2135, %v2131
    %v2400 = vpack.c.b16 %v2136, %v2132
    %v2401 = vpack.c.b16 %v2137, %v2133
    %v2402 = vpack.c.b16 %v2142, %v2138
    %v2403 = vpack.c.b16 %v2143, %v2139
    %v2404 = vpack.c.b16 %v2144, %v2140
    %v2405 = vpack.c.b16 %v2145, %v2141
    %v2406 = vpack.c.b16 %v2150, %v2146
    %v2407 = vpack.c.b16 %v2151, %v2147
    %v2408 = vpack.c.b16 %v2152, %v2148
    %v2409 = vpack.c.b16 %v2153, %v2149
    %2666 = vmatprep.subr.bf16.mxu0 %v2155
    %2667 = vmatpush1.bf16.msra.mxu0 %v2154
    %2668 = vmatprep.subr.bf16.mxu0 %v2159
    %2669 = vmatpush1.bf16.msra.mxu0 %v2158
    %2670 = vmatprep.subr.bf16.mxu0 %v2163
    %2671 = vmatpush1.bf16.msra.mxu0 %v2162
    %2672 = vmatprep.subr.bf16.mxu0 %v2167
    %2673 = vmatpush1.bf16.msra.mxu0 %v2166
    %2674 = vmatprep.subr.bf16.mxu0 %v2171
    %2675 = vmatpush1.bf16.msra.mxu0 %v2170
    %2676 = vmatprep.subr.bf16.mxu0 %v2175
    %2677 = vmatpush1.bf16.msra.mxu0 %v2174
    %2678 = vmatprep.subr.bf16.mxu0 %v2179
    %2679 = vmatpush1.bf16.msra.mxu0 %v2178
    %2680 = vmatprep.subr.bf16.mxu0 %v2183
    %2681 = vmatpush1.bf16.msra.mxu0 %v2182
    %2682 = vmatprep.subr.bf16.mxu0 %v2187
    %2683 = vmatpush1.bf16.msra.mxu0 %v2186
    %2684 = vmatprep.subr.bf16.mxu0 %v2191
    %2685 = vmatpush1.bf16.msra.mxu0 %v2190
    %2686 = vmatprep.subr.bf16.mxu0 %v2195
    %2687 = vmatpush1.bf16.msra.mxu0 %v2194
    %2688 = vmatprep.subr.bf16.mxu0 %v2199
    %2689 = vmatpush1.bf16.msra.mxu0 %v2198
    %2690 = vmatprep.subr.bf16.mxu0 %v2203
    %2691 = vmatpush1.bf16.msra.mxu0 %v2202
    %2692 = vmatprep.subr.bf16.mxu0 %v2207
    %2693 = vmatpush1.bf16.msra.mxu0 %v2206
    %2694 = vmatprep.subr.bf16.mxu0 %v2211
    %2695 = vmatpush1.bf16.msra.mxu0 %v2210
    %2696 = vmatprep.subr.bf16.mxu0 %v2215
    %2697 = vmatpush1.bf16.msra.mxu0 %v2214
    %2698 = vmatprep.mubr.bf16.mxu0 %v1371
    %2699 = vmatmul.mubr.bf16.gmra.mrb[0].mxu0 %v1370
    %v2700 = vpop.f32.mrb[0].mxu0
    %v2701 = vadd.f32 %v1252, %v2700
    %v2702 = vpop.f32.mrb[0].mxu0
    %v2703 = vadd.f32 %v1254, %v2702
    %v2704 = vpop.f32.mrb[0].mxu0
    %v2705 = vadd.f32 %v1256, %v2704
    %v2706 = vpop.f32.mrb[0].mxu0
    %v2707 = vadd.f32 %v1258, %v2706
    %2708 = vdwg.mxu0
    %2709 = vmatprep.subr.bf16.mxu0 %v2219
    %2710 = vmatpush1.bf16.msra.mxu0 %v2218
    %2711 = vmatprep.subr.bf16.mxu0 %v2223
    %2712 = vmatpush1.bf16.msra.mxu0 %v2222
    %2713 = vmatprep.subr.bf16.mxu0 %v2227
    %2714 = vmatpush1.bf16.msra.mxu0 %v2226
    %2715 = vmatprep.subr.bf16.mxu0 %v2231
    %2716 = vmatpush1.bf16.msra.mxu0 %v2230
    %2717 = vmatprep.subr.bf16.mxu0 %v2235
    %2718 = vmatpush1.bf16.msra.mxu0 %v2234
    %2719 = vmatprep.subr.bf16.mxu0 %v2239
    %2720 = vmatpush1.bf16.msra.mxu0 %v2238
    %2721 = vmatprep.subr.bf16.mxu0 %v2243
    %2722 = vmatpush1.bf16.msra.mxu0 %v2242
    %2723 = vmatprep.subr.bf16.mxu0 %v2247
    %2724 = vmatpush1.bf16.msra.mxu0 %v2246
    %2725 = vmatprep.subr.bf16.mxu0 %v2251
    %2726 = vmatpush1.bf16.msra.mxu0 %v2250
    %2727 = vmatprep.subr.bf16.mxu0 %v2255
    %2728 = vmatpush1.bf16.msra.mxu0 %v2254
    %2729 = vmatprep.subr.bf16.mxu0 %v2259
    %2730 = vmatpush1.bf16.msra.mxu0 %v2258
    %2731 = vmatprep.subr.bf16.mxu0 %v2263
    %2732 = vmatpush1.bf16.msra.mxu0 %v2262
    %2733 = vmatprep.subr.bf16.mxu0 %v2267
    %2734 = vmatpush1.bf16.msra.mxu0 %v2266
    %2735 = vmatprep.subr.bf16.mxu0 %v2271
    %2736 = vmatpush1.bf16.msra.mxu0 %v2270
    %2737 = vmatprep.subr.bf16.mxu0 %v2275
    %2738 = vmatpush1.bf16.msra.mxu0 %v2274
    %2739 = vmatprep.subr.bf16.mxu0 %v2279
    %2740 = vmatpush1.bf16.msra.mxu0 %v2278
    %2741 = vmatprep.mubr.bf16.mxu0 %v1373
    %2742 = vmatmul.mubr.bf16.gmra.mrb[0].mxu0 %v1372
    %v2743 = vpop.f32.mrb[0].mxu0
    %v2744 = vadd.f32 %v2701, %v2743
    %v2745 = vpop.f32.mrb[0].mxu0
    %v2746 = vadd.f32 %v2703, %v2745
    %v2747 = vpop.f32.mrb[0].mxu0
    %v2748 = vadd.f32 %v2705, %v2747
    %v2749 = vpop.f32.mrb[0].mxu0
    %v2750 = vadd.f32 %v2707, %v2749
    %2751 = vdwg.mxu0
    %2752 = vmatprep.subr.bf16.mxu0 %v2283
    %2753 = vmatpush1.bf16.msra.mxu0 %v2282
    %2754 = vmatprep.subr.bf16.mxu0 %v2287
    %2755 = vmatpush1.bf16.msra.mxu0 %v2286
    %2756 = vmatprep.subr.bf16.mxu0 %v2291
    %2757 = vmatpush1.bf16.msra.mxu0 %v2290
    %2758 = vmatprep.subr.bf16.mxu0 %v2295
    %2759 = vmatpush1.bf16.msra.mxu0 %v2294
    %2760 = vmatprep.subr.bf16.mxu0 %v2299
    %2761 = vmatpush1.bf16.msra.mxu0 %v2298
    %2762 = vmatprep.subr.bf16.mxu0 %v2303
    %2763 = vmatpush1.bf16.msra.mxu0 %v2302
    %2764 = vmatprep.subr.bf16.mxu0 %v2307
    %2765 = vmatpush1.bf16.msra.mxu0 %v2306
    %2766 = vmatprep.subr.bf16.mxu0 %v2311
    %2767 = vmatpush1.bf16.msra.mxu0 %v2310
    %2768 = vmatprep.subr.bf16.mxu0 %v2315
    %2769 = vmatpush1.bf16.msra.mxu0 %v2314
    %2770 = vmatprep.subr.bf16.mxu0 %v2319
    %2771 = vmatpush1.bf16.msra.mxu0 %v2318
    %2772 = vmatprep.subr.bf16.mxu0 %v2323
    %2773 = vmatpush1.bf16.msra.mxu0 %v2322
    %2774 = vmatprep.subr.bf16.mxu0 %v2327
    %2775 = vmatpush1.bf16.msra.mxu0 %v2326
    %2776 = vmatprep.subr.bf16.mxu0 %v2331
    %2777 = vmatpush1.bf16.msra.mxu0 %v2330
    %2778 = vmatprep.subr.bf16.mxu0 %v2335
    %2779 = vmatpush1.bf16.msra.mxu0 %v2334
    %2780 = vmatprep.subr.bf16.mxu0 %v2339
    %2781 = vmatpush1.bf16.msra.mxu0 %v2338
    %2782 = vmatprep.subr.bf16.mxu0 %v2343
    %2783 = vmatpush1.bf16.msra.mxu0 %v2342
    %2784 = vmatprep.mubr.bf16.mxu0 %v1375
    %2785 = vmatmul.mubr.bf16.gmra.mrb[0].mxu0 %v1374
    %v2786 = vpop.f32.mrb[0].mxu0
    %v2787 = vadd.f32 %v2744, %v2786
    %v2788 = vpop.f32.mrb[0].mxu0
    %v2789 = vadd.f32 %v2746, %v2788
    %v2790 = vpop.f32.mrb[0].mxu0
    %v2791 = vadd.f32 %v2748, %v2790
    %v2792 = vpop.f32.mrb[0].mxu0
    %v2793 = vadd.f32 %v2750, %v2792
    %2794 = vdwg.mxu0
    %2795 = vmatprep.subr.bf16.mxu0 %v2347
    %2796 = vmatpush1.bf16.msra.mxu0 %v2346
    %2797 = vmatprep.subr.bf16.mxu0 %v2351
    %2798 = vmatpush1.bf16.msra.mxu0 %v2350
    %2799 = vmatprep.subr.bf16.mxu0 %v2355
    %2800 = vmatpush1.bf16.msra.mxu0 %v2354
    %2801 = vmatprep.subr.bf16.mxu0 %v2359
    %2802 = vmatpush1.bf16.msra.mxu0 %v2358
    %2803 = vmatprep.subr.bf16.mxu0 %v2363
    %2804 = vmatpush1.bf16.msra.mxu0 %v2362
    %2805 = vmatprep.subr.bf16.mxu0 %v2367
    %2806 = vmatpush1.bf16.msra.mxu0 %v2366
    %2807 = vmatprep.subr.bf16.mxu0 %v2371
    %2808 = vmatpush1.bf16.msra.mxu0 %v2370
    %2809 = vmatprep.subr.bf16.mxu0 %v2375
    %2810 = vmatpush1.bf16.msra.mxu0 %v2374
    %2811 = vmatprep.subr.bf16.mxu0 %v2379
    %2812 = vmatpush1.bf16.msra.mxu0 %v2378
    %2813 = vmatprep.subr.bf16.mxu0 %v2383
    %2814 = vmatpush1.bf16.msra.mxu0 %v2382
    %2815 = vmatprep.subr.bf16.mxu0 %v2387
    %2816 = vmatpush1.bf16.msra.mxu0 %v2386
    %2817 = vmatprep.subr.bf16.mxu0 %v2391
    %2818 = vmatpush1.bf16.msra.mxu0 %v2390
    %2819 = vmatprep.subr.bf16.mxu0 %v2395
    %2820 = vmatpush1.bf16.msra.mxu0 %v2394
    %2821 = vmatprep.subr.bf16.mxu0 %v2399
    %2822 = vmatpush1.bf16.msra.mxu0 %v2398
    %2823 = vmatprep.subr.bf16.mxu0 %v2403
    %2824 = vmatpush1.bf16.msra.mxu0 %v2402
    %2825 = vmatprep.subr.bf16.mxu0 %v2407
    %2826 = vmatpush1.bf16.msra.mxu0 %v2406
    %2827 = vmatprep.mubr.bf16.mxu0 %v1377
    %2828 = vmatmul.mubr.bf16.gmra.mrb[0].mxu0 %v1376
    %v2829 = vpop.f32.mrb[0].mxu0
    %v2830 = vadd.f32 %v2787, %v2829
    %v2831 = vpop.f32.mrb[0].mxu0
    %v2832 = vadd.f32 %v2789, %v2831
    %v2833 = vpop.f32.mrb[0].mxu0
    %v2834 = vadd.f32 %v2791, %v2833
    %v2835 = vpop.f32.mrb[0].mxu0
    %v2836 = vadd.f32 %v2793, %v2835
    %2837 = vdwg.mxu0
    %2838 = vmatprep.subr.bf16.mxu0 %v2157
    %2839 = vmatpush1.bf16.msra.mxu0 %v2156
    %2840 = vmatprep.subr.bf16.mxu0 %v2161
    %2841 = vmatpush1.bf16.msra.mxu0 %v2160
    %2842 = vmatprep.subr.bf16.mxu0 %v2165
    %2843 = vmatpush1.bf16.msra.mxu0 %v2164
    %2844 = vmatprep.subr.bf16.mxu0 %v2169
    %2845 = vmatpush1.bf16.msra.mxu0 %v2168
    %2846 = vmatprep.subr.bf16.mxu0 %v2173
    %2847 = vmatpush1.bf16.msra.mxu0 %v2172
    %2848 = vmatprep.subr.bf16.mxu0 %v2177
    %2849 = vmatpush1.bf16.msra.mxu0 %v2176
    %2850 = vmatprep.subr.bf16.mxu0 %v2181
    %2851 = vmatpush1.bf16.msra.mxu0 %v2180
    %2852 = vmatprep.subr.bf16.mxu0 %v2185
    %2853 = vmatpush1.bf16.msra.mxu0 %v2184
    %2854 = vmatprep.subr.bf16.mxu0 %v2189
    %2855 = vmatpush1.bf16.msra.mxu0 %v2188
    %2856 = vmatprep.subr.bf16.mxu0 %v2193
    %2857 = vmatpush1.bf16.msra.mxu0 %v2192
    %2858 = vmatprep.subr.bf16.mxu0 %v2197
    %2859 = vmatpush1.bf16.msra.mxu0 %v2196
    %2860 = vmatprep.subr.bf16.mxu0 %v2201
    %2861 = vmatpush1.bf16.msra.mxu0 %v2200
    %2862 = vmatprep.subr.bf16.mxu0 %v2205
    %2863 = vmatpush1.bf16.msra.mxu0 %v2204
    %2864 = vmatprep.subr.bf16.mxu0 %v2209
    %2865 = vmatpush1.bf16.msra.mxu0 %v2208
    %2866 = vmatprep.subr.bf16.mxu0 %v2213
    %2867 = vmatpush1.bf16.msra.mxu0 %v2212
    %2868 = vmatprep.subr.bf16.mxu0 %v2217
    %2869 = vmatpush1.bf16.msra.mxu0 %v2216
    %2870 = vmatprep.mubr.bf16.mxu0 %v1371
    %2871 = vmatmul.mubr.bf16.gmra.mrb[0].mxu0 %v1370
    %v2872 = vpop.f32.mrb[0].mxu0
    %v2873 = vadd.f32 %v1338, %v2872
    %v2874 = vpop.f32.mrb[0].mxu0
    %v2875 = vadd.f32 %v1340, %v2874
    %v2876 = vpop.f32.mrb[0].mxu0
    %v2877 = vadd.f32 %v1342, %v2876
    %v2878 = vpop.f32.mrb[0].mxu0
    %v2879 = vadd.f32 %v1344, %v2878
    %2880 = vdwg.mxu0
    %2881 = vmatprep.subr.bf16.mxu0 %v2221
    %2882 = vmatpush1.bf16.msra.mxu0 %v2220
    %2883 = vmatprep.subr.bf16.mxu0 %v2225
    %2884 = vmatpush1.bf16.msra.mxu0 %v2224
    %2885 = vmatprep.subr.bf16.mxu0 %v2229
    %2886 = vmatpush1.bf16.msra.mxu0 %v2228
    %2887 = vmatprep.subr.bf16.mxu0 %v2233
    %2888 = vmatpush1.bf16.msra.mxu0 %v2232
    %2889 = vmatprep.subr.bf16.mxu0 %v2237
    %2890 = vmatpush1.bf16.msra.mxu0 %v2236
    %2891 = vmatprep.subr.bf16.mxu0 %v2241
    %2892 = vmatpush1.bf16.msra.mxu0 %v2240
    %2893 = vmatprep.subr.bf16.mxu0 %v2245
    %2894 = vmatpush1.bf16.msra.mxu0 %v2244
    %2895 = vmatprep.subr.bf16.mxu0 %v2249
    %2896 = vmatpush1.bf16.msra.mxu0 %v2248
    %2897 = vmatprep.subr.bf16.mxu0 %v2253
    %2898 = vmatpush1.bf16.msra.mxu0 %v2252
    %2899 = vmatprep.subr.bf16.mxu0 %v2257
    %2900 = vmatpush1.bf16.msra.mxu0 %v2256
    %2901 = vmatprep.subr.bf16.mxu0 %v2261
    %2902 = vmatpush1.bf16.msra.mxu0 %v2260
    %2903 = vmatprep.subr.bf16.mxu0 %v2265
    %2904 = vmatpush1.bf16.msra.mxu0 %v2264
    %2905 = vmatprep.subr.bf16.mxu0 %v2269
    %2906 = vmatpush1.bf16.msra.mxu0 %v2268
    %2907 = vmatprep.subr.bf16.mxu0 %v2273
    %2908 = vmatpush1.bf16.msra.mxu0 %v2272
    %2909 = vmatprep.subr.bf16.mxu0 %v2277
    %2910 = vmatpush1.bf16.msra.mxu0 %v2276
    %2911 = vmatprep.subr.bf16.mxu0 %v2281
    %2912 = vmatpush1.bf16.msra.mxu0 %v2280
    %2913 = vmatprep.mubr.bf16.mxu0 %v1373
    %2914 = vmatmul.mubr.bf16.gmra.mrb[0].mxu0 %v1372
    %v2915 = vpop.f32.mrb[0].mxu0
    %v2916 = vadd.f32 %v2873, %v2915
    %v2917 = vpop.f32.mrb[0].mxu0
    %v2918 = vadd.f32 %v2875, %v2917
    %v2919 = vpop.f32.mrb[0].mxu0
    %v2920 = vadd.f32 %v2877, %v2919
    %v2921 = vpop.f32.mrb[0].mxu0
    %v2922 = vadd.f32 %v2879, %v2921
    %2923 = vdwg.mxu0
    %2924 = vmatprep.subr.bf16.mxu0 %v2285
    %2925 = vmatpush1.bf16.msra.mxu0 %v2284
    %2926 = vmatprep.subr.bf16.mxu0 %v2289
    %2927 = vmatpush1.bf16.msra.mxu0 %v2288
    %2928 = vmatprep.subr.bf16.mxu0 %v2293
    %2929 = vmatpush1.bf16.msra.mxu0 %v2292
    %2930 = vmatprep.subr.bf16.mxu0 %v2297
    %2931 = vmatpush1.bf16.msra.mxu0 %v2296
    %2932 = vmatprep.subr.bf16.mxu0 %v2301
    %2933 = vmatpush1.bf16.msra.mxu0 %v2300
    %2934 = vmatprep.subr.bf16.mxu0 %v2305
    %2935 = vmatpush1.bf16.msra.mxu0 %v2304
    %2936 = vmatprep.subr.bf16.mxu0 %v2309
    %2937 = vmatpush1.bf16.msra.mxu0 %v2308
    %2938 = vmatprep.subr.bf16.mxu0 %v2313
    %2939 = vmatpush1.bf16.msra.mxu0 %v2312
    %2940 = vmatprep.subr.bf16.mxu0 %v2317
    %2941 = vmatpush1.bf16.msra.mxu0 %v2316
    %2942 = vmatprep.subr.bf16.mxu0 %v2321
    %2943 = vmatpush1.bf16.msra.mxu0 %v2320
    %2944 = vmatprep.subr.bf16.mxu0 %v2325
    %2945 = vmatpush1.bf16.msra.mxu0 %v2324
    %2946 = vmatprep.subr.bf16.mxu0 %v2329
    %2947 = vmatpush1.bf16.msra.mxu0 %v2328
    %2948 = vmatprep.subr.bf16.mxu0 %v2333
    %2949 = vmatpush1.bf16.msra.mxu0 %v2332
    %2950 = vmatprep.subr.bf16.mxu0 %v2337
    %2951 = vmatpush1.bf16.msra.mxu0 %v2336
    %2952 = vmatprep.subr.bf16.mxu0 %v2341
    %2953 = vmatpush1.bf16.msra.mxu0 %v2340
    %2954 = vmatprep.subr.bf16.mxu0 %v2345
    %2955 = vmatpush1.bf16.msra.mxu0 %v2344
    %2956 = vmatprep.mubr.bf16.mxu0 %v1375
    %2957 = vmatmul.mubr.bf16.gmra.mrb[0].mxu0 %v1374
    %v2958 = vpop.f32.mrb[0].mxu0
    %v2959 = vadd.f32 %v2916, %v2958
    %v2960 = vpop.f32.mrb[0].mxu0
    %v2961 = vadd.f32 %v2918, %v2960
    %v2962 = vpop.f32.mrb[0].mxu0
    %v2963 = vadd.f32 %v2920, %v2962
    %v2964 = vpop.f32.mrb[0].mxu0
    %v2965 = vadd.f32 %v2922, %v2964
    %2966 = vdwg.mxu0
    %2967 = vmatprep.subr.bf16.mxu0 %v2349
    %2968 = vmatpush1.bf16.msra.mxu0 %v2348
    %2969 = vmatprep.subr.bf16.mxu0 %v2353
    %2970 = vmatpush1.bf16.msra.mxu0 %v2352
    %2971 = vmatprep.subr.bf16.mxu0 %v2357
    %2972 = vmatpush1.bf16.msra.mxu0 %v2356
    %2973 = vmatprep.subr.bf16.mxu0 %v2361
    %2974 = vmatpush1.bf16.msra.mxu0 %v2360
    %2975 = vmatprep.subr.bf16.mxu0 %v2365
    %2976 = vmatpush1.bf16.msra.mxu0 %v2364
    %2977 = vmatprep.subr.bf16.mxu0 %v2369
    %2978 = vmatpush1.bf16.msra.mxu0 %v2368
    %2979 = vmatprep.subr.bf16.mxu0 %v2373
    %2980 = vmatpush1.bf16.msra.mxu0 %v2372
    %2981 = vmatprep.subr.bf16.mxu0 %v2377
    %2982 = vmatpush1.bf16.msra.mxu0 %v2376
    %2983 = vmatprep.subr.bf16.mxu0 %v2381
    %2984 = vmatpush1.bf16.msra.mxu0 %v2380
    %2985 = vmatprep.subr.bf16.mxu0 %v2385
    %2986 = vmatpush1.bf16.msra.mxu0 %v2384
    %2987 = vmatprep.subr.bf16.mxu0 %v2389
    %2988 = vmatpush1.bf16.msra.mxu0 %v2388
    %2989 = vmatprep.subr.bf16.mxu0 %v2393
    %2990 = vmatpush1.bf16.msra.mxu0 %v2392
    %2991 = vmatprep.subr.bf16.mxu0 %v2397
    %2992 = vmatpush1.bf16.msra.mxu0 %v2396
    %2993 = vmatprep.subr.bf16.mxu0 %v2401
    %2994 = vmatpush1.bf16.msra.mxu0 %v2400
    %2995 = vmatprep.subr.bf16.mxu0 %v2405
    %2996 = vmatpush1.bf16.msra.mxu0 %v2404
    %2997 = vmatprep.subr.bf16.mxu0 %v2409
    %2998 = vmatpush1.bf16.msra.mxu0 %v2408
    %2999 = vmatprep.mubr.bf16.mxu0 %v1377
    %3000 = vmatmul.mubr.bf16.gmra.mrb[0].mxu0 %v1376
    %v3001 = vpop.f32.mrb[0].mxu0
    %v3002 = vadd.f32 %v2959, %v3001
    %v3003 = vpop.f32.mrb[0].mxu0
    %v3004 = vadd.f32 %v2961, %v3003
    %v3005 = vpop.f32.mrb[0].mxu0
    %v3006 = vadd.f32 %v2963, %v3005
    %v3007 = vpop.f32.mrb[0].mxu0
    %v3008 = vadd.f32 %v2965, %v3007
    %3009 = vdwg.mxu0
    %v3010 = vld [vmem:[#allocation11] ss:$4 sm:$0xf]
    %s3011 = scalar_lea.vmem [#allocation11], 1
    %v3012 = vld [vmem:[%s3011] ss:$4 sm:$0xf]
    %v3013 = vadd.f32 %v2830, %v2832
    %v3014 = vadd.f32 %v3013, %v3002
    %v3015 = vadd.f32 %v3014, %v3004
    %3016 = vadd.xlane.f32.xlu0 %v3015
    %v3017 = vpop.xlane.xlu0 %3016
    %v3018 = vadd.f32 %v2834, %v2836
    %v3019 = vadd.f32 %v3018, %v3006
    %v3020 = vadd.f32 %v3019, %v3008
    %3021 = vadd.xlane.f32.xlu0 %v3020
    %v3022 = vpop.xlane.xlu0 %3021
    %v3023 = vmul.f32 %v2830, %v2830
    %v3024 = vmul.f32 %v2832, %v2832
    %v3025 = vmul.f32 %v3002, %v3002
    %v3026 = vmul.f32 %v3004, %v3004
    %v3027 = vmul.f32 %v2834, %v2834
    %v3028 = vmul.f32 %v2836, %v2836
    %v3029 = vmul.f32 %v3006, %v3006
    %v3030 = vmul.f32 %v3008, %v3008
    %v3031 = vadd.f32 %v3023, %v3024
    %v3032 = vadd.f32 %v3031, %v3025
    %v3033 = vadd.f32 %v3032, %v3026
    %3034 = vadd.xlane.f32.xlu0 %v3033
    %v3035 = vpop.xlane.xlu0 %3034
    %v3036 = vadd.f32 %v3027, %v3028
    %v3037 = vadd.f32 %v3036, %v3029
    %v3038 = vadd.f32 %v3037, %v3030
    %3039 = vadd.xlane.f32.xlu0 %v3038
    %v3040 = vpop.xlane.xlu0 %3039
    %v3041 = vmul.f32 %v3017, 0.001953125
    %v3042 = vmul.f32 %v3022, 0.001953125
    %v3043 = vmul.f32 %v3035, 0.001953125
    %v3044 = vmul.f32 %v3040, 0.001953125
    %v3045 = vmul.f32 %v3041, %v3041
    %v3046 = vmul.f32 %v3042, %v3042
    %v3047 = vsub.f32 %v3043, %v3045
    %v3048 = vsub.f32 %v3044, %v3046
    %v3049 = vmax.f32 %v3047, 0.0
    %v3050 = vmax.f32 %v3048, 0.0
    %v3051 = vadd.f32 %v3049, 0.001
    %v3052 = vadd.f32 %v3050, 0.001
    %v3053 = vrsqrt.pop %v3051
    %v3054 = vrsqrt.pop %v3052
    %v3055 = vsub.f32 %v2830, %v3041
    %v3056 = vsub.f32 %v2832, %v3041
    %v3057 = vsub.f32 %v3002, %v3041
    %v3058 = vsub.f32 %v3004, %v3041
    %v3059 = vsub.f32 %v2834, %v3042
    %v3060 = vsub.f32 %v2836, %v3042
    %v3061 = vsub.f32 %v3006, %v3042
    %v3062 = vsub.f32 %v3008, %v3042
    %v3063 = vmul.f32 %v3055, %v3053
    %v3064 = vmul.f32 %v3056, %v3053
    %v3065 = vmul.f32 %v3057, %v3053
    %v3066 = vmul.f32 %v3058, %v3053
    %v3067 = vmul.f32 %v3059, %v3054
    %v3068 = vmul.f32 %v3060, %v3054
    %v3069 = vmul.f32 %v3061, %v3054
    %v3070 = vmul.f32 %v3062, %v3054
    %v3072 = vlaneseq
    %v3073 = vshrl.u32 %v3072, 7
    %v3074 = vsub.s32 0, %v3073
    %v3075 = vrot.slane %v3010, %v3074
    %v3076 = vlaneseq
    %v3077 = vshrl.u32 %v3076, 7
    %v3078 = vsub.s32 1, %v3077
    %v3079 = vrot.slane %v3010, %v3078
    %v3080 = vlaneseq
    %v3081 = vshrl.u32 %v3080, 7
    %v3082 = vsub.s32 2, %v3081
    %v3083 = vrot.slane %v3010, %v3082
    %v3084 = vlaneseq
    %v3085 = vshrl.u32 %v3084, 7
    %v3086 = vsub.s32 3, %v3085
    %v3087 = vrot.slane %v3010, %v3086
    %v3092 = vmul.f32 %v3063, %v3075
    %v3093 = vmul.f32 %v3064, %v3079
    %v3094 = vmul.f32 %v3065, %v3083
    %v3095 = vmul.f32 %v3066, %v3087
    %v3096 = vmul.f32 %v3067, %v3075
    %v3097 = vmul.f32 %v3068, %v3079
    %v3098 = vmul.f32 %v3069, %v3083
    %v3099 = vmul.f32 %v3070, %v3087
    %v3101 = vlaneseq
    %v3102 = vshrl.u32 %v3101, 7
    %v3103 = vsub.s32 0, %v3102
    %v3104 = vrot.slane %v3012, %v3103
    %v3105 = vlaneseq
    %v3106 = vshrl.u32 %v3105, 7
    %v3107 = vsub.s32 1, %v3106
    %v3108 = vrot.slane %v3012, %v3107
    %v3109 = vlaneseq
    %v3110 = vshrl.u32 %v3109, 7
    %v3111 = vsub.s32 2, %v3110
    %v3112 = vrot.slane %v3012, %v3111
    %v3113 = vlaneseq
    %v3114 = vshrl.u32 %v3113, 7
    %v3115 = vsub.s32 3, %v3114
    %v3116 = vrot.slane %v3012, %v3115
    %v3121 = vadd.f32 %v3092, %v3104
    %v3122 = vadd.f32 %v3093, %v3108
    %v3123 = vadd.f32 %v3094, %v3112
    %v3124 = vadd.f32 %v3095, %v3116
    %v3125 = vadd.f32 %v3096, %v3104
    %v3126 = vadd.f32 %v3097, %v3108
    %v3127 = vadd.f32 %v3098, %v3112
    %v3128 = vadd.f32 %v3099, %v3116
    %v3129 = vmul.f32 %v3121, 0.5
    %v3130 = vmul.f32 %v3122, 0.5
    %v3131 = vmul.f32 %v3123, 0.5
    %v3132 = vmul.f32 %v3124, 0.5
    %v3133 = vmul.f32 %v3125, 0.5
    %v3134 = vmul.f32 %v3126, 0.5
    %v3135 = vmul.f32 %v3127, 0.5
    %v3136 = vmul.f32 %v3128, 0.5
    %v3137 = vtanh.pop %v3129
    %v3138 = vtanh.pop %v3130
    %v3139 = vtanh.pop %v3131
    %v3140 = vtanh.pop %v3132
    %v3141 = vtanh.pop %v3133
    %v3142 = vtanh.pop %v3134
    %v3143 = vtanh.pop %v3135
    %v3144 = vtanh.pop %v3136
    %v3145 = vmul.f32 %v3137, 0.5
    %v3146 = vmul.f32 %v3138, 0.5
    %v3147 = vmul.f32 %v3139, 0.5
    %v3148 = vmul.f32 %v3140, 0.5
    %v3149 = vmul.f32 %v3141, 0.5
    %v3150 = vmul.f32 %v3142, 0.5
    %v3151 = vmul.f32 %v3143, 0.5
    %v3152 = vmul.f32 %v3144, 0.5
    %v3153 = vadd.f32 %v3145, 0.5
    %v3154 = vadd.f32 %v3146, 0.5
    %v3155 = vadd.f32 %v3147, 0.5
    %v3156 = vadd.f32 %v3148, 0.5
    %v3157 = vadd.f32 %v3149, 0.5
    %v3158 = vadd.f32 %v3150, 0.5
    %v3159 = vadd.f32 %v3151, 0.5
    %v3160 = vadd.f32 %v3152, 0.5
    %v3161 = vmul.f32 %v3121, %v3153
    %v3162 = vmul.f32 %v3122, %v3154
    %v3163 = vmul.f32 %v3123, %v3155
    %v3164 = vmul.f32 %v3124, %v3156
    %v3165 = vmul.f32 %v3125, %v3157
    %v3166 = vmul.f32 %v3126, %v3158
    %v3167 = vmul.f32 %v3127, %v3159
    %v3168 = vmul.f32 %v3128, %v3160
    %v3169 = vpack.c.bf16 %v3165, %v3161
    %v3170 = vpack.c.bf16 %v3166, %v3162
    %v3171 = vpack.c.bf16 %v3167, %v3163
    %v3172 = vpack.c.bf16 %v3168, %v3164
    %v3173 = vld [vmem:[#allocation8] sm:$0xff]
    %v3174 = vld [vmem:[#allocation8 + $0x8] sm:$0xff]
    %v3175 = vld [vmem:[#allocation8 + $0x10] sm:$0xff]
    %v3176 = vld [vmem:[#allocation8 + $0x18] sm:$0xff]
    %v3177 = vld [vmem:[#allocation8 + $0x20] sm:$0xff]
    %v3178 = vld [vmem:[#allocation8 + $0x28] sm:$0xff]
    %v3179 = vld [vmem:[#allocation8 + $0x30] sm:$0xff]
    %v3180 = vld [vmem:[#allocation8 + $0x38] sm:$0xff]
    %v3181 = vld [vmem:[#allocation8 + $0x40] sm:$0xff]
    %v3182 = vld [vmem:[#allocation8 + $0x48] sm:$0xff]
    %v3183 = vld [vmem:[#allocation8 + $0x50] sm:$0xff]
    %v3184 = vld [vmem:[#allocation8 + $0x58] sm:$0xff]
    %v3185 = vld [vmem:[#allocation8 + $0x60] sm:$0xff]
    %v3186 = vld [vmem:[#allocation8 + $0x68] sm:$0xff]
    %v3187 = vld [vmem:[#allocation8 + $0x70] sm:$0xff]
    %v3188 = vld [vmem:[#allocation8 + $0x78] sm:$0xff]
    %v3189 = vld [vmem:[#allocation8 + $0x80] sm:$0xff]
    %v3190 = vld [vmem:[#allocation8 + $0x88] sm:$0xff]
    %v3191 = vld [vmem:[#allocation8 + $0x90] sm:$0xff]
    %v3192 = vld [vmem:[#allocation8 + $0x98] sm:$0xff]
    %v3193 = vld [vmem:[#allocation8 + $0xa0] sm:$0xff]
    %v3194 = vld [vmem:[#allocation8 + $0xa8] sm:$0xff]
    %v3195 = vld [vmem:[#allocation8 + $0xb0] sm:$0xff]
    %v3196 = vld [vmem:[#allocation8 + $0xb8] sm:$0xff]
    %v3197 = vld [vmem:[#allocation8 + $0xc0] sm:$0xff]
    %v3198 = vld [vmem:[#allocation8 + $0xc8] sm:$0xff]
    %v3199 = vld [vmem:[#allocation8 + $0xd0] sm:$0xff]
    %v3200 = vld [vmem:[#allocation8 + $0xd8] sm:$0xff]
    %v3201 = vld [vmem:[#allocation8 + $0xe0] sm:$0xff]
    %v3202 = vld [vmem:[#allocation8 + $0xe8] sm:$0xff]
    %v3203 = vld [vmem:[#allocation8 + $0xf0] sm:$0xff]
    %v3204 = vld [vmem:[#allocation8 + $0xf8] sm:$0xff]
    %v3205 = vld [vmem:[#allocation8 + $0x100] sm:$0xff]
    %v3206 = vld [vmem:[#allocation8 + $0x108] sm:$0xff]
    %v3207 = vld [vmem:[#allocation8 + $0x110] sm:$0xff]
    %v3208 = vld [vmem:[#allocation8 + $0x118] sm:$0xff]
    %v3209 = vld [vmem:[#allocation8 + $0x120] sm:$0xff]
    %v3210 = vld [vmem:[#allocation8 + $0x128] sm:$0xff]
    %v3211 = vld [vmem:[#allocation8 + $0x130] sm:$0xff]
    %v3212 = vld [vmem:[#allocation8 + $0x138] sm:$0xff]
    %v3213 = vld [vmem:[#allocation8 + $0x140] sm:$0xff]
    %v3214 = vld [vmem:[#allocation8 + $0x148] sm:$0xff]
    %v3215 = vld [vmem:[#allocation8 + $0x150] sm:$0xff]
    %v3216 = vld [vmem:[#allocation8 + $0x158] sm:$0xff]
    %v3217 = vld [vmem:[#allocation8 + $0x160] sm:$0xff]
    %v3218 = vld [vmem:[#allocation8 + $0x168] sm:$0xff]
    %v3219 = vld [vmem:[#allocation8 + $0x170] sm:$0xff]
    %v3220 = vld [vmem:[#allocation8 + $0x178] sm:$0xff]
    %v3221 = vld [vmem:[#allocation8 + $0x180] sm:$0xff]
    %v3222 = vld [vmem:[#allocation8 + $0x188] sm:$0xff]
    %v3223 = vld [vmem:[#allocation8 + $0x190] sm:$0xff]
    %v3224 = vld [vmem:[#allocation8 + $0x198] sm:$0xff]
    %v3225 = vld [vmem:[#allocation8 + $0x1a0] sm:$0xff]
    %v3226 = vld [vmem:[#allocation8 + $0x1a8] sm:$0xff]
    %v3227 = vld [vmem:[#allocation8 + $0x1b0] sm:$0xff]
    %v3228 = vld [vmem:[#allocation8 + $0x1b8] sm:$0xff]
    %v3229 = vld [vmem:[#allocation8 + $0x1c0] sm:$0xff]
    %v3230 = vld [vmem:[#allocation8 + $0x1c8] sm:$0xff]
    %v3231 = vld [vmem:[#allocation8 + $0x1d0] sm:$0xff]
    %v3232 = vld [vmem:[#allocation8 + $0x1d8] sm:$0xff]
    %v3233 = vld [vmem:[#allocation8 + $0x1e0] sm:$0xff]
    %v3234 = vld [vmem:[#allocation8 + $0x1e8] sm:$0xff]
    %v3235 = vld [vmem:[#allocation8 + $0x1f0] sm:$0xff]
    %v3236 = vld [vmem:[#allocation8 + $0x1f8] sm:$0xff]
    %v3237 = vld [vmem:[#allocation8 + $0x200] sm:$0xff]
    %v3238 = vld [vmem:[#allocation8 + $0x208] sm:$0xff]
    %v3239 = vld [vmem:[#allocation8 + $0x210] sm:$0xff]
    %v3240 = vld [vmem:[#allocation8 + $0x218] sm:$0xff]
    %v3241 = vld [vmem:[#allocation8 + $0x220] sm:$0xff]
    %v3242 = vld [vmem:[#allocation8 + $0x228] sm:$0xff]
    %v3243 = vld [vmem:[#allocation8 + $0x230] sm:$0xff]
    %v3244 = vld [vmem:[#allocation8 + $0x238] sm:$0xff]
    %v3245 = vld [vmem:[#allocation8 + $0x240] sm:$0xff]
    %v3246 = vld [vmem:[#allocation8 + $0x248] sm:$0xff]
    %v3247 = vld [vmem:[#allocation8 + $0x250] sm:$0xff]
    %v3248 = vld [vmem:[#allocation8 + $0x258] sm:$0xff]
    %v3249 = vld [vmem:[#allocation8 + $0x260] sm:$0xff]
    %v3250 = vld [vmem:[#allocation8 + $0x268] sm:$0xff]
    %v3251 = vld [vmem:[#allocation8 + $0x270] sm:$0xff]
    %v3252 = vld [vmem:[#allocation8 + $0x278] sm:$0xff]
    %v3253 = vld [vmem:[#allocation8 + $0x280] sm:$0xff]
    %v3254 = vld [vmem:[#allocation8 + $0x288] sm:$0xff]
    %v3255 = vld [vmem:[#allocation8 + $0x290] sm:$0xff]
    %v3256 = vld [vmem:[#allocation8 + $0x298] sm:$0xff]
    %v3257 = vld [vmem:[#allocation8 + $0x2a0] sm:$0xff]
    %v3258 = vld [vmem:[#allocation8 + $0x2a8] sm:$0xff]
    %v3259 = vld [vmem:[#allocation8 + $0x2b0] sm:$0xff]
    %v3260 = vld [vmem:[#allocation8 + $0x2b8] sm:$0xff]
    %v3261 = vld [vmem:[#allocation8 + $0x2c0] sm:$0xff]
    %v3262 = vld [vmem:[#allocation8 + $0x2c8] sm:$0xff]
    %v3263 = vld [vmem:[#allocation8 + $0x2d0] sm:$0xff]
    %v3264 = vld [vmem:[#allocation8 + $0x2d8] sm:$0xff]
    %v3265 = vld [vmem:[#allocation8 + $0x2e0] sm:$0xff]
    %v3266 = vld [vmem:[#allocation8 + $0x2e8] sm:$0xff]
    %v3267 = vld [vmem:[#allocation8 + $0x2f0] sm:$0xff]
    %v3268 = vld [vmem:[#allocation8 + $0x2f8] sm:$0xff]
    %v3269 = vld [vmem:[#allocation8 + $0x300] sm:$0xff]
    %v3270 = vld [vmem:[#allocation8 + $0x308] sm:$0xff]
    %v3271 = vld [vmem:[#allocation8 + $0x310] sm:$0xff]
    %v3272 = vld [vmem:[#allocation8 + $0x318] sm:$0xff]
    %v3273 = vld [vmem:[#allocation8 + $0x320] sm:$0xff]
    %v3274 = vld [vmem:[#allocation8 + $0x328] sm:$0xff]
    %v3275 = vld [vmem:[#allocation8 + $0x330] sm:$0xff]
    %v3276 = vld [vmem:[#allocation8 + $0x338] sm:$0xff]
    %v3277 = vld [vmem:[#allocation8 + $0x340] sm:$0xff]
    %v3278 = vld [vmem:[#allocation8 + $0x348] sm:$0xff]
    %v3279 = vld [vmem:[#allocation8 + $0x350] sm:$0xff]
    %v3280 = vld [vmem:[#allocation8 + $0x358] sm:$0xff]
    %v3281 = vld [vmem:[#allocation8 + $0x360] sm:$0xff]
    %v3282 = vld [vmem:[#allocation8 + $0x368] sm:$0xff]
    %v3283 = vld [vmem:[#allocation8 + $0x370] sm:$0xff]
    %v3284 = vld [vmem:[#allocation8 + $0x378] sm:$0xff]
    %v3285 = vld [vmem:[#allocation8 + $0x380] sm:$0xff]
    %v3286 = vld [vmem:[#allocation8 + $0x388] sm:$0xff]
    %v3287 = vld [vmem:[#allocation8 + $0x390] sm:$0xff]
    %v3288 = vld [vmem:[#allocation8 + $0x398] sm:$0xff]
    %v3289 = vld [vmem:[#allocation8 + $0x3a0] sm:$0xff]
    %v3290 = vld [vmem:[#allocation8 + $0x3a8] sm:$0xff]
    %v3291 = vld [vmem:[#allocation8 + $0x3b0] sm:$0xff]
    %v3292 = vld [vmem:[#allocation8 + $0x3b8] sm:$0xff]
    %v3293 = vld [vmem:[#allocation8 + $0x3c0] sm:$0xff]
    %v3294 = vld [vmem:[#allocation8 + $0x3c8] sm:$0xff]
    %v3295 = vld [vmem:[#allocation8 + $0x3d0] sm:$0xff]
    %v3296 = vld [vmem:[#allocation8 + $0x3d8] sm:$0xff]
    %v3297 = vld [vmem:[#allocation8 + $0x3e0] sm:$0xff]
    %v3298 = vld [vmem:[#allocation8 + $0x3e8] sm:$0xff]
    %v3299 = vld [vmem:[#allocation8 + $0x3f0] sm:$0xff]
    %v3300 = vld [vmem:[#allocation8 + $0x3f8] sm:$0xff]
    %v3429 = vunpack.c.l.b16 %v3173
    %v3430 = vunpack.c.h.b16 %v3173
    %v3431 = vunpack.c.l.b16 %v3174
    %v3432 = vunpack.c.h.b16 %v3174
    %v3433 = vunpack.c.l.b16 %v3175
    %v3434 = vunpack.c.h.b16 %v3175
    %v3435 = vunpack.c.l.b16 %v3176
    %v3436 = vunpack.c.h.b16 %v3176
    %v3437 = vunpack.c.l.b16 %v3177
    %v3438 = vunpack.c.h.b16 %v3177
    %v3439 = vunpack.c.l.b16 %v3178
    %v3440 = vunpack.c.h.b16 %v3178
    %v3441 = vunpack.c.l.b16 %v3179
    %v3442 = vunpack.c.h.b16 %v3179
    %v3443 = vunpack.c.l.b16 %v3180
    %v3444 = vunpack.c.h.b16 %v3180
    %v3445 = vunpack.c.l.b16 %v3181
    %v3446 = vunpack.c.h.b16 %v3181
    %v3447 = vunpack.c.l.b16 %v3182
    %v3448 = vunpack.c.h.b16 %v3182
    %v3449 = vunpack.c.l.b16 %v3183
    %v3450 = vunpack.c.h.b16 %v3183
    %v3451 = vunpack.c.l.b16 %v3184
    %v3452 = vunpack.c.h.b16 %v3184
    %v3453 = vunpack.c.l.b16 %v3185
    %v3454 = vunpack.c.h.b16 %v3185
    %v3455 = vunpack.c.l.b16 %v3186
    %v3456 = vunpack.c.h.b16 %v3186
    %v3457 = vunpack.c.l.b16 %v3187
    %v3458 = vunpack.c.h.b16 %v3187
    %v3459 = vunpack.c.l.b16 %v3188
    %v3460 = vunpack.c.h.b16 %v3188
    %v3461 = vunpack.c.l.b16 %v3189
    %v3462 = vunpack.c.h.b16 %v3189
    %v3463 = vunpack.c.l.b16 %v3190
    %v3464 = vunpack.c.h.b16 %v3190
    %v3465 = vunpack.c.l.b16 %v3191
    %v3466 = vunpack.c.h.b16 %v3191
    %v3467 = vunpack.c.l.b16 %v3192
    %v3468 = vunpack.c.h.b16 %v3192
    %v3469 = vunpack.c.l.b16 %v3193
    %v3470 = vunpack.c.h.b16 %v3193
    %v3471 = vunpack.c.l.b16 %v3194
    %v3472 = vunpack.c.h.b16 %v3194
    %v3473 = vunpack.c.l.b16 %v3195
    %v3474 = vunpack.c.h.b16 %v3195
    %v3475 = vunpack.c.l.b16 %v3196
    %v3476 = vunpack.c.h.b16 %v3196
    %v3477 = vunpack.c.l.b16 %v3197
    %v3478 = vunpack.c.h.b16 %v3197
    %v3479 = vunpack.c.l.b16 %v3198
    %v3480 = vunpack.c.h.b16 %v3198
    %v3481 = vunpack.c.l.b16 %v3199
    %v3482 = vunpack.c.h.b16 %v3199
    %v3483 = vunpack.c.l.b16 %v3200
    %v3484 = vunpack.c.h.b16 %v3200
    %v3485 = vunpack.c.l.b16 %v3201
    %v3486 = vunpack.c.h.b16 %v3201
    %v3487 = vunpack.c.l.b16 %v3202
    %v3488 = vunpack.c.h.b16 %v3202
    %v3489 = vunpack.c.l.b16 %v3203
    %v3490 = vunpack.c.h.b16 %v3203
    %v3491 = vunpack.c.l.b16 %v3204
    %v3492 = vunpack.c.h.b16 %v3204
    %v3493 = vunpack.c.l.b16 %v3205
    %v3494 = vunpack.c.h.b16 %v3205
    %v3495 = vunpack.c.l.b16 %v3206
    %v3496 = vunpack.c.h.b16 %v3206
    %v3497 = vunpack.c.l.b16 %v3207
    %v3498 = vunpack.c.h.b16 %v3207
    %v3499 = vunpack.c.l.b16 %v3208
    %v3500 = vunpack.c.h.b16 %v3208
    %v3501 = vunpack.c.l.b16 %v3209
    %v3502 = vunpack.c.h.b16 %v3209
    %v3503 = vunpack.c.l.b16 %v3210
    %v3504 = vunpack.c.h.b16 %v3210
    %v3505 = vunpack.c.l.b16 %v3211
    %v3506 = vunpack.c.h.b16 %v3211
    %v3507 = vunpack.c.l.b16 %v3212
    %v3508 = vunpack.c.h.b16 %v3212
    %v3509 = vunpack.c.l.b16 %v3213
    %v3510 = vunpack.c.h.b16 %v3213
    %v3511 = vunpack.c.l.b16 %v3214
    %v3512 = vunpack.c.h.b16 %v3214
    %v3513 = vunpack.c.l.b16 %v3215
    %v3514 = vunpack.c.h.b16 %v3215
    %v3515 = vunpack.c.l.b16 %v3216
    %v3516 = vunpack.c.h.b16 %v3216
    %v3517 = vunpack.c.l.b16 %v3217
    %v3518 = vunpack.c.h.b16 %v3217
    %v3519 = vunpack.c.l.b16 %v3218
    %v3520 = vunpack.c.h.b16 %v3218
    %v3521 = vunpack.c.l.b16 %v3219
    %v3522 = vunpack.c.h.b16 %v3219
    %v3523 = vunpack.c.l.b16 %v3220
    %v3524 = vunpack.c.h.b16 %v3220
    %v3525 = vunpack.c.l.b16 %v3221
    %v3526 = vunpack.c.h.b16 %v3221
    %v3527 = vunpack.c.l.b16 %v3222
    %v3528 = vunpack.c.h.b16 %v3222
    %v3529 = vunpack.c.l.b16 %v3223
    %v3530 = vunpack.c.h.b16 %v3223
    %v3531 = vunpack.c.l.b16 %v3224
    %v3532 = vunpack.c.h.b16 %v3224
    %v3533 = vunpack.c.l.b16 %v3225
    %v3534 = vunpack.c.h.b16 %v3225
    %v3535 = vunpack.c.l.b16 %v3226
    %v3536 = vunpack.c.h.b16 %v3226
    %v3537 = vunpack.c.l.b16 %v3227
    %v3538 = vunpack.c.h.b16 %v3227
    %v3539 = vunpack.c.l.b16 %v3228
    %v3540 = vunpack.c.h.b16 %v3228
    %v3541 = vunpack.c.l.b16 %v3229
    %v3542 = vunpack.c.h.b16 %v3229
    %v3543 = vunpack.c.l.b16 %v3230
    %v3544 = vunpack.c.h.b16 %v3230
    %v3545 = vunpack.c.l.b16 %v3231
    %v3546 = vunpack.c.h.b16 %v3231
    %v3547 = vunpack.c.l.b16 %v3232
    %v3548 = vunpack.c.h.b16 %v3232
    %v3549 = vunpack.c.l.b16 %v3233
    %v3550 = vunpack.c.h.b16 %v3233
    %v3551 = vunpack.c.l.b16 %v3234
    %v3552 = vunpack.c.h.b16 %v3234
    %v3553 = vunpack.c.l.b16 %v3235
    %v3554 = vunpack.c.h.b16 %v3235
    %v3555 = vunpack.c.l.b16 %v3236
    %v3556 = vunpack.c.h.b16 %v3236
    %v3557 = vunpack.c.l.b16 %v3237
    %v3558 = vunpack.c.h.b16 %v3237
    %v3559 = vunpack.c.l.b16 %v3238
    %v3560 = vunpack.c.h.b16 %v3238
    %v3561 = vunpack.c.l.b16 %v3239
    %v3562 = vunpack.c.h.b16 %v3239
    %v3563 = vunpack.c.l.b16 %v3240
    %v3564 = vunpack.c.h.b16 %v3240
    %v3565 = vunpack.c.l.b16 %v3241
    %v3566 = vunpack.c.h.b16 %v3241
    %v3567 = vunpack.c.l.b16 %v3242
    %v3568 = vunpack.c.h.b16 %v3242
    %v3569 = vunpack.c.l.b16 %v3243
    %v3570 = vunpack.c.h.b16 %v3243
    %v3571 = vunpack.c.l.b16 %v3244
    %v3572 = vunpack.c.h.b16 %v3244
    %v3573 = vunpack.c.l.b16 %v3245
    %v3574 = vunpack.c.h.b16 %v3245
    %v3575 = vunpack.c.l.b16 %v3246
    %v3576 = vunpack.c.h.b16 %v3246
    %v3577 = vunpack.c.l.b16 %v3247
    %v3578 = vunpack.c.h.b16 %v3247
    %v3579 = vunpack.c.l.b16 %v3248
    %v3580 = vunpack.c.h.b16 %v3248
    %v3581 = vunpack.c.l.b16 %v3249
    %v3582 = vunpack.c.h.b16 %v3249
    %v3583 = vunpack.c.l.b16 %v3250
    %v3584 = vunpack.c.h.b16 %v3250
    %v3585 = vunpack.c.l.b16 %v3251
    %v3586 = vunpack.c.h.b16 %v3251
    %v3587 = vunpack.c.l.b16 %v3252
    %v3588 = vunpack.c.h.b16 %v3252
    %v3589 = vunpack.c.l.b16 %v3253
    %v3590 = vunpack.c.h.b16 %v3253
    %v3591 = vunpack.c.l.b16 %v3254
    %v3592 = vunpack.c.h.b16 %v3254
    %v3593 = vunpack.c.l.b16 %v3255
    %v3594 = vunpack.c.h.b16 %v3255
    %v3595 = vunpack.c.l.b16 %v3256
    %v3596 = vunpack.c.h.b16 %v3256
    %v3597 = vunpack.c.l.b16 %v3257
    %v3598 = vunpack.c.h.b16 %v3257
    %v3599 = vunpack.c.l.b16 %v3258
    %v3600 = vunpack.c.h.b16 %v3258
    %v3601 = vunpack.c.l.b16 %v3259
    %v3602 = vunpack.c.h.b16 %v3259
    %v3603 = vunpack.c.l.b16 %v3260
    %v3604 = vunpack.c.h.b16 %v3260
    %v3605 = vunpack.c.l.b16 %v3261
    %v3606 = vunpack.c.h.b16 %v3261
    %v3607 = vunpack.c.l.b16 %v3262
    %v3608 = vunpack.c.h.b16 %v3262
    %v3609 = vunpack.c.l.b16 %v3263
    %v3610 = vunpack.c.h.b16 %v3263
    %v3611 = vunpack.c.l.b16 %v3264
    %v3612 = vunpack.c.h.b16 %v3264
    %v3613 = vunpack.c.l.b16 %v3265
    %v3614 = vunpack.c.h.b16 %v3265
    %v3615 = vunpack.c.l.b16 %v3266
    %v3616 = vunpack.c.h.b16 %v3266
    %v3617 = vunpack.c.l.b16 %v3267
    %v3618 = vunpack.c.h.b16 %v3267
    %v3619 = vunpack.c.l.b16 %v3268
    %v3620 = vunpack.c.h.b16 %v3268
    %v3621 = vunpack.c.l.b16 %v3269
    %v3622 = vunpack.c.h.b16 %v3269
    %v3623 = vunpack.c.l.b16 %v3270
    %v3624 = vunpack.c.h.b16 %v3270
    %v3625 = vunpack.c.l.b16 %v3271
    %v3626 = vunpack.c.h.b16 %v3271
    %v3627 = vunpack.c.l.b16 %v3272
    %v3628 = vunpack.c.h.b16 %v3272
    %v3629 = vunpack.c.l.b16 %v3273
    %v3630 = vunpack.c.h.b16 %v3273
    %v3631 = vunpack.c.l.b16 %v3274
    %v3632 = vunpack.c.h.b16 %v3274
    %v3633 = vunpack.c.l.b16 %v3275
    %v3634 = vunpack.c.h.b16 %v3275
    %v3635 = vunpack.c.l.b16 %v3276
    %v3636 = vunpack.c.h.b16 %v3276
    %v3637 = vunpack.c.l.b16 %v3277
    %v3638 = vunpack.c.h.b16 %v3277
    %v3639 = vunpack.c.l.b16 %v3278
    %v3640 = vunpack.c.h.b16 %v3278
    %v3641 = vunpack.c.l.b16 %v3279
    %v3642 = vunpack.c.h.b16 %v3279
    %v3643 = vunpack.c.l.b16 %v3280
    %v3644 = vunpack.c.h.b16 %v3280
    %v3645 = vunpack.c.l.b16 %v3281
    %v3646 = vunpack.c.h.b16 %v3281
    %v3647 = vunpack.c.l.b16 %v3282
    %v3648 = vunpack.c.h.b16 %v3282
    %v3649 = vunpack.c.l.b16 %v3283
    %v3650 = vunpack.c.h.b16 %v3283
    %v3651 = vunpack.c.l.b16 %v3284
    %v3652 = vunpack.c.h.b16 %v3284
    %v3653 = vunpack.c.l.b16 %v3285
    %v3654 = vunpack.c.h.b16 %v3285
    %v3655 = vunpack.c.l.b16 %v3286
    %v3656 = vunpack.c.h.b16 %v3286
    %v3657 = vunpack.c.l.b16 %v3287
    %v3658 = vunpack.c.h.b16 %v3287
    %v3659 = vunpack.c.l.b16 %v3288
    %v3660 = vunpack.c.h.b16 %v3288
    %v3661 = vunpack.c.l.b16 %v3289
    %v3662 = vunpack.c.h.b16 %v3289
    %v3663 = vunpack.c.l.b16 %v3290
    %v3664 = vunpack.c.h.b16 %v3290
    %v3665 = vunpack.c.l.b16 %v3291
    %v3666 = vunpack.c.h.b16 %v3291
    %v3667 = vunpack.c.l.b16 %v3292
    %v3668 = vunpack.c.h.b16 %v3292
    %v3669 = vunpack.c.l.b16 %v3293
    %v3670 = vunpack.c.h.b16 %v3293
    %v3671 = vunpack.c.l.b16 %v3294
    %v3672 = vunpack.c.h.b16 %v3294
    %v3673 = vunpack.c.l.b16 %v3295
    %v3674 = vunpack.c.h.b16 %v3295
    %v3675 = vunpack.c.l.b16 %v3296
    %v3676 = vunpack.c.h.b16 %v3296
    %v3677 = vunpack.c.l.b16 %v3297
    %v3678 = vunpack.c.h.b16 %v3297
    %v3679 = vunpack.c.l.b16 %v3298
    %v3680 = vunpack.c.h.b16 %v3298
    %v3681 = vunpack.c.l.b16 %v3299
    %v3682 = vunpack.c.h.b16 %v3299
    %v3683 = vunpack.c.l.b16 %v3300
    %v3684 = vunpack.c.h.b16 %v3300
    %v3685 = vpack.c.b16 %v3433, %v3429
    %v3686 = vpack.c.b16 %v3434, %v3430
    %v3687 = vpack.c.b16 %v3435, %v3431
    %v3688 = vpack.c.b16 %v3436, %v3432
    %v3689 = vpack.c.b16 %v3441, %v3437
    %v3690 = vpack.c.b16 %v3442, %v3438
    %v3691 = vpack.c.b16 %v3443, %v3439
    %v3692 = vpack.c.b16 %v3444, %v3440
    %v3693 = vpack.c.b16 %v3449, %v3445
    %v3694 = vpack.c.b16 %v3450, %v3446
    %v3695 = vpack.c.b16 %v3451, %v3447
    %v3696 = vpack.c.b16 %v3452, %v3448
    %v3697 = vpack.c.b16 %v3457, %v3453
    %v3698 = vpack.c.b16 %v3458, %v3454
    %v3699 = vpack.c.b16 %v3459, %v3455
    %v3700 = vpack.c.b16 %v3460, %v3456
    %v3701 = vpack.c.b16 %v3465, %v3461
    %v3702 = vpack.c.b16 %v3466, %v3462
    %v3703 = vpack.c.b16 %v3467, %v3463
    %v3704 = vpack.c.b16 %v3468, %v3464
    %v3705 = vpack.c.b16 %v3473, %v3469
    %v3706 = vpack.c.b16 %v3474, %v3470
    %v3707 = vpack.c.b16 %v3475, %v3471
    %v3708 = vpack.c.b16 %v3476, %v3472
    %v3709 = vpack.c.b16 %v3481, %v3477
    %v3710 = vpack.c.b16 %v3482, %v3478
    %v3711 = vpack.c.b16 %v3483, %v3479
    %v3712 = vpack.c.b16 %v3484, %v3480
    %v3713 = vpack.c.b16 %v3489, %v3485
    %v3714 = vpack.c.b16 %v3490, %v3486
    %v3715 = vpack.c.b16 %v3491, %v3487
    %v3716 = vpack.c.b16 %v3492, %v3488
    %v3717 = vpack.c.b16 %v3497, %v3493
    %v3718 = vpack.c.b16 %v3498, %v3494
    %v3719 = vpack.c.b16 %v3499, %v3495
    %v3720 = vpack.c.b16 %v3500, %v3496
    %v3721 = vpack.c.b16 %v3505, %v3501
    %v3722 = vpack.c.b16 %v3506, %v3502
    %v3723 = vpack.c.b16 %v3507, %v3503
    %v3724 = vpack.c.b16 %v3508, %v3504
    %v3725 = vpack.c.b16 %v3513, %v3509
    %v3726 = vpack.c.b16 %v3514, %v3510
    %v3727 = vpack.c.b16 %v3515, %v3511
    %v3728 = vpack.c.b16 %v3516, %v3512
    %v3729 = vpack.c.b16 %v3521, %v3517
    %v3730 = vpack.c.b16 %v3522, %v3518
    %v3731 = vpack.c.b16 %v3523, %v3519
    %v3732 = vpack.c.b16 %v3524, %v3520
    %v3733 = vpack.c.b16 %v3529, %v3525
    %v3734 = vpack.c.b16 %v3530, %v3526
    %v3735 = vpack.c.b16 %v3531, %v3527
    %v3736 = vpack.c.b16 %v3532, %v3528
    %v3737 = vpack.c.b16 %v3537, %v3533
    %v3738 = vpack.c.b16 %v3538, %v3534
    %v3739 = vpack.c.b16 %v3539, %v3535
    %v3740 = vpack.c.b16 %v3540, %v3536
    %v3741 = vpack.c.b16 %v3545, %v3541
    %v3742 = vpack.c.b16 %v3546, %v3542
    %v3743 = vpack.c.b16 %v3547, %v3543
    %v3744 = vpack.c.b16 %v3548, %v3544
    %v3745 = vpack.c.b16 %v3553, %v3549
    %v3746 = vpack.c.b16 %v3554, %v3550
    %v3747 = vpack.c.b16 %v3555, %v3551
    %v3748 = vpack.c.b16 %v3556, %v3552
    %v3749 = vpack.c.b16 %v3561, %v3557
    %v3750 = vpack.c.b16 %v3562, %v3558
    %v3751 = vpack.c.b16 %v3563, %v3559
    %v3752 = vpack.c.b16 %v3564, %v3560
    %v3753 = vpack.c.b16 %v3569, %v3565
    %v3754 = vpack.c.b16 %v3570, %v3566
    %v3755 = vpack.c.b16 %v3571, %v3567
    %v3756 = vpack.c.b16 %v3572, %v3568
    %v3757 = vpack.c.b16 %v3577, %v3573
    %v3758 = vpack.c.b16 %v3578, %v3574
    %v3759 = vpack.c.b16 %v3579, %v3575
    %v3760 = vpack.c.b16 %v3580, %v3576
    %v3761 = vpack.c.b16 %v3585, %v3581
    %v3762 = vpack.c.b16 %v3586, %v3582
    %v3763 = vpack.c.b16 %v3587, %v3583
    %v3764 = vpack.c.b16 %v3588, %v3584
    %v3765 = vpack.c.b16 %v3593, %v3589
    %v3766 = vpack.c.b16 %v3594, %v3590
    %v3767 = vpack.c.b16 %v3595, %v3591
    %v3768 = vpack.c.b16 %v3596, %v3592
    %v3769 = vpack.c.b16 %v3601, %v3597
    %v3770 = vpack.c.b16 %v3602, %v3598
    %v3771 = vpack.c.b16 %v3603, %v3599
    %v3772 = vpack.c.b16 %v3604, %v3600
    %v3773 = vpack.c.b16 %v3609, %v3605
    %v3774 = vpack.c.b16 %v3610, %v3606
    %v3775 = vpack.c.b16 %v3611, %v3607
    %v3776 = vpack.c.b16 %v3612, %v3608
    %v3777 = vpack.c.b16 %v3617, %v3613
    %v3778 = vpack.c.b16 %v3618, %v3614
    %v3779 = vpack.c.b16 %v3619, %v3615
    %v3780 = vpack.c.b16 %v3620, %v3616
    %v3781 = vpack.c.b16 %v3625, %v3621
    %v3782 = vpack.c.b16 %v3626, %v3622
    %v3783 = vpack.c.b16 %v3627, %v3623
    %v3784 = vpack.c.b16 %v3628, %v3624
    %v3785 = vpack.c.b16 %v3633, %v3629
    %v3786 = vpack.c.b16 %v3634, %v3630
    %v3787 = vpack.c.b16 %v3635, %v3631
    %v3788 = vpack.c.b16 %v3636, %v3632
    %v3789 = vpack.c.b16 %v3641, %v3637
    %v3790 = vpack.c.b16 %v3642, %v3638
    %v3791 = vpack.c.b16 %v3643, %v3639
    %v3792 = vpack.c.b16 %v3644, %v3640
    %v3793 = vpack.c.b16 %v3649, %v3645
    %v3794 = vpack.c.b16 %v3650, %v3646
    %v3795 = vpack.c.b16 %v3651, %v3647
    %v3796 = vpack.c.b16 %v3652, %v3648
    %v3797 = vpack.c.b16 %v3657, %v3653
    %v3798 = vpack.c.b16 %v3658, %v3654
    %v3799 = vpack.c.b16 %v3659, %v3655
    %v3800 = vpack.c.b16 %v3660, %v3656
    %v3801 = vpack.c.b16 %v3665, %v3661
    %v3802 = vpack.c.b16 %v3666, %v3662
    %v3803 = vpack.c.b16 %v3667, %v3663
    %v3804 = vpack.c.b16 %v3668, %v3664
    %v3805 = vpack.c.b16 %v3673, %v3669
    %v3806 = vpack.c.b16 %v3674, %v3670
    %v3807 = vpack.c.b16 %v3675, %v3671
    %v3808 = vpack.c.b16 %v3676, %v3672
    %v3809 = vpack.c.b16 %v3681, %v3677
    %v3810 = vpack.c.b16 %v3682, %v3678
    %v3811 = vpack.c.b16 %v3683, %v3679
    %v3812 = vpack.c.b16 %v3684, %v3680
    %3941 = vmatprep.subr.bf16.mxu0 %v3686
    %3942 = vmatpush1.bf16.msra.mxu0 %v3685
    %3943 = vmatprep.subr.bf16.mxu0 %v3690
    %3944 = vmatpush1.bf16.msra.mxu0 %v3689
    %3945 = vmatprep.subr.bf16.mxu0 %v3694
    %3946 = vmatpush1.bf16.msra.mxu0 %v3693
    %3947 = vmatprep.subr.bf16.mxu0 %v3698
    %3948 = vmatpush1.bf16.msra.mxu0 %v3697
    %3949 = vmatprep.subr.bf16.mxu0 %v3702
    %3950 = vmatpush1.bf16.msra.mxu0 %v3701
    %3951 = vmatprep.subr.bf16.mxu0 %v3706
    %3952 = vmatpush1.bf16.msra.mxu0 %v3705
    %3953 = vmatprep.subr.bf16.mxu0 %v3710
    %3954 = vmatpush1.bf16.msra.mxu0 %v3709
    %3955 = vmatprep.subr.bf16.mxu0 %v3714
    %3956 = vmatpush1.bf16.msra.mxu0 %v3713
    %3957 = vmatprep.subr.bf16.mxu0 %v3718
    %3958 = vmatpush1.bf16.msra.mxu0 %v3717
    %3959 = vmatprep.subr.bf16.mxu0 %v3722
    %3960 = vmatpush1.bf16.msra.mxu0 %v3721
    %3961 = vmatprep.subr.bf16.mxu0 %v3726
    %3962 = vmatpush1.bf16.msra.mxu0 %v3725
    %3963 = vmatprep.subr.bf16.mxu0 %v3730
    %3964 = vmatpush1.bf16.msra.mxu0 %v3729
    %3965 = vmatprep.subr.bf16.mxu0 %v3734
    %3966 = vmatpush1.bf16.msra.mxu0 %v3733
    %3967 = vmatprep.subr.bf16.mxu0 %v3738
    %3968 = vmatpush1.bf16.msra.mxu0 %v3737
    %3969 = vmatprep.subr.bf16.mxu0 %v3742
    %3970 = vmatpush1.bf16.msra.mxu0 %v3741
    %3971 = vmatprep.subr.bf16.mxu0 %v3746
    %3972 = vmatpush1.bf16.msra.mxu0 %v3745
    %3973 = vmatprep.mubr.bf16.mxu0 %v3170
    %3974 = vmatmul.mubr.bf16.gmra.mrb[0].mxu0 %v3169
    %v3975 = vpop.f32.mrb[0].mxu0
    %v3976 = vadd.f32 0.0, %v3975
    %v3977 = vpop.f32.mrb[0].mxu0
    %v3978 = vadd.f32 0.0, %v3977
    %v3979 = vpop.f32.mrb[0].mxu0
    %v3980 = vadd.f32 0.0, %v3979
    %v3981 = vpop.f32.mrb[0].mxu0
    %v3982 = vadd.f32 0.0, %v3981
    %3983 = vdwg.mxu0
    %3984 = vmatprep.subr.bf16.mxu0 %v3750
    %3985 = vmatpush1.bf16.msra.mxu0 %v3749
    %3986 = vmatprep.subr.bf16.mxu0 %v3754
    %3987 = vmatpush1.bf16.msra.mxu0 %v3753
    %3988 = vmatprep.subr.bf16.mxu0 %v3758
    %3989 = vmatpush1.bf16.msra.mxu0 %v3757
    %3990 = vmatprep.subr.bf16.mxu0 %v3762
    %3991 = vmatpush1.bf16.msra.mxu0 %v3761
    %3992 = vmatprep.subr.bf16.mxu0 %v3766
    %3993 = vmatpush1.bf16.msra.mxu0 %v3765
    %3994 = vmatprep.subr.bf16.mxu0 %v3770
    %3995 = vmatpush1.bf16.msra.mxu0 %v3769
    %3996 = vmatprep.subr.bf16.mxu0 %v3774
    %3997 = vmatpush1.bf16.msra.mxu0 %v3773
    %3998 = vmatprep.subr.bf16.mxu0 %v3778
    %3999 = vmatpush1.bf16.msra.mxu0 %v3777
    %4000 = vmatprep.subr.bf16.mxu0 %v3782
    %4001 = vmatpush1.bf16.msra.mxu0 %v3781
    %4002 = vmatprep.subr.bf16.mxu0 %v3786
    %4003 = vmatpush1.bf16.msra.mxu0 %v3785
    %4004 = vmatprep.subr.bf16.mxu0 %v3790
    %4005 = vmatpush1.bf16.msra.mxu0 %v3789
    %4006 = vmatprep.subr.bf16.mxu0 %v3794
    %4007 = vmatpush1.bf16.msra.mxu0 %v3793
    %4008 = vmatprep.subr.bf16.mxu0 %v3798
    %4009 = vmatpush1.bf16.msra.mxu0 %v3797
    %4010 = vmatprep.subr.bf16.mxu0 %v3802
    %4011 = vmatpush1.bf16.msra.mxu0 %v3801
    %4012 = vmatprep.subr.bf16.mxu0 %v3806
    %4013 = vmatpush1.bf16.msra.mxu0 %v3805
    %4014 = vmatprep.subr.bf16.mxu0 %v3810
    %4015 = vmatpush1.bf16.msra.mxu0 %v3809
    %4016 = vmatprep.mubr.bf16.mxu0 %v3172
    %4017 = vmatmul.mubr.bf16.gmra.mrb[0].mxu0 %v3171
    %v4018 = vpop.f32.mrb[0].mxu0
    %v4019 = vadd.f32 %v3976, %v4018
    %v4020 = vpop.f32.mrb[0].mxu0
    %v4021 = vadd.f32 %v3978, %v4020
    %v4022 = vpop.f32.mrb[0].mxu0
    %v4023 = vadd.f32 %v3980, %v4022
    %v4024 = vpop.f32.mrb[0].mxu0
    %v4025 = vadd.f32 %v3982, %v4024
    %4026 = vdwg.mxu0
    %4027 = vmatprep.subr.bf16.mxu0 %v3688
    %4028 = vmatpush1.bf16.msra.mxu0 %v3687
    %4029 = vmatprep.subr.bf16.mxu0 %v3692
    %4030 = vmatpush1.bf16.msra.mxu0 %v3691
    %4031 = vmatprep.subr.bf16.mxu0 %v3696
    %4032 = vmatpush1.bf16.msra.mxu0 %v3695
    %4033 = vmatprep.subr.bf16.mxu0 %v3700
    %4034 = vmatpush1.bf16.msra.mxu0 %v3699
    %4035 = vmatprep.subr.bf16.mxu0 %v3704
    %4036 = vmatpush1.bf16.msra.mxu0 %v3703
    %4037 = vmatprep.subr.bf16.mxu0 %v3708
    %4038 = vmatpush1.bf16.msra.mxu0 %v3707
    %4039 = vmatprep.subr.bf16.mxu0 %v3712
    %4040 = vmatpush1.bf16.msra.mxu0 %v3711
    %4041 = vmatprep.subr.bf16.mxu0 %v3716
    %4042 = vmatpush1.bf16.msra.mxu0 %v3715
    %4043 = vmatprep.subr.bf16.mxu0 %v3720
    %4044 = vmatpush1.bf16.msra.mxu0 %v3719
    %4045 = vmatprep.subr.bf16.mxu0 %v3724
    %4046 = vmatpush1.bf16.msra.mxu0 %v3723
    %4047 = vmatprep.subr.bf16.mxu0 %v3728
    %4048 = vmatpush1.bf16.msra.mxu0 %v3727
    %4049 = vmatprep.subr.bf16.mxu0 %v3732
    %4050 = vmatpush1.bf16.msra.mxu0 %v3731
    %4051 = vmatprep.subr.bf16.mxu0 %v3736
    %4052 = vmatpush1.bf16.msra.mxu0 %v3735
    %4053 = vmatprep.subr.bf16.mxu0 %v3740
    %4054 = vmatpush1.bf16.msra.mxu0 %v3739
    %4055 = vmatprep.subr.bf16.mxu0 %v3744
    %4056 = vmatpush1.bf16.msra.mxu0 %v3743
    %4057 = vmatprep.subr.bf16.mxu0 %v3748
    %4058 = vmatpush1.bf16.msra.mxu0 %v3747
    %4059 = vmatprep.mubr.bf16.mxu0 %v3170
    %4060 = vmatmul.mubr.bf16.gmra.mrb[0].mxu0 %v3169
    %v4061 = vpop.f32.mrb[0].mxu0
    %v4062 = vadd.f32 0.0, %v4061
    %v4063 = vpop.f32.mrb[0].mxu0
    %v4064 = vadd.f32 0.0, %v4063
    %v4065 = vpop.f32.mrb[0].mxu0
    %v4066 = vadd.f32 0.0, %v4065
    %v4067 = vpop.f32.mrb[0].mxu0
    %v4068 = vadd.f32 0.0, %v4067
    %4069 = vdwg.mxu0
    %4070 = vmatprep.subr.bf16.mxu0 %v3752
    %4071 = vmatpush1.bf16.msra.mxu0 %v3751
    %4072 = vmatprep.subr.bf16.mxu0 %v3756
    %4073 = vmatpush1.bf16.msra.mxu0 %v3755
    %4074 = vmatprep.subr.bf16.mxu0 %v3760
    %4075 = vmatpush1.bf16.msra.mxu0 %v3759
    %4076 = vmatprep.subr.bf16.mxu0 %v3764
    %4077 = vmatpush1.bf16.msra.mxu0 %v3763
    %4078 = vmatprep.subr.bf16.mxu0 %v3768
    %4079 = vmatpush1.bf16.msra.mxu0 %v3767
    %4080 = vmatprep.subr.bf16.mxu0 %v3772
    %4081 = vmatpush1.bf16.msra.mxu0 %v3771
    %4082 = vmatprep.subr.bf16.mxu0 %v3776
    %4083 = vmatpush1.bf16.msra.mxu0 %v3775
    %4084 = vmatprep.subr.bf16.mxu0 %v3780
    %4085 = vmatpush1.bf16.msra.mxu0 %v3779
    %4086 = vmatprep.subr.bf16.mxu0 %v3784
    %4087 = vmatpush1.bf16.msra.mxu0 %v3783
    %4088 = vmatprep.subr.bf16.mxu0 %v3788
    %4089 = vmatpush1.bf16.msra.mxu0 %v3787
    %4090 = vmatprep.subr.bf16.mxu0 %v3792
    %4091 = vmatpush1.bf16.msra.mxu0 %v3791
    %4092 = vmatprep.subr.bf16.mxu0 %v3796
    %4093 = vmatpush1.bf16.msra.mxu0 %v3795
    %4094 = vmatprep.subr.bf16.mxu0 %v3800
    %4095 = vmatpush1.bf16.msra.mxu0 %v3799
    %4096 = vmatprep.subr.bf16.mxu0 %v3804
    %4097 = vmatpush1.bf16.msra.mxu0 %v3803
    %4098 = vmatprep.subr.bf16.mxu0 %v3808
    %4099 = vmatpush1.bf16.msra.mxu0 %v3807
    %4100 = vmatprep.subr.bf16.mxu0 %v3812
    %4101 = vmatpush1.bf16.msra.mxu0 %v3811
    %4102 = vmatprep.mubr.bf16.mxu0 %v3172
    %4103 = vmatmul.mubr.bf16.gmra.mrb[0].mxu0 %v3171
    %v4104 = vpop.f32.mrb[0].mxu0
    %v4105 = vadd.f32 %v4062, %v4104
    %v4106 = vpop.f32.mrb[0].mxu0
    %v4107 = vadd.f32 %v4064, %v4106
    %v4108 = vpop.f32.mrb[0].mxu0
    %v4109 = vadd.f32 %v4066, %v4108
    %v4110 = vpop.f32.mrb[0].mxu0
    %v4111 = vadd.f32 %v4068, %v4110
    %4112 = vdwg.mxu0
    %s4113 = scalar_lea.vmem [#allocation11], 2
    %v4114 = vld [vmem:[%s4113] ss:$4 sm:$0xf]
    %s4115 = scalar_lea.vmem [#allocation11], 3
    %v4116 = vld [vmem:[%s4115] ss:$4 sm:$0xf]
    %v4117 = vadd.f32 %v4019, %v4021
    %v4118 = vadd.f32 %v4117, %v4105
    %v4119 = vadd.f32 %v4118, %v4107
    %4120 = vadd.xlane.f32.xlu0 %v4119
    %v4121 = vpop.xlane.xlu0 %4120
    %v4122 = vadd.f32 %v4023, %v4025
    %v4123 = vadd.f32 %v4122, %v4109
    %v4124 = vadd.f32 %v4123, %v4111
    %4125 = vadd.xlane.f32.xlu0 %v4124
    %v4126 = vpop.xlane.xlu0 %4125
    %v4127 = vmul.f32 %v4019, %v4019
    %v4128 = vmul.f32 %v4021, %v4021
    %v4129 = vmul.f32 %v4105, %v4105
    %v4130 = vmul.f32 %v4107, %v4107
    %v4131 = vmul.f32 %v4023, %v4023
    %v4132 = vmul.f32 %v4025, %v4025
    %v4133 = vmul.f32 %v4109, %v4109
    %v4134 = vmul.f32 %v4111, %v4111
    %v4135 = vadd.f32 %v4127, %v4128
    %v4136 = vadd.f32 %v4135, %v4129
    %v4137 = vadd.f32 %v4136, %v4130
    %4138 = vadd.xlane.f32.xlu0 %v4137
    %v4139 = vpop.xlane.xlu0 %4138
    %v4140 = vadd.f32 %v4131, %v4132
    %v4141 = vadd.f32 %v4140, %v4133
    %v4142 = vadd.f32 %v4141, %v4134
    %4143 = vadd.xlane.f32.xlu0 %v4142
    %v4144 = vpop.xlane.xlu0 %4143
    %v4145 = vmul.f32 %v4121, 0.001953125
    %v4146 = vmul.f32 %v4126, 0.001953125
    %v4147 = vmul.f32 %v4139, 0.001953125
    %v4148 = vmul.f32 %v4144, 0.001953125
    %v4149 = vmul.f32 %v4145, %v4145
    %v4150 = vmul.f32 %v4146, %v4146
    %v4151 = vsub.f32 %v4147, %v4149
    %v4152 = vsub.f32 %v4148, %v4150
    %v4153 = vmax.f32 %v4151, 0.0
    %v4154 = vmax.f32 %v4152, 0.0
    %v4155 = vadd.f32 %v4153, 0.001
    %v4156 = vadd.f32 %v4154, 0.001
    %v4157 = vrsqrt.pop %v4155
    %v4158 = vrsqrt.pop %v4156
    %v4159 = vsub.f32 %v4019, %v4145
    %v4160 = vsub.f32 %v4021, %v4145
    %v4161 = vsub.f32 %v4105, %v4145
    %v4162 = vsub.f32 %v4107, %v4145
    %v4163 = vsub.f32 %v4023, %v4146
    %v4164 = vsub.f32 %v4025, %v4146
    %v4165 = vsub.f32 %v4109, %v4146
    %v4166 = vsub.f32 %v4111, %v4146
    %v4167 = vmul.f32 %v4159, %v4157
    %v4168 = vmul.f32 %v4160, %v4157
    %v4169 = vmul.f32 %v4161, %v4157
    %v4170 = vmul.f32 %v4162, %v4157
    %v4171 = vmul.f32 %v4163, %v4158
    %v4172 = vmul.f32 %v4164, %v4158
    %v4173 = vmul.f32 %v4165, %v4158
    %v4174 = vmul.f32 %v4166, %v4158
    %v4176 = vlaneseq
    %v4177 = vshrl.u32 %v4176, 7
    %v4178 = vsub.s32 0, %v4177
    %v4179 = vrot.slane %v4114, %v4178
    %v4180 = vlaneseq
    %v4181 = vshrl.u32 %v4180, 7
    %v4182 = vsub.s32 1, %v4181
    %v4183 = vrot.slane %v4114, %v4182
    %v4184 = vlaneseq
    %v4185 = vshrl.u32 %v4184, 7
    %v4186 = vsub.s32 2, %v4185
    %v4187 = vrot.slane %v4114, %v4186
    %v4188 = vlaneseq
    %v4189 = vshrl.u32 %v4188, 7
    %v4190 = vsub.s32 3, %v4189
    %v4191 = vrot.slane %v4114, %v4190
    %v4196 = vmul.f32 %v4167, %v4179
    %v4197 = vmul.f32 %v4168, %v4183
    %v4198 = vmul.f32 %v4169, %v4187
    %v4199 = vmul.f32 %v4170, %v4191
    %v4200 = vmul.f32 %v4171, %v4179
    %v4201 = vmul.f32 %v4172, %v4183
    %v4202 = vmul.f32 %v4173, %v4187
    %v4203 = vmul.f32 %v4174, %v4191
    %v4205 = vlaneseq
    %v4206 = vshrl.u32 %v4205, 7
    %v4207 = vsub.s32 0, %v4206
    %v4208 = vrot.slane %v4116, %v4207
    %v4209 = vlaneseq
    %v4210 = vshrl.u32 %v4209, 7
    %v4211 = vsub.s32 1, %v4210
    %v4212 = vrot.slane %v4116, %v4211
    %v4213 = vlaneseq
    %v4214 = vshrl.u32 %v4213, 7
    %v4215 = vsub.s32 2, %v4214
    %v4216 = vrot.slane %v4116, %v4215
    %v4217 = vlaneseq
    %v4218 = vshrl.u32 %v4217, 7
    %v4219 = vsub.s32 3, %v4218
    %v4220 = vrot.slane %v4116, %v4219
    %v4225 = vadd.f32 %v4196, %v4208
    %v4226 = vadd.f32 %v4197, %v4212
    %v4227 = vadd.f32 %v4198, %v4216
    %v4228 = vadd.f32 %v4199, %v4220
    %v4229 = vadd.f32 %v4200, %v4208
    %v4230 = vadd.f32 %v4201, %v4212
    %v4231 = vadd.f32 %v4202, %v4216
    %v4232 = vadd.f32 %v4203, %v4220
    %v4233 = vmul.f32 %v4225, 0.5
    %v4234 = vmul.f32 %v4226, 0.5
    %v4235 = vmul.f32 %v4227, 0.5
    %v4236 = vmul.f32 %v4228, 0.5
    %v4237 = vmul.f32 %v4229, 0.5
    %v4238 = vmul.f32 %v4230, 0.5
    %v4239 = vmul.f32 %v4231, 0.5
    %v4240 = vmul.f32 %v4232, 0.5
    %v4241 = vtanh.pop %v4233
    %v4242 = vtanh.pop %v4234
    %v4243 = vtanh.pop %v4235
    %v4244 = vtanh.pop %v4236
    %v4245 = vtanh.pop %v4237
    %v4246 = vtanh.pop %v4238
    %v4247 = vtanh.pop %v4239
    %v4248 = vtanh.pop %v4240
    %v4249 = vmul.f32 %v4241, 0.5
    %v4250 = vmul.f32 %v4242, 0.5
    %v4251 = vmul.f32 %v4243, 0.5
    %v4252 = vmul.f32 %v4244, 0.5
    %v4253 = vmul.f32 %v4245, 0.5
    %v4254 = vmul.f32 %v4246, 0.5
    %v4255 = vmul.f32 %v4247, 0.5
    %v4256 = vmul.f32 %v4248, 0.5
    %v4257 = vadd.f32 %v4249, 0.5
    %v4258 = vadd.f32 %v4250, 0.5
    %v4259 = vadd.f32 %v4251, 0.5
    %v4260 = vadd.f32 %v4252, 0.5
    %v4261 = vadd.f32 %v4253, 0.5
    %v4262 = vadd.f32 %v4254, 0.5
    %v4263 = vadd.f32 %v4255, 0.5
    %v4264 = vadd.f32 %v4256, 0.5
    %v4265 = vmul.f32 %v4225, %v4257
    %v4266 = vmul.f32 %v4226, %v4258
    %v4267 = vmul.f32 %v4227, %v4259
    %v4268 = vmul.f32 %v4228, %v4260
    %v4269 = vmul.f32 %v4229, %v4261
    %v4270 = vmul.f32 %v4230, %v4262
    %v4271 = vmul.f32 %v4231, %v4263
    %v4272 = vmul.f32 %v4232, %v4264
    %v4273 = vpack.c.bf16 %v4269, %v4265
    %v4274 = vpack.c.bf16 %v4270, %v4266
    %v4275 = vpack.c.bf16 %v4271, %v4267
    %v4276 = vpack.c.bf16 %v4272, %v4268
    %v4277 = vld [vmem:[#allocation10] sm:$0xff]
    %v4278 = vld [vmem:[#allocation10 + $0x8] sm:$0xff]
    %v4279 = vld [vmem:[#allocation10 + $0x10] sm:$0xff]
    %v4280 = vld [vmem:[#allocation10 + $0x18] sm:$0xff]
    %v4281 = vld [vmem:[#allocation10 + $0x20] sm:$0xff]
    %v4282 = vld [vmem:[#allocation10 + $0x28] sm:$0xff]
    %v4283 = vld [vmem:[#allocation10 + $0x30] sm:$0xff]
    %v4284 = vld [vmem:[#allocation10 + $0x38] sm:$0xff]
    %v4285 = vld [vmem:[#allocation10 + $0x40] sm:$0xff]
    %v4286 = vld [vmem:[#allocation10 + $0x48] sm:$0xff]
    %v4287 = vld [vmem:[#allocation10 + $0x50] sm:$0xff]
    %v4288 = vld [vmem:[#allocation10 + $0x58] sm:$0xff]
    %v4289 = vld [vmem:[#allocation10 + $0x60] sm:$0xff]
    %v4290 = vld [vmem:[#allocation10 + $0x68] sm:$0xff]
    %v4291 = vld [vmem:[#allocation10 + $0x70] sm:$0xff]
    %v4292 = vld [vmem:[#allocation10 + $0x78] sm:$0xff]
    %v4293 = vld [vmem:[#allocation10 + $0x80] sm:$0xff]
    %v4294 = vld [vmem:[#allocation10 + $0x88] sm:$0xff]
    %v4295 = vld [vmem:[#allocation10 + $0x90] sm:$0xff]
    %v4296 = vld [vmem:[#allocation10 + $0x98] sm:$0xff]
    %v4297 = vld [vmem:[#allocation10 + $0xa0] sm:$0xff]
    %v4298 = vld [vmem:[#allocation10 + $0xa8] sm:$0xff]
    %v4299 = vld [vmem:[#allocation10 + $0xb0] sm:$0xff]
    %v4300 = vld [vmem:[#allocation10 + $0xb8] sm:$0xff]
    %v4301 = vld [vmem:[#allocation10 + $0xc0] sm:$0xff]
    %v4302 = vld [vmem:[#allocation10 + $0xc8] sm:$0xff]
    %v4303 = vld [vmem:[#allocation10 + $0xd0] sm:$0xff]
    %v4304 = vld [vmem:[#allocation10 + $0xd8] sm:$0xff]
    %v4305 = vld [vmem:[#allocation10 + $0xe0] sm:$0xff]
    %v4306 = vld [vmem:[#allocation10 + $0xe8] sm:$0xff]
    %v4307 = vld [vmem:[#allocation10 + $0xf0] sm:$0xff]
    %v4308 = vld [vmem:[#allocation10 + $0xf8] sm:$0xff]
    %v4309 = vld [vmem:[#allocation10 + $0x100] sm:$0xff]
    %v4310 = vld [vmem:[#allocation10 + $0x108] sm:$0xff]
    %v4311 = vld [vmem:[#allocation10 + $0x110] sm:$0xff]
    %v4312 = vld [vmem:[#allocation10 + $0x118] sm:$0xff]
    %v4313 = vld [vmem:[#allocation10 + $0x120] sm:$0xff]
    %v4314 = vld [vmem:[#allocation10 + $0x128] sm:$0xff]
    %v4315 = vld [vmem:[#allocation10 + $0x130] sm:$0xff]
    %v4316 = vld [vmem:[#allocation10 + $0x138] sm:$0xff]
    %v4317 = vld [vmem:[#allocation10 + $0x140] sm:$0xff]
    %v4318 = vld [vmem:[#allocation10 + $0x148] sm:$0xff]
    %v4319 = vld [vmem:[#allocation10 + $0x150] sm:$0xff]
    %v4320 = vld [vmem:[#allocation10 + $0x158] sm:$0xff]
    %v4321 = vld [vmem:[#allocation10 + $0x160] sm:$0xff]
    %v4322 = vld [vmem:[#allocation10 + $0x168] sm:$0xff]
    %v4323 = vld [vmem:[#allocation10 + $0x170] sm:$0xff]
    %v4324 = vld [vmem:[#allocation10 + $0x178] sm:$0xff]
    %v4325 = vld [vmem:[#allocation10 + $0x180] sm:$0xff]
    %v4326 = vld [vmem:[#allocation10 + $0x188] sm:$0xff]
    %v4327 = vld [vmem:[#allocation10 + $0x190] sm:$0xff]
    %v4328 = vld [vmem:[#allocation10 + $0x198] sm:$0xff]
    %v4329 = vld [vmem:[#allocation10 + $0x1a0] sm:$0xff]
    %v4330 = vld [vmem:[#allocation10 + $0x1a8] sm:$0xff]
    %v4331 = vld [vmem:[#allocation10 + $0x1b0] sm:$0xff]
    %v4332 = vld [vmem:[#allocation10 + $0x1b8] sm:$0xff]
    %v4333 = vld [vmem:[#allocation10 + $0x1c0] sm:$0xff]
    %v4334 = vld [vmem:[#allocation10 + $0x1c8] sm:$0xff]
    %v4335 = vld [vmem:[#allocation10 + $0x1d0] sm:$0xff]
    %v4336 = vld [vmem:[#allocation10 + $0x1d8] sm:$0xff]
    %v4337 = vld [vmem:[#allocation10 + $0x1e0] sm:$0xff]
    %v4338 = vld [vmem:[#allocation10 + $0x1e8] sm:$0xff]
    %v4339 = vld [vmem:[#allocation10 + $0x1f0] sm:$0xff]
    %v4340 = vld [vmem:[#allocation10 + $0x1f8] sm:$0xff]
    %v4341 = vld [vmem:[#allocation13] sm:$0x3]
    %v4343 = vlaneseq
    %v4344 = vshrl.u32 %v4343, 7
    %v4345 = vsub.s32 0, %v4344
    %v4346 = vrot.slane %v4341, %v4345
    %v4347 = vlaneseq
    %v4348 = vshrl.u32 %v4347, 7
    %v4349 = vsub.s32 1, %v4348
    %v4350 = vrot.slane %v4341, %v4349
    %v4417 = vunpack.c.l.b16 %v4277
    %v4418 = vunpack.c.h.b16 %v4277
    %v4419 = vunpack.c.l.b16 %v4278
    %v4420 = vunpack.c.h.b16 %v4278
    %v4421 = vunpack.c.l.b16 %v4279
    %v4422 = vunpack.c.h.b16 %v4279
    %v4423 = vunpack.c.l.b16 %v4280
    %v4424 = vunpack.c.h.b16 %v4280
    %v4425 = vunpack.c.l.b16 %v4281
    %v4426 = vunpack.c.h.b16 %v4281
    %v4427 = vunpack.c.l.b16 %v4282
    %v4428 = vunpack.c.h.b16 %v4282
    %v4429 = vunpack.c.l.b16 %v4283
    %v4430 = vunpack.c.h.b16 %v4283
    %v4431 = vunpack.c.l.b16 %v4284
    %v4432 = vunpack.c.h.b16 %v4284
    %v4433 = vunpack.c.l.b16 %v4285
    %v4434 = vunpack.c.h.b16 %v4285
    %v4435 = vunpack.c.l.b16 %v4286
    %v4436 = vunpack.c.h.b16 %v4286
    %v4437 = vunpack.c.l.b16 %v4287
    %v4438 = vunpack.c.h.b16 %v4287
    %v4439 = vunpack.c.l.b16 %v4288
    %v4440 = vunpack.c.h.b16 %v4288
    %v4441 = vunpack.c.l.b16 %v4289
    %v4442 = vunpack.c.h.b16 %v4289
    %v4443 = vunpack.c.l.b16 %v4290
    %v4444 = vunpack.c.h.b16 %v4290
    %v4445 = vunpack.c.l.b16 %v4291
    %v4446 = vunpack.c.h.b16 %v4291
    %v4447 = vunpack.c.l.b16 %v4292
    %v4448 = vunpack.c.h.b16 %v4292
    %v4449 = vunpack.c.l.b16 %v4293
    %v4450 = vunpack.c.h.b16 %v4293
    %v4451 = vunpack.c.l.b16 %v4294
    %v4452 = vunpack.c.h.b16 %v4294
    %v4453 = vunpack.c.l.b16 %v4295
    %v4454 = vunpack.c.h.b16 %v4295
    %v4455 = vunpack.c.l.b16 %v4296
    %v4456 = vunpack.c.h.b16 %v4296
    %v4457 = vunpack.c.l.b16 %v4297
    %v4458 = vunpack.c.h.b16 %v4297
    %v4459 = vunpack.c.l.b16 %v4298
    %v4460 = vunpack.c.h.b16 %v4298
    %v4461 = vunpack.c.l.b16 %v4299
    %v4462 = vunpack.c.h.b16 %v4299
    %v4463 = vunpack.c.l.b16 %v4300
    %v4464 = vunpack.c.h.b16 %v4300
    %v4465 = vunpack.c.l.b16 %v4301
    %v4466 = vunpack.c.h.b16 %v4301
    %v4467 = vunpack.c.l.b16 %v4302
    %v4468 = vunpack.c.h.b16 %v4302
    %v4469 = vunpack.c.l.b16 %v4303
    %v4470 = vunpack.c.h.b16 %v4303
    %v4471 = vunpack.c.l.b16 %v4304
    %v4472 = vunpack.c.h.b16 %v4304
    %v4473 = vunpack.c.l.b16 %v4305
    %v4474 = vunpack.c.h.b16 %v4305
    %v4475 = vunpack.c.l.b16 %v4306
    %v4476 = vunpack.c.h.b16 %v4306
    %v4477 = vunpack.c.l.b16 %v4307
    %v4478 = vunpack.c.h.b16 %v4307
    %v4479 = vunpack.c.l.b16 %v4308
    %v4480 = vunpack.c.h.b16 %v4308
    %v4481 = vunpack.c.l.b16 %v4309
    %v4482 = vunpack.c.h.b16 %v4309
    %v4483 = vunpack.c.l.b16 %v4310
    %v4484 = vunpack.c.h.b16 %v4310
    %v4485 = vunpack.c.l.b16 %v4311
    %v4486 = vunpack.c.h.b16 %v4311
    %v4487 = vunpack.c.l.b16 %v4312
    %v4488 = vunpack.c.h.b16 %v4312
    %v4489 = vunpack.c.l.b16 %v4313
    %v4490 = vunpack.c.h.b16 %v4313
    %v4491 = vunpack.c.l.b16 %v4314
    %v4492 = vunpack.c.h.b16 %v4314
    %v4493 = vunpack.c.l.b16 %v4315
    %v4494 = vunpack.c.h.b16 %v4315
    %v4495 = vunpack.c.l.b16 %v4316
    %v4496 = vunpack.c.h.b16 %v4316
    %v4497 = vunpack.c.l.b16 %v4317
    %v4498 = vunpack.c.h.b16 %v4317
    %v4499 = vunpack.c.l.b16 %v4318
    %v4500 = vunpack.c.h.b16 %v4318
    %v4501 = vunpack.c.l.b16 %v4319
    %v4502 = vunpack.c.h.b16 %v4319
    %v4503 = vunpack.c.l.b16 %v4320
    %v4504 = vunpack.c.h.b16 %v4320
    %v4505 = vunpack.c.l.b16 %v4321
    %v4506 = vunpack.c.h.b16 %v4321
    %v4507 = vunpack.c.l.b16 %v4322
    %v4508 = vunpack.c.h.b16 %v4322
    %v4509 = vunpack.c.l.b16 %v4323
    %v4510 = vunpack.c.h.b16 %v4323
    %v4511 = vunpack.c.l.b16 %v4324
    %v4512 = vunpack.c.h.b16 %v4324
    %v4513 = vunpack.c.l.b16 %v4325
    %v4514 = vunpack.c.h.b16 %v4325
    %v4515 = vunpack.c.l.b16 %v4326
    %v4516 = vunpack.c.h.b16 %v4326
    %v4517 = vunpack.c.l.b16 %v4327
    %v4518 = vunpack.c.h.b16 %v4327
    %v4519 = vunpack.c.l.b16 %v4328
    %v4520 = vunpack.c.h.b16 %v4328
    %v4521 = vunpack.c.l.b16 %v4329
    %v4522 = vunpack.c.h.b16 %v4329
    %v4523 = vunpack.c.l.b16 %v4330
    %v4524 = vunpack.c.h.b16 %v4330
    %v4525 = vunpack.c.l.b16 %v4331
    %v4526 = vunpack.c.h.b16 %v4331
    %v4527 = vunpack.c.l.b16 %v4332
    %v4528 = vunpack.c.h.b16 %v4332
    %v4529 = vunpack.c.l.b16 %v4333
    %v4530 = vunpack.c.h.b16 %v4333
    %v4531 = vunpack.c.l.b16 %v4334
    %v4532 = vunpack.c.h.b16 %v4334
    %v4533 = vunpack.c.l.b16 %v4335
    %v4534 = vunpack.c.h.b16 %v4335
    %v4535 = vunpack.c.l.b16 %v4336
    %v4536 = vunpack.c.h.b16 %v4336
    %v4537 = vunpack.c.l.b16 %v4337
    %v4538 = vunpack.c.h.b16 %v4337
    %v4539 = vunpack.c.l.b16 %v4338
    %v4540 = vunpack.c.h.b16 %v4338
    %v4541 = vunpack.c.l.b16 %v4339
    %v4542 = vunpack.c.h.b16 %v4339
    %v4543 = vunpack.c.l.b16 %v4340
    %v4544 = vunpack.c.h.b16 %v4340
    %v4545 = vpack.c.b16 %v4419, %v4417
    %v4546 = vpack.c.b16 %v4420, %v4418
    %v4547 = vpack.c.b16 %v4423, %v4421
    %v4548 = vpack.c.b16 %v4424, %v4422
    %v4549 = vpack.c.b16 %v4427, %v4425
    %v4550 = vpack.c.b16 %v4428, %v4426
    %v4551 = vpack.c.b16 %v4431, %v4429
    %v4552 = vpack.c.b16 %v4432, %v4430
    %v4553 = vpack.c.b16 %v4435, %v4433
    %v4554 = vpack.c.b16 %v4436, %v4434
    %v4555 = vpack.c.b16 %v4439, %v4437
    %v4556 = vpack.c.b16 %v4440, %v4438
    %v4557 = vpack.c.b16 %v4443, %v4441
    %v4558 = vpack.c.b16 %v4444, %v4442
    %v4559 = vpack.c.b16 %v4447, %v4445
    %v4560 = vpack.c.b16 %v4448, %v4446
    %v4561 = vpack.c.b16 %v4451, %v4449
    %v4562 = vpack.c.b16 %v4452, %v4450
    %v4563 = vpack.c.b16 %v4455, %v4453
    %v4564 = vpack.c.b16 %v4456, %v4454
    %v4565 = vpack.c.b16 %v4459, %v4457
    %v4566 = vpack.c.b16 %v4460, %v4458
    %v4567 = vpack.c.b16 %v4463, %v4461
    %v4568 = vpack.c.b16 %v4464, %v4462
    %v4569 = vpack.c.b16 %v4467, %v4465
    %v4570 = vpack.c.b16 %v4468, %v4466
    %v4571 = vpack.c.b16 %v4471, %v4469
    %v4572 = vpack.c.b16 %v4472, %v4470
    %v4573 = vpack.c.b16 %v4475, %v4473
    %v4574 = vpack.c.b16 %v4476, %v4474
    %v4575 = vpack.c.b16 %v4479, %v4477
    %v4576 = vpack.c.b16 %v4480, %v4478
    %v4577 = vpack.c.b16 %v4483, %v4481
    %v4578 = vpack.c.b16 %v4484, %v4482
    %v4579 = vpack.c.b16 %v4487, %v4485
    %v4580 = vpack.c.b16 %v4488, %v4486
    %v4581 = vpack.c.b16 %v4491, %v4489
    %v4582 = vpack.c.b16 %v4492, %v4490
    %v4583 = vpack.c.b16 %v4495, %v4493
    %v4584 = vpack.c.b16 %v4496, %v4494
    %v4585 = vpack.c.b16 %v4499, %v4497
    %v4586 = vpack.c.b16 %v4500, %v4498
    %v4587 = vpack.c.b16 %v4503, %v4501
    %v4588 = vpack.c.b16 %v4504, %v4502
    %v4589 = vpack.c.b16 %v4507, %v4505
    %v4590 = vpack.c.b16 %v4508, %v4506
    %v4591 = vpack.c.b16 %v4511, %v4509
    %v4592 = vpack.c.b16 %v4512, %v4510
    %v4593 = vpack.c.b16 %v4515, %v4513
    %v4594 = vpack.c.b16 %v4516, %v4514
    %v4595 = vpack.c.b16 %v4519, %v4517
    %v4596 = vpack.c.b16 %v4520, %v4518
    %v4597 = vpack.c.b16 %v4523, %v4521
    %v4598 = vpack.c.b16 %v4524, %v4522
    %v4599 = vpack.c.b16 %v4527, %v4525
    %v4600 = vpack.c.b16 %v4528, %v4526
    %v4601 = vpack.c.b16 %v4531, %v4529
    %v4602 = vpack.c.b16 %v4532, %v4530
    %v4603 = vpack.c.b16 %v4535, %v4533
    %v4604 = vpack.c.b16 %v4536, %v4534
    %v4605 = vpack.c.b16 %v4539, %v4537
    %v4606 = vpack.c.b16 %v4540, %v4538
    %v4607 = vpack.c.b16 %v4543, %v4541
    %v4608 = vpack.c.b16 %v4544, %v4542
    %4673 = vmatprep.subr.bf16.mxu0 %v4546
    %4674 = vmatpush1.bf16.msra.mxu0 %v4545
    %4675 = vmatprep.subr.bf16.mxu0 %v4548
    %4676 = vmatpush1.bf16.msra.mxu0 %v4547
    %4677 = vmatprep.subr.bf16.mxu0 %v4550
    %4678 = vmatpush1.bf16.msra.mxu0 %v4549
    %4679 = vmatprep.subr.bf16.mxu0 %v4552
    %4680 = vmatpush1.bf16.msra.mxu0 %v4551
    %4681 = vmatprep.subr.bf16.mxu0 %v4554
    %4682 = vmatpush1.bf16.msra.mxu0 %v4553
    %4683 = vmatprep.subr.bf16.mxu0 %v4556
    %4684 = vmatpush1.bf16.msra.mxu0 %v4555
    %4685 = vmatprep.subr.bf16.mxu0 %v4558
    %4686 = vmatpush1.bf16.msra.mxu0 %v4557
    %4687 = vmatprep.subr.bf16.mxu0 %v4560
    %4688 = vmatpush1.bf16.msra.mxu0 %v4559
    %4689 = vmatprep.subr.bf16.mxu0 %v4562
    %4690 = vmatpush1.bf16.msra.mxu0 %v4561
    %4691 = vmatprep.subr.bf16.mxu0 %v4564
    %4692 = vmatpush1.bf16.msra.mxu0 %v4563
    %4693 = vmatprep.subr.bf16.mxu0 %v4566
    %4694 = vmatpush1.bf16.msra.mxu0 %v4565
    %4695 = vmatprep.subr.bf16.mxu0 %v4568
    %4696 = vmatpush1.bf16.msra.mxu0 %v4567
    %4697 = vmatprep.subr.bf16.mxu0 %v4570
    %4698 = vmatpush1.bf16.msra.mxu0 %v4569
    %4699 = vmatprep.subr.bf16.mxu0 %v4572
    %4700 = vmatpush1.bf16.msra.mxu0 %v4571
    %4701 = vmatprep.subr.bf16.mxu0 %v4574
    %4702 = vmatpush1.bf16.msra.mxu0 %v4573
    %4703 = vmatprep.subr.bf16.mxu0 %v4576
    %4704 = vmatpush1.bf16.msra.mxu0 %v4575
    %4705 = vmatprep.mubr.bf16.mxu0 %v4274
    %4706 = vmatmul.mubr.bf16.gmra.mrb[0].mxu0 %v4273
    %v4707 = vpop.f32.mrb[0].mxu0
    %v4708 = vadd.f32 %v4346, %v4707
    %v4709 = vpop.f32.mrb[0].mxu0
    %v4710 = vadd.f32 %v4350, %v4709
    %v4711 = vpop.f32.mrb[0].mxu0
    %v4712 = vadd.f32 %v4346, %v4711
    %v4713 = vpop.f32.mrb[0].mxu0
    %v4714 = vadd.f32 %v4350, %v4713
    %4715 = vdwg.mxu0
    %4716 = vmatprep.subr.bf16.mxu0 %v4578
    %4717 = vmatpush1.bf16.msra.mxu0 %v4577
    %4718 = vmatprep.subr.bf16.mxu0 %v4580
    %4719 = vmatpush1.bf16.msra.mxu0 %v4579
    %4720 = vmatprep.subr.bf16.mxu0 %v4582
    %4721 = vmatpush1.bf16.msra.mxu0 %v4581
    %4722 = vmatprep.subr.bf16.mxu0 %v4584
    %4723 = vmatpush1.bf16.msra.mxu0 %v4583
    %4724 = vmatprep.subr.bf16.mxu0 %v4586
    %4725 = vmatpush1.bf16.msra.mxu0 %v4585
    %4726 = vmatprep.subr.bf16.mxu0 %v4588
    %4727 = vmatpush1.bf16.msra.mxu0 %v4587
    %4728 = vmatprep.subr.bf16.mxu0 %v4590
    %4729 = vmatpush1.bf16.msra.mxu0 %v4589
    %4730 = vmatprep.subr.bf16.mxu0 %v4592
    %4731 = vmatpush1.bf16.msra.mxu0 %v4591
    %4732 = vmatprep.subr.bf16.mxu0 %v4594
    %4733 = vmatpush1.bf16.msra.mxu0 %v4593
    %4734 = vmatprep.subr.bf16.mxu0 %v4596
    %4735 = vmatpush1.bf16.msra.mxu0 %v4595
    %4736 = vmatprep.subr.bf16.mxu0 %v4598
    %4737 = vmatpush1.bf16.msra.mxu0 %v4597
    %4738 = vmatprep.subr.bf16.mxu0 %v4600
    %4739 = vmatpush1.bf16.msra.mxu0 %v4599
    %4740 = vmatprep.subr.bf16.mxu0 %v4602
    %4741 = vmatpush1.bf16.msra.mxu0 %v4601
    %4742 = vmatprep.subr.bf16.mxu0 %v4604
    %4743 = vmatpush1.bf16.msra.mxu0 %v4603
    %4744 = vmatprep.subr.bf16.mxu0 %v4606
    %4745 = vmatpush1.bf16.msra.mxu0 %v4605
    %4746 = vmatprep.subr.bf16.mxu0 %v4608
    %4747 = vmatpush1.bf16.msra.mxu0 %v4607
    %4748 = vmatprep.mubr.bf16.mxu0 %v4276
    %4749 = vmatmul.mubr.bf16.gmra.mrb[0].mxu0 %v4275
    %v4750 = vpop.f32.mrb[0].mxu0
    %v4751 = vadd.f32 %v4708, %v4750
    %v4752 = vpop.f32.mrb[0].mxu0
    %v4753 = vadd.f32 %v4710, %v4752
    %v4754 = vpop.f32.mrb[0].mxu0
    %v4755 = vadd.f32 %v4712, %v4754
    %v4756 = vpop.f32.mrb[0].mxu0
    %v4757 = vadd.f32 %v4714, %v4756
    %4758 = vdwg.mxu0
    %4759 = vst [vmem:[#allocation14] sm:$0xff] %v4751
    %4760 = vst [vmem:[#allocation14 + $0x8] sm:$0xff] %v4753
    %4761 = vst [vmem:[#allocation14 + $0x10] sm:$0xff] %v4755
    %4762 = vst [vmem:[#allocation14 + $0x18] sm:$0xff] %v4757
    // Predicated region
    $region58: #{tpu_custom_call.1} parent=1 // pred_check
      _
    $region59: #{tpu_custom_call.1} parent=1 // pred_check_branch
      %4764 = sbr.rel (0) target = $region61
    $region60: #{tpu_custom_call.1} parent=1 // pred_region
      %s4766 = ssub.s32 512, 512
      %4767 = vsyncadd [#allocation4], %s4766
      %s4768 = sshll.u32 [#allocation14], 4
      %s4769 = int_to_ptr.vmem [resolvable:$true] %s4768
      %4774 = dma.vmem_to_hbm [thread:$0]  %s4769, 512, %s7, [#allocation4], 256, 256, 16
    $region61: #{tpu_custom_call.1} parent=1 // pred_fallthru
      _
    // Predicated region
    $region62: #{tpu_custom_call.1} parent=1 // pred_check
      _
    $region63: #{tpu_custom_call.1} parent=1 // pred_check_branch
      %4776 = sbr.rel (0) target = $region65
    $region64: #{tpu_custom_call.1} parent=1 // pred_region
      %4777 = dma.done [#allocation4], 512
    $region65: #{tpu_custom_call.1} parent=1 // pred_fallthru
      _
    %4778 = vsyncpa [#allocation3], 1
    %4779 = vsyncpa [#allocation6], 1
    %4780 = vsyncpa [#allocation9], 1
    %4781 = vsyncpa [#allocation12], 1
    %4782 = vsyncpa [#allocation4], 1

// kernel: tpu_custom_call.1
$region0: #{tpu_custom_call.1}
  #allocation0 [shape = 'u32[]', space=smem, size = 0x4, offset = 0x4, fixed_abs, tag = 'smem constant byte address 0x4 - core index']
  #allocation1 [shape = 'u32[144,128]{1,0:T(1,128)}', space=vmem, size = 0x12000, scoped, tag = 'internal scratch']
  %s0 = inlined_call_operand.hbm [shape: bf16[16,1024], index: 0, kind: input, shape index: {}]
  %s1 = inlined_call_operand.hbm [shape: bf16[16,512], index: 1, kind: input, shape index: {}]
  %s2 = inlined_call_operand.hbm [shape: bf16[1536,512], index: 2, kind: input, shape index: {}]
  %s3 = inlined_call_operand.hbm [shape: bf16[512,512], index: 3, kind: input, shape index: {}]
  %s4 = inlined_call_operand.hbm [shape: bf16[512,256], index: 4, kind: input, shape index: {}]
  %s5 = inlined_call_operand.hbm [shape: f32[4,512], index: 5, kind: input, shape index: {}]
  %s6 = inlined_call_operand.hbm [shape: f32[1,256], index: 6, kind: input, shape index: {}]
  %s7 = inlined_call_operand.hbm [shape: f32[16,256], index: 7, kind: output, shape index: {}]
  %s8 = sld [smem:[#allocation0]]
  $region66: #{tpu_custom_call.1} parent=0
    _
  %s10 = ssub.s32 1, %s8
  %s11 = scalar_select 0, %s10, %s8
  $region1: #{tpu_custom_call.1} parent=0
    #allocation2 [shape = 'u8[32768]{0}', space=vmem, size = 0x8000, scoped, tag = 'input window, operand 0, single buffered']
    #allocation3 [shape = 's32[1]{0}', space=sflag, size = 0x4, scoped, tag = 'scoped memory for tpu_custom_call.1']
    #allocation4 [shape = 's32[1]{0}', space=sflag, size = 0x4, scoped, tag = 'scoped memory for tpu_custom_call.1']
    #allocation5 [shape = 'u8[16384]{0}', space=vmem, size = 0x4000, scoped, tag = 'input window, operand 1, single buffered']
    #allocation6 [shape = 's32[1]{0}', space=sflag, size = 0x4, scoped, tag = 'scoped memory for tpu_custom_call.1']
    #allocation7 [shape = 'u8[1572864]{0}', space=vmem, size = 0x180000, scoped, tag = 'input window, operand 2, single buffered']
    #allocation8 [shape = 'u8[524288]{0}', space=vmem, size = 0x80000, scoped, tag = 'input window, operand 3, single buffered']
    #allocation9 [shape = 's32[1]{0}', space=sflag, size = 0x4, scoped, tag = 'scoped memory for tpu_custom_call.1']
    #allocation10 [shape = 'u8[262144]{0}', space=vmem, size = 0x40000, scoped, tag = 'input window, operand 4, single buffered']
    #allocation11 [shape = 'u8[8192]{0}', space=vmem, size = 0x2000, scoped, tag = 'input window, operand 5, single buffered']
    #allocation12 [shape = 's32[1]{0}', space=sflag, size = 0x4, scoped, tag = 'scoped memory for tpu_custom_call.1']
    #allocation13 [shape = 'u8[1024]{0}', space=vmem, size = 0x400, scoped, tag = 'input window, operand 6, single buffered']
    #allocation14 [shape = 'u8[16384]{0}', space=vmem, size = 0x4000, scoped, tag = 'output window, operand 0, single buffered']
    %12 = vsyncpa [#allocation3], 0
    %13 = vsyncpa [#allocation6], 0
    %14 = vsyncpa [#allocation9], 0
    %15 = vsyncpa [#allocation12], 0
    %16 = vsyncpa [#allocation4], 0
    // Predicated region
    $region2: #{tpu_custom_call.1} parent=1 // pred_check
      _
    $region3: #{tpu_custom_call.1} parent=1 // pred_check_branch
      %18 = sbr.rel (0) target = $region5
    $region4: #{tpu_custom_call.1} parent=1 // pred_region
      %s20 = ssub.s32 1024, 1024
      %21 = vsyncadd [#allocation3], %s20
      %s22 = sshll.u32 [#allocation2], 4
      %s23 = int_to_ptr.vmem [resolvable:$true] %s22
      %28 = dma.hbm_to_vmem [thread:$0]  %s0, 1024, %s23, [#allocation3], 512, 512, 32
    $region5: #{tpu_custom_call.1} parent=1 // pred_fallthru
      _
    // Predicated region
    $region6: #{tpu_custom_call.1} parent=1 // pred_check
      _
    $region7: #{tpu_custom_call.1} parent=1 // pred_check_branch
      %30 = sbr.rel (0) target = $region9
    $region8: #{tpu_custom_call.1} parent=1 // pred_region
      %s32 = ssub.s32 512, 512
      %33 = vsyncadd [#allocation6], %s32
      %s34 = sshll.u32 [#allocation5], 4
      %s35 = int_to_ptr.vmem [resolvable:$true] %s34
      %40 = dma.hbm_to_vmem [thread:$0]  %s1, 512, %s35, [#allocation6], 256, 256, 16
    $region9: #{tpu_custom_call.1} parent=1 // pred_fallthru
      _
    // Predicated region
    $region10: #{tpu_custom_call.1} parent=1 // pred_check
      _
    $region11: #{tpu_custom_call.1} parent=1 // pred_check_branch
      %42 = sbr.rel (0) target = $region13
    $region12: #{tpu_custom_call.1} parent=1 // pred_region
      %s44 = ssub.s32 49152, 49152
      %45 = vsyncadd [#allocation6], %s44
      %s46 = sshll.u32 [#allocation7], 4
      %s47 = int_to_ptr.vmem [resolvable:$true] %s46
      %52 = dma.hbm_to_vmem [thread:$0]  %s2, 49152, %s47, [#allocation6], 256, 256, 16
    $region13: #{tpu_custom_call.1} parent=1 // pred_fallthru
      _
    // Predicated region
    $region14: #{tpu_custom_call.1} parent=1 // pred_check
      _
    $region15: #{tpu_custom_call.1} parent=1 // pred_check_branch
      %54 = sbr.rel (0) target = $region17
    $region16: #{tpu_custom_call.1} parent=1 // pred_region
      %s56 = ssub.s32 16384, 16384
      %57 = vsyncadd [#allocation9], %s56
      %s58 = sshll.u32 [#allocation8], 4
      %s59 = int_to_ptr.vmem [resolvable:$true] %s58
      %64 = dma.hbm_to_vmem [thread:$0]  %s3, 16384, %s59, [#allocation9], 256, 256, 16
    $region17: #{tpu_custom_call.1} parent=1 // pred_fallthru
      _
    // Predicated region
    $region18: #{tpu_custom_call.1} parent=1 // pred_check
      _
    $region19: #{tpu_custom_call.1} parent=1 // pred_check_branch
      %66 = sbr.rel (0) target = $region21
    $region20: #{tpu_custom_call.1} parent=1 // pred_region
      %s68 = ssub.s32 8192, 8192
      %69 = vsyncadd [#allocation9], %s68
      %s70 = sshll.u32 [#allocation10], 4
      %s71 = int_to_ptr.vmem [resolvable:$true] %s70
      %76 = dma.hbm_to_vmem [thread:$0]  %s4, 8192, %s71, [#allocation9], 128, 128, 8
    $region21: #{tpu_custom_call.1} parent=1 // pred_fallthru
      _
    // Predicated region
    $region22: #{tpu_custom_call.1} parent=1 // pred_check
      _
    $region23: #{tpu_custom_call.1} parent=1 // pred_check_branch
      %78 = sbr.rel (0) target = $region25
    $region24: #{tpu_custom_call.1} parent=1 // pred_region
      %s80 = ssub.s32 256, 256
      %81 = vsyncadd [#allocation12], %s80
      %s83 = sshll.u32 [#allocation11], 4
      %s84 = int_to_ptr.vmem [resolvable:$true] %s83
      %86 = dma.hbm_to_vmem [thread:$0]  %s5, 256, %s84, [#allocation12]
    $region25: #{tpu_custom_call.1} parent=1 // pred_fallthru
      _
    // Predicated region
    $region26: #{tpu_custom_call.1} parent=1 // pred_check
      _
    $region27: #{tpu_custom_call.1} parent=1 // pred_check_branch
      %88 = sbr.rel (0) target = $region29
    $region28: #{tpu_custom_call.1} parent=1 // pred_region
      %s90 = ssub.s32 32, 32
      %91 = vsyncadd [#allocation12], %s90
      %s93 = sshll.u32 [#allocation13], 4
      %s94 = int_to_ptr.vmem [resolvable:$true] %s93
      %96 = dma.hbm_to_vmem [thread:$0]  %s6, 32, %s94, [#allocation12]
    $region29: #{tpu_custom_call.1} parent=1 // pred_fallthru
      _
    // Predicated region
    $region30: #{tpu_custom_call.1} parent=1 // pred_check
      _
    $region31: #{tpu_custom_call.1} parent=1 // pred_check_branch
      %98 = sbr.rel (0) target = $region33
    $region32: #{tpu_custom_call.1} parent=1 // pred_region
      %99 = dma.done [#allocation3], 1024
    $region33: #{tpu_custom_call.1} parent=1 // pred_fallthru
      _
    // Predicated region
    $region34: #{tpu_custom_call.1} parent=1 // pred_check
      _
    $region35: #{tpu_custom_call.1} parent=1 // pred_check_branch
      %101 = sbr.rel (0) target = $region37
    $region36: #{tpu_custom_call.1} parent=1 // pred_region
      %102 = dma.done [#allocation6], 512
    $region37: #{tpu_custom_call.1} parent=1 // pred_fallthru
      _
    // Predicated region
    $region38: #{tpu_custom_call.1} parent=1 // pred_check
      _
    $region39: #{tpu_custom_call.1} parent=1 // pred_check_branch
      %104 = sbr.rel (0) target = $region41
    $region40: #{tpu_custom_call.1} parent=1 // pred_region
      %105 = dma.done [#allocation6], 49152
    $region41: #{tpu_custom_call.1} parent=1 // pred_fallthru
      _
    // Predicated region
    $region42: #{tpu_custom_call.1} parent=1 // pred_check
      _
    $region43: #{tpu_custom_call.1} parent=1 // pred_check_branch
      %107 = sbr.rel (0) target = $region45
    $region44: #{tpu_custom_call.1} parent=1 // pred_region
      %108 = dma.done [#allocation9], 16384
    $region45: #{tpu_custom_call.1} parent=1 // pred_fallthru
      _
    // Predicated region
    $region46: #{tpu_custom_call.1} parent=1 // pred_check
      _
    $region47: #{tpu_custom_call.1} parent=1 // pred_check_branch
      %110 = sbr.rel (0) target = $region49
    $region48: #{tpu_custom_call.1} parent=1 // pred_region
      %111 = dma.done [#allocation9], 8192
    $region49: #{tpu_custom_call.1} parent=1 // pred_fallthru
      _
    // Predicated region
    $region50: #{tpu_custom_call.1} parent=1 // pred_check
      _
    $region51: #{tpu_custom_call.1} parent=1 // pred_check_branch
      %113 = sbr.rel (0) target = $region53
    $region52: #{tpu_custom_call.1} parent=1 // pred_region
      %114 = dma.done [#allocation12], 256
    $region53: #{tpu_custom_call.1} parent=1 // pred_fallthru
      _
    // Predicated region
    $region54: #{tpu_custom_call.1} parent=1 // pred_check
      _
    $region55: #{tpu_custom_call.1} parent=1 // pred_check_branch
      %116 = sbr.rel (0) target = $region57
    $region56: #{tpu_custom_call.1} parent=1 // pred_region
      %117 = dma.done [#allocation12], 32
    $region57: #{tpu_custom_call.1} parent=1 // pred_fallthru
      _
    %v118 = vld [vmem:[#allocation2] sm:$0xff]
    %v119 = vld [vmem:[#allocation2 + $0x8] sm:$0xff]
    %v120 = vld [vmem:[#allocation2 + $0x10] sm:$0xff]
    %v121 = vld [vmem:[#allocation2 + $0x18] sm:$0xff]
    %v122 = vld [vmem:[#allocation2 + $0x20] sm:$0xff]
    %v123 = vld [vmem:[#allocation2 + $0x28] sm:$0xff]
    %v124 = vld [vmem:[#allocation2 + $0x30] sm:$0xff]
    %v125 = vld [vmem:[#allocation2 + $0x38] sm:$0xff]
    %v126 = vld [vmem:[#allocation7] sm:$0xff]
    %v127 = vld [vmem:[#allocation7 + $0x8] sm:$0xff]
    %v128 = vld [vmem:[#allocation7 + $0x10] sm:$0xff]
    %v129 = vld [vmem:[#allocation7 + $0x18] sm:$0xff]
    %v130 = vld [vmem:[#allocation7 + $0x20] sm:$0xff]
    %v131 = vld [vmem:[#allocation7 + $0x28] sm:$0xff]
    %v132 = vld [vmem:[#allocation7 + $0x30] sm:$0xff]
    %v133 = vld [vmem:[#allocation7 + $0x38] sm:$0xff]
    %v134 = vld [vmem:[#allocation7 + $0x40] sm:$0xff]
    %v135 = vld [vmem:[#allocation7 + $0x48] sm:$0xff]
    %v136 = vld [vmem:[#allocation7 + $0x50] sm:$0xff]
    %v137 = vld [vmem:[#allocation7 + $0x58] sm:$0xff]
    %v138 = vld [vmem:[#allocation7 + $0x60] sm:$0xff]
    %v139 = vld [vmem:[#allocation7 + $0x68] sm:$0xff]
    %v140 = vld [vmem:[#allocation7 + $0x70] sm:$0xff]
    %v141 = vld [vmem:[#allocation7 + $0x78] sm:$0xff]
    %v142 = vld [vmem:[#allocation7 + $0x80] sm:$0xff]
    %v143 = vld [vmem:[#allocation7 + $0x88] sm:$0xff]
    %v144 = vld [vmem:[#allocation7 + $0x90] sm:$0xff]
    %v145 = vld [vmem:[#allocation7 + $0x98] sm:$0xff]
    %v146 = vld [vmem:[#allocation7 + $0xa0] sm:$0xff]
    %v147 = vld [vmem:[#allocation7 + $0xa8] sm:$0xff]
    %v148 = vld [vmem:[#allocation7 + $0xb0] sm:$0xff]
    %v149 = vld [vmem:[#allocation7 + $0xb8] sm:$0xff]
    %v150 = vld [vmem:[#allocation7 + $0xc0] sm:$0xff]
    %v151 = vld [vmem:[#allocation7 + $0xc8] sm:$0xff]
    %v152 = vld [vmem:[#allocation7 + $0xd0] sm:$0xff]
    %v153 = vld [vmem:[#allocation7 + $0xd8] sm:$0xff]
    %v154 = vld [vmem:[#allocation7 + $0xe0] sm:$0xff]
    %v155 = vld [vmem:[#allocation7 + $0xe8] sm:$0xff]
    %v156 = vld [vmem:[#allocation7 + $0xf0] sm:$0xff]
    %v157 = vld [vmem:[#allocation7 + $0xf8] sm:$0xff]
    %v158 = vld [vmem:[#allocation7 + $0x100] sm:$0xff]
    %v159 = vld [vmem:[#allocation7 + $0x108] sm:$0xff]
    %v160 = vld [vmem:[#allocation7 + $0x110] sm:$0xff]
    %v161 = vld [vmem:[#allocation7 + $0x118] sm:$0xff]
    %v162 = vld [vmem:[#allocation7 + $0x120] sm:$0xff]
    %v163 = vld [vmem:[#allocation7 + $0x128] sm:$0xff]
    %v164 = vld [vmem:[#allocation7 + $0x130] sm:$0xff]
    %v165 = vld [vmem:[#allocation7 + $0x138] sm:$0xff]
    %v166 = vld [vmem:[#allocation7 + $0x140] sm:$0xff]
    %v167 = vld [vmem:[#allocation7 + $0x148] sm:$0xff]
    %v168 = vld [vmem:[#allocation7 + $0x150] sm:$0xff]
    %v169 = vld [vmem:[#allocation7 + $0x158] sm:$0xff]
    %v170 = vld [vmem:[#allocation7 + $0x160] sm:$0xff]
    %v171 = vld [vmem:[#allocation7 + $0x168] sm:$0xff]
    %v172 = vld [vmem:[#allocation7 + $0x170] sm:$0xff]
    %v173 = vld [vmem:[#allocation7 + $0x178] sm:$0xff]
    %v174 = vld [vmem:[#allocation7 + $0x180] sm:$0xff]
    %v175 = vld [vmem:[#allocation7 + $0x188] sm:$0xff]
    %v176 = vld [vmem:[#allocation7 + $0x190] sm:$0xff]
    %v177 = vld [vmem:[#allocation7 + $0x198] sm:$0xff]
    %v178 = vld [vmem:[#allocation7 + $0x1a0] sm:$0xff]
    %v179 = vld [vmem:[#allocation7 + $0x1a8] sm:$0xff]
    %v180 = vld [vmem:[#allocation7 + $0x1b0] sm:$0xff]
    %v181 = vld [vmem:[#allocation7 + $0x1b8] sm:$0xff]
    %v182 = vld [vmem:[#allocation7 + $0x1c0] sm:$0xff]
    %v183 = vld [vmem:[#allocation7 + $0x1c8] sm:$0xff]
    %v184 = vld [vmem:[#allocation7 + $0x1d0] sm:$0xff]
    %v185 = vld [vmem:[#allocation7 + $0x1d8] sm:$0xff]
    %v186 = vld [vmem:[#allocation7 + $0x1e0] sm:$0xff]
    %v187 = vld [vmem:[#allocation7 + $0x1e8] sm:$0xff]
    %v188 = vld [vmem:[#allocation7 + $0x1f0] sm:$0xff]
    %v189 = vld [vmem:[#allocation7 + $0x1f8] sm:$0xff]
    %v190 = vld [vmem:[#allocation7 + $0x200] sm:$0xff]
    %v191 = vld [vmem:[#allocation7 + $0x208] sm:$0xff]
    %v192 = vld [vmem:[#allocation7 + $0x210] sm:$0xff]
    %v193 = vld [vmem:[#allocation7 + $0x218] sm:$0xff]
    %v194 = vld [vmem:[#allocation7 + $0x220] sm:$0xff]
    %v195 = vld [vmem:[#allocation7 + $0x228] sm:$0xff]
    %v196 = vld [vmem:[#allocation7 + $0x230] sm:$0xff]
    %v197 = vld [vmem:[#allocation7 + $0x238] sm:$0xff]
    %v198 = vld [vmem:[#allocation7 + $0x240] sm:$0xff]
    %v199 = vld [vmem:[#allocation7 + $0x248] sm:$0xff]
    %v200 = vld [vmem:[#allocation7 + $0x250] sm:$0xff]
    %v201 = vld [vmem:[#allocation7 + $0x258] sm:$0xff]
    %v202 = vld [vmem:[#allocation7 + $0x260] sm:$0xff]
    %v203 = vld [vmem:[#allocation7 + $0x268] sm:$0xff]
    %v204 = vld [vmem:[#allocation7 + $0x270] sm:$0xff]
    %v205 = vld [vmem:[#allocation7 + $0x278] sm:$0xff]
    %v206 = vld [vmem:[#allocation7 + $0x280] sm:$0xff]
    %v207 = vld [vmem:[#allocation7 + $0x288] sm:$0xff]
    %v208 = vld [vmem:[#allocation7 + $0x290] sm:$0xff]
    %v209 = vld [vmem:[#allocation7 + $0x298] sm:$0xff]
    %v210 = vld [vmem:[#allocation7 + $0x2a0] sm:$0xff]
    %v211 = vld [vmem:[#allocation7 + $0x2a8] sm:$0xff]
    %v212 = vld [vmem:[#allocation7 + $0x2b0] sm:$0xff]
    %v213 = vld [vmem:[#allocation7 + $0x2b8] sm:$0xff]
    %v214 = vld [vmem:[#allocation7 + $0x2c0] sm:$0xff]
    %v215 = vld [vmem:[#allocation7 + $0x2c8] sm:$0xff]
    %v216 = vld [vmem:[#allocation7 + $0x2d0] sm:$0xff]
    %v217 = vld [vmem:[#allocation7 + $0x2d8] sm:$0xff]
    %v218 = vld [vmem:[#allocation7 + $0x2e0] sm:$0xff]
    %v219 = vld [vmem:[#allocation7 + $0x2e8] sm:$0xff]
    %v220 = vld [vmem:[#allocation7 + $0x2f0] sm:$0xff]
    %v221 = vld [vmem:[#allocation7 + $0x2f8] sm:$0xff]
    %v222 = vld [vmem:[#allocation7 + $0x300] sm:$0xff]
    %v223 = vld [vmem:[#allocation7 + $0x308] sm:$0xff]
    %v224 = vld [vmem:[#allocation7 + $0x310] sm:$0xff]
    %v225 = vld [vmem:[#allocation7 + $0x318] sm:$0xff]
    %v226 = vld [vmem:[#allocation7 + $0x320] sm:$0xff]
    %v227 = vld [vmem:[#allocation7 + $0x328] sm:$0xff]
    %v228 = vld [vmem:[#allocation7 + $0x330] sm:$0xff]
    %v229 = vld [vmem:[#allocation7 + $0x338] sm:$0xff]
    %v230 = vld [vmem:[#allocation7 + $0x340] sm:$0xff]
    %v231 = vld [vmem:[#allocation7 + $0x348] sm:$0xff]
    %v232 = vld [vmem:[#allocation7 + $0x350] sm:$0xff]
    %v233 = vld [vmem:[#allocation7 + $0x358] sm:$0xff]
    %v234 = vld [vmem:[#allocation7 + $0x360] sm:$0xff]
    %v235 = vld [vmem:[#allocation7 + $0x368] sm:$0xff]
    %v236 = vld [vmem:[#allocation7 + $0x370] sm:$0xff]
    %v237 = vld [vmem:[#allocation7 + $0x378] sm:$0xff]
    %v238 = vld [vmem:[#allocation7 + $0x380] sm:$0xff]
    %v239 = vld [vmem:[#allocation7 + $0x388] sm:$0xff]
    %v240 = vld [vmem:[#allocation7 + $0x390] sm:$0xff]
    %v241 = vld [vmem:[#allocation7 + $0x398] sm:$0xff]
    %v242 = vld [vmem:[#allocation7 + $0x3a0] sm:$0xff]
    %v243 = vld [vmem:[#allocation7 + $0x3a8] sm:$0xff]
    %v244 = vld [vmem:[#allocation7 + $0x3b0] sm:$0xff]
    %v245 = vld [vmem:[#allocation7 + $0x3b8] sm:$0xff]
    %v246 = vld [vmem:[#allocation7 + $0x3c0] sm:$0xff]
    %v247 = vld [vmem:[#allocation7 + $0x3c8] sm:$0xff]
    %v248 = vld [vmem:[#allocation7 + $0x3d0] sm:$0xff]
    %v249 = vld [vmem:[#allocation7 + $0x3d8] sm:$0xff]
    %v250 = vld [vmem:[#allocation7 + $0x3e0] sm:$0xff]
    %v251 = vld [vmem:[#allocation7 + $0x3e8] sm:$0xff]
    %v252 = vld [vmem:[#allocation7 + $0x3f0] sm:$0xff]
    %v253 = vld [vmem:[#allocation7 + $0x3f8] sm:$0xff]
    %v254 = vld [vmem:[#allocation7 + $0x400] sm:$0xff]
    %v255 = vld [vmem:[#allocation7 + $0x408] sm:$0xff]
    %v256 = vld [vmem:[#allocation7 + $0x410] sm:$0xff]
    %v257 = vld [vmem:[#allocation7 + $0x418] sm:$0xff]
    %v258 = vld [vmem:[#allocation7 + $0x420] sm:$0xff]
    %v259 = vld [vmem:[#allocation7 + $0x428] sm:$0xff]
    %v260 = vld [vmem:[#allocation7 + $0x430] sm:$0xff]
    %v261 = vld [vmem:[#allocation7 + $0x438] sm:$0xff]
    %v262 = vld [vmem:[#allocation7 + $0x440] sm:$0xff]
    %v263 = vld [vmem:[#allocation7 + $0x448] sm:$0xff]
    %v264 = vld [vmem:[#allocation7 + $0x450] sm:$0xff]
    %v265 = vld [vmem:[#allocation7 + $0x458] sm:$0xff]
    %v266 = vld [vmem:[#allocation7 + $0x460] sm:$0xff]
    %v267 = vld [vmem:[#allocation7 + $0x468] sm:$0xff]
    %v268 = vld [vmem:[#allocation7 + $0x470] sm:$0xff]
    %v269 = vld [vmem:[#allocation7 + $0x478] sm:$0xff]
    %v270 = vld [vmem:[#allocation7 + $0x480] sm:$0xff]
    %v271 = vld [vmem:[#allocation7 + $0x488] sm:$0xff]
    %v272 = vld [vmem:[#allocation7 + $0x490] sm:$0xff]
    %v273 = vld [vmem:[#allocation7 + $0x498] sm:$0xff]
    %v274 = vld [vmem:[#allocation7 + $0x4a0] sm:$0xff]
    %v275 = vld [vmem:[#allocation7 + $0x4a8] sm:$0xff]
    %v276 = vld [vmem:[#allocation7 + $0x4b0] sm:$0xff]
    %v277 = vld [vmem:[#allocation7 + $0x4b8] sm:$0xff]
    %v278 = vld [vmem:[#allocation7 + $0x4c0] sm:$0xff]
    %v279 = vld [vmem:[#allocation7 + $0x4c8] sm:$0xff]
    %v280 = vld [vmem:[#allocation7 + $0x4d0] sm:$0xff]
    %v281 = vld [vmem:[#allocation7 + $0x4d8] sm:$0xff]
    %v282 = vld [vmem:[#allocation7 + $0x4e0] sm:$0xff]
    %v283 = vld [vmem:[#allocation7 + $0x4e8] sm:$0xff]
    %v284 = vld [vmem:[#allocation7 + $0x4f0] sm:$0xff]
    %v285 = vld [vmem:[#allocation7 + $0x4f8] sm:$0xff]
    %v286 = vld [vmem:[#allocation7 + $0x500] sm:$0xff]
    %v287 = vld [vmem:[#allocation7 + $0x508] sm:$0xff]
    %v288 = vld [vmem:[#allocation7 + $0x510] sm:$0xff]
    %v289 = vld [vmem:[#allocation7 + $0x518] sm:$0xff]
    %v290 = vld [vmem:[#allocation7 + $0x520] sm:$0xff]
    %v291 = vld [vmem:[#allocation7 + $0x528] sm:$0xff]
    %v292 = vld [vmem:[#allocation7 + $0x530] sm:$0xff]
    %v293 = vld [vmem:[#allocation7 + $0x538] sm:$0xff]
    %v294 = vld [vmem:[#allocation7 + $0x540] sm:$0xff]
    %v295 = vld [vmem:[#allocation7 + $0x548] sm:$0xff]
    %v296 = vld [vmem:[#allocation7 + $0x550] sm:$0xff]
    %v297 = vld [vmem:[#allocation7 + $0x558] sm:$0xff]
    %v298 = vld [vmem:[#allocation7 + $0x560] sm:$0xff]
    %v299 = vld [vmem:[#allocation7 + $0x568] sm:$0xff]
    %v300 = vld [vmem:[#allocation7 + $0x570] sm:$0xff]
    %v301 = vld [vmem:[#allocation7 + $0x578] sm:$0xff]
    %v302 = vld [vmem:[#allocation7 + $0x580] sm:$0xff]
    %v303 = vld [vmem:[#allocation7 + $0x588] sm:$0xff]
    %v304 = vld [vmem:[#allocation7 + $0x590] sm:$0xff]
    %v305 = vld [vmem:[#allocation7 + $0x598] sm:$0xff]
    %v306 = vld [vmem:[#allocation7 + $0x5a0] sm:$0xff]
    %v307 = vld [vmem:[#allocation7 + $0x5a8] sm:$0xff]
    %v308 = vld [vmem:[#allocation7 + $0x5b0] sm:$0xff]
    %v309 = vld [vmem:[#allocation7 + $0x5b8] sm:$0xff]
    %v310 = vld [vmem:[#allocation7 + $0x5c0] sm:$0xff]
    %v311 = vld [vmem:[#allocation7 + $0x5c8] sm:$0xff]
    %v312 = vld [vmem:[#allocation7 + $0x5d0] sm:$0xff]
    %v313 = vld [vmem:[#allocation7 + $0x5d8] sm:$0xff]
    %v314 = vld [vmem:[#allocation7 + $0x5e0] sm:$0xff]
    %v315 = vld [vmem:[#allocation7 + $0x5e8] sm:$0xff]
    %v316 = vld [vmem:[#allocation7 + $0x5f0] sm:$0xff]
    %v317 = vld [vmem:[#allocation7 + $0x5f8] sm:$0xff]
    %v318 = vld [vmem:[#allocation7 + $0x600] sm:$0xff]
    %v319 = vld [vmem:[#allocation7 + $0x608] sm:$0xff]
    %v320 = vld [vmem:[#allocation7 + $0x610] sm:$0xff]
    %v321 = vld [vmem:[#allocation7 + $0x618] sm:$0xff]
    %v322 = vld [vmem:[#allocation7 + $0x620] sm:$0xff]
    %v323 = vld [vmem:[#allocation7 + $0x628] sm:$0xff]
    %v324 = vld [vmem:[#allocation7 + $0x630] sm:$0xff]
    %v325 = vld [vmem:[#allocation7 + $0x638] sm:$0xff]
    %v326 = vld [vmem:[#allocation7 + $0x640] sm:$0xff]
    %v327 = vld [vmem:[#allocation7 + $0x648] sm:$0xff]
    %v328 = vld [vmem:[#allocation7 + $0x650] sm:$0xff]
    %v329 = vld [vmem:[#allocation7 + $0x658] sm:$0xff]
    %v330 = vld [vmem:[#allocation7 + $0x660] sm:$0xff]
    %v331 = vld [vmem:[#allocation7 + $0x668] sm:$0xff]
    %v332 = vld [vmem:[#allocation7 + $0x670] sm:$0xff]
    %v333 = vld [vmem:[#allocation7 + $0x678] sm:$0xff]
    %v334 = vld [vmem:[#allocation7 + $0x680] sm:$0xff]
    %v335 = vld [vmem:[#allocation7 + $0x688] sm:$0xff]
    %v336 = vld [vmem:[#allocation7 + $0x690] sm:$0xff]
    %v337 = vld [vmem:[#allocation7 + $0x698] sm:$0xff]
    %v338 = vld [vmem:[#allocation7 + $0x6a0] sm:$0xff]
    %v339 = vld [vmem:[#allocation7 + $0x6a8] sm:$0xff]
    %v340 = vld [vmem:[#allocation7 + $0x6b0] sm:$0xff]
    %v341 = vld [vmem:[#allocation7 + $0x6b8] sm:$0xff]
    %v342 = vld [vmem:[#allocation7 + $0x6c0] sm:$0xff]
    %v343 = vld [vmem:[#allocation7 + $0x6c8] sm:$0xff]
    %v344 = vld [vmem:[#allocation7 + $0x6d0] sm:$0xff]
    %v345 = vld [vmem:[#allocation7 + $0x6d8] sm:$0xff]
    %v346 = vld [vmem:[#allocation7 + $0x6e0] sm:$0xff]
    %v347 = vld [vmem:[#allocation7 + $0x6e8] sm:$0xff]
    %v348 = vld [vmem:[#allocation7 + $0x6f0] sm:$0xff]
    %v349 = vld [vmem:[#allocation7 + $0x6f8] sm:$0xff]
    %v350 = vld [vmem:[#allocation7 + $0x700] sm:$0xff]
    %v351 = vld [vmem:[#allocation7 + $0x708] sm:$0xff]
    %v352 = vld [vmem:[#allocation7 + $0x710] sm:$0xff]
    %v353 = vld [vmem:[#allocation7 + $0x718] sm:$0xff]
    %v354 = vld [vmem:[#allocation7 + $0x720] sm:$0xff]
    %v355 = vld [vmem:[#allocation7 + $0x728] sm:$0xff]
    %v356 = vld [vmem:[#allocation7 + $0x730] sm:$0xff]
    %v357 = vld [vmem:[#allocation7 + $0x738] sm:$0xff]
    %v358 = vld [vmem:[#allocation7 + $0x740] sm:$0xff]
    %v359 = vld [vmem:[#allocation7 + $0x748] sm:$0xff]
    %v360 = vld [vmem:[#allocation7 + $0x750] sm:$0xff]
    %v361 = vld [vmem:[#allocation7 + $0x758] sm:$0xff]
    %v362 = vld [vmem:[#allocation7 + $0x760] sm:$0xff]
    %v363 = vld [vmem:[#allocation7 + $0x768] sm:$0xff]
    %v364 = vld [vmem:[#allocation7 + $0x770] sm:$0xff]
    %v365 = vld [vmem:[#allocation7 + $0x778] sm:$0xff]
    %v366 = vld [vmem:[#allocation7 + $0x780] sm:$0xff]
    %v367 = vld [vmem:[#allocation7 + $0x788] sm:$0xff]
    %v368 = vld [vmem:[#allocation7 + $0x790] sm:$0xff]
    %v369 = vld [vmem:[#allocation7 + $0x798] sm:$0xff]
    %v370 = vld [vmem:[#allocation7 + $0x7a0] sm:$0xff]
    %v371 = vld [vmem:[#allocation7 + $0x7a8] sm:$0xff]
    %v372 = vld [vmem:[#allocation7 + $0x7b0] sm:$0xff]
    %v373 = vld [vmem:[#allocation7 + $0x7b8] sm:$0xff]
    %v374 = vld [vmem:[#allocation7 + $0x7c0] sm:$0xff]
    %v375 = vld [vmem:[#allocation7 + $0x7c8] sm:$0xff]
    %v376 = vld [vmem:[#allocation7 + $0x7d0] sm:$0xff]
    %v377 = vld [vmem:[#allocation7 + $0x7d8] sm:$0xff]
    %v378 = vld [vmem:[#allocation7 + $0x7e0] sm:$0xff]
    %v379 = vld [vmem:[#allocation7 + $0x7e8] sm:$0xff]
    %v380 = vld [vmem:[#allocation7 + $0x7f0] sm:$0xff]
    %v381 = vld [vmem:[#allocation7 + $0x7f8] sm:$0xff]
    %v382 = vld [vmem:[#allocation5] sm:$0xff]
    %v383 = vld [vmem:[#allocation5 + $0x8] sm:$0xff]
    %v384 = vld [vmem:[#allocation5 + $0x10] sm:$0xff]
    %v385 = vld [vmem:[#allocation5 + $0x18] sm:$0xff]
    %v386 = vld [vmem:[#allocation7 + $0x800] sm:$0xff]
    %v387 = vld [vmem:[#allocation7 + $0x808] sm:$0xff]
    %v388 = vld [vmem:[#allocation7 + $0x810] sm:$0xff]
    %v389 = vld [vmem:[#allocation7 + $0x818] sm:$0xff]
    %v390 = vld [vmem:[#allocation7 + $0x820] sm:$0xff]
    %v391 = vld [vmem:[#allocation7 + $0x828] sm:$0xff]
    %v392 = vld [vmem:[#allocation7 + $0x830] sm:$0xff]
    %v393 = vld [vmem:[#allocation7 + $0x838] sm:$0xff]
    %v394 = vld [vmem:[#allocation7 + $0x840] sm:$0xff]
    %v395 = vld [vmem:[#allocation7 + $0x848] sm:$0xff]
    %v396 = vld [vmem:[#allocation7 + $0x850] sm:$0xff]
    %v397 = vld [vmem:[#allocation7 + $0x858] sm:$0xff]
    %v398 = vld [vmem:[#allocation7 + $0x860] sm:$0xff]
    %v399 = vld [vmem:[#allocation7 + $0x868] sm:$0xff]
    %v400 = vld [vmem:[#allocation7 + $0x870] sm:$0xff]
    %v401 = vld [vmem:[#allocation7 + $0x878] sm:$0xff]
    %v402 = vld [vmem:[#allocation7 + $0x880] sm:$0xff]
    %v403 = vld [vmem:[#allocation7 + $0x888] sm:$0xff]
    %v404 = vld [vmem:[#allocation7 + $0x890] sm:$0xff]
    %v405 = vld [vmem:[#allocation7 + $0x898] sm:$0xff]
    %v406 = vld [vmem:[#allocation7 + $0x8a0] sm:$0xff]
    %v407 = vld [vmem:[#allocation7 + $0x8a8] sm:$0xff]
    %v408 = vld [vmem:[#allocation7 + $0x8b0] sm:$0xff]
    %v409 = vld [vmem:[#allocation7 + $0x8b8] sm:$0xff]
    %v410 = vld [vmem:[#allocation7 + $0x8c0] sm:$0xff]
    %v411 = vld [vmem:[#allocation7 + $0x8c8] sm:$0xff]
    %v412 = vld [vmem:[#allocation7 + $0x8d0] sm:$0xff]
    %v413 = vld [vmem:[#allocation7 + $0x8d8] sm:$0xff]
    %v414 = vld [vmem:[#allocation7 + $0x8e0] sm:$0xff]
    %v415 = vld [vmem:[#allocation7 + $0x8e8] sm:$0xff]
    %v416 = vld [vmem:[#allocation7 + $0x8f0] sm:$0xff]
    %v417 = vld [vmem:[#allocation7 + $0x8f8] sm:$0xff]
    %v418 = vld [vmem:[#allocation7 + $0x900] sm:$0xff]
    %v419 = vld [vmem:[#allocation7 + $0x908] sm:$0xff]
    %v420 = vld [vmem:[#allocation7 + $0x910] sm:$0xff]
    %v421 = vld [vmem:[#allocation7 + $0x918] sm:$0xff]
    %v422 = vld [vmem:[#allocation7 + $0x920] sm:$0xff]
    %v423 = vld [vmem:[#allocation7 + $0x928] sm:$0xff]
    %v424 = vld [vmem:[#allocation7 + $0x930] sm:$0xff]
    %v425 = vld [vmem:[#allocation7 + $0x938] sm:$0xff]
    %v426 = vld [vmem:[#allocation7 + $0x940] sm:$0xff]
    %v427 = vld [vmem:[#allocation7 + $0x948] sm:$0xff]
    %v428 = vld [vmem:[#allocation7 + $0x950] sm:$0xff]
    %v429 = vld [vmem:[#allocation7 + $0x958] sm:$0xff]
    %v430 = vld [vmem:[#allocation7 + $0x960] sm:$0xff]
    %v431 = vld [vmem:[#allocation7 + $0x968] sm:$0xff]
    %v432 = vld [vmem:[#allocation7 + $0x970] sm:$0xff]
    %v433 = vld [vmem:[#allocation7 + $0x978] sm:$0xff]
    %v434 = vld [vmem:[#allocation7 + $0x980] sm:$0xff]
    %v435 = vld [vmem:[#allocation7 + $0x988] sm:$0xff]
    %v436 = vld [vmem:[#allocation7 + $0x990] sm:$0xff]
    %v437 = vld [vmem:[#allocation7 + $0x998] sm:$0xff]
    %v438 = vld [vmem:[#allocation7 + $0x9a0] sm:$0xff]
    %v439 = vld [vmem:[#allocation7 + $0x9a8] sm:$0xff]
    %v440 = vld [vmem:[#allocation7 + $0x9b0] sm:$0xff]
    %v441 = vld [vmem:[#allocation7 + $0x9b8] sm:$0xff]
    %v442 = vld [vmem:[#allocation7 + $0x9c0] sm:$0xff]
    %v443 = vld [vmem:[#allocation7 + $0x9c8] sm:$0xff]
    %v444 = vld [vmem:[#allocation7 + $0x9d0] sm:$0xff]
    %v445 = vld [vmem:[#allocation7 + $0x9d8] sm:$0xff]
    %v446 = vld [vmem:[#allocation7 + $0x9e0] sm:$0xff]
    %v447 = vld [vmem:[#allocation7 + $0x9e8] sm:$0xff]
    %v448 = vld [vmem:[#allocation7 + $0x9f0] sm:$0xff]
    %v449 = vld [vmem:[#allocation7 + $0x9f8] sm:$0xff]
    %v450 = vld [vmem:[#allocation7 + $0xa00] sm:$0xff]
    %v451 = vld [vmem:[#allocation7 + $0xa08] sm:$0xff]
    %v452 = vld [vmem:[#allocation7 + $0xa10] sm:$0xff]
    %v453 = vld [vmem:[#allocation7 + $0xa18] sm:$0xff]
    %v454 = vld [vmem:[#allocation7 + $0xa20] sm:$0xff]
    %v455 = vld [vmem:[#allocation7 + $0xa28] sm:$0xff]
    %v456 = vld [vmem:[#allocation7 + $0xa30] sm:$0xff]
    %v457 = vld [vmem:[#allocation7 + $0xa38] sm:$0xff]
    %v458 = vld [vmem:[#allocation7 + $0xa40] sm:$0xff]
    %v459 = vld [vmem:[#allocation7 + $0xa48] sm:$0xff]
    %v460 = vld [vmem:[#allocation7 + $0xa50] sm:$0xff]
    %v461 = vld [vmem:[#allocation7 + $0xa58] sm:$0xff]
    %v462 = vld [vmem:[#allocation7 + $0xa60] sm:$0xff]
    %v463 = vld [vmem:[#allocation7 + $0xa68] sm:$0xff]
    %v464 = vld [vmem:[#allocation7 + $0xa70] sm:$0xff]
    %v465 = vld [vmem:[#allocation7 + $0xa78] sm:$0xff]
    %v466 = vld [vmem:[#allocation7 + $0xa80] sm:$0xff]
    %v467 = vld [vmem:[#allocation7 + $0xa88] sm:$0xff]
    %v468 = vld [vmem:[#allocation7 + $0xa90] sm:$0xff]
    %v469 = vld [vmem:[#allocation7 + $0xa98] sm:$0xff]
    %v470 = vld [vmem:[#allocation7 + $0xaa0] sm:$0xff]
    %v471 = vld [vmem:[#allocation7 + $0xaa8] sm:$0xff]
    %v472 = vld [vmem:[#allocation7 + $0xab0] sm:$0xff]
    %v473 = vld [vmem:[#allocation7 + $0xab8] sm:$0xff]
    %v474 = vld [vmem:[#allocation7 + $0xac0] sm:$0xff]
    %v475 = vld [vmem:[#allocation7 + $0xac8] sm:$0xff]
    %v476 = vld [vmem:[#allocation7 + $0xad0] sm:$0xff]
    %v477 = vld [vmem:[#allocation7 + $0xad8] sm:$0xff]
    %v478 = vld [vmem:[#allocation7 + $0xae0] sm:$0xff]
    %v479 = vld [vmem:[#allocation7 + $0xae8] sm:$0xff]
    %v480 = vld [vmem:[#allocation7 + $0xaf0] sm:$0xff]
    %v481 = vld [vmem:[#allocation7 + $0xaf8] sm:$0xff]
    %v482 = vld [vmem:[#allocation7 + $0xb00] sm:$0xff]
    %v483 = vld [vmem:[#allocation7 + $0xb08] sm:$0xff]
    %v484 = vld [vmem:[#allocation7 + $0xb10] sm:$0xff]
    %v485 = vld [vmem:[#allocation7 + $0xb18] sm:$0xff]
    %v486 = vld [vmem:[#allocation7 + $0xb20] sm:$0xff]
    %v487 = vld [vmem:[#allocation7 + $0xb28] sm:$0xff]
    %v488 = vld [vmem:[#allocation7 + $0xb30] sm:$0xff]
    %v489 = vld [vmem:[#allocation7 + $0xb38] sm:$0xff]
    %v490 = vld [vmem:[#allocation7 + $0xb40] sm:$0xff]
    %v491 = vld [vmem:[#allocation7 + $0xb48] sm:$0xff]
    %v492 = vld [vmem:[#allocation7 + $0xb50] sm:$0xff]
    %v493 = vld [vmem:[#allocation7 + $0xb58] sm:$0xff]
    %v494 = vld [vmem:[#allocation7 + $0xb60] sm:$0xff]
    %v495 = vld [vmem:[#allocation7 + $0xb68] sm:$0xff]
    %v496 = vld [vmem:[#allocation7 + $0xb70] sm:$0xff]
    %v497 = vld [vmem:[#allocation7 + $0xb78] sm:$0xff]
    %v498 = vld [vmem:[#allocation7 + $0xb80] sm:$0xff]
    %v499 = vld [vmem:[#allocation7 + $0xb88] sm:$0xff]
    %v500 = vld [vmem:[#allocation7 + $0xb90] sm:$0xff]
    %v501 = vld [vmem:[#allocation7 + $0xb98] sm:$0xff]
    %v502 = vld [vmem:[#allocation7 + $0xba0] sm:$0xff]
    %v503 = vld [vmem:[#allocation7 + $0xba8] sm:$0xff]
    %v504 = vld [vmem:[#allocation7 + $0xbb0] sm:$0xff]
    %v505 = vld [vmem:[#allocation7 + $0xbb8] sm:$0xff]
    %v506 = vld [vmem:[#allocation7 + $0xbc0] sm:$0xff]
    %v507 = vld [vmem:[#allocation7 + $0xbc8] sm:$0xff]
    %v508 = vld [vmem:[#allocation7 + $0xbd0] sm:$0xff]
    %v509 = vld [vmem:[#allocation7 + $0xbd8] sm:$0xff]
    %v510 = vld [vmem:[#allocation7 + $0xbe0] sm:$0xff]
    %v511 = vld [vmem:[#allocation7 + $0xbe8] sm:$0xff]
    %v512 = vld [vmem:[#allocation7 + $0xbf0] sm:$0xff]
    %v513 = vld [vmem:[#allocation7 + $0xbf8] sm:$0xff]
    %v518 = vunpack.c.l.b16 %v382
    %v519 = vunpack.c.h.b16 %v382
    %v520 = vunpack.c.l.b16 %v383
    %v521 = vunpack.c.h.b16 %v383
    %v522 = vunpack.c.l.b16 %v384
    %v523 = vunpack.c.h.b16 %v384
    %v524 = vunpack.c.l.b16 %v385
    %v525 = vunpack.c.h.b16 %v385
    %v526 = vpack.c.b16 %v522, %v518
    %v527 = vpack.c.b16 %v523, %v519
    %v528 = vpack.c.b16 %v524, %v520
    %v529 = vpack.c.b16 %v525, %v521
    %v662 = vunpack.c.l.b16 %v386
    %v663 = vunpack.c.h.b16 %v386
    %v664 = vunpack.c.l.b16 %v387
    %v665 = vunpack.c.h.b16 %v387
    %v666 = vunpack.c.l.b16 %v388
    %v667 = vunpack.c.h.b16 %v388
    %v668 = vunpack.c.l.b16 %v389
    %v669 = vunpack.c.h.b16 %v389
    %v670 = vunpack.c.l.b16 %v390
    %v671 = vunpack.c.h.b16 %v390
    %v672 = vunpack.c.l.b16 %v391
    %v673 = vunpack.c.h.b16 %v391
    %v674 = vunpack.c.l.b16 %v392
    %v675 = vunpack.c.h.b16 %v392
    %v676 = vunpack.c.l.b16 %v393
    %v677 = vunpack.c.h.b16 %v393
    %v678 = vunpack.c.l.b16 %v394
    %v679 = vunpack.c.h.b16 %v394
    %v680 = vunpack.c.l.b16 %v395
    %v681 = vunpack.c.h.b16 %v395
    %v682 = vunpack.c.l.b16 %v396
    %v683 = vunpack.c.h.b16 %v396
    %v684 = vunpack.c.l.b16 %v397
    %v685 = vunpack.c.h.b16 %v397
    %v686 = vunpack.c.l.b16 %v398
    %v687 = vunpack.c.h.b16 %v398
    %v688 = vunpack.c.l.b16 %v399
    %v689 = vunpack.c.h.b16 %v399
    %v690 = vunpack.c.l.b16 %v400
    %v691 = vunpack.c.h.b16 %v400
    %v692 = vunpack.c.l.b16 %v401
    %v693 = vunpack.c.h.b16 %v401
    %v694 = vunpack.c.l.b16 %v402
    %v695 = vunpack.c.h.b16 %v402
    %v696 = vunpack.c.l.b16 %v403
    %v697 = vunpack.c.h.b16 %v403
    %v698 = vunpack.c.l.b16 %v404
    %v699 = vunpack.c.h.b16 %v404
    %v700 = vunpack.c.l.b16 %v405
    %v701 = vunpack.c.h.b16 %v405
    %v702 = vunpack.c.l.b16 %v406
    %v703 = vunpack.c.h.b16 %v406
    %v704 = vunpack.c.l.b16 %v407
    %v705 = vunpack.c.h.b16 %v407
    %v706 = vunpack.c.l.b16 %v408
    %v707 = vunpack.c.h.b16 %v408
    %v708 = vunpack.c.l.b16 %v409
    %v709 = vunpack.c.h.b16 %v409
    %v710 = vunpack.c.l.b16 %v410
    %v711 = vunpack.c.h.b16 %v410
    %v712 = vunpack.c.l.b16 %v411
    %v713 = vunpack.c.h.b16 %v411
    %v714 = vunpack.c.l.b16 %v412
    %v715 = vunpack.c.h.b16 %v412
    %v716 = vunpack.c.l.b16 %v413
    %v717 = vunpack.c.h.b16 %v413
    %v718 = vunpack.c.l.b16 %v414
    %v719 = vunpack.c.h.b16 %v414
    %v720 = vunpack.c.l.b16 %v415
    %v721 = vunpack.c.h.b16 %v415
    %v722 = vunpack.c.l.b16 %v416
    %v723 = vunpack.c.h.b16 %v416
    %v724 = vunpack.c.l.b16 %v417
    %v725 = vunpack.c.h.b16 %v417
    %v726 = vunpack.c.l.b16 %v418
    %v727 = vunpack.c.h.b16 %v418
    %v728 = vunpack.c.l.b16 %v419
    %v729 = vunpack.c.h.b16 %v419
    %v730 = vunpack.c.l.b16 %v420
    %v731 = vunpack.c.h.b16 %v420
    %v732 = vunpack.c.l.b16 %v421
    %v733 = vunpack.c.h.b16 %v421
    %v734 = vunpack.c.l.b16 %v422
    %v735 = vunpack.c.h.b16 %v422
    %v736 = vunpack.c.l.b16 %v423
    %v737 = vunpack.c.h.b16 %v423
    %v738 = vunpack.c.l.b16 %v424
    %v739 = vunpack.c.h.b16 %v424
    %v740 = vunpack.c.l.b16 %v425
    %v741 = vunpack.c.h.b16 %v425
    %v742 = vunpack.c.l.b16 %v426
    %v743 = vunpack.c.h.b16 %v426
    %v744 = vunpack.c.l.b16 %v427
    %v745 = vunpack.c.h.b16 %v427
    %v746 = vunpack.c.l.b16 %v428
    %v747 = vunpack.c.h.b16 %v428
    %v748 = vunpack.c.l.b16 %v429
    %v749 = vunpack.c.h.b16 %v429
    %v750 = vunpack.c.l.b16 %v430
    %v751 = vunpack.c.h.b16 %v430
    %v752 = vunpack.c.l.b16 %v431
    %v753 = vunpack.c.h.b16 %v431
    %v754 = vunpack.c.l.b16 %v432
    %v755 = vunpack.c.h.b16 %v432
    %v756 = vunpack.c.l.b16 %v433
    %v757 = vunpack.c.h.b16 %v433
    %v758 = vunpack.c.l.b16 %v434
    %v759 = vunpack.c.h.b16 %v434
    %v760 = vunpack.c.l.b16 %v435
    %v761 = vunpack.c.h.b16 %v435
    %v762 = vunpack.c.l.b16 %v436
    %v763 = vunpack.c.h.b16 %v436
    %v764 = vunpack.c.l.b16 %v437
    %v765 = vunpack.c.h.b16 %v437
    %v766 = vunpack.c.l.b16 %v438
    %v767 = vunpack.c.h.b16 %v438
    %v768 = vunpack.c.l.b16 %v439
    %v769 = vunpack.c.h.b16 %v439
    %v770 = vunpack.c.l.b16 %v440
    %v771 = vunpack.c.h.b16 %v440
    %v772 = vunpack.c.l.b16 %v441
    %v773 = vunpack.c.h.b16 %v441
    %v774 = vunpack.c.l.b16 %v442
    %v775 = vunpack.c.h.b16 %v442
    %v776 = vunpack.c.l.b16 %v443
    %v777 = vunpack.c.h.b16 %v443
    %v778 = vunpack.c.l.b16 %v444
    %v779 = vunpack.c.h.b16 %v444
    %v780 = vunpack.c.l.b16 %v445
    %v781 = vunpack.c.h.b16 %v445
    %v782 = vunpack.c.l.b16 %v446
    %v783 = vunpack.c.h.b16 %v446
    %v784 = vunpack.c.l.b16 %v447
    %v785 = vunpack.c.h.b16 %v447
    %v786 = vunpack.c.l.b16 %v448
    %v787 = vunpack.c.h.b16 %v448
    %v788 = vunpack.c.l.b16 %v449
    %v789 = vunpack.c.h.b16 %v449
    %v790 = vunpack.c.l.b16 %v450
    %v791 = vunpack.c.h.b16 %v450
    %v792 = vunpack.c.l.b16 %v451
    %v793 = vunpack.c.h.b16 %v451
    %v794 = vunpack.c.l.b16 %v452
    %v795 = vunpack.c.h.b16 %v452
    %v796 = vunpack.c.l.b16 %v453
    %v797 = vunpack.c.h.b16 %v453
    %v798 = vunpack.c.l.b16 %v454
    %v799 = vunpack.c.h.b16 %v454
    %v800 = vunpack.c.l.b16 %v455
    %v801 = vunpack.c.h.b16 %v455
    %v802 = vunpack.c.l.b16 %v456
    %v803 = vunpack.c.h.b16 %v456
    %v804 = vunpack.c.l.b16 %v457
    %v805 = vunpack.c.h.b16 %v457
    %v806 = vunpack.c.l.b16 %v458
    %v807 = vunpack.c.h.b16 %v458
    %v808 = vunpack.c.l.b16 %v459
    %v809 = vunpack.c.h.b16 %v459
    %v810 = vunpack.c.l.b16 %v460
    %v811 = vunpack.c.h.b16 %v460
    %v812 = vunpack.c.l.b16 %v461
    %v813 = vunpack.c.h.b16 %v461
    %v814 = vunpack.c.l.b16 %v462
    %v815 = vunpack.c.h.b16 %v462
    %v816 = vunpack.c.l.b16 %v463
    %v817 = vunpack.c.h.b16 %v463
    %v818 = vunpack.c.l.b16 %v464
    %v819 = vunpack.c.h.b16 %v464
    %v820 = vunpack.c.l.b16 %v465
    %v821 = vunpack.c.h.b16 %v465
    %v822 = vunpack.c.l.b16 %v466
    %v823 = vunpack.c.h.b16 %v466
    %v824 = vunpack.c.l.b16 %v467
    %v825 = vunpack.c.h.b16 %v467
    %v826 = vunpack.c.l.b16 %v468
    %v827 = vunpack.c.h.b16 %v468
    %v828 = vunpack.c.l.b16 %v469
    %v829 = vunpack.c.h.b16 %v469
    %v830 = vunpack.c.l.b16 %v470
    %v831 = vunpack.c.h.b16 %v470
    %v832 = vunpack.c.l.b16 %v471
    %v833 = vunpack.c.h.b16 %v471
    %v834 = vunpack.c.l.b16 %v472
    %v835 = vunpack.c.h.b16 %v472
    %v836 = vunpack.c.l.b16 %v473
    %v837 = vunpack.c.h.b16 %v473
    %v838 = vunpack.c.l.b16 %v474
    %v839 = vunpack.c.h.b16 %v474
    %v840 = vunpack.c.l.b16 %v475
    %v841 = vunpack.c.h.b16 %v475
    %v842 = vunpack.c.l.b16 %v476
    %v843 = vunpack.c.h.b16 %v476
    %v844 = vunpack.c.l.b16 %v477
    %v845 = vunpack.c.h.b16 %v477
    %v846 = vunpack.c.l.b16 %v478
    %v847 = vunpack.c.h.b16 %v478
    %v848 = vunpack.c.l.b16 %v479
    %v849 = vunpack.c.h.b16 %v479
    %v850 = vunpack.c.l.b16 %v480
    %v851 = vunpack.c.h.b16 %v480
    %v852 = vunpack.c.l.b16 %v481
    %v853 = vunpack.c.h.b16 %v481
    %v854 = vunpack.c.l.b16 %v482
    %v855 = vunpack.c.h.b16 %v482
    %v856 = vunpack.c.l.b16 %v483
    %v857 = vunpack.c.h.b16 %v483
    %v858 = vunpack.c.l.b16 %v484
    %v859 = vunpack.c.h.b16 %v484
    %v860 = vunpack.c.l.b16 %v485
    %v861 = vunpack.c.h.b16 %v485
    %v862 = vunpack.c.l.b16 %v486
    %v863 = vunpack.c.h.b16 %v486
    %v864 = vunpack.c.l.b16 %v487
    %v865 = vunpack.c.h.b16 %v487
    %v866 = vunpack.c.l.b16 %v488
    %v867 = vunpack.c.h.b16 %v488
    %v868 = vunpack.c.l.b16 %v489
    %v869 = vunpack.c.h.b16 %v489
    %v870 = vunpack.c.l.b16 %v490
    %v871 = vunpack.c.h.b16 %v490
    %v872 = vunpack.c.l.b16 %v491
    %v873 = vunpack.c.h.b16 %v491
    %v874 = vunpack.c.l.b16 %v492
    %v875 = vunpack.c.h.b16 %v492
    %v876 = vunpack.c.l.b16 %v493
    %v877 = vunpack.c.h.b16 %v493
    %v878 = vunpack.c.l.b16 %v494
    %v879 = vunpack.c.h.b16 %v494
    %v880 = vunpack.c.l.b16 %v495
    %v881 = vunpack.c.h.b16 %v495
    %v882 = vunpack.c.l.b16 %v496
    %v883 = vunpack.c.h.b16 %v496
    %v884 = vunpack.c.l.b16 %v497
    %v885 = vunpack.c.h.b16 %v497
    %v886 = vunpack.c.l.b16 %v498
    %v887 = vunpack.c.h.b16 %v498
    %v888 = vunpack.c.l.b16 %v499
    %v889 = vunpack.c.h.b16 %v499
    %v890 = vunpack.c.l.b16 %v500
    %v891 = vunpack.c.h.b16 %v500
    %v892 = vunpack.c.l.b16 %v501
    %v893 = vunpack.c.h.b16 %v501
    %v894 = vunpack.c.l.b16 %v502
    %v895 = vunpack.c.h.b16 %v502
    %v896 = vunpack.c.l.b16 %v503
    %v897 = vunpack.c.h.b16 %v503
    %v898 = vunpack.c.l.b16 %v504
    %v899 = vunpack.c.h.b16 %v504
    %v900 = vunpack.c.l.b16 %v505
    %v901 = vunpack.c.h.b16 %v505
    %v902 = vunpack.c.l.b16 %v506
    %v903 = vunpack.c.h.b16 %v506
    %v904 = vunpack.c.l.b16 %v507
    %v905 = vunpack.c.h.b16 %v507
    %v906 = vunpack.c.l.b16 %v508
    %v907 = vunpack.c.h.b16 %v508
    %v908 = vunpack.c.l.b16 %v509
    %v909 = vunpack.c.h.b16 %v509
    %v910 = vunpack.c.l.b16 %v510
    %v911 = vunpack.c.h.b16 %v510
    %v912 = vunpack.c.l.b16 %v511
    %v913 = vunpack.c.h.b16 %v511
    %v914 = vunpack.c.l.b16 %v512
    %v915 = vunpack.c.h.b16 %v512
    %v916 = vunpack.c.l.b16 %v513
    %v917 = vunpack.c.h.b16 %v513
    %v918 = vpack.c.b16 %v666, %v662
    %v919 = vpack.c.b16 %v667, %v663
    %v920 = vpack.c.b16 %v668, %v664
    %v921 = vpack.c.b16 %v669, %v665
    %v922 = vpack.c.b16 %v674, %v670
    %v923 = vpack.c.b16 %v675, %v671
    %v924 = vpack.c.b16 %v676, %v672
    %v925 = vpack.c.b16 %v677, %v673
    %v926 = vpack.c.b16 %v682, %v678
    %v927 = vpack.c.b16 %v683, %v679
    %v928 = vpack.c.b16 %v684, %v680
    %v929 = vpack.c.b16 %v685, %v681
    %v930 = vpack.c.b16 %v690, %v686
    %v931 = vpack.c.b16 %v691, %v687
    %v932 = vpack.c.b16 %v692, %v688
    %v933 = vpack.c.b16 %v693, %v689
    %v934 = vpack.c.b16 %v698, %v694
    %v935 = vpack.c.b16 %v699, %v695
    %v936 = vpack.c.b16 %v700, %v696
    %v937 = vpack.c.b16 %v701, %v697
    %v938 = vpack.c.b16 %v706, %v702
    %v939 = vpack.c.b16 %v707, %v703
    %v940 = vpack.c.b16 %v708, %v704
    %v941 = vpack.c.b16 %v709, %v705
    %v942 = vpack.c.b16 %v714, %v710
    %v943 = vpack.c.b16 %v715, %v711
    %v944 = vpack.c.b16 %v716, %v712
    %v945 = vpack.c.b16 %v717, %v713
    %v946 = vpack.c.b16 %v722, %v718
    %v947 = vpack.c.b16 %v723, %v719
    %v948 = vpack.c.b16 %v724, %v720
    %v949 = vpack.c.b16 %v725, %v721
    %v950 = vpack.c.b16 %v730, %v726
    %v951 = vpack.c.b16 %v731, %v727
    %v952 = vpack.c.b16 %v732, %v728
    %v953 = vpack.c.b16 %v733, %v729
    %v954 = vpack.c.b16 %v738, %v734
    %v955 = vpack.c.b16 %v739, %v735
    %v956 = vpack.c.b16 %v740, %v736
    %v957 = vpack.c.b16 %v741, %v737
    %v958 = vpack.c.b16 %v746, %v742
    %v959 = vpack.c.b16 %v747, %v743
    %v960 = vpack.c.b16 %v748, %v744
    %v961 = vpack.c.b16 %v749, %v745
    %v962 = vpack.c.b16 %v754, %v750
    %v963 = vpack.c.b16 %v755, %v751
    %v964 = vpack.c.b16 %v756, %v752
    %v965 = vpack.c.b16 %v757, %v753
    %v966 = vpack.c.b16 %v762, %v758
    %v967 = vpack.c.b16 %v763, %v759
    %v968 = vpack.c.b16 %v764, %v760
    %v969 = vpack.c.b16 %v765, %v761
    %v970 = vpack.c.b16 %v770, %v766
    %v971 = vpack.c.b16 %v771, %v767
    %v972 = vpack.c.b16 %v772, %v768
    %v973 = vpack.c.b16 %v773, %v769
    %v974 = vpack.c.b16 %v778, %v774
    %v975 = vpack.c.b16 %v779, %v775
    %v976 = vpack.c.b16 %v780, %v776
    %v977 = vpack.c.b16 %v781, %v777
    %v978 = vpack.c.b16 %v786, %v782
    %v979 = vpack.c.b16 %v787, %v783
    %v980 = vpack.c.b16 %v788, %v784
    %v981 = vpack.c.b16 %v789, %v785
    %v982 = vpack.c.b16 %v794, %v790
    %v983 = vpack.c.b16 %v795, %v791
    %v984 = vpack.c.b16 %v796, %v792
    %v985 = vpack.c.b16 %v797, %v793
    %v986 = vpack.c.b16 %v802, %v798
    %v987 = vpack.c.b16 %v803, %v799
    %v988 = vpack.c.b16 %v804, %v800
    %v989 = vpack.c.b16 %v805, %v801
    %v990 = vpack.c.b16 %v810, %v806
    %v991 = vpack.c.b16 %v811, %v807
    %v992 = vpack.c.b16 %v812, %v808
    %v993 = vpack.c.b16 %v813, %v809
    %v994 = vpack.c.b16 %v818, %v814
    %v995 = vpack.c.b16 %v819, %v815
    %v996 = vpack.c.b16 %v820, %v816
    %v997 = vpack.c.b16 %v821, %v817
    %v998 = vpack.c.b16 %v826, %v822
    %v999 = vpack.c.b16 %v827, %v823
    %v1000 = vpack.c.b16 %v828, %v824
    %v1001 = vpack.c.b16 %v829, %v825
    %v1002 = vpack.c.b16 %v834, %v830
    %v1003 = vpack.c.b16 %v835, %v831
    %v1004 = vpack.c.b16 %v836, %v832
    %v1005 = vpack.c.b16 %v837, %v833
    %v1006 = vpack.c.b16 %v842, %v838
    %v1007 = vpack.c.b16 %v843, %v839
    %v1008 = vpack.c.b16 %v844, %v840
    %v1009 = vpack.c.b16 %v845, %v841
    %v1010 = vpack.c.b16 %v850, %v846
    %v1011 = vpack.c.b16 %v851, %v847
    %v1012 = vpack.c.b16 %v852, %v848
    %v1013 = vpack.c.b16 %v853, %v849
    %v1014 = vpack.c.b16 %v858, %v854
    %v1015 = vpack.c.b16 %v859, %v855
    %v1016 = vpack.c.b16 %v860, %v856
    %v1017 = vpack.c.b16 %v861, %v857
    %v1018 = vpack.c.b16 %v866, %v862
    %v1019 = vpack.c.b16 %v867, %v863
    %v1020 = vpack.c.b16 %v868, %v864
    %v1021 = vpack.c.b16 %v869, %v865
    %v1022 = vpack.c.b16 %v874, %v870
    %v1023 = vpack.c.b16 %v875, %v871
    %v1024 = vpack.c.b16 %v876, %v872
    %v1025 = vpack.c.b16 %v877, %v873
    %v1026 = vpack.c.b16 %v882, %v878
    %v1027 = vpack.c.b16 %v883, %v879
    %v1028 = vpack.c.b16 %v884, %v880
    %v1029 = vpack.c.b16 %v885, %v881
    %v1030 = vpack.c.b16 %v890, %v886
    %v1031 = vpack.c.b16 %v891, %v887
    %v1032 = vpack.c.b16 %v892, %v888
    %v1033 = vpack.c.b16 %v893, %v889
    %v1034 = vpack.c.b16 %v898, %v894
    %v1035 = vpack.c.b16 %v899, %v895
    %v1036 = vpack.c.b16 %v900, %v896
    %v1037 = vpack.c.b16 %v901, %v897
    %v1038 = vpack.c.b16 %v906, %v902
    %v1039 = vpack.c.b16 %v907, %v903
    %v1040 = vpack.c.b16 %v908, %v904
    %v1041 = vpack.c.b16 %v909, %v905
    %v1042 = vpack.c.b16 %v914, %v910
    %v1043 = vpack.c.b16 %v915, %v911
    %v1044 = vpack.c.b16 %v916, %v912
    %v1045 = vpack.c.b16 %v917, %v913
    %1174 = vmatprep.subr.bf16.mxu0 %v919
    %1175 = vmatpush1.bf16.msra.mxu0 %v918
    %1176 = vmatprep.subr.bf16.mxu0 %v923
    %1177 = vmatpush1.bf16.msra.mxu0 %v922
    %1178 = vmatprep.subr.bf16.mxu0 %v927
    %1179 = vmatpush1.bf16.msra.mxu0 %v926
    %1180 = vmatprep.subr.bf16.mxu0 %v931
    %1181 = vmatpush1.bf16.msra.mxu0 %v930
    %1182 = vmatprep.subr.bf16.mxu0 %v935
    %1183 = vmatpush1.bf16.msra.mxu0 %v934
    %1184 = vmatprep.subr.bf16.mxu0 %v939
    %1185 = vmatpush1.bf16.msra.mxu0 %v938
    %1186 = vmatprep.subr.bf16.mxu0 %v943
    %1187 = vmatpush1.bf16.msra.mxu0 %v942
    %1188 = vmatprep.subr.bf16.mxu0 %v947
    %1189 = vmatpush1.bf16.msra.mxu0 %v946
    %1190 = vmatprep.subr.bf16.mxu0 %v951
    %1191 = vmatpush1.bf16.msra.mxu0 %v950
    %1192 = vmatprep.subr.bf16.mxu0 %v955
    %1193 = vmatpush1.bf16.msra.mxu0 %v954
    %1194 = vmatprep.subr.bf16.mxu0 %v959
    %1195 = vmatpush1.bf16.msra.mxu0 %v958
    %1196 = vmatprep.subr.bf16.mxu0 %v963
    %1197 = vmatpush1.bf16.msra.mxu0 %v962
    %1198 = vmatprep.subr.bf16.mxu0 %v967
    %1199 = vmatpush1.bf16.msra.mxu0 %v966
    %1200 = vmatprep.subr.bf16.mxu0 %v971
    %1201 = vmatpush1.bf16.msra.mxu0 %v970
    %1202 = vmatprep.subr.bf16.mxu0 %v975
    %1203 = vmatpush1.bf16.msra.mxu0 %v974
    %1204 = vmatprep.subr.bf16.mxu0 %v979
    %1205 = vmatpush1.bf16.msra.mxu0 %v978
    %1206 = vmatprep.mubr.bf16.mxu0 %v527
    %1207 = vmatmul.mubr.bf16.gmra.mrb[0].mxu0 %v526
    %v1208 = vpop.f32.mrb[0].mxu0
    %v1209 = vadd.f32 0.0, %v1208
    %v1210 = vpop.f32.mrb[0].mxu0
    %v1211 = vadd.f32 0.0, %v1210
    %v1212 = vpop.f32.mrb[0].mxu0
    %v1213 = vadd.f32 0.0, %v1212
    %v1214 = vpop.f32.mrb[0].mxu0
    %v1215 = vadd.f32 0.0, %v1214
    %1216 = vdwg.mxu0
    %1217 = vmatprep.subr.bf16.mxu0 %v983
    %1218 = vmatpush1.bf16.msra.mxu0 %v982
    %1219 = vmatprep.subr.bf16.mxu0 %v987
    %1220 = vmatpush1.bf16.msra.mxu0 %v986
    %1221 = vmatprep.subr.bf16.mxu0 %v991
    %1222 = vmatpush1.bf16.msra.mxu0 %v990
    %1223 = vmatprep.subr.bf16.mxu0 %v995
    %1224 = vmatpush1.bf16.msra.mxu0 %v994
    %1225 = vmatprep.subr.bf16.mxu0 %v999
    %1226 = vmatpush1.bf16.msra.mxu0 %v998
    %1227 = vmatprep.subr.bf16.mxu0 %v1003
    %1228 = vmatpush1.bf16.msra.mxu0 %v1002
    %1229 = vmatprep.subr.bf16.mxu0 %v1007
    %1230 = vmatpush1.bf16.msra.mxu0 %v1006
    %1231 = vmatprep.subr.bf16.mxu0 %v1011
    %1232 = vmatpush1.bf16.msra.mxu0 %v1010
    %1233 = vmatprep.subr.bf16.mxu0 %v1015
    %1234 = vmatpush1.bf16.msra.mxu0 %v1014
    %1235 = vmatprep.subr.bf16.mxu0 %v1019
    %1236 = vmatpush1.bf16.msra.mxu0 %v1018
    %1237 = vmatprep.subr.bf16.mxu0 %v1023
    %1238 = vmatpush1.bf16.msra.mxu0 %v1022
    %1239 = vmatprep.subr.bf16.mxu0 %v1027
    %1240 = vmatpush1.bf16.msra.mxu0 %v1026
    %1241 = vmatprep.subr.bf16.mxu0 %v1031
    %1242 = vmatpush1.bf16.msra.mxu0 %v1030
    %1243 = vmatprep.subr.bf16.mxu0 %v1035
    %1244 = vmatpush1.bf16.msra.mxu0 %v1034
    %1245 = vmatprep.subr.bf16.mxu0 %v1039
    %1246 = vmatpush1.bf16.msra.mxu0 %v1038
    %1247 = vmatprep.subr.bf16.mxu0 %v1043
    %1248 = vmatpush1.bf16.msra.mxu0 %v1042
    %1249 = vmatprep.mubr.bf16.mxu0 %v529
    %1250 = vmatmul.mubr.bf16.gmra.mrb[0].mxu0 %v528
    %v1251 = vpop.f32.mrb[0].mxu0
    %v1252 = vadd.f32 %v1209, %v1251
    %v1253 = vpop.f32.mrb[0].mxu0
    %v1254 = vadd.f32 %v1211, %v1253
    %v1255 = vpop.f32.mrb[0].mxu0
    %v1256 = vadd.f32 %v1213, %v1255
    %v1257 = vpop.f32.mrb[0].mxu0
    %v1258 = vadd.f32 %v1215, %v1257
    %1259 = vdwg.mxu0
    %1260 = vmatprep.subr.bf16.mxu0 %v921
    %1261 = vmatpush1.bf16.msra.mxu0 %v920
    %1262 = vmatprep.subr.bf16.mxu0 %v925
    %1263 = vmatpush1.bf16.msra.mxu0 %v924
    %1264 = vmatprep.subr.bf16.mxu0 %v929
    %1265 = vmatpush1.bf16.msra.mxu0 %v928
    %1266 = vmatprep.subr.bf16.mxu0 %v933
    %1267 = vmatpush1.bf16.msra.mxu0 %v932
    %1268 = vmatprep.subr.bf16.mxu0 %v937
    %1269 = vmatpush1.bf16.msra.mxu0 %v936
    %1270 = vmatprep.subr.bf16.mxu0 %v941
    %1271 = vmatpush1.bf16.msra.mxu0 %v940
    %1272 = vmatprep.subr.bf16.mxu0 %v945
    %1273 = vmatpush1.bf16.msra.mxu0 %v944
    %1274 = vmatprep.subr.bf16.mxu0 %v949
    %1275 = vmatpush1.bf16.msra.mxu0 %v948
    %1276 = vmatprep.subr.bf16.mxu0 %v953
    %1277 = vmatpush1.bf16.msra.mxu0 %v952
    %1278 = vmatprep.subr.bf16.mxu0 %v957
    %1279 = vmatpush1.bf16.msra.mxu0 %v956
    %1280 = vmatprep.subr.bf16.mxu0 %v961
    %1281 = vmatpush1.bf16.msra.mxu0 %v960
    %1282 = vmatprep.subr.bf16.mxu0 %v965
    %1283 = vmatpush1.bf16.msra.mxu0 %v964
    %1284 = vmatprep.subr.bf16.mxu0 %v969
    %1285 = vmatpush1.bf16.msra.mxu0 %v968
    %1286 = vmatprep.subr.bf16.mxu0 %v973
    %1287 = vmatpush1.bf16.msra.mxu0 %v972
    %1288 = vmatprep.subr.bf16.mxu0 %v977
    %1289 = vmatpush1.bf16.msra.mxu0 %v976
    %1290 = vmatprep.subr.bf16.mxu0 %v981
    %1291 = vmatpush1.bf16.msra.mxu0 %v980
    %1292 = vmatprep.mubr.bf16.mxu0 %v527
    %1293 = vmatmul.mubr.bf16.gmra.mrb[0].mxu0 %v526
    %v1294 = vpop.f32.mrb[0].mxu0
    %v1295 = vadd.f32 0.0, %v1294
    %v1296 = vpop.f32.mrb[0].mxu0
    %v1297 = vadd.f32 0.0, %v1296
    %v1298 = vpop.f32.mrb[0].mxu0
    %v1299 = vadd.f32 0.0, %v1298
    %v1300 = vpop.f32.mrb[0].mxu0
    %v1301 = vadd.f32 0.0, %v1300
    %1302 = vdwg.mxu0
    %1303 = vmatprep.subr.bf16.mxu0 %v985
    %1304 = vmatpush1.bf16.msra.mxu0 %v984
    %1305 = vmatprep.subr.bf16.mxu0 %v989
    %1306 = vmatpush1.bf16.msra.mxu0 %v988
    %1307 = vmatprep.subr.bf16.mxu0 %v993
    %1308 = vmatpush1.bf16.msra.mxu0 %v992
    %1309 = vmatprep.subr.bf16.mxu0 %v997
    %1310 = vmatpush1.bf16.msra.mxu0 %v996
    %1311 = vmatprep.subr.bf16.mxu0 %v1001
    %1312 = vmatpush1.bf16.msra.mxu0 %v1000
    %1313 = vmatprep.subr.bf16.mxu0 %v1005
    %1314 = vmatpush1.bf16.msra.mxu0 %v1004
    %1315 = vmatprep.subr.bf16.mxu0 %v1009
    %1316 = vmatpush1.bf16.msra.mxu0 %v1008
    %1317 = vmatprep.subr.bf16.mxu0 %v1013
    %1318 = vmatpush1.bf16.msra.mxu0 %v1012
    %1319 = vmatprep.subr.bf16.mxu0 %v1017
    %1320 = vmatpush1.bf16.msra.mxu0 %v1016
    %1321 = vmatprep.subr.bf16.mxu0 %v1021
    %1322 = vmatpush1.bf16.msra.mxu0 %v1020
    %1323 = vmatprep.subr.bf16.mxu0 %v1025
    %1324 = vmatpush1.bf16.msra.mxu0 %v1024
    %1325 = vmatprep.subr.bf16.mxu0 %v1029
    %1326 = vmatpush1.bf16.msra.mxu0 %v1028
    %1327 = vmatprep.subr.bf16.mxu0 %v1033
    %1328 = vmatpush1.bf16.msra.mxu0 %v1032
    %1329 = vmatprep.subr.bf16.mxu0 %v1037
    %1330 = vmatpush1.bf16.msra.mxu0 %v1036
    %1331 = vmatprep.subr.bf16.mxu0 %v1041
    %1332 = vmatpush1.bf16.msra.mxu0 %v1040
    %1333 = vmatprep.subr.bf16.mxu0 %v1045
    %1334 = vmatpush1.bf16.msra.mxu0 %v1044
    %1335 = vmatprep.mubr.bf16.mxu0 %v529
    %1336 = vmatmul.mubr.bf16.gmra.mrb[0].mxu0 %v528
    %v1337 = vpop.f32.mrb[0].mxu0
    %v1338 = vadd.f32 %v1295, %v1337
    %v1339 = vpop.f32.mrb[0].mxu0
    %v1340 = vadd.f32 %v1297, %v1339
    %v1341 = vpop.f32.mrb[0].mxu0
    %v1342 = vadd.f32 %v1299, %v1341
    %v1343 = vpop.f32.mrb[0].mxu0
    %v1344 = vadd.f32 %v1301, %v1343
    %1345 = vdwg.mxu0
    %v1354 = vunpack.c.l.b16 %v118
    %v1355 = vunpack.c.h.b16 %v118
    %v1356 = vunpack.c.l.b16 %v119
    %v1357 = vunpack.c.h.b16 %v119
    %v1358 = vunpack.c.l.b16 %v120
    %v1359 = vunpack.c.h.b16 %v120
    %v1360 = vunpack.c.l.b16 %v121
    %v1361 = vunpack.c.h.b16 %v121
    %v1362 = vunpack.c.l.b16 %v122
    %v1363 = vunpack.c.h.b16 %v122
    %v1364 = vunpack.c.l.b16 %v123
    %v1365 = vunpack.c.h.b16 %v123
    %v1366 = vunpack.c.l.b16 %v124
    %v1367 = vunpack.c.h.b16 %v124
    %v1368 = vunpack.c.l.b16 %v125
    %v1369 = vunpack.c.h.b16 %v125
    %v1370 = vpack.c.b16 %v1362, %v1354
    %v1371 = vpack.c.b16 %v1363, %v1355
    %v1372 = vpack.c.b16 %v1364, %v1356
    %v1373 = vpack.c.b16 %v1365, %v1357
    %v1374 = vpack.c.b16 %v1366, %v1358
    %v1375 = vpack.c.b16 %v1367, %v1359
    %v1376 = vpack.c.b16 %v1368, %v1360
    %v1377 = vpack.c.b16 %v1369, %v1361
    %v1642 = vunpack.c.l.b16 %v126
    %v1643 = vunpack.c.h.b16 %v126
    %v1644 = vunpack.c.l.b16 %v127
    %v1645 = vunpack.c.h.b16 %v127
    %v1646 = vunpack.c.l.b16 %v128
    %v1647 = vunpack.c.h.b16 %v128
    %v1648 = vunpack.c.l.b16 %v129
    %v1649 = vunpack.c.h.b16 %v129
    %v1650 = vunpack.c.l.b16 %v130
    %v1651 = vunpack.c.h.b16 %v130
    %v1652 = vunpack.c.l.b16 %v131
    %v1653 = vunpack.c.h.b16 %v131
    %v1654 = vunpack.c.l.b16 %v132
    %v1655 = vunpack.c.h.b16 %v132
    %v1656 = vunpack.c.l.b16 %v133
    %v1657 = vunpack.c.h.b16 %v133
    %v1658 = vunpack.c.l.b16 %v134
    %v1659 = vunpack.c.h.b16 %v134
    %v1660 = vunpack.c.l.b16 %v135
    %v1661 = vunpack.c.h.b16 %v135
    %v1662 = vunpack.c.l.b16 %v136
    %v1663 = vunpack.c.h.b16 %v136
    %v1664 = vunpack.c.l.b16 %v137
    %v1665 = vunpack.c.h.b16 %v137
    %v1666 = vunpack.c.l.b16 %v138
    %v1667 = vunpack.c.h.b16 %v138
    %v1668 = vunpack.c.l.b16 %v139
    %v1669 = vunpack.c.h.b16 %v139
    %v1670 = vunpack.c.l.b16 %v140
    %v1671 = vunpack.c.h.b16 %v140
    %v1672 = vunpack.c.l.b16 %v141
    %v1673 = vunpack.c.h.b16 %v141
    %v1674 = vunpack.c.l.b16 %v142
    %v1675 = vunpack.c.h.b16 %v142
    %v1676 = vunpack.c.l.b16 %v143
    %v1677 = vunpack.c.h.b16 %v143
    %v1678 = vunpack.c.l.b16 %v144
    %v1679 = vunpack.c.h.b16 %v144
    %v1680 = vunpack.c.l.b16 %v145
    %v1681 = vunpack.c.h.b16 %v145
    %v1682 = vunpack.c.l.b16 %v146
    %v1683 = vunpack.c.h.b16 %v146
    %v1684 = vunpack.c.l.b16 %v147
    %v1685 = vunpack.c.h.b16 %v147
    %v1686 = vunpack.c.l.b16 %v148
    %v1687 = vunpack.c.h.b16 %v148
    %v1688 = vunpack.c.l.b16 %v149
    %v1689 = vunpack.c.h.b16 %v149
    %v1690 = vunpack.c.l.b16 %v150
    %v1691 = vunpack.c.h.b16 %v150
    %v1692 = vunpack.c.l.b16 %v151
    %v1693 = vunpack.c.h.b16 %v151
    %v1694 = vunpack.c.l.b16 %v152
    %v1695 = vunpack.c.h.b16 %v152
    %v1696 = vunpack.c.l.b16 %v153
    %v1697 = vunpack.c.h.b16 %v153
    %v1698 = vunpack.c.l.b16 %v154
    %v1699 = vunpack.c.h.b16 %v154
    %v1700 = vunpack.c.l.b16 %v155
    %v1701 = vunpack.c.h.b16 %v155
    %v1702 = vunpack.c.l.b16 %v156
    %v1703 = vunpack.c.h.b16 %v156
    %v1704 = vunpack.c.l.b16 %v157
    %v1705 = vunpack.c.h.b16 %v157
    %v1706 = vunpack.c.l.b16 %v158
    %v1707 = vunpack.c.h.b16 %v158
    %v1708 = vunpack.c.l.b16 %v159
    %v1709 = vunpack.c.h.b16 %v159
    %v1710 = vunpack.c.l.b16 %v160
    %v1711 = vunpack.c.h.b16 %v160
    %v1712 = vunpack.c.l.b16 %v161
    %v1713 = vunpack.c.h.b16 %v161
    %v1714 = vunpack.c.l.b16 %v162
    %v1715 = vunpack.c.h.b16 %v162
    %v1716 = vunpack.c.l.b16 %v163
    %v1717 = vunpack.c.h.b16 %v163
    %v1718 = vunpack.c.l.b16 %v164
    %v1719 = vunpack.c.h.b16 %v164
    %v1720 = vunpack.c.l.b16 %v165
    %v1721 = vunpack.c.h.b16 %v165
    %v1722 = vunpack.c.l.b16 %v166
    %v1723 = vunpack.c.h.b16 %v166
    %v1724 = vunpack.c.l.b16 %v167
    %v1725 = vunpack.c.h.b16 %v167
    %v1726 = vunpack.c.l.b16 %v168
    %v1727 = vunpack.c.h.b16 %v168
    %v1728 = vunpack.c.l.b16 %v169
    %v1729 = vunpack.c.h.b16 %v169
    %v1730 = vunpack.c.l.b16 %v170
    %v1731 = vunpack.c.h.b16 %v170
    %v1732 = vunpack.c.l.b16 %v171
    %v1733 = vunpack.c.h.b16 %v171
    %v1734 = vunpack.c.l.b16 %v172
    %v1735 = vunpack.c.h.b16 %v172
    %v1736 = vunpack.c.l.b16 %v173
    %v1737 = vunpack.c.h.b16 %v173
    %v1738 = vunpack.c.l.b16 %v174
    %v1739 = vunpack.c.h.b16 %v174
    %v1740 = vunpack.c.l.b16 %v175
    %v1741 = vunpack.c.h.b16 %v175
    %v1742 = vunpack.c.l.b16 %v176
    %v1743 = vunpack.c.h.b16 %v176
    %v1744 = vunpack.c.l.b16 %v177
    %v1745 = vunpack.c.h.b16 %v177
    %v1746 = vunpack.c.l.b16 %v178
    %v1747 = vunpack.c.h.b16 %v178
    %v1748 = vunpack.c.l.b16 %v179
    %v1749 = vunpack.c.h.b16 %v179
    %v1750 = vunpack.c.l.b16 %v180
    %v1751 = vunpack.c.h.b16 %v180
    %v1752 = vunpack.c.l.b16 %v181
    %v1753 = vunpack.c.h.b16 %v181
    %v1754 = vunpack.c.l.b16 %v182
    %v1755 = vunpack.c.h.b16 %v182
    %v1756 = vunpack.c.l.b16 %v183
    %v1757 = vunpack.c.h.b16 %v183
    %v1758 = vunpack.c.l.b16 %v184
    %v1759 = vunpack.c.h.b16 %v184
    %v1760 = vunpack.c.l.b16 %v185
    %v1761 = vunpack.c.h.b16 %v185
    %v1762 = vunpack.c.l.b16 %v186
    %v1763 = vunpack.c.h.b16 %v186
    %v1764 = vunpack.c.l.b16 %v187
    %v1765 = vunpack.c.h.b16 %v187
    %v1766 = vunpack.c.l.b16 %v188
    %v1767 = vunpack.c.h.b16 %v188
    %v1768 = vunpack.c.l.b16 %v189
    %v1769 = vunpack.c.h.b16 %v189
    %v1770 = vunpack.c.l.b16 %v190
    %v1771 = vunpack.c.h.b16 %v190
    %v1772 = vunpack.c.l.b16 %v191
    %v1773 = vunpack.c.h.b16 %v191
    %v1774 = vunpack.c.l.b16 %v192
    %v1775 = vunpack.c.h.b16 %v192
    %v1776 = vunpack.c.l.b16 %v193
    %v1777 = vunpack.c.h.b16 %v193
    %v1778 = vunpack.c.l.b16 %v194
    %v1779 = vunpack.c.h.b16 %v194
    %v1780 = vunpack.c.l.b16 %v195
    %v1781 = vunpack.c.h.b16 %v195
    %v1782 = vunpack.c.l.b16 %v196
    %v1783 = vunpack.c.h.b16 %v196
    %v1784 = vunpack.c.l.b16 %v197
    %v1785 = vunpack.c.h.b16 %v197
    %v1786 = vunpack.c.l.b16 %v198
    %v1787 = vunpack.c.h.b16 %v198
    %v1788 = vunpack.c.l.b16 %v199
    %v1789 = vunpack.c.h.b16 %v199
    %v1790 = vunpack.c.l.b16 %v200
    %v1791 = vunpack.c.h.b16 %v200
    %v1792 = vunpack.c.l.b16 %v201
    %v1793 = vunpack.c.h.b16 %v201
    %v1794 = vunpack.c.l.b16 %v202
    %v1795 = vunpack.c.h.b16 %v202
    %v1796 = vunpack.c.l.b16 %v203
    %v1797 = vunpack.c.h.b16 %v203
    %v1798 = vunpack.c.l.b16 %v204
    %v1799 = vunpack.c.h.b16 %v204
    %v1800 = vunpack.c.l.b16 %v205
    %v1801 = vunpack.c.h.b16 %v205
    %v1802 = vunpack.c.l.b16 %v206
    %v1803 = vunpack.c.h.b16 %v206
    %v1804 = vunpack.c.l.b16 %v207
    %v1805 = vunpack.c.h.b16 %v207
    %v1806 = vunpack.c.l.b16 %v208
    %v1807 = vunpack.c.h.b16 %v208
    %v1808 = vunpack.c.l.b16 %v209
    %v1809 = vunpack.c.h.b16 %v209
    %v1810 = vunpack.c.l.b16 %v210
    %v1811 = vunpack.c.h.b16 %v210
    %v1812 = vunpack.c.l.b16 %v211
    %v1813 = vunpack.c.h.b16 %v211
    %v1814 = vunpack.c.l.b16 %v212
    %v1815 = vunpack.c.h.b16 %v212
    %v1816 = vunpack.c.l.b16 %v213
    %v1817 = vunpack.c.h.b16 %v213
    %v1818 = vunpack.c.l.b16 %v214
    %v1819 = vunpack.c.h.b16 %v214
    %v1820 = vunpack.c.l.b16 %v215
    %v1821 = vunpack.c.h.b16 %v215
    %v1822 = vunpack.c.l.b16 %v216
    %v1823 = vunpack.c.h.b16 %v216
    %v1824 = vunpack.c.l.b16 %v217
    %v1825 = vunpack.c.h.b16 %v217
    %v1826 = vunpack.c.l.b16 %v218
    %v1827 = vunpack.c.h.b16 %v218
    %v1828 = vunpack.c.l.b16 %v219
    %v1829 = vunpack.c.h.b16 %v219
    %v1830 = vunpack.c.l.b16 %v220
    %v1831 = vunpack.c.h.b16 %v220
    %v1832 = vunpack.c.l.b16 %v221
    %v1833 = vunpack.c.h.b16 %v221
    %v1834 = vunpack.c.l.b16 %v222
    %v1835 = vunpack.c.h.b16 %v222
    %v1836 = vunpack.c.l.b16 %v223
    %v1837 = vunpack.c.h.b16 %v223
    %v1838 = vunpack.c.l.b16 %v224
    %v1839 = vunpack.c.h.b16 %v224
    %v1840 = vunpack.c.l.b16 %v225
    %v1841 = vunpack.c.h.b16 %v225
    %v1842 = vunpack.c.l.b16 %v226
    %v1843 = vunpack.c.h.b16 %v226
    %v1844 = vunpack.c.l.b16 %v227
    %v1845 = vunpack.c.h.b16 %v227
    %v1846 = vunpack.c.l.b16 %v228
    %v1847 = vunpack.c.h.b16 %v228
    %v1848 = vunpack.c.l.b16 %v229
    %v1849 = vunpack.c.h.b16 %v229
    %v1850 = vunpack.c.l.b16 %v230
    %v1851 = vunpack.c.h.b16 %v230
    %v1852 = vunpack.c.l.b16 %v231
    %v1853 = vunpack.c.h.b16 %v231
    %v1854 = vunpack.c.l.b16 %v232
    %v1855 = vunpack.c.h.b16 %v232
    %v1856 = vunpack.c.l.b16 %v233
    %v1857 = vunpack.c.h.b16 %v233
    %v1858 = vunpack.c.l.b16 %v234
    %v1859 = vunpack.c.h.b16 %v234
    %v1860 = vunpack.c.l.b16 %v235
    %v1861 = vunpack.c.h.b16 %v235
    %v1862 = vunpack.c.l.b16 %v236
    %v1863 = vunpack.c.h.b16 %v236
    %v1864 = vunpack.c.l.b16 %v237
    %v1865 = vunpack.c.h.b16 %v237
    %v1866 = vunpack.c.l.b16 %v238
    %v1867 = vunpack.c.h.b16 %v238
    %v1868 = vunpack.c.l.b16 %v239
    %v1869 = vunpack.c.h.b16 %v239
    %v1870 = vunpack.c.l.b16 %v240
    %v1871 = vunpack.c.h.b16 %v240
    %v1872 = vunpack.c.l.b16 %v241
    %v1873 = vunpack.c.h.b16 %v241
    %v1874 = vunpack.c.l.b16 %v242
    %v1875 = vunpack.c.h.b16 %v242
    %v1876 = vunpack.c.l.b16 %v243
    %v1877 = vunpack.c.h.b16 %v243
    %v1878 = vunpack.c.l.b16 %v244
    %v1879 = vunpack.c.h.b16 %v244
    %v1880 = vunpack.c.l.b16 %v245
    %v1881 = vunpack.c.h.b16 %v245
    %v1882 = vunpack.c.l.b16 %v246
    %v1883 = vunpack.c.h.b16 %v246
    %v1884 = vunpack.c.l.b16 %v247
    %v1885 = vunpack.c.h.b16 %v247
    %v1886 = vunpack.c.l.b16 %v248
    %v1887 = vunpack.c.h.b16 %v248
    %v1888 = vunpack.c.l.b16 %v249
    %v1889 = vunpack.c.h.b16 %v249
    %v1890 = vunpack.c.l.b16 %v250
    %v1891 = vunpack.c.h.b16 %v250
    %v1892 = vunpack.c.l.b16 %v251
    %v1893 = vunpack.c.h.b16 %v251
    %v1894 = vunpack.c.l.b16 %v252
    %v1895 = vunpack.c.h.b16 %v252
    %v1896 = vunpack.c.l.b16 %v253
    %v1897 = vunpack.c.h.b16 %v253
    %v1898 = vunpack.c.l.b16 %v254
    %v1899 = vunpack.c.h.b16 %v254
    %v1900 = vunpack.c.l.b16 %v255
    %v1901 = vunpack.c.h.b16 %v255
    %v1902 = vunpack.c.l.b16 %v256
    %v1903 = vunpack.c.h.b16 %v256
    %v1904 = vunpack.c.l.b16 %v257
    %v1905 = vunpack.c.h.b16 %v257
    %v1906 = vunpack.c.l.b16 %v258
    %v1907 = vunpack.c.h.b16 %v258
    %v1908 = vunpack.c.l.b16 %v259
    %v1909 = vunpack.c.h.b16 %v259
    %v1910 = vunpack.c.l.b16 %v260
    %v1911 = vunpack.c.h.b16 %v260
    %v1912 = vunpack.c.l.b16 %v261
    %v1913 = vunpack.c.h.b16 %v261
    %v1914 = vunpack.c.l.b16 %v262
    %v1915 = vunpack.c.h.b16 %v262
    %v1916 = vunpack.c.l.b16 %v263
    %v1917 = vunpack.c.h.b16 %v263
    %v1918 = vunpack.c.l.b16 %v264
    %v1919 = vunpack.c.h.b16 %v264
    %v1920 = vunpack.c.l.b16 %v265
    %v1921 = vunpack.c.h.b16 %v265
    %v1922 = vunpack.c.l.b16 %v266
    %v1923 = vunpack.c.h.b16 %v266
    %v1924 = vunpack.c.l.b16 %v267
    %v1925 = vunpack.c.h.b16 %v267
    %v1926 = vunpack.c.l.b16 %v268
    %v1927 = vunpack.c.h.b16 %v268
    %v1928 = vunpack.c.l.b16 %v269
    %v1929 = vunpack.c.h.b16 %v269
    %v1930 = vunpack.c.l.b16 %v270
    %v1931 = vunpack.c.h.b16 %v270
    %v1932 = vunpack.c.l.b16 %v271
    %v1933 = vunpack.c.h.b16 %v271
    %v1934 = vunpack.c.l.b16 %v272
    %v1935 = vunpack.c.h.b16 %v272
    %v1936 = vunpack.c.l.b16 %v273
    %v1937 = vunpack.c.h.b16 %v273
    %v1938 = vunpack.c.l.b16 %v274
    %v1939 = vunpack.c.h.b16 %v274
    %v1940 = vunpack.c.l.b16 %v275
    %v1941 = vunpack.c.h.b16 %v275
    %v1942 = vunpack.c.l.b16 %v276
    %v1943 = vunpack.c.h.b16 %v276
    %v1944 = vunpack.c.l.b16 %v277
    %v1945 = vunpack.c.h.b16 %v277
    %v1946 = vunpack.c.l.b16 %v278
    %v1947 = vunpack.c.h.b16 %v278
    %v1948 = vunpack.c.l.b16 %v279
    %v1949 = vunpack.c.h.b16 %v279
    %v1950 = vunpack.c.l.b16 %v280
    %v1951 = vunpack.c.h.b16 %v280
    %v1952 = vunpack.c.l.b16 %v281
    %v1953 = vunpack.c.h.b16 %v281
    %v1954 = vunpack.c.l.b16 %v282
    %v1955 = vunpack.c.h.b16 %v282
    %v1956 = vunpack.c.l.b16 %v283
    %v1957 = vunpack.c.h.b16 %v283
    %v1958 = vunpack.c.l.b16 %v284
    %v1959 = vunpack.c.h.b16 %v284
    %v1960 = vunpack.c.l.b16 %v285
    %v1961 = vunpack.c.h.b16 %v285
    %v1962 = vunpack.c.l.b16 %v286
    %v1963 = vunpack.c.h.b16 %v286
    %v1964 = vunpack.c.l.b16 %v287
    %v1965 = vunpack.c.h.b16 %v287
    %v1966 = vunpack.c.l.b16 %v288
    %v1967 = vunpack.c.h.b16 %v288
    %v1968 = vunpack.c.l.b16 %v289
    %v1969 = vunpack.c.h.b16 %v289
    %v1970 = vunpack.c.l.b16 %v290
    %v1971 = vunpack.c.h.b16 %v290
    %v1972 = vunpack.c.l.b16 %v291
    %v1973 = vunpack.c.h.b16 %v291
    %v1974 = vunpack.c.l.b16 %v292
    %v1975 = vunpack.c.h.b16 %v292
    %v1976 = vunpack.c.l.b16 %v293
    %v1977 = vunpack.c.h.b16 %v293
    %v1978 = vunpack.c.l.b16 %v294
    %v1979 = vunpack.c.h.b16 %v294
    %v1980 = vunpack.c.l.b16 %v295
    %v1981 = vunpack.c.h.b16 %v295
    %v1982 = vunpack.c.l.b16 %v296
    %v1983 = vunpack.c.h.b16 %v296
    %v1984 = vunpack.c.l.b16 %v297
    %v1985 = vunpack.c.h.b16 %v297
    %v1986 = vunpack.c.l.b16 %v298
    %v1987 = vunpack.c.h.b16 %v298
    %v1988 = vunpack.c.l.b16 %v299
    %v1989 = vunpack.c.h.b16 %v299
    %v1990 = vunpack.c.l.b16 %v300
    %v1991 = vunpack.c.h.b16 %v300
    %v1992 = vunpack.c.l.b16 %v301
    %v1993 = vunpack.c.h.b16 %v301
    %v1994 = vunpack.c.l.b16 %v302
    %v1995 = vunpack.c.h.b16 %v302
    %v1996 = vunpack.c.l.b16 %v303
    %v1997 = vunpack.c.h.b16 %v303
    %v1998 = vunpack.c.l.b16 %v304
    %v1999 = vunpack.c.h.b16 %v304
    %v2000 = vunpack.c.l.b16 %v305
    %v2001 = vunpack.c.h.b16 %v305
    %v2002 = vunpack.c.l.b16 %v306
    %v2003 = vunpack.c.h.b16 %v306
    %v2004 = vunpack.c.l.b16 %v307
    %v2005 = vunpack.c.h.b16 %v307
    %v2006 = vunpack.c.l.b16 %v308
    %v2007 = vunpack.c.h.b16 %v308
    %v2008 = vunpack.c.l.b16 %v309
    %v2009 = vunpack.c.h.b16 %v309
    %v2010 = vunpack.c.l.b16 %v310
    %v2011 = vunpack.c.h.b16 %v310
    %v2012 = vunpack.c.l.b16 %v311
    %v2013 = vunpack.c.h.b16 %v311
    %v2014 = vunpack.c.l.b16 %v312
    %v2015 = vunpack.c.h.b16 %v312
    %v2016 = vunpack.c.l.b16 %v313
    %v2017 = vunpack.c.h.b16 %v313
    %v2018 = vunpack.c.l.b16 %v314
    %v2019 = vunpack.c.h.b16 %v314
    %v2020 = vunpack.c.l.b16 %v315
    %v2021 = vunpack.c.h.b16 %v315
    %v2022 = vunpack.c.l.b16 %v316
    %v2023 = vunpack.c.h.b16 %v316
    %v2024 = vunpack.c.l.b16 %v317
    %v2025 = vunpack.c.h.b16 %v317
    %v2026 = vunpack.c.l.b16 %v318
    %v2027 = vunpack.c.h.b16 %v318
    %v2028 = vunpack.c.l.b16 %v319
    %v2029 = vunpack.c.h.b16 %v319
    %v2030 = vunpack.c.l.b16 %v320
    %v2031 = vunpack.c.h.b16 %v320
    %v2032 = vunpack.c.l.b16 %v321
    %v2033 = vunpack.c.h.b16 %v321
    %v2034 = vunpack.c.l.b16 %v322
    %v2035 = vunpack.c.h.b16 %v322
    %v2036 = vunpack.c.l.b16 %v323
    %v2037 = vunpack.c.h.b16 %v323
    %v2038 = vunpack.c.l.b16 %v324
    %v2039 = vunpack.c.h.b16 %v324
    %v2040 = vunpack.c.l.b16 %v325
    %v2041 = vunpack.c.h.b16 %v325
    %v2042 = vunpack.c.l.b16 %v326
    %v2043 = vunpack.c.h.b16 %v326
    %v2044 = vunpack.c.l.b16 %v327
    %v2045 = vunpack.c.h.b16 %v327
    %v2046 = vunpack.c.l.b16 %v328
    %v2047 = vunpack.c.h.b16 %v328
    %v2048 = vunpack.c.l.b16 %v329
    %v2049 = vunpack.c.h.b16 %v329
    %v2050 = vunpack.c.l.b16 %v330
    %v2051 = vunpack.c.h.b16 %v330
    %v2052 = vunpack.c.l.b16 %v331
    %v2053 = vunpack.c.h.b16 %v331
    %v2054 = vunpack.c.l.b16 %v332
    %v2055 = vunpack.c.h.b16 %v332
    %v2056 = vunpack.c.l.b16 %v333
    %v2057 = vunpack.c.h.b16 %v333
    %v2058 = vunpack.c.l.b16 %v334
    %v2059 = vunpack.c.h.b16 %v334
    %v2060 = vunpack.c.l.b16 %v335
    %v2061 = vunpack.c.h.b16 %v335
    %v2062 = vunpack.c.l.b16 %v336
    %v2063 = vunpack.c.h.b16 %v336
    %v2064 = vunpack.c.l.b16 %v337
    %v2065 = vunpack.c.h.b16 %v337
    %v2066 = vunpack.c.l.b16 %v338
    %v2067 = vunpack.c.h.b16 %v338
    %v2068 = vunpack.c.l.b16 %v339
    %v2069 = vunpack.c.h.b16 %v339
    %v2070 = vunpack.c.l.b16 %v340
    %v2071 = vunpack.c.h.b16 %v340
    %v2072 = vunpack.c.l.b16 %v341
    %v2073 = vunpack.c.h.b16 %v341
    %v2074 = vunpack.c.l.b16 %v342
    %v2075 = vunpack.c.h.b16 %v342
    %v2076 = vunpack.c.l.b16 %v343
    %v2077 = vunpack.c.h.b16 %v343
    %v2078 = vunpack.c.l.b16 %v344
    %v2079 = vunpack.c.h.b16 %v344
    %v2080 = vunpack.c.l.b16 %v345
    %v2081 = vunpack.c.h.b16 %v345
    %v2082 = vunpack.c.l.b16 %v346
    %v2083 = vunpack.c.h.b16 %v346
    %v2084 = vunpack.c.l.b16 %v347
    %v2085 = vunpack.c.h.b16 %v347
    %v2086 = vunpack.c.l.b16 %v348
    %v2087 = vunpack.c.h.b16 %v348
    %v2088 = vunpack.c.l.b16 %v349
    %v2089 = vunpack.c.h.b16 %v349
    %v2090 = vunpack.c.l.b16 %v350
    %v2091 = vunpack.c.h.b16 %v350
    %v2092 = vunpack.c.l.b16 %v351
    %v2093 = vunpack.c.h.b16 %v351
    %v2094 = vunpack.c.l.b16 %v352
    %v2095 = vunpack.c.h.b16 %v352
    %v2096 = vunpack.c.l.b16 %v353
    %v2097 = vunpack.c.h.b16 %v353
    %v2098 = vunpack.c.l.b16 %v354
    %v2099 = vunpack.c.h.b16 %v354
    %v2100 = vunpack.c.l.b16 %v355
    %v2101 = vunpack.c.h.b16 %v355
    %v2102 = vunpack.c.l.b16 %v356
    %v2103 = vunpack.c.h.b16 %v356
    %v2104 = vunpack.c.l.b16 %v357
    %v2105 = vunpack.c.h.b16 %v357
    %v2106 = vunpack.c.l.b16 %v358
    %v2107 = vunpack.c.h.b16 %v358
    %v2108 = vunpack.c.l.b16 %v359
    %v2109 = vunpack.c.h.b16 %v359
    %v2110 = vunpack.c.l.b16 %v360
    %v2111 = vunpack.c.h.b16 %v360
    %v2112 = vunpack.c.l.b16 %v361
    %v2113 = vunpack.c.h.b16 %v361
    %v2114 = vunpack.c.l.b16 %v362
    %v2115 = vunpack.c.h.b16 %v362
    %v2116 = vunpack.c.l.b16 %v363
    %v2117 = vunpack.c.h.b16 %v363
    %v2118 = vunpack.c.l.b16 %v364
    %v2119 = vunpack.c.h.b16 %v364
    %v2120 = vunpack.c.l.b16 %v365
    %v2121 = vunpack.c.h.b16 %v365
    %v2122 = vunpack.c.l.b16 %v366
    %v2123 = vunpack.c.h.b16 %v366
    %v2124 = vunpack.c.l.b16 %v367
    %v2125 = vunpack.c.h.b16 %v367
    %v2126 = vunpack.c.l.b16 %v368
    %v2127 = vunpack.c.h.b16 %v368
    %v2128 = vunpack.c.l.b16 %v369
    %v2129 = vunpack.c.h.b16 %v369
    %v2130 = vunpack.c.l.b16 %v370
    %v2131 = vunpack.c.h.b16 %v370
    %v2132 = vunpack.c.l.b16 %v371
    %v2133 = vunpack.c.h.b16 %v371
    %v2134 = vunpack.c.l.b16 %v372
    %v2135 = vunpack.c.h.b16 %v372
    %v2136 = vunpack.c.l.b16 %v373
    %v2137 = vunpack.c.h.b16 %v373
    %v2138 = vunpack.c.l.b16 %v374
    %v2139 = vunpack.c.h.b16 %v374
    %v2140 = vunpack.c.l.b16 %v375
    %v2141 = vunpack.c.h.b16 %v375
    %v2142 = vunpack.c.l.b16 %v376
    %v2143 = vunpack.c.h.b16 %v376
    %v2144 = vunpack.c.l.b16 %v377
    %v2145 = vunpack.c.h.b16 %v377
    %v2146 = vunpack.c.l.b16 %v378
    %v2147 = vunpack.c.h.b16 %v378
    %v2148 = vunpack.c.l.b16 %v379
    %v2149 = vunpack.c.h.b16 %v379
    %v2150 = vunpack.c.l.b16 %v380
    %v2151 = vunpack.c.h.b16 %v380
    %v2152 = vunpack.c.l.b16 %v381
    %v2153 = vunpack.c.h.b16 %v381
    %v2154 = vpack.c.b16 %v1646, %v1642
    %v2155 = vpack.c.b16 %v1647, %v1643
    %v2156 = vpack.c.b16 %v1648, %v1644
    %v2157 = vpack.c.b16 %v1649, %v1645
    %v2158 = vpack.c.b16 %v1654, %v1650
    %v2159 = vpack.c.b16 %v1655, %v1651
    %v2160 = vpack.c.b16 %v1656, %v1652
    %v2161 = vpack.c.b16 %v1657, %v1653
    %v2162 = vpack.c.b16 %v1662, %v1658
    %v2163 = vpack.c.b16 %v1663, %v1659
    %v2164 = vpack.c.b16 %v1664, %v1660
    %v2165 = vpack.c.b16 %v1665, %v1661
    %v2166 = vpack.c.b16 %v1670, %v1666
    %v2167 = vpack.c.b16 %v1671, %v1667
    %v2168 = vpack.c.b16 %v1672, %v1668
    %v2169 = vpack.c.b16 %v1673, %v1669
    %v2170 = vpack.c.b16 %v1678, %v1674
    %v2171 = vpack.c.b16 %v1679, %v1675
    %v2172 = vpack.c.b16 %v1680, %v1676
    %v2173 = vpack.c.b16 %v1681, %v1677
    %v2174 = vpack.c.b16 %v1686, %v1682
    %v2175 = vpack.c.b16 %v1687, %v1683
    %v2176 = vpack.c.b16 %v1688, %v1684
    %v2177 = vpack.c.b16 %v1689, %v1685
    %v2178 = vpack.c.b16 %v1694, %v1690
    %v2179 = vpack.c.b16 %v1695, %v1691
    %v2180 = vpack.c.b16 %v1696, %v1692
    %v2181 = vpack.c.b16 %v1697, %v1693
    %v2182 = vpack.c.b16 %v1702, %v1698
    %v2183 = vpack.c.b16 %v1703, %v1699
    %v2184 = vpack.c.b16 %v1704, %v1700
    %v2185 = vpack.c.b16 %v1705, %v1701
    %v2186 = vpack.c.b16 %v1710, %v1706
    %v2187 = vpack.c.b16 %v1711, %v1707
    %v2188 = vpack.c.b16 %v1712, %v1708
    %v2189 = vpack.c.b16 %v1713, %v1709
    %v2190 = vpack.c.b16 %v1718, %v1714
    %v2191 = vpack.c.b16 %v1719, %v1715
    %v2192 = vpack.c.b16 %v1720, %v1716
    %v2193 = vpack.c.b16 %v1721, %v1717
    %v2194 = vpack.c.b16 %v1726, %v1722
    %v2195 = vpack.c.b16 %v1727, %v1723
    %v2196 = vpack.c.b16 %v1728, %v1724
    %v2197 = vpack.c.b16 %v1729, %v1725
    %v2198 = vpack.c.b16 %v1734, %v1730
    %v2199 = vpack.c.b16 %v1735, %v1731
    %v2200 = vpack.c.b16 %v1736, %v1732
    %v2201 = vpack.c.b16 %v1737, %v1733
    %v2202 = vpack.c.b16 %v1742, %v1738
    %v2203 = vpack.c.b16 %v1743, %v1739
    %v2204 = vpack.c.b16 %v1744, %v1740
    %v2205 = vpack.c.b16 %v1745, %v1741
    %v2206 = vpack.c.b16 %v1750, %v1746
    %v2207 = vpack.c.b16 %v1751, %v1747
    %v2208 = vpack.c.b16 %v1752, %v1748
    %v2209 = vpack.c.b16 %v1753, %v1749
    %v2210 = vpack.c.b16 %v1758, %v1754
    %v2211 = vpack.c.b16 %v1759, %v1755
    %v2212 = vpack.c.b16 %v1760, %v1756
    %v2213 = vpack.c.b16 %v1761, %v1757
    %v2214 = vpack.c.b16 %v1766, %v1762
    %v2215 = vpack.c.b16 %v1767, %v1763
    %v2216 = vpack.c.b16 %v1768, %v1764
    %v2217 = vpack.c.b16 %v1769, %v1765
    %v2218 = vpack.c.b16 %v1774, %v1770
    %v2219 = vpack.c.b16 %v1775, %v1771
    %v2220 = vpack.c.b16 %v1776, %v1772
    %v2221 = vpack.c.b16 %v1777, %v1773
    %v2222 = vpack.c.b16 %v1782, %v1778
    %v2223 = vpack.c.b16 %v1783, %v1779
    %v2224 = vpack.c.b16 %v1784, %v1780
    %v2225 = vpack.c.b16 %v1785, %v1781
    %v2226 = vpack.c.b16 %v1790, %v1786
    %v2227 = vpack.c.b16 %v1791, %v1787
    %v2228 = vpack.c.b16 %v1792, %v1788
    %v2229 = vpack.c.b16 %v1793, %v1789
    %v2230 = vpack.c.b16 %v1798, %v1794
    %v2231 = vpack.c.b16 %v1799, %v1795
    %v2232 = vpack.c.b16 %v1800, %v1796
    %v2233 = vpack.c.b16 %v1801, %v1797
    %v2234 = vpack.c.b16 %v1806, %v1802
    %v2235 = vpack.c.b16 %v1807, %v1803
    %v2236 = vpack.c.b16 %v1808, %v1804
    %v2237 = vpack.c.b16 %v1809, %v1805
    %v2238 = vpack.c.b16 %v1814, %v1810
    %v2239 = vpack.c.b16 %v1815, %v1811
    %v2240 = vpack.c.b16 %v1816, %v1812
    %v2241 = vpack.c.b16 %v1817, %v1813
    %v2242 = vpack.c.b16 %v1822, %v1818
    %v2243 = vpack.c.b16 %v1823, %v1819
    %v2244 = vpack.c.b16 %v1824, %v1820
    %v2245 = vpack.c.b16 %v1825, %v1821
    %v2246 = vpack.c.b16 %v1830, %v1826
    %v2247 = vpack.c.b16 %v1831, %v1827
    %v2248 = vpack.c.b16 %v1832, %v1828
    %v2249 = vpack.c.b16 %v1833, %v1829
    %v2250 = vpack.c.b16 %v1838, %v1834
    %v2251 = vpack.c.b16 %v1839, %v1835
    %v2252 = vpack.c.b16 %v1840, %v1836
    %v2253 = vpack.c.b16 %v1841, %v1837
    %v2254 = vpack.c.b16 %v1846, %v1842
    %v2255 = vpack.c.b16 %v1847, %v1843
    %v2256 = vpack.c.b16 %v1848, %v1844
    %v2257 = vpack.c.b16 %v1849, %v1845
    %v2258 = vpack.c.b16 %v1854, %v1850
    %v2259 = vpack.c.b16 %v1855, %v1851
    %v2260 = vpack.c.b16 %v1856, %v1852
    %v2261 = vpack.c.b16 %v1857, %v1853
    %v2262 = vpack.c.b16 %v1862, %v1858
    %v2263 = vpack.c.b16 %v1863, %v1859
    %v2264 = vpack.c.b16 %v1864, %v1860
    %v2265 = vpack.c.b16 %v1865, %v1861
    %v2266 = vpack.c.b16 %v1870, %v1866
    %v2267 = vpack.c.b16 %v1871, %v1867
    %v2268 = vpack.c.b16 %v1872, %v1868
    %v2269 = vpack.c.b16 %v1873, %v1869
    %v2270 = vpack.c.b16 %v1878, %v1874
    %v2271 = vpack.c.b16 %v1879, %v1875
    %v2272 = vpack.c.b16 %v1880, %v1876
    %v2273 = vpack.c.b16 %v1881, %v1877
    %v2274 = vpack.c.b16 %v1886, %v1882
    %v2275 = vpack.c.b16 %v1887, %v1883
    %v2276 = vpack.c.b16 %v1888, %v1884
    %v2277 = vpack.c.b16 %v1889, %v1885
    %v2278 = vpack.c.b16 %v1894, %v1890
    %v2279 = vpack.c.b16 %v1895, %v1891
    %v2280 = vpack.c.b16 %v1896, %v1892
    %v2281 = vpack.c.b16 %v1897, %v1893
    %v2282 = vpack.c.b16 %v1902, %v1898
    %v2283 = vpack.c.b16 %v1903, %v1899
    %v2284 = vpack.c.b16 %v1904, %v1900
    %v2285 = vpack.c.b16 %v1905, %v1901
    %v2286 = vpack.c.b16 %v1910, %v1906
    %v2287 = vpack.c.b16 %v1911, %v1907
    %v2288 = vpack.c.b16 %v1912, %v1908
    %v2289 = vpack.c.b16 %v1913, %v1909
    %v2290 = vpack.c.b16 %v1918, %v1914
    %v2291 = vpack.c.b16 %v1919, %v1915
    %v2292 = vpack.c.b16 %v1920, %v1916
    %v2293 = vpack.c.b16 %v1921, %v1917
    %v2294 = vpack.c.b16 %v1926, %v1922
    %v2295 = vpack.c.b16 %v1927, %v1923
    %v2296 = vpack.c.b16 %v1928, %v1924
    %v2297 = vpack.c.b16 %v1929, %v1925
    %v2298 = vpack.c.b16 %v1934, %v1930
    %v2299 = vpack.c.b16 %v1935, %v1931
    %v2300 = vpack.c.b16 %v1936, %v1932
    %v2301 = vpack.c.b16 %v1937, %v1933
    %v2302 = vpack.c.b16 %v1942, %v1938
    %v2303 = vpack.c.b16 %v1943, %v1939
    %v2304 = vpack.c.b16 %v1944, %v1940
    %v2305 = vpack.c.b16 %v1945, %v1941
    %v2306 = vpack.c.b16 %v1950, %v1946
    %v2307 = vpack.c.b16 %v1951, %v1947
    %v2308 = vpack.c.b16 %v1952, %v1948
    %v2309 = vpack.c.b16 %v1953, %v1949
    %v2310 = vpack.c.b16 %v1958, %v1954
    %v2311 = vpack.c.b16 %v1959, %v1955
    %v2312 = vpack.c.b16 %v1960, %v1956
    %v2313 = vpack.c.b16 %v1961, %v1957
    %v2314 = vpack.c.b16 %v1966, %v1962
    %v2315 = vpack.c.b16 %v1967, %v1963
    %v2316 = vpack.c.b16 %v1968, %v1964
    %v2317 = vpack.c.b16 %v1969, %v1965
    %v2318 = vpack.c.b16 %v1974, %v1970
    %v2319 = vpack.c.b16 %v1975, %v1971
    %v2320 = vpack.c.b16 %v1976, %v1972
    %v2321 = vpack.c.b16 %v1977, %v1973
    %v2322 = vpack.c.b16 %v1982, %v1978
    %v2323 = vpack.c.b16 %v1983, %v1979
    %v2324 = vpack.c.b16 %v1984, %v1980
    %v2325 = vpack.c.b16 %v1985, %v1981
    %v2326 = vpack.c.b16 %v1990, %v1986
    %v2327 = vpack.c.b16 %v1991, %v1987
    %v2328 = vpack.c.b16 %v1992, %v1988
    %v2329 = vpack.c.b16 %v1993, %v1989
    %v2330 = vpack.c.b16 %v1998, %v1994
    %v2331 = vpack.c.b16 %v1999, %v1995
    %v2332 = vpack.c.b16 %v2000, %v1996
    %v2333 = vpack.c.b16 %v2001, %v1997
    %v2334 = vpack.c.b16 %v2006, %v2002
    %v2335 = vpack.c.b16 %v2007, %v2003
    %v2336 = vpack.c.b16 %v2008, %v2004
    %v2337 = vpack.c.b16 %v2009, %v2005
    %v2338 = vpack.c.b16 %v2014, %v2010
    %v2339 = vpack.c.b16 %v2015, %v2011
    %v2340 = vpack.c.b16 %v2016, %v2012
    %v2341 = vpack.c.b16 %v2017, %v2013
    %v2342 = vpack.c.b16 %v2022, %v2018
    %v2343 = vpack.c.b16 %v2023, %v2019
    %v2344 = vpack.c.b16 %v2024, %v2020
    %v2345 = vpack.c.b16 %v2025, %v2021
    %v2346 = vpack.c.b16 %v2030, %v2026
    %v2347 = vpack.c.b16 %v2031, %v2027
    %v2348 = vpack.c.b16 %v2032, %v2028
    %v2349 = vpack.c.b16 %v2033, %v2029
    %v2350 = vpack.c.b16 %v2038, %v2034
    %v2351 = vpack.c.b16 %v2039, %v2035
    %v2352 = vpack.c.b16 %v2040, %v2036
    %v2353 = vpack.c.b16 %v2041, %v2037
    %v2354 = vpack.c.b16 %v2046, %v2042
    %v2355 = vpack.c.b16 %v2047, %v2043
    %v2356 = vpack.c.b16 %v2048, %v2044
    %v2357 = vpack.c.b16 %v2049, %v2045
    %v2358 = vpack.c.b16 %v2054, %v2050
    %v2359 = vpack.c.b16 %v2055, %v2051
    %v2360 = vpack.c.b16 %v2056, %v2052
    %v2361 = vpack.c.b16 %v2057, %v2053
    %v2362 = vpack.c.b16 %v2062, %v2058
    %v2363 = vpack.c.b16 %v2063, %v2059
    %v2364 = vpack.c.b16 %v2064, %v2060
    %v2365 = vpack.c.b16 %v2065, %v2061
    %v2366 = vpack.c.b16 %v2070, %v2066
    %v2367 = vpack.c.b16 %v2071, %v2067
    %v2368 = vpack.c.b16 %v2072, %v2068
    %v2369 = vpack.c.b16 %v2073, %v2069
    %v2370 = vpack.c.b16 %v2078, %v2074
    %v2371 = vpack.c.b16 %v2079, %v2075
    %v2372 = vpack.c.b16 %v2080, %v2076
    %v2373 = vpack.c.b16 %v2081, %v2077
    %v2374 = vpack.c.b16 %v2086, %v2082
    %v2375 = vpack.c.b16 %v2087, %v2083
    %v2376 = vpack.c.b16 %v2088, %v2084
    %v2377 = vpack.c.b16 %v2089, %v2085
    %v2378 = vpack.c.b16 %v2094, %v2090
    %v2379 = vpack.c.b16 %v2095, %v2091
    %v2380 = vpack.c.b16 %v2096, %v2092
    %v2381 = vpack.c.b16 %v2097, %v2093
    %v2382 = vpack.c.b16 %v2102, %v2098
    %v2383 = vpack.c.b16 %v2103, %v2099
    %v2384 = vpack.c.b16 %v2104, %v2100
    %v2385 = vpack.c.b16 %v2105, %v2101
    %v2386 = vpack.c.b16 %v2110, %v2106
    %v2387 = vpack.c.b16 %v2111, %v2107
    %v2388 = vpack.c.b16 %v2112, %v2108
    %v2389 = vpack.c.b16 %v2113, %v2109
    %v2390 = vpack.c.b16 %v2118, %v2114
    %v2391 = vpack.c.b16 %v2119, %v2115
    %v2392 = vpack.c.b16 %v2120, %v2116
    %v2393 = vpack.c.b16 %v2121, %v2117
    %v2394 = vpack.c.b16 %v2126, %v2122
    %v2395 = vpack.c.b16 %v2127, %v2123
    %v2396 = vpack.c.b16 %v2128, %v2124
    %v2397 = vpack.c.b16 %v2129, %v2125
    %v2398 = vpack.c.b16 %v2134, %v2130
    %v2399 = vpack.c.b16 %v2135, %v2131
    %v2400 = vpack.c.b16 %v2136, %v2132
    %v2401 = vpack.c.b16 %v2137, %v2133
    %v2402 = vpack.c.b16 %v2142, %v2138
    %v2403 = vpack.c.b16 %v2143, %v2139
    %v2404 = vpack.c.b16 %v2144, %v2140
    %v2405 = vpack.c.b16 %v2145, %v2141
    %v2406 = vpack.c.b16 %v2150, %v2146
    %v2407 = vpack.c.b16 %v2151, %v2147
    %v2408 = vpack.c.b16 %v2152, %v2148
    %v2409 = vpack.c.b16 %v2153, %v2149
    %2666 = vmatprep.subr.bf16.mxu0 %v2155
    %2667 = vmatpush1.bf16.msra.mxu0 %v2154
    %2668 = vmatprep.subr.bf16.mxu0 %v2159
    %2669 = vmatpush1.bf16.msra.mxu0 %v2158
    %2670 = vmatprep.subr.bf16.mxu0 %v2163
    %2671 = vmatpush1.bf16.msra.mxu0 %v2162
    %2672 = vmatprep.subr.bf16.mxu0 %v2167
    %2673 = vmatpush1.bf16.msra.mxu0 %v2166
    %2674 = vmatprep.subr.bf16.mxu0 %v2171
    %2675 = vmatpush1.bf16.msra.mxu0 %v2170
    %2676 = vmatprep.subr.bf16.mxu0 %v2175
    %2677 = vmatpush1.bf16.msra.mxu0 %v2174
    %2678 = vmatprep.subr.bf16.mxu0 %v2179
    %2679 = vmatpush1.bf16.msra.mxu0 %v2178
    %2680 = vmatprep.subr.bf16.mxu0 %v2183
    %2681 = vmatpush1.bf16.msra.mxu0 %v2182
    %2682 = vmatprep.subr.bf16.mxu0 %v2187
    %2683 = vmatpush1.bf16.msra.mxu0 %v2186
    %2684 = vmatprep.subr.bf16.mxu0 %v2191
    %2685 = vmatpush1.bf16.msra.mxu0 %v2190
    %2686 = vmatprep.subr.bf16.mxu0 %v2195
    %2687 = vmatpush1.bf16.msra.mxu0 %v2194
    %2688 = vmatprep.subr.bf16.mxu0 %v2199
    %2689 = vmatpush1.bf16.msra.mxu0 %v2198
    %2690 = vmatprep.subr.bf16.mxu0 %v2203
    %2691 = vmatpush1.bf16.msra.mxu0 %v2202
    %2692 = vmatprep.subr.bf16.mxu0 %v2207
    %2693 = vmatpush1.bf16.msra.mxu0 %v2206
    %2694 = vmatprep.subr.bf16.mxu0 %v2211
    %2695 = vmatpush1.bf16.msra.mxu0 %v2210
    %2696 = vmatprep.subr.bf16.mxu0 %v2215
    %2697 = vmatpush1.bf16.msra.mxu0 %v2214
    %2698 = vmatprep.mubr.bf16.mxu0 %v1371
    %2699 = vmatmul.mubr.bf16.gmra.mrb[0].mxu0 %v1370
    %v2700 = vpop.f32.mrb[0].mxu0
    %v2701 = vadd.f32 %v1252, %v2700
    %v2702 = vpop.f32.mrb[0].mxu0
    %v2703 = vadd.f32 %v1254, %v2702
    %v2704 = vpop.f32.mrb[0].mxu0
    %v2705 = vadd.f32 %v1256, %v2704
    %v2706 = vpop.f32.mrb[0].mxu0
    %v2707 = vadd.f32 %v1258, %v2706
    %2708 = vdwg.mxu0
    %2709 = vmatprep.subr.bf16.mxu0 %v2219
    %2710 = vmatpush1.bf16.msra.mxu0 %v2218
    %2711 = vmatprep.subr.bf16.mxu0 %v2223
    %2712 = vmatpush1.bf16.msra.mxu0 %v2222
    %2713 = vmatprep.subr.bf16.mxu0 %v2227
    %2714 = vmatpush1.bf16.msra.mxu0 %v2226
    %2715 = vmatprep.subr.bf16.mxu0 %v2231
    %2716 = vmatpush1.bf16.msra.mxu0 %v2230
    %2717 = vmatprep.subr.bf16.mxu0 %v2235
    %2718 = vmatpush1.bf16.msra.mxu0 %v2234
    %2719 = vmatprep.subr.bf16.mxu0 %v2239
    %2720 = vmatpush1.bf16.msra.mxu0 %v2238
    %2721 = vmatprep.subr.bf16.mxu0 %v2243
    %2722 = vmatpush1.bf16.msra.mxu0 %v2242
    %2723 = vmatprep.subr.bf16.mxu0 %v2247
    %2724 = vmatpush1.bf16.msra.mxu0 %v2246
    %2725 = vmatprep.subr.bf16.mxu0 %v2251
    %2726 = vmatpush1.bf16.msra.mxu0 %v2250
    %2727 = vmatprep.subr.bf16.mxu0 %v2255
    %2728 = vmatpush1.bf16.msra.mxu0 %v2254
    %2729 = vmatprep.subr.bf16.mxu0 %v2259
    %2730 = vmatpush1.bf16.msra.mxu0 %v2258
    %2731 = vmatprep.subr.bf16.mxu0 %v2263
    %2732 = vmatpush1.bf16.msra.mxu0 %v2262
    %2733 = vmatprep.subr.bf16.mxu0 %v2267
    %2734 = vmatpush1.bf16.msra.mxu0 %v2266
    %2735 = vmatprep.subr.bf16.mxu0 %v2271
    %2736 = vmatpush1.bf16.msra.mxu0 %v2270
    %2737 = vmatprep.subr.bf16.mxu0 %v2275
    %2738 = vmatpush1.bf16.msra.mxu0 %v2274
    %2739 = vmatprep.subr.bf16.mxu0 %v2279
    %2740 = vmatpush1.bf16.msra.mxu0 %v2278
    %2741 = vmatprep.mubr.bf16.mxu0 %v1373
    %2742 = vmatmul.mubr.bf16.gmra.mrb[0].mxu0 %v1372
    %v2743 = vpop.f32.mrb[0].mxu0
    %v2744 = vadd.f32 %v2701, %v2743
    %v2745 = vpop.f32.mrb[0].mxu0
    %v2746 = vadd.f32 %v2703, %v2745
    %v2747 = vpop.f32.mrb[0].mxu0
    %v2748 = vadd.f32 %v2705, %v2747
    %v2749 = vpop.f32.mrb[0].mxu0
    %v2750 = vadd.f32 %v2707, %v2749
    %2751 = vdwg.mxu0
    %2752 = vmatprep.subr.bf16.mxu0 %v2283
    %2753 = vmatpush1.bf16.msra.mxu0 %v2282
    %2754 = vmatprep.subr.bf16.mxu0 %v2287
    %2755 = vmatpush1.bf16.msra.mxu0 %v2286
    %2756 = vmatprep.subr.bf16.mxu0 %v2291
    %2757 = vmatpush1.bf16.msra.mxu0 %v2290
    %2758 = vmatprep.subr.bf16.mxu0 %v2295
    %2759 = vmatpush1.bf16.msra.mxu0 %v2294
    %2760 = vmatprep.subr.bf16.mxu0 %v2299
    %2761 = vmatpush1.bf16.msra.mxu0 %v2298
    %2762 = vmatprep.subr.bf16.mxu0 %v2303
    %2763 = vmatpush1.bf16.msra.mxu0 %v2302
    %2764 = vmatprep.subr.bf16.mxu0 %v2307
    %2765 = vmatpush1.bf16.msra.mxu0 %v2306
    %2766 = vmatprep.subr.bf16.mxu0 %v2311
    %2767 = vmatpush1.bf16.msra.mxu0 %v2310
    %2768 = vmatprep.subr.bf16.mxu0 %v2315
    %2769 = vmatpush1.bf16.msra.mxu0 %v2314
    %2770 = vmatprep.subr.bf16.mxu0 %v2319
    %2771 = vmatpush1.bf16.msra.mxu0 %v2318
    %2772 = vmatprep.subr.bf16.mxu0 %v2323
    %2773 = vmatpush1.bf16.msra.mxu0 %v2322
    %2774 = vmatprep.subr.bf16.mxu0 %v2327
    %2775 = vmatpush1.bf16.msra.mxu0 %v2326
    %2776 = vmatprep.subr.bf16.mxu0 %v2331
    %2777 = vmatpush1.bf16.msra.mxu0 %v2330
    %2778 = vmatprep.subr.bf16.mxu0 %v2335
    %2779 = vmatpush1.bf16.msra.mxu0 %v2334
    %2780 = vmatprep.subr.bf16.mxu0 %v2339
    %2781 = vmatpush1.bf16.msra.mxu0 %v2338
    %2782 = vmatprep.subr.bf16.mxu0 %v2343
    %2783 = vmatpush1.bf16.msra.mxu0 %v2342
    %2784 = vmatprep.mubr.bf16.mxu0 %v1375
    %2785 = vmatmul.mubr.bf16.gmra.mrb[0].mxu0 %v1374
    %v2786 = vpop.f32.mrb[0].mxu0
    %v2787 = vadd.f32 %v2744, %v2786
    %v2788 = vpop.f32.mrb[0].mxu0
    %v2789 = vadd.f32 %v2746, %v2788
    %v2790 = vpop.f32.mrb[0].mxu0
    %v2791 = vadd.f32 %v2748, %v2790
    %v2792 = vpop.f32.mrb[0].mxu0
    %v2793 = vadd.f32 %v2750, %v2792
    %2794 = vdwg.mxu0
    %2795 = vmatprep.subr.bf16.mxu0 %v2347
    %2796 = vmatpush1.bf16.msra.mxu0 %v2346
    %2797 = vmatprep.subr.bf16.mxu0 %v2351
    %2798 = vmatpush1.bf16.msra.mxu0 %v2350
    %2799 = vmatprep.subr.bf16.mxu0 %v2355
    %2800 = vmatpush1.bf16.msra.mxu0 %v2354
    %2801 = vmatprep.subr.bf16.mxu0 %v2359
    %2802 = vmatpush1.bf16.msra.mxu0 %v2358
    %2803 = vmatprep.subr.bf16.mxu0 %v2363
    %2804 = vmatpush1.bf16.msra.mxu0 %v2362
    %2805 = vmatprep.subr.bf16.mxu0 %v2367
    %2806 = vmatpush1.bf16.msra.mxu0 %v2366
    %2807 = vmatprep.subr.bf16.mxu0 %v2371
    %2808 = vmatpush1.bf16.msra.mxu0 %v2370
    %2809 = vmatprep.subr.bf16.mxu0 %v2375
    %2810 = vmatpush1.bf16.msra.mxu0 %v2374
    %2811 = vmatprep.subr.bf16.mxu0 %v2379
    %2812 = vmatpush1.bf16.msra.mxu0 %v2378
    %2813 = vmatprep.subr.bf16.mxu0 %v2383
    %2814 = vmatpush1.bf16.msra.mxu0 %v2382
    %2815 = vmatprep.subr.bf16.mxu0 %v2387
    %2816 = vmatpush1.bf16.msra.mxu0 %v2386
    %2817 = vmatprep.subr.bf16.mxu0 %v2391
    %2818 = vmatpush1.bf16.msra.mxu0 %v2390
    %2819 = vmatprep.subr.bf16.mxu0 %v2395
    %2820 = vmatpush1.bf16.msra.mxu0 %v2394
    %2821 = vmatprep.subr.bf16.mxu0 %v2399
    %2822 = vmatpush1.bf16.msra.mxu0 %v2398
    %2823 = vmatprep.subr.bf16.mxu0 %v2403
    %2824 = vmatpush1.bf16.msra.mxu0 %v2402
    %2825 = vmatprep.subr.bf16.mxu0 %v2407
    %2826 = vmatpush1.bf16.msra.mxu0 %v2406
    %2827 = vmatprep.mubr.bf16.mxu0 %v1377
    %2828 = vmatmul.mubr.bf16.gmra.mrb[0].mxu0 %v1376
    %v2829 = vpop.f32.mrb[0].mxu0
    %v2830 = vadd.f32 %v2787, %v2829
    %v2831 = vpop.f32.mrb[0].mxu0
    %v2832 = vadd.f32 %v2789, %v2831
    %v2833 = vpop.f32.mrb[0].mxu0
    %v2834 = vadd.f32 %v2791, %v2833
    %v2835 = vpop.f32.mrb[0].mxu0
    %v2836 = vadd.f32 %v2793, %v2835
    %2837 = vdwg.mxu0
    %2838 = vmatprep.subr.bf16.mxu0 %v2157
    %2839 = vmatpush1.bf16.msra.mxu0 %v2156
    %2840 = vmatprep.subr.bf16.mxu0 %v2161
    %2841 = vmatpush1.bf16.msra.mxu0 %v2160
    %2842 = vmatprep.subr.bf16.mxu0 %v2165
    %2843 = vmatpush1.bf16.msra.mxu0 %v2164
    %2844 = vmatprep.subr.bf16.mxu0 %v2169
    %2845 = vmatpush1.bf16.msra.mxu0 %v2168
    %2846 = vmatprep.subr.bf16.mxu0 %v2173
    %2847 = vmatpush1.bf16.msra.mxu0 %v2172
    %2848 = vmatprep.subr.bf16.mxu0 %v2177
    %2849 = vmatpush1.bf16.msra.mxu0 %v2176
    %2850 = vmatprep.subr.bf16.mxu0 %v2181
    %2851 = vmatpush1.bf16.msra.mxu0 %v2180
    %2852 = vmatprep.subr.bf16.mxu0 %v2185
    %2853 = vmatpush1.bf16.msra.mxu0 %v2184
    %2854 = vmatprep.subr.bf16.mxu0 %v2189
    %2855 = vmatpush1.bf16.msra.mxu0 %v2188
    %2856 = vmatprep.subr.bf16.mxu0 %v2193
    %2857 = vmatpush1.bf16.msra.mxu0 %v2192
    %2858 = vmatprep.subr.bf16.mxu0 %v2197
    %2859 = vmatpush1.bf16.msra.mxu0 %v2196
    %2860 = vmatprep.subr.bf16.mxu0 %v2201
    %2861 = vmatpush1.bf16.msra.mxu0 %v2200
    %2862 = vmatprep.subr.bf16.mxu0 %v2205
    %2863 = vmatpush1.bf16.msra.mxu0 %v2204
    %2864 = vmatprep.subr.bf16.mxu0 %v2209
    %2865 = vmatpush1.bf16.msra.mxu0 %v2208
    %2866 = vmatprep.subr.bf16.mxu0 %v2213
    %2867 = vmatpush1.bf16.msra.mxu0 %v2212
    %2868 = vmatprep.subr.bf16.mxu0 %v2217
    %2869 = vmatpush1.bf16.msra.mxu0 %v2216
    %2870 = vmatprep.mubr.bf16.mxu0 %v1371
    %2871 = vmatmul.mubr.bf16.gmra.mrb[0].mxu0 %v1370
    %v2872 = vpop.f32.mrb[0].mxu0
    %v2873 = vadd.f32 %v1338, %v2872
    %v2874 = vpop.f32.mrb[0].mxu0
    %v2875 = vadd.f32 %v1340, %v2874
    %v2876 = vpop.f32.mrb[0].mxu0
    %v2877 = vadd.f32 %v1342, %v2876
    %v2878 = vpop.f32.mrb[0].mxu0
    %v2879 = vadd.f32 %v1344, %v2878
    %2880 = vdwg.mxu0
    %2881 = vmatprep.subr.bf16.mxu0 %v2221
    %2882 = vmatpush1.bf16.msra.mxu0 %v2220
    %2883 = vmatprep.subr.bf16.mxu0 %v2225
    %2884 = vmatpush1.bf16.msra.mxu0 %v2224
    %2885 = vmatprep.subr.bf16.mxu0 %v2229
    %2886 = vmatpush1.bf16.msra.mxu0 %v2228
    %2887 = vmatprep.subr.bf16.mxu0 %v2233
    %2888 = vmatpush1.bf16.msra.mxu0 %v2232
    %2889 = vmatprep.subr.bf16.mxu0 %v2237
    %2890 = vmatpush1.bf16.msra.mxu0 %v2236
    %2891 = vmatprep.subr.bf16.mxu0 %v2241
    %2892 = vmatpush1.bf16.msra.mxu0 %v2240
    %2893 = vmatprep.subr.bf16.mxu0 %v2245
    %2894 = vmatpush1.bf16.msra.mxu0 %v2244
    %2895 = vmatprep.subr.bf16.mxu0 %v2249
    %2896 = vmatpush1.bf16.msra.mxu0 %v2248
    %2897 = vmatprep.subr.bf16.mxu0 %v2253
    %2898 = vmatpush1.bf16.msra.mxu0 %v2252
    %2899 = vmatprep.subr.bf16.mxu0 %v2257
    %2900 = vmatpush1.bf16.msra.mxu0 %v2256
    %2901 = vmatprep.subr.bf16.mxu0 %v2261
    %2902 = vmatpush1.bf16.msra.mxu0 %v2260
    %2903 = vmatprep.subr.bf16.mxu0 %v2265
    %2904 = vmatpush1.bf16.msra.mxu0 %v2264
    %2905 = vmatprep.subr.bf16.mxu0 %v2269
    %2906 = vmatpush1.bf16.msra.mxu0 %v2268
    %2907 = vmatprep.subr.bf16.mxu0 %v2273
    %2908 = vmatpush1.bf16.msra.mxu0 %v2272
    %2909 = vmatprep.subr.bf16.mxu0 %v2277
    %2910 = vmatpush1.bf16.msra.mxu0 %v2276
    %2911 = vmatprep.subr.bf16.mxu0 %v2281
    %2912 = vmatpush1.bf16.msra.mxu0 %v2280
    %2913 = vmatprep.mubr.bf16.mxu0 %v1373
    %2914 = vmatmul.mubr.bf16.gmra.mrb[0].mxu0 %v1372
    %v2915 = vpop.f32.mrb[0].mxu0
    %v2916 = vadd.f32 %v2873, %v2915
    %v2917 = vpop.f32.mrb[0].mxu0
    %v2918 = vadd.f32 %v2875, %v2917
    %v2919 = vpop.f32.mrb[0].mxu0
    %v2920 = vadd.f32 %v2877, %v2919
    %v2921 = vpop.f32.mrb[0].mxu0
    %v2922 = vadd.f32 %v2879, %v2921
    %2923 = vdwg.mxu0
    %2924 = vmatprep.subr.bf16.mxu0 %v2285
    %2925 = vmatpush1.bf16.msra.mxu0 %v2284
    %2926 = vmatprep.subr.bf16.mxu0 %v2289
    %2927 = vmatpush1.bf16.msra.mxu0 %v2288
    %2928 = vmatprep.subr.bf16.mxu0 %v2293
    %2929 = vmatpush1.bf16.msra.mxu0 %v2292
    %2930 = vmatprep.subr.bf16.mxu0 %v2297
    %2931 = vmatpush1.bf16.msra.mxu0 %v2296
    %2932 = vmatprep.subr.bf16.mxu0 %v2301
    %2933 = vmatpush1.bf16.msra.mxu0 %v2300
    %2934 = vmatprep.subr.bf16.mxu0 %v2305
    %2935 = vmatpush1.bf16.msra.mxu0 %v2304
    %2936 = vmatprep.subr.bf16.mxu0 %v2309
    %2937 = vmatpush1.bf16.msra.mxu0 %v2308
    %2938 = vmatprep.subr.bf16.mxu0 %v2313
    %2939 = vmatpush1.bf16.msra.mxu0 %v2312
    %2940 = vmatprep.subr.bf16.mxu0 %v2317
    %2941 = vmatpush1.bf16.msra.mxu0 %v2316
    %2942 = vmatprep.subr.bf16.mxu0 %v2321
    %2943 = vmatpush1.bf16.msra.mxu0 %v2320
    %2944 = vmatprep.subr.bf16.mxu0 %v2325
    %2945 = vmatpush1.bf16.msra.mxu0 %v2324
    %2946 = vmatprep.subr.bf16.mxu0 %v2329
    %2947 = vmatpush1.bf16.msra.mxu0 %v2328
    %2948 = vmatprep.subr.bf16.mxu0 %v2333
    %2949 = vmatpush1.bf16.msra.mxu0 %v2332
    %2950 = vmatprep.subr.bf16.mxu0 %v2337
    %2951 = vmatpush1.bf16.msra.mxu0 %v2336
    %2952 = vmatprep.subr.bf16.mxu0 %v2341
    %2953 = vmatpush1.bf16.msra.mxu0 %v2340
    %2954 = vmatprep.subr.bf16.mxu0 %v2345
    %2955 = vmatpush1.bf16.msra.mxu0 %v2344
    %2956 = vmatprep.mubr.bf16.mxu0 %v1375
    %2957 = vmatmul.mubr.bf16.gmra.mrb[0].mxu0 %v1374
    %v2958 = vpop.f32.mrb[0].mxu0
    %v2959 = vadd.f32 %v2916, %v2958
    %v2960 = vpop.f32.mrb[0].mxu0
    %v2961 = vadd.f32 %v2918, %v2960
    %v2962 = vpop.f32.mrb[0].mxu0
    %v2963 = vadd.f32 %v2920, %v2962
    %v2964 = vpop.f32.mrb[0].mxu0
    %v2965 = vadd.f32 %v2922, %v2964
    %2966 = vdwg.mxu0
    %2967 = vmatprep.subr.bf16.mxu0 %v2349
    %2968 = vmatpush1.bf16.msra.mxu0 %v2348
    %2969 = vmatprep.subr.bf16.mxu0 %v2353
    %2970 = vmatpush1.bf16.msra.mxu0 %v2352
    %2971 = vmatprep.subr.bf16.mxu0 %v2357
    %2972 = vmatpush1.bf16.msra.mxu0 %v2356
    %2973 = vmatprep.subr.bf16.mxu0 %v2361
    %2974 = vmatpush1.bf16.msra.mxu0 %v2360
    %2975 = vmatprep.subr.bf16.mxu0 %v2365
    %2976 = vmatpush1.bf16.msra.mxu0 %v2364
    %2977 = vmatprep.subr.bf16.mxu0 %v2369
    %2978 = vmatpush1.bf16.msra.mxu0 %v2368
    %2979 = vmatprep.subr.bf16.mxu0 %v2373
    %2980 = vmatpush1.bf16.msra.mxu0 %v2372
    %2981 = vmatprep.subr.bf16.mxu0 %v2377
    %2982 = vmatpush1.bf16.msra.mxu0 %v2376
    %2983 = vmatprep.subr.bf16.mxu0 %v2381
    %2984 = vmatpush1.bf16.msra.mxu0 %v2380
    %2985 = vmatprep.subr.bf16.mxu0 %v2385
    %2986 = vmatpush1.bf16.msra.mxu0 %v2384
    %2987 = vmatprep.subr.bf16.mxu0 %v2389
    %2988 = vmatpush1.bf16.msra.mxu0 %v2388
    %2989 = vmatprep.subr.bf16.mxu0 %v2393
    %2990 = vmatpush1.bf16.msra.mxu0 %v2392
    %2991 = vmatprep.subr.bf16.mxu0 %v2397
    %2992 = vmatpush1.bf16.msra.mxu0 %v2396
    %2993 = vmatprep.subr.bf16.mxu0 %v2401
    %2994 = vmatpush1.bf16.msra.mxu0 %v2400
    %2995 = vmatprep.subr.bf16.mxu0 %v2405
    %2996 = vmatpush1.bf16.msra.mxu0 %v2404
    %2997 = vmatprep.subr.bf16.mxu0 %v2409
    %2998 = vmatpush1.bf16.msra.mxu0 %v2408
    %2999 = vmatprep.mubr.bf16.mxu0 %v1377
    %3000 = vmatmul.mubr.bf16.gmra.mrb[0].mxu0 %v1376
    %v3001 = vpop.f32.mrb[0].mxu0
    %v3002 = vadd.f32 %v2959, %v3001
    %v3003 = vpop.f32.mrb[0].mxu0
    %v3004 = vadd.f32 %v2961, %v3003
    %v3005 = vpop.f32.mrb[0].mxu0
    %v3006 = vadd.f32 %v2963, %v3005
    %v3007 = vpop.f32.mrb[0].mxu0
    %v3008 = vadd.f32 %v2965, %v3007
    %3009 = vdwg.mxu0
    %v3010 = vld [vmem:[#allocation11] ss:$4 sm:$0xf]
    %s3011 = scalar_lea.vmem [#allocation11], 1
    %v3012 = vld [vmem:[%s3011] ss:$4 sm:$0xf]
    %v3013 = vadd.f32 %v2830, %v2832
    %v3014 = vadd.f32 %v3013, %v3002
    %v3015 = vadd.f32 %v3014, %v3004
    %3016 = vadd.xlane.f32.xlu0 %v3015
    %v3017 = vpop.xlane.xlu0 %3016
    %v3018 = vadd.f32 %v2834, %v2836
    %v3019 = vadd.f32 %v3018, %v3006
    %v3020 = vadd.f32 %v3019, %v3008
    %3021 = vadd.xlane.f32.xlu0 %v3020
    %v3022 = vpop.xlane.xlu0 %3021
    %v3023 = vmul.f32 %v2830, %v2830
    %v3024 = vmul.f32 %v2832, %v2832
    %v3025 = vmul.f32 %v3002, %v3002
    %v3026 = vmul.f32 %v3004, %v3004
    %v3027 = vmul.f32 %v2834, %v2834
    %v3028 = vmul.f32 %v2836, %v2836
    %v3029 = vmul.f32 %v3006, %v3006
    %v3030 = vmul.f32 %v3008, %v3008
    %v3031 = vadd.f32 %v3023, %v3024
    %v3032 = vadd.f32 %v3031, %v3025
    %v3033 = vadd.f32 %v3032, %v3026
    %3034 = vadd.xlane.f32.xlu0 %v3033
    %v3035 = vpop.xlane.xlu0 %3034
    %v3036 = vadd.f32 %v3027, %v3028
    %v3037 = vadd.f32 %v3036, %v3029
    %v3038 = vadd.f32 %v3037, %v3030
    %3039 = vadd.xlane.f32.xlu0 %v3038
    %v3040 = vpop.xlane.xlu0 %3039
    %v3041 = vmul.f32 %v3017, 0.001953125
    %v3042 = vmul.f32 %v3022, 0.001953125
    %v3043 = vmul.f32 %v3035, 0.001953125
    %v3044 = vmul.f32 %v3040, 0.001953125
    %v3045 = vmul.f32 %v3041, %v3041
    %v3046 = vmul.f32 %v3042, %v3042
    %v3047 = vsub.f32 %v3043, %v3045
    %v3048 = vsub.f32 %v3044, %v3046
    %v3049 = vmax.f32 %v3047, 0.0
    %v3050 = vmax.f32 %v3048, 0.0
    %v3051 = vadd.f32 %v3049, 0.001
    %v3052 = vadd.f32 %v3050, 0.001
    %v3053 = vrsqrt.pop %v3051
    %v3054 = vrsqrt.pop %v3052
    %v3055 = vsub.f32 %v2830, %v3041
    %v3056 = vsub.f32 %v2832, %v3041
    %v3057 = vsub.f32 %v3002, %v3041
    %v3058 = vsub.f32 %v3004, %v3041
    %v3059 = vsub.f32 %v2834, %v3042
    %v3060 = vsub.f32 %v2836, %v3042
    %v3061 = vsub.f32 %v3006, %v3042
    %v3062 = vsub.f32 %v3008, %v3042
    %v3063 = vmul.f32 %v3055, %v3053
    %v3064 = vmul.f32 %v3056, %v3053
    %v3065 = vmul.f32 %v3057, %v3053
    %v3066 = vmul.f32 %v3058, %v3053
    %v3067 = vmul.f32 %v3059, %v3054
    %v3068 = vmul.f32 %v3060, %v3054
    %v3069 = vmul.f32 %v3061, %v3054
    %v3070 = vmul.f32 %v3062, %v3054
    %v3072 = vlaneseq
    %v3073 = vshrl.u32 %v3072, 7
    %v3074 = vsub.s32 0, %v3073
    %v3075 = vrot.slane %v3010, %v3074
    %v3076 = vlaneseq
    %v3077 = vshrl.u32 %v3076, 7
    %v3078 = vsub.s32 1, %v3077
    %v3079 = vrot.slane %v3010, %v3078
    %v3080 = vlaneseq
    %v3081 = vshrl.u32 %v3080, 7
    %v3082 = vsub.s32 2, %v3081
    %v3083 = vrot.slane %v3010, %v3082
    %v3084 = vlaneseq
    %v3085 = vshrl.u32 %v3084, 7
    %v3086 = vsub.s32 3, %v3085
    %v3087 = vrot.slane %v3010, %v3086
    %v3092 = vmul.f32 %v3063, %v3075
    %v3093 = vmul.f32 %v3064, %v3079
    %v3094 = vmul.f32 %v3065, %v3083
    %v3095 = vmul.f32 %v3066, %v3087
    %v3096 = vmul.f32 %v3067, %v3075
    %v3097 = vmul.f32 %v3068, %v3079
    %v3098 = vmul.f32 %v3069, %v3083
    %v3099 = vmul.f32 %v3070, %v3087
    %v3101 = vlaneseq
    %v3102 = vshrl.u32 %v3101, 7
    %v3103 = vsub.s32 0, %v3102
    %v3104 = vrot.slane %v3012, %v3103
    %v3105 = vlaneseq
    %v3106 = vshrl.u32 %v3105, 7
    %v3107 = vsub.s32 1, %v3106
    %v3108 = vrot.slane %v3012, %v3107
    %v3109 = vlaneseq
    %v3110 = vshrl.u32 %v3109, 7
    %v3111 = vsub.s32 2, %v3110
    %v3112 = vrot.slane %v3012, %v3111
    %v3113 = vlaneseq
    %v3114 = vshrl.u32 %v3113, 7
    %v3115 = vsub.s32 3, %v3114
    %v3116 = vrot.slane %v3012, %v3115
    %v3121 = vadd.f32 %v3092, %v3104
    %v3122 = vadd.f32 %v3093, %v3108
    %v3123 = vadd.f32 %v3094, %v3112
    %v3124 = vadd.f32 %v3095, %v3116
    %v3125 = vadd.f32 %v3096, %v3104
    %v3126 = vadd.f32 %v3097, %v3108
    %v3127 = vadd.f32 %v3098, %v3112
    %v3128 = vadd.f32 %v3099, %v3116
    %v3129 = vmul.f32 %v3121, 0.5
    %v3130 = vmul.f32 %v3122, 0.5
    %v3131 = vmul.f32 %v3123, 0.5
    %v3132 = vmul.f32 %v3124, 0.5
    %v3133 = vmul.f32 %v3125, 0.5
    %v3134 = vmul.f32 %v3126, 0.5
    %v3135 = vmul.f32 %v3127, 0.5
    %v3136 = vmul.f32 %v3128, 0.5
    %v3137 = vtanh.pop %v3129
    %v3138 = vtanh.pop %v3130
    %v3139 = vtanh.pop %v3131
    %v3140 = vtanh.pop %v3132
    %v3141 = vtanh.pop %v3133
    %v3142 = vtanh.pop %v3134
    %v3143 = vtanh.pop %v3135
    %v3144 = vtanh.pop %v3136
    %v3145 = vmul.f32 %v3137, 0.5
    %v3146 = vmul.f32 %v3138, 0.5
    %v3147 = vmul.f32 %v3139, 0.5
    %v3148 = vmul.f32 %v3140, 0.5
    %v3149 = vmul.f32 %v3141, 0.5
    %v3150 = vmul.f32 %v3142, 0.5
    %v3151 = vmul.f32 %v3143, 0.5
    %v3152 = vmul.f32 %v3144, 0.5
    %v3153 = vadd.f32 %v3145, 0.5
    %v3154 = vadd.f32 %v3146, 0.5
    %v3155 = vadd.f32 %v3147, 0.5
    %v3156 = vadd.f32 %v3148, 0.5
    %v3157 = vadd.f32 %v3149, 0.5
    %v3158 = vadd.f32 %v3150, 0.5
    %v3159 = vadd.f32 %v3151, 0.5
    %v3160 = vadd.f32 %v3152, 0.5
    %v3161 = vmul.f32 %v3121, %v3153
    %v3162 = vmul.f32 %v3122, %v3154
    %v3163 = vmul.f32 %v3123, %v3155
    %v3164 = vmul.f32 %v3124, %v3156
    %v3165 = vmul.f32 %v3125, %v3157
    %v3166 = vmul.f32 %v3126, %v3158
    %v3167 = vmul.f32 %v3127, %v3159
    %v3168 = vmul.f32 %v3128, %v3160
    %v3169 = vpack.c.bf16 %v3165, %v3161
    %v3170 = vpack.c.bf16 %v3166, %v3162
    %v3171 = vpack.c.bf16 %v3167, %v3163
    %v3172 = vpack.c.bf16 %v3168, %v3164
    %v3173 = vld [vmem:[#allocation8] sm:$0xff]
    %v3174 = vld [vmem:[#allocation8 + $0x8] sm:$0xff]
    %v3175 = vld [vmem:[#allocation8 + $0x10] sm:$0xff]
    %v3176 = vld [vmem:[#allocation8 + $0x18] sm:$0xff]
    %v3177 = vld [vmem:[#allocation8 + $0x20] sm:$0xff]
    %v3178 = vld [vmem:[#allocation8 + $0x28] sm:$0xff]
    %v3179 = vld [vmem:[#allocation8 + $0x30] sm:$0xff]
    %v3180 = vld [vmem:[#allocation8 + $0x38] sm:$0xff]
    %v3181 = vld [vmem:[#allocation8 + $0x40] sm:$0xff]
    %v3182 = vld [vmem:[#allocation8 + $0x48] sm:$0xff]
    %v3183 = vld [vmem:[#allocation8 + $0x50] sm:$0xff]
    %v3184 = vld [vmem:[#allocation8 + $0x58] sm:$0xff]
    %v3185 = vld [vmem:[#allocation8 + $0x60] sm:$0xff]
    %v3186 = vld [vmem:[#allocation8 + $0x68] sm:$0xff]
    %v3187 = vld [vmem:[#allocation8 + $0x70] sm:$0xff]
    %v3188 = vld [vmem:[#allocation8 + $0x78] sm:$0xff]
    %v3189 = vld [vmem:[#allocation8 + $0x80] sm:$0xff]
    %v3190 = vld [vmem:[#allocation8 + $0x88] sm:$0xff]
    %v3191 = vld [vmem:[#allocation8 + $0x90] sm:$0xff]
    %v3192 = vld [vmem:[#allocation8 + $0x98] sm:$0xff]
    %v3193 = vld [vmem:[#allocation8 + $0xa0] sm:$0xff]
    %v3194 = vld [vmem:[#allocation8 + $0xa8] sm:$0xff]
    %v3195 = vld [vmem:[#allocation8 + $0xb0] sm:$0xff]
    %v3196 = vld [vmem:[#allocation8 + $0xb8] sm:$0xff]
    %v3197 = vld [vmem:[#allocation8 + $0xc0] sm:$0xff]
    %v3198 = vld [vmem:[#allocation8 + $0xc8] sm:$0xff]
    %v3199 = vld [vmem:[#allocation8 + $0xd0] sm:$0xff]
    %v3200 = vld [vmem:[#allocation8 + $0xd8] sm:$0xff]
    %v3201 = vld [vmem:[#allocation8 + $0xe0] sm:$0xff]
    %v3202 = vld [vmem:[#allocation8 + $0xe8] sm:$0xff]
    %v3203 = vld [vmem:[#allocation8 + $0xf0] sm:$0xff]
    %v3204 = vld [vmem:[#allocation8 + $0xf8] sm:$0xff]
    %v3205 = vld [vmem:[#allocation8 + $0x100] sm:$0xff]
    %v3206 = vld [vmem:[#allocation8 + $0x108] sm:$0xff]
    %v3207 = vld [vmem:[#allocation8 + $0x110] sm:$0xff]
    %v3208 = vld [vmem:[#allocation8 + $0x118] sm:$0xff]
    %v3209 = vld [vmem:[#allocation8 + $0x120] sm:$0xff]
    %v3210 = vld [vmem:[#allocation8 + $0x128] sm:$0xff]
    %v3211 = vld [vmem:[#allocation8 + $0x130] sm:$0xff]
    %v3212 = vld [vmem:[#allocation8 + $0x138] sm:$0xff]
    %v3213 = vld [vmem:[#allocation8 + $0x140] sm:$0xff]
    %v3214 = vld [vmem:[#allocation8 + $0x148] sm:$0xff]
    %v3215 = vld [vmem:[#allocation8 + $0x150] sm:$0xff]
    %v3216 = vld [vmem:[#allocation8 + $0x158] sm:$0xff]
    %v3217 = vld [vmem:[#allocation8 + $0x160] sm:$0xff]
    %v3218 = vld [vmem:[#allocation8 + $0x168] sm:$0xff]
    %v3219 = vld [vmem:[#allocation8 + $0x170] sm:$0xff]
    %v3220 = vld [vmem:[#allocation8 + $0x178] sm:$0xff]
    %v3221 = vld [vmem:[#allocation8 + $0x180] sm:$0xff]
    %v3222 = vld [vmem:[#allocation8 + $0x188] sm:$0xff]
    %v3223 = vld [vmem:[#allocation8 + $0x190] sm:$0xff]
    %v3224 = vld [vmem:[#allocation8 + $0x198] sm:$0xff]
    %v3225 = vld [vmem:[#allocation8 + $0x1a0] sm:$0xff]
    %v3226 = vld [vmem:[#allocation8 + $0x1a8] sm:$0xff]
    %v3227 = vld [vmem:[#allocation8 + $0x1b0] sm:$0xff]
    %v3228 = vld [vmem:[#allocation8 + $0x1b8] sm:$0xff]
    %v3229 = vld [vmem:[#allocation8 + $0x1c0] sm:$0xff]
    %v3230 = vld [vmem:[#allocation8 + $0x1c8] sm:$0xff]
    %v3231 = vld [vmem:[#allocation8 + $0x1d0] sm:$0xff]
    %v3232 = vld [vmem:[#allocation8 + $0x1d8] sm:$0xff]
    %v3233 = vld [vmem:[#allocation8 + $0x1e0] sm:$0xff]
    %v3234 = vld [vmem:[#allocation8 + $0x1e8] sm:$0xff]
    %v3235 = vld [vmem:[#allocation8 + $0x1f0] sm:$0xff]
    %v3236 = vld [vmem:[#allocation8 + $0x1f8] sm:$0xff]
    %v3237 = vld [vmem:[#allocation8 + $0x200] sm:$0xff]
    %v3238 = vld [vmem:[#allocation8 + $0x208] sm:$0xff]
    %v3239 = vld [vmem:[#allocation8 + $0x210] sm:$0xff]
    %v3240 = vld [vmem:[#allocation8 + $0x218] sm:$0xff]
    %v3241 = vld [vmem:[#allocation8 + $0x220] sm:$0xff]
    %v3242 = vld [vmem:[#allocation8 + $0x228] sm:$0xff]
    %v3243 = vld [vmem:[#allocation8 + $0x230] sm:$0xff]
    %v3244 = vld [vmem:[#allocation8 + $0x238] sm:$0xff]
    %v3245 = vld [vmem:[#allocation8 + $0x240] sm:$0xff]
    %v3246 = vld [vmem:[#allocation8 + $0x248] sm:$0xff]
    %v3247 = vld [vmem:[#allocation8 + $0x250] sm:$0xff]
    %v3248 = vld [vmem:[#allocation8 + $0x258] sm:$0xff]
    %v3249 = vld [vmem:[#allocation8 + $0x260] sm:$0xff]
    %v3250 = vld [vmem:[#allocation8 + $0x268] sm:$0xff]
    %v3251 = vld [vmem:[#allocation8 + $0x270] sm:$0xff]
    %v3252 = vld [vmem:[#allocation8 + $0x278] sm:$0xff]
    %v3253 = vld [vmem:[#allocation8 + $0x280] sm:$0xff]
    %v3254 = vld [vmem:[#allocation8 + $0x288] sm:$0xff]
    %v3255 = vld [vmem:[#allocation8 + $0x290] sm:$0xff]
    %v3256 = vld [vmem:[#allocation8 + $0x298] sm:$0xff]
    %v3257 = vld [vmem:[#allocation8 + $0x2a0] sm:$0xff]
    %v3258 = vld [vmem:[#allocation8 + $0x2a8] sm:$0xff]
    %v3259 = vld [vmem:[#allocation8 + $0x2b0] sm:$0xff]
    %v3260 = vld [vmem:[#allocation8 + $0x2b8] sm:$0xff]
    %v3261 = vld [vmem:[#allocation8 + $0x2c0] sm:$0xff]
    %v3262 = vld [vmem:[#allocation8 + $0x2c8] sm:$0xff]
    %v3263 = vld [vmem:[#allocation8 + $0x2d0] sm:$0xff]
    %v3264 = vld [vmem:[#allocation8 + $0x2d8] sm:$0xff]
    %v3265 = vld [vmem:[#allocation8 + $0x2e0] sm:$0xff]
    %v3266 = vld [vmem:[#allocation8 + $0x2e8] sm:$0xff]
    %v3267 = vld [vmem:[#allocation8 + $0x2f0] sm:$0xff]
    %v3268 = vld [vmem:[#allocation8 + $0x2f8] sm:$0xff]
    %v3269 = vld [vmem:[#allocation8 + $0x300] sm:$0xff]
    %v3270 = vld [vmem:[#allocation8 + $0x308] sm:$0xff]
    %v3271 = vld [vmem:[#allocation8 + $0x310] sm:$0xff]
    %v3272 = vld [vmem:[#allocation8 + $0x318] sm:$0xff]
    %v3273 = vld [vmem:[#allocation8 + $0x320] sm:$0xff]
    %v3274 = vld [vmem:[#allocation8 + $0x328] sm:$0xff]
    %v3275 = vld [vmem:[#allocation8 + $0x330] sm:$0xff]
    %v3276 = vld [vmem:[#allocation8 + $0x338] sm:$0xff]
    %v3277 = vld [vmem:[#allocation8 + $0x340] sm:$0xff]
    %v3278 = vld [vmem:[#allocation8 + $0x348] sm:$0xff]
    %v3279 = vld [vmem:[#allocation8 + $0x350] sm:$0xff]
    %v3280 = vld [vmem:[#allocation8 + $0x358] sm:$0xff]
    %v3281 = vld [vmem:[#allocation8 + $0x360] sm:$0xff]
    %v3282 = vld [vmem:[#allocation8 + $0x368] sm:$0xff]
    %v3283 = vld [vmem:[#allocation8 + $0x370] sm:$0xff]
    %v3284 = vld [vmem:[#allocation8 + $0x378] sm:$0xff]
    %v3285 = vld [vmem:[#allocation8 + $0x380] sm:$0xff]
    %v3286 = vld [vmem:[#allocation8 + $0x388] sm:$0xff]
    %v3287 = vld [vmem:[#allocation8 + $0x390] sm:$0xff]
    %v3288 = vld [vmem:[#allocation8 + $0x398] sm:$0xff]
    %v3289 = vld [vmem:[#allocation8 + $0x3a0] sm:$0xff]
    %v3290 = vld [vmem:[#allocation8 + $0x3a8] sm:$0xff]
    %v3291 = vld [vmem:[#allocation8 + $0x3b0] sm:$0xff]
    %v3292 = vld [vmem:[#allocation8 + $0x3b8] sm:$0xff]
    %v3293 = vld [vmem:[#allocation8 + $0x3c0] sm:$0xff]
    %v3294 = vld [vmem:[#allocation8 + $0x3c8] sm:$0xff]
    %v3295 = vld [vmem:[#allocation8 + $0x3d0] sm:$0xff]
    %v3296 = vld [vmem:[#allocation8 + $0x3d8] sm:$0xff]
    %v3297 = vld [vmem:[#allocation8 + $0x3e0] sm:$0xff]
    %v3298 = vld [vmem:[#allocation8 + $0x3e8] sm:$0xff]
    %v3299 = vld [vmem:[#allocation8 + $0x3f0] sm:$0xff]
    %v3300 = vld [vmem:[#allocation8 + $0x3f8] sm:$0xff]
    %v3429 = vunpack.c.l.b16 %v3173
    %v3430 = vunpack.c.h.b16 %v3173
    %v3431 = vunpack.c.l.b16 %v3174
    %v3432 = vunpack.c.h.b16 %v3174
    %v3433 = vunpack.c.l.b16 %v3175
    %v3434 = vunpack.c.h.b16 %v3175
    %v3435 = vunpack.c.l.b16 %v3176
    %v3436 = vunpack.c.h.b16 %v3176
    %v3437 = vunpack.c.l.b16 %v3177
    %v3438 = vunpack.c.h.b16 %v3177
    %v3439 = vunpack.c.l.b16 %v3178
    %v3440 = vunpack.c.h.b16 %v3178
    %v3441 = vunpack.c.l.b16 %v3179
    %v3442 = vunpack.c.h.b16 %v3179
    %v3443 = vunpack.c.l.b16 %v3180
    %v3444 = vunpack.c.h.b16 %v3180
    %v3445 = vunpack.c.l.b16 %v3181
    %v3446 = vunpack.c.h.b16 %v3181
    %v3447 = vunpack.c.l.b16 %v3182
    %v3448 = vunpack.c.h.b16 %v3182
    %v3449 = vunpack.c.l.b16 %v3183
    %v3450 = vunpack.c.h.b16 %v3183
    %v3451 = vunpack.c.l.b16 %v3184
    %v3452 = vunpack.c.h.b16 %v3184
    %v3453 = vunpack.c.l.b16 %v3185
    %v3454 = vunpack.c.h.b16 %v3185
    %v3455 = vunpack.c.l.b16 %v3186
    %v3456 = vunpack.c.h.b16 %v3186
    %v3457 = vunpack.c.l.b16 %v3187
    %v3458 = vunpack.c.h.b16 %v3187
    %v3459 = vunpack.c.l.b16 %v3188
    %v3460 = vunpack.c.h.b16 %v3188
    %v3461 = vunpack.c.l.b16 %v3189
    %v3462 = vunpack.c.h.b16 %v3189
    %v3463 = vunpack.c.l.b16 %v3190
    %v3464 = vunpack.c.h.b16 %v3190
    %v3465 = vunpack.c.l.b16 %v3191
    %v3466 = vunpack.c.h.b16 %v3191
    %v3467 = vunpack.c.l.b16 %v3192
    %v3468 = vunpack.c.h.b16 %v3192
    %v3469 = vunpack.c.l.b16 %v3193
    %v3470 = vunpack.c.h.b16 %v3193
    %v3471 = vunpack.c.l.b16 %v3194
    %v3472 = vunpack.c.h.b16 %v3194
    %v3473 = vunpack.c.l.b16 %v3195
    %v3474 = vunpack.c.h.b16 %v3195
    %v3475 = vunpack.c.l.b16 %v3196
    %v3476 = vunpack.c.h.b16 %v3196
    %v3477 = vunpack.c.l.b16 %v3197
    %v3478 = vunpack.c.h.b16 %v3197
    %v3479 = vunpack.c.l.b16 %v3198
    %v3480 = vunpack.c.h.b16 %v3198
    %v3481 = vunpack.c.l.b16 %v3199
    %v3482 = vunpack.c.h.b16 %v3199
    %v3483 = vunpack.c.l.b16 %v3200
    %v3484 = vunpack.c.h.b16 %v3200
    %v3485 = vunpack.c.l.b16 %v3201
    %v3486 = vunpack.c.h.b16 %v3201
    %v3487 = vunpack.c.l.b16 %v3202
    %v3488 = vunpack.c.h.b16 %v3202
    %v3489 = vunpack.c.l.b16 %v3203
    %v3490 = vunpack.c.h.b16 %v3203
    %v3491 = vunpack.c.l.b16 %v3204
    %v3492 = vunpack.c.h.b16 %v3204
    %v3493 = vunpack.c.l.b16 %v3205
    %v3494 = vunpack.c.h.b16 %v3205
    %v3495 = vunpack.c.l.b16 %v3206
    %v3496 = vunpack.c.h.b16 %v3206
    %v3497 = vunpack.c.l.b16 %v3207
    %v3498 = vunpack.c.h.b16 %v3207
    %v3499 = vunpack.c.l.b16 %v3208
    %v3500 = vunpack.c.h.b16 %v3208
    %v3501 = vunpack.c.l.b16 %v3209
    %v3502 = vunpack.c.h.b16 %v3209
    %v3503 = vunpack.c.l.b16 %v3210
    %v3504 = vunpack.c.h.b16 %v3210
    %v3505 = vunpack.c.l.b16 %v3211
    %v3506 = vunpack.c.h.b16 %v3211
    %v3507 = vunpack.c.l.b16 %v3212
    %v3508 = vunpack.c.h.b16 %v3212
    %v3509 = vunpack.c.l.b16 %v3213
    %v3510 = vunpack.c.h.b16 %v3213
    %v3511 = vunpack.c.l.b16 %v3214
    %v3512 = vunpack.c.h.b16 %v3214
    %v3513 = vunpack.c.l.b16 %v3215
    %v3514 = vunpack.c.h.b16 %v3215
    %v3515 = vunpack.c.l.b16 %v3216
    %v3516 = vunpack.c.h.b16 %v3216
    %v3517 = vunpack.c.l.b16 %v3217
    %v3518 = vunpack.c.h.b16 %v3217
    %v3519 = vunpack.c.l.b16 %v3218
    %v3520 = vunpack.c.h.b16 %v3218
    %v3521 = vunpack.c.l.b16 %v3219
    %v3522 = vunpack.c.h.b16 %v3219
    %v3523 = vunpack.c.l.b16 %v3220
    %v3524 = vunpack.c.h.b16 %v3220
    %v3525 = vunpack.c.l.b16 %v3221
    %v3526 = vunpack.c.h.b16 %v3221
    %v3527 = vunpack.c.l.b16 %v3222
    %v3528 = vunpack.c.h.b16 %v3222
    %v3529 = vunpack.c.l.b16 %v3223
    %v3530 = vunpack.c.h.b16 %v3223
    %v3531 = vunpack.c.l.b16 %v3224
    %v3532 = vunpack.c.h.b16 %v3224
    %v3533 = vunpack.c.l.b16 %v3225
    %v3534 = vunpack.c.h.b16 %v3225
    %v3535 = vunpack.c.l.b16 %v3226
    %v3536 = vunpack.c.h.b16 %v3226
    %v3537 = vunpack.c.l.b16 %v3227
    %v3538 = vunpack.c.h.b16 %v3227
    %v3539 = vunpack.c.l.b16 %v3228
    %v3540 = vunpack.c.h.b16 %v3228
    %v3541 = vunpack.c.l.b16 %v3229
    %v3542 = vunpack.c.h.b16 %v3229
    %v3543 = vunpack.c.l.b16 %v3230
    %v3544 = vunpack.c.h.b16 %v3230
    %v3545 = vunpack.c.l.b16 %v3231
    %v3546 = vunpack.c.h.b16 %v3231
    %v3547 = vunpack.c.l.b16 %v3232
    %v3548 = vunpack.c.h.b16 %v3232
    %v3549 = vunpack.c.l.b16 %v3233
    %v3550 = vunpack.c.h.b16 %v3233
    %v3551 = vunpack.c.l.b16 %v3234
    %v3552 = vunpack.c.h.b16 %v3234
    %v3553 = vunpack.c.l.b16 %v3235
    %v3554 = vunpack.c.h.b16 %v3235
    %v3555 = vunpack.c.l.b16 %v3236
    %v3556 = vunpack.c.h.b16 %v3236
    %v3557 = vunpack.c.l.b16 %v3237
    %v3558 = vunpack.c.h.b16 %v3237
    %v3559 = vunpack.c.l.b16 %v3238
    %v3560 = vunpack.c.h.b16 %v3238
    %v3561 = vunpack.c.l.b16 %v3239
    %v3562 = vunpack.c.h.b16 %v3239
    %v3563 = vunpack.c.l.b16 %v3240
    %v3564 = vunpack.c.h.b16 %v3240
    %v3565 = vunpack.c.l.b16 %v3241
    %v3566 = vunpack.c.h.b16 %v3241
    %v3567 = vunpack.c.l.b16 %v3242
    %v3568 = vunpack.c.h.b16 %v3242
    %v3569 = vunpack.c.l.b16 %v3243
    %v3570 = vunpack.c.h.b16 %v3243
    %v3571 = vunpack.c.l.b16 %v3244
    %v3572 = vunpack.c.h.b16 %v3244
    %v3573 = vunpack.c.l.b16 %v3245
    %v3574 = vunpack.c.h.b16 %v3245
    %v3575 = vunpack.c.l.b16 %v3246
    %v3576 = vunpack.c.h.b16 %v3246
    %v3577 = vunpack.c.l.b16 %v3247
    %v3578 = vunpack.c.h.b16 %v3247
    %v3579 = vunpack.c.l.b16 %v3248
    %v3580 = vunpack.c.h.b16 %v3248
    %v3581 = vunpack.c.l.b16 %v3249
    %v3582 = vunpack.c.h.b16 %v3249
    %v3583 = vunpack.c.l.b16 %v3250
    %v3584 = vunpack.c.h.b16 %v3250
    %v3585 = vunpack.c.l.b16 %v3251
    %v3586 = vunpack.c.h.b16 %v3251
    %v3587 = vunpack.c.l.b16 %v3252
    %v3588 = vunpack.c.h.b16 %v3252
    %v3589 = vunpack.c.l.b16 %v3253
    %v3590 = vunpack.c.h.b16 %v3253
    %v3591 = vunpack.c.l.b16 %v3254
    %v3592 = vunpack.c.h.b16 %v3254
    %v3593 = vunpack.c.l.b16 %v3255
    %v3594 = vunpack.c.h.b16 %v3255
    %v3595 = vunpack.c.l.b16 %v3256
    %v3596 = vunpack.c.h.b16 %v3256
    %v3597 = vunpack.c.l.b16 %v3257
    %v3598 = vunpack.c.h.b16 %v3257
    %v3599 = vunpack.c.l.b16 %v3258
    %v3600 = vunpack.c.h.b16 %v3258
    %v3601 = vunpack.c.l.b16 %v3259
    %v3602 = vunpack.c.h.b16 %v3259
    %v3603 = vunpack.c.l.b16 %v3260
    %v3604 = vunpack.c.h.b16 %v3260
    %v3605 = vunpack.c.l.b16 %v3261
    %v3606 = vunpack.c.h.b16 %v3261
    %v3607 = vunpack.c.l.b16 %v3262
    %v3608 = vunpack.c.h.b16 %v3262
    %v3609 = vunpack.c.l.b16 %v3263
    %v3610 = vunpack.c.h.b16 %v3263
    %v3611 = vunpack.c.l.b16 %v3264
    %v3612 = vunpack.c.h.b16 %v3264
    %v3613 = vunpack.c.l.b16 %v3265
    %v3614 = vunpack.c.h.b16 %v3265
    %v3615 = vunpack.c.l.b16 %v3266
    %v3616 = vunpack.c.h.b16 %v3266
    %v3617 = vunpack.c.l.b16 %v3267
    %v3618 = vunpack.c.h.b16 %v3267
    %v3619 = vunpack.c.l.b16 %v3268
    %v3620 = vunpack.c.h.b16 %v3268
    %v3621 = vunpack.c.l.b16 %v3269
    %v3622 = vunpack.c.h.b16 %v3269
    %v3623 = vunpack.c.l.b16 %v3270
    %v3624 = vunpack.c.h.b16 %v3270
    %v3625 = vunpack.c.l.b16 %v3271
    %v3626 = vunpack.c.h.b16 %v3271
    %v3627 = vunpack.c.l.b16 %v3272
    %v3628 = vunpack.c.h.b16 %v3272
    %v3629 = vunpack.c.l.b16 %v3273
    %v3630 = vunpack.c.h.b16 %v3273
    %v3631 = vunpack.c.l.b16 %v3274
    %v3632 = vunpack.c.h.b16 %v3274
    %v3633 = vunpack.c.l.b16 %v3275
    %v3634 = vunpack.c.h.b16 %v3275
    %v3635 = vunpack.c.l.b16 %v3276
    %v3636 = vunpack.c.h.b16 %v3276
    %v3637 = vunpack.c.l.b16 %v3277
    %v3638 = vunpack.c.h.b16 %v3277
    %v3639 = vunpack.c.l.b16 %v3278
    %v3640 = vunpack.c.h.b16 %v3278
    %v3641 = vunpack.c.l.b16 %v3279
    %v3642 = vunpack.c.h.b16 %v3279
    %v3643 = vunpack.c.l.b16 %v3280
    %v3644 = vunpack.c.h.b16 %v3280
    %v3645 = vunpack.c.l.b16 %v3281
    %v3646 = vunpack.c.h.b16 %v3281
    %v3647 = vunpack.c.l.b16 %v3282
    %v3648 = vunpack.c.h.b16 %v3282
    %v3649 = vunpack.c.l.b16 %v3283
    %v3650 = vunpack.c.h.b16 %v3283
    %v3651 = vunpack.c.l.b16 %v3284
    %v3652 = vunpack.c.h.b16 %v3284
    %v3653 = vunpack.c.l.b16 %v3285
    %v3654 = vunpack.c.h.b16 %v3285
    %v3655 = vunpack.c.l.b16 %v3286
    %v3656 = vunpack.c.h.b16 %v3286
    %v3657 = vunpack.c.l.b16 %v3287
    %v3658 = vunpack.c.h.b16 %v3287
    %v3659 = vunpack.c.l.b16 %v3288
    %v3660 = vunpack.c.h.b16 %v3288
    %v3661 = vunpack.c.l.b16 %v3289
    %v3662 = vunpack.c.h.b16 %v3289
    %v3663 = vunpack.c.l.b16 %v3290
    %v3664 = vunpack.c.h.b16 %v3290
    %v3665 = vunpack.c.l.b16 %v3291
    %v3666 = vunpack.c.h.b16 %v3291
    %v3667 = vunpack.c.l.b16 %v3292
    %v3668 = vunpack.c.h.b16 %v3292
    %v3669 = vunpack.c.l.b16 %v3293
    %v3670 = vunpack.c.h.b16 %v3293
    %v3671 = vunpack.c.l.b16 %v3294
    %v3672 = vunpack.c.h.b16 %v3294
    %v3673 = vunpack.c.l.b16 %v3295
    %v3674 = vunpack.c.h.b16 %v3295
    %v3675 = vunpack.c.l.b16 %v3296
    %v3676 = vunpack.c.h.b16 %v3296
    %v3677 = vunpack.c.l.b16 %v3297
    %v3678 = vunpack.c.h.b16 %v3297
    %v3679 = vunpack.c.l.b16 %v3298
    %v3680 = vunpack.c.h.b16 %v3298
    %v3681 = vunpack.c.l.b16 %v3299
    %v3682 = vunpack.c.h.b16 %v3299
    %v3683 = vunpack.c.l.b16 %v3300
    %v3684 = vunpack.c.h.b16 %v3300
    %v3685 = vpack.c.b16 %v3433, %v3429
    %v3686 = vpack.c.b16 %v3434, %v3430
    %v3687 = vpack.c.b16 %v3435, %v3431
    %v3688 = vpack.c.b16 %v3436, %v3432
    %v3689 = vpack.c.b16 %v3441, %v3437
    %v3690 = vpack.c.b16 %v3442, %v3438
    %v3691 = vpack.c.b16 %v3443, %v3439
    %v3692 = vpack.c.b16 %v3444, %v3440
    %v3693 = vpack.c.b16 %v3449, %v3445
    %v3694 = vpack.c.b16 %v3450, %v3446
    %v3695 = vpack.c.b16 %v3451, %v3447
    %v3696 = vpack.c.b16 %v3452, %v3448
    %v3697 = vpack.c.b16 %v3457, %v3453
    %v3698 = vpack.c.b16 %v3458, %v3454
    %v3699 = vpack.c.b16 %v3459, %v3455
    %v3700 = vpack.c.b16 %v3460, %v3456
    %v3701 = vpack.c.b16 %v3465, %v3461
    %v3702 = vpack.c.b16 %v3466, %v3462
    %v3703 = vpack.c.b16 %v3467, %v3463
    %v3704 = vpack.c.b16 %v3468, %v3464
    %v3705 = vpack.c.b16 %v3473, %v3469
    %v3706 = vpack.c.b16 %v3474, %v3470
    %v3707 = vpack.c.b16 %v3475, %v3471
    %v3708 = vpack.c.b16 %v3476, %v3472
    %v3709 = vpack.c.b16 %v3481, %v3477
    %v3710 = vpack.c.b16 %v3482, %v3478
    %v3711 = vpack.c.b16 %v3483, %v3479
    %v3712 = vpack.c.b16 %v3484, %v3480
    %v3713 = vpack.c.b16 %v3489, %v3485
    %v3714 = vpack.c.b16 %v3490, %v3486
    %v3715 = vpack.c.b16 %v3491, %v3487
    %v3716 = vpack.c.b16 %v3492, %v3488
    %v3717 = vpack.c.b16 %v3497, %v3493
    %v3718 = vpack.c.b16 %v3498, %v3494
    %v3719 = vpack.c.b16 %v3499, %v3495
    %v3720 = vpack.c.b16 %v3500, %v3496
    %v3721 = vpack.c.b16 %v3505, %v3501
    %v3722 = vpack.c.b16 %v3506, %v3502
    %v3723 = vpack.c.b16 %v3507, %v3503
    %v3724 = vpack.c.b16 %v3508, %v3504
    %v3725 = vpack.c.b16 %v3513, %v3509
    %v3726 = vpack.c.b16 %v3514, %v3510
    %v3727 = vpack.c.b16 %v3515, %v3511
    %v3728 = vpack.c.b16 %v3516, %v3512
    %v3729 = vpack.c.b16 %v3521, %v3517
    %v3730 = vpack.c.b16 %v3522, %v3518
    %v3731 = vpack.c.b16 %v3523, %v3519
    %v3732 = vpack.c.b16 %v3524, %v3520
    %v3733 = vpack.c.b16 %v3529, %v3525
    %v3734 = vpack.c.b16 %v3530, %v3526
    %v3735 = vpack.c.b16 %v3531, %v3527
    %v3736 = vpack.c.b16 %v3532, %v3528
    %v3737 = vpack.c.b16 %v3537, %v3533
    %v3738 = vpack.c.b16 %v3538, %v3534
    %v3739 = vpack.c.b16 %v3539, %v3535
    %v3740 = vpack.c.b16 %v3540, %v3536
    %v3741 = vpack.c.b16 %v3545, %v3541
    %v3742 = vpack.c.b16 %v3546, %v3542
    %v3743 = vpack.c.b16 %v3547, %v3543
    %v3744 = vpack.c.b16 %v3548, %v3544
    %v3745 = vpack.c.b16 %v3553, %v3549
    %v3746 = vpack.c.b16 %v3554, %v3550
    %v3747 = vpack.c.b16 %v3555, %v3551
    %v3748 = vpack.c.b16 %v3556, %v3552
    %v3749 = vpack.c.b16 %v3561, %v3557
    %v3750 = vpack.c.b16 %v3562, %v3558
    %v3751 = vpack.c.b16 %v3563, %v3559
    %v3752 = vpack.c.b16 %v3564, %v3560
    %v3753 = vpack.c.b16 %v3569, %v3565
    %v3754 = vpack.c.b16 %v3570, %v3566
    %v3755 = vpack.c.b16 %v3571, %v3567
    %v3756 = vpack.c.b16 %v3572, %v3568
    %v3757 = vpack.c.b16 %v3577, %v3573
    %v3758 = vpack.c.b16 %v3578, %v3574
    %v3759 = vpack.c.b16 %v3579, %v3575
    %v3760 = vpack.c.b16 %v3580, %v3576
    %v3761 = vpack.c.b16 %v3585, %v3581
    %v3762 = vpack.c.b16 %v3586, %v3582
    %v3763 = vpack.c.b16 %v3587, %v3583
    %v3764 = vpack.c.b16 %v3588, %v3584
    %v3765 = vpack.c.b16 %v3593, %v3589
    %v3766 = vpack.c.b16 %v3594, %v3590
    %v3767 = vpack.c.b16 %v3595, %v3591
    %v3768 = vpack.c.b16 %v3596, %v3592
    %v3769 = vpack.c.b16 %v3601, %v3597
    %v3770 = vpack.c.b16 %v3602, %v3598
    %v3771 = vpack.c.b16 %v3603, %v3599
    %v3772 = vpack.c.b16 %v3604, %v3600
    %v3773 = vpack.c.b16 %v3609, %v3605
    %v3774 = vpack.c.b16 %v3610, %v3606
    %v3775 = vpack.c.b16 %v3611, %v3607
    %v3776 = vpack.c.b16 %v3612, %v3608
    %v3777 = vpack.c.b16 %v3617, %v3613
    %v3778 = vpack.c.b16 %v3618, %v3614
    %v3779 = vpack.c.b16 %v3619, %v3615
    %v3780 = vpack.c.b16 %v3620, %v3616
    %v3781 = vpack.c.b16 %v3625, %v3621
    %v3782 = vpack.c.b16 %v3626, %v3622
    %v3783 = vpack.c.b16 %v3627, %v3623
    %v3784 = vpack.c.b16 %v3628, %v3624
    %v3785 = vpack.c.b16 %v3633, %v3629
    %v3786 = vpack.c.b16 %v3634, %v3630
    %v3787 = vpack.c.b16 %v3635, %v3631
    %v3788 = vpack.c.b16 %v3636, %v3632
    %v3789 = vpack.c.b16 %v3641, %v3637
    %v3790 = vpack.c.b16 %v3642, %v3638
    %v3791 = vpack.c.b16 %v3643, %v3639
    %v3792 = vpack.c.b16 %v3644, %v3640
    %v3793 = vpack.c.b16 %v3649, %v3645
    %v3794 = vpack.c.b16 %v3650, %v3646
    %v3795 = vpack.c.b16 %v3651, %v3647
    %v3796 = vpack.c.b16 %v3652, %v3648
    %v3797 = vpack.c.b16 %v3657, %v3653
    %v3798 = vpack.c.b16 %v3658, %v3654
    %v3799 = vpack.c.b16 %v3659, %v3655
    %v3800 = vpack.c.b16 %v3660, %v3656
    %v3801 = vpack.c.b16 %v3665, %v3661
    %v3802 = vpack.c.b16 %v3666, %v3662
    %v3803 = vpack.c.b16 %v3667, %v3663
    %v3804 = vpack.c.b16 %v3668, %v3664
    %v3805 = vpack.c.b16 %v3673, %v3669
    %v3806 = vpack.c.b16 %v3674, %v3670
    %v3807 = vpack.c.b16 %v3675, %v3671
    %v3808 = vpack.c.b16 %v3676, %v3672
    %v3809 = vpack.c.b16 %v3681, %v3677
    %v3810 = vpack.c.b16 %v3682, %v3678
    %v3811 = vpack.c.b16 %v3683, %v3679
    %v3812 = vpack.c.b16 %v3684, %v3680
    %3941 = vmatprep.subr.bf16.mxu0 %v3686
    %3942 = vmatpush1.bf16.msra.mxu0 %v3685
    %3943 = vmatprep.subr.bf16.mxu0 %v3690
    %3944 = vmatpush1.bf16.msra.mxu0 %v3689
    %3945 = vmatprep.subr.bf16.mxu0 %v3694
    %3946 = vmatpush1.bf16.msra.mxu0 %v3693
    %3947 = vmatprep.subr.bf16.mxu0 %v3698
    %3948 = vmatpush1.bf16.msra.mxu0 %v3697
    %3949 = vmatprep.subr.bf16.mxu0 %v3702
    %3950 = vmatpush1.bf16.msra.mxu0 %v3701
    %3951 = vmatprep.subr.bf16.mxu0 %v3706
    %3952 = vmatpush1.bf16.msra.mxu0 %v3705
    %3953 = vmatprep.subr.bf16.mxu0 %v3710
    %3954 = vmatpush1.bf16.msra.mxu0 %v3709
    %3955 = vmatprep.subr.bf16.mxu0 %v3714
    %3956 = vmatpush1.bf16.msra.mxu0 %v3713
    %3957 = vmatprep.subr.bf16.mxu0 %v3718
    %3958 = vmatpush1.bf16.msra.mxu0 %v3717
    %3959 = vmatprep.subr.bf16.mxu0 %v3722
    %3960 = vmatpush1.bf16.msra.mxu0 %v3721
    %3961 = vmatprep.subr.bf16.mxu0 %v3726
    %3962 = vmatpush1.bf16.msra.mxu0 %v3725
    %3963 = vmatprep.subr.bf16.mxu0 %v3730
    %3964 = vmatpush1.bf16.msra.mxu0 %v3729
    %3965 = vmatprep.subr.bf16.mxu0 %v3734
    %3966 = vmatpush1.bf16.msra.mxu0 %v3733
    %3967 = vmatprep.subr.bf16.mxu0 %v3738
    %3968 = vmatpush1.bf16.msra.mxu0 %v3737
    %3969 = vmatprep.subr.bf16.mxu0 %v3742
    %3970 = vmatpush1.bf16.msra.mxu0 %v3741
    %3971 = vmatprep.subr.bf16.mxu0 %v3746
    %3972 = vmatpush1.bf16.msra.mxu0 %v3745
    %3973 = vmatprep.mubr.bf16.mxu0 %v3170
    %3974 = vmatmul.mubr.bf16.gmra.mrb[0].mxu0 %v3169
    %v3975 = vpop.f32.mrb[0].mxu0
    %v3976 = vadd.f32 0.0, %v3975
    %v3977 = vpop.f32.mrb[0].mxu0
    %v3978 = vadd.f32 0.0, %v3977
    %v3979 = vpop.f32.mrb[0].mxu0
    %v3980 = vadd.f32 0.0, %v3979
    %v3981 = vpop.f32.mrb[0].mxu0
    %v3982 = vadd.f32 0.0, %v3981
    %3983 = vdwg.mxu0
    %3984 = vmatprep.subr.bf16.mxu0 %v3750
    %3985 = vmatpush1.bf16.msra.mxu0 %v3749
    %3986 = vmatprep.subr.bf16.mxu0 %v3754
    %3987 = vmatpush1.bf16.msra.mxu0 %v3753
    %3988 = vmatprep.subr.bf16.mxu0 %v3758
    %3989 = vmatpush1.bf16.msra.mxu0 %v3757
    %3990 = vmatprep.subr.bf16.mxu0 %v3762
    %3991 = vmatpush1.bf16.msra.mxu0 %v3761
    %3992 = vmatprep.subr.bf16.mxu0 %v3766
    %3993 = vmatpush1.bf16.msra.mxu0 %v3765
    %3994 = vmatprep.subr.bf16.mxu0 %v3770
    %3995 = vmatpush1.bf16.msra.mxu0 %v3769
    %3996 = vmatprep.subr.bf16.mxu0 %v3774
    %3997 = vmatpush1.bf16.msra.mxu0 %v3773
    %3998 = vmatprep.subr.bf16.mxu0 %v3778
    %3999 = vmatpush1.bf16.msra.mxu0 %v3777
    %4000 = vmatprep.subr.bf16.mxu0 %v3782
    %4001 = vmatpush1.bf16.msra.mxu0 %v3781
    %4002 = vmatprep.subr.bf16.mxu0 %v3786
    %4003 = vmatpush1.bf16.msra.mxu0 %v3785
    %4004 = vmatprep.subr.bf16.mxu0 %v3790
    %4005 = vmatpush1.bf16.msra.mxu0 %v3789
    %4006 = vmatprep.subr.bf16.mxu0 %v3794
    %4007 = vmatpush1.bf16.msra.mxu0 %v3793
    %4008 = vmatprep.subr.bf16.mxu0 %v3798
    %4009 = vmatpush1.bf16.msra.mxu0 %v3797
    %4010 = vmatprep.subr.bf16.mxu0 %v3802
    %4011 = vmatpush1.bf16.msra.mxu0 %v3801
    %4012 = vmatprep.subr.bf16.mxu0 %v3806
    %4013 = vmatpush1.bf16.msra.mxu0 %v3805
    %4014 = vmatprep.subr.bf16.mxu0 %v3810
    %4015 = vmatpush1.bf16.msra.mxu0 %v3809
    %4016 = vmatprep.mubr.bf16.mxu0 %v3172
    %4017 = vmatmul.mubr.bf16.gmra.mrb[0].mxu0 %v3171
    %v4018 = vpop.f32.mrb[0].mxu0
    %v4019 = vadd.f32 %v3976, %v4018
    %v4020 = vpop.f32.mrb[0].mxu0
    %v4021 = vadd.f32 %v3978, %v4020
    %v4022 = vpop.f32.mrb[0].mxu0
    %v4023 = vadd.f32 %v3980, %v4022
    %v4024 = vpop.f32.mrb[0].mxu0
    %v4025 = vadd.f32 %v3982, %v4024
    %4026 = vdwg.mxu0
    %4027 = vmatprep.subr.bf16.mxu0 %v3688
    %4028 = vmatpush1.bf16.msra.mxu0 %v3687
    %4029 = vmatprep.subr.bf16.mxu0 %v3692
    %4030 = vmatpush1.bf16.msra.mxu0 %v3691
    %4031 = vmatprep.subr.bf16.mxu0 %v3696
    %4032 = vmatpush1.bf16.msra.mxu0 %v3695
    %4033 = vmatprep.subr.bf16.mxu0 %v3700
    %4034 = vmatpush1.bf16.msra.mxu0 %v3699
    %4035 = vmatprep.subr.bf16.mxu0 %v3704
    %4036 = vmatpush1.bf16.msra.mxu0 %v3703
    %4037 = vmatprep.subr.bf16.mxu0 %v3708
    %4038 = vmatpush1.bf16.msra.mxu0 %v3707
    %4039 = vmatprep.subr.bf16.mxu0 %v3712
    %4040 = vmatpush1.bf16.msra.mxu0 %v3711
    %4041 = vmatprep.subr.bf16.mxu0 %v3716
    %4042 = vmatpush1.bf16.msra.mxu0 %v3715
    %4043 = vmatprep.subr.bf16.mxu0 %v3720
    %4044 = vmatpush1.bf16.msra.mxu0 %v3719
    %4045 = vmatprep.subr.bf16.mxu0 %v3724
    %4046 = vmatpush1.bf16.msra.mxu0 %v3723
    %4047 = vmatprep.subr.bf16.mxu0 %v3728
    %4048 = vmatpush1.bf16.msra.mxu0 %v3727
    %4049 = vmatprep.subr.bf16.mxu0 %v3732
    %4050 = vmatpush1.bf16.msra.mxu0 %v3731
    %4051 = vmatprep.subr.bf16.mxu0 %v3736
    %4052 = vmatpush1.bf16.msra.mxu0 %v3735
    %4053 = vmatprep.subr.bf16.mxu0 %v3740
    %4054 = vmatpush1.bf16.msra.mxu0 %v3739
    %4055 = vmatprep.subr.bf16.mxu0 %v3744
    %4056 = vmatpush1.bf16.msra.mxu0 %v3743
    %4057 = vmatprep.subr.bf16.mxu0 %v3748
    %4058 = vmatpush1.bf16.msra.mxu0 %v3747
    %4059 = vmatprep.mubr.bf16.mxu0 %v3170
    %4060 = vmatmul.mubr.bf16.gmra.mrb[0].mxu0 %v3169
    %v4061 = vpop.f32.mrb[0].mxu0
    %v4062 = vadd.f32 0.0, %v4061
    %v4063 = vpop.f32.mrb[0].mxu0
    %v4064 = vadd.f32 0.0, %v4063
    %v4065 = vpop.f32.mrb[0].mxu0
    %v4066 = vadd.f32 0.0, %v4065
    %v4067 = vpop.f32.mrb[0].mxu0
    %v4068 = vadd.f32 0.0, %v4067
    %4069 = vdwg.mxu0
    %4070 = vmatprep.subr.bf16.mxu0 %v3752
    %4071 = vmatpush1.bf16.msra.mxu0 %v3751
    %4072 = vmatprep.subr.bf16.mxu0 %v3756
    %4073 = vmatpush1.bf16.msra.mxu0 %v3755
    %4074 = vmatprep.subr.bf16.mxu0 %v3760
    %4075 = vmatpush1.bf16.msra.mxu0 %v3759
    %4076 = vmatprep.subr.bf16.mxu0 %v3764
    %4077 = vmatpush1.bf16.msra.mxu0 %v3763
    %4078 = vmatprep.subr.bf16.mxu0 %v3768
    %4079 = vmatpush1.bf16.msra.mxu0 %v3767
    %4080 = vmatprep.subr.bf16.mxu0 %v3772
    %4081 = vmatpush1.bf16.msra.mxu0 %v3771
    %4082 = vmatprep.subr.bf16.mxu0 %v3776
    %4083 = vmatpush1.bf16.msra.mxu0 %v3775
    %4084 = vmatprep.subr.bf16.mxu0 %v3780
    %4085 = vmatpush1.bf16.msra.mxu0 %v3779
    %4086 = vmatprep.subr.bf16.mxu0 %v3784
    %4087 = vmatpush1.bf16.msra.mxu0 %v3783
    %4088 = vmatprep.subr.bf16.mxu0 %v3788
    %4089 = vmatpush1.bf16.msra.mxu0 %v3787
    %4090 = vmatprep.subr.bf16.mxu0 %v3792
    %4091 = vmatpush1.bf16.msra.mxu0 %v3791
    %4092 = vmatprep.subr.bf16.mxu0 %v3796
    %4093 = vmatpush1.bf16.msra.mxu0 %v3795
    %4094 = vmatprep.subr.bf16.mxu0 %v3800
    %4095 = vmatpush1.bf16.msra.mxu0 %v3799
    %4096 = vmatprep.subr.bf16.mxu0 %v3804
    %4097 = vmatpush1.bf16.msra.mxu0 %v3803
    %4098 = vmatprep.subr.bf16.mxu0 %v3808
    %4099 = vmatpush1.bf16.msra.mxu0 %v3807
    %4100 = vmatprep.subr.bf16.mxu0 %v3812
    %4101 = vmatpush1.bf16.msra.mxu0 %v3811
    %4102 = vmatprep.mubr.bf16.mxu0 %v3172
    %4103 = vmatmul.mubr.bf16.gmra.mrb[0].mxu0 %v3171
    %v4104 = vpop.f32.mrb[0].mxu0
    %v4105 = vadd.f32 %v4062, %v4104
    %v4106 = vpop.f32.mrb[0].mxu0
    %v4107 = vadd.f32 %v4064, %v4106
    %v4108 = vpop.f32.mrb[0].mxu0
    %v4109 = vadd.f32 %v4066, %v4108
    %v4110 = vpop.f32.mrb[0].mxu0
    %v4111 = vadd.f32 %v4068, %v4110
    %4112 = vdwg.mxu0
    %s4113 = scalar_lea.vmem [#allocation11], 2
    %v4114 = vld [vmem:[%s4113] ss:$4 sm:$0xf]
    %s4115 = scalar_lea.vmem [#allocation11], 3
    %v4116 = vld [vmem:[%s4115] ss:$4 sm:$0xf]
    %v4117 = vadd.f32 %v4019, %v4021
    %v4118 = vadd.f32 %v4117, %v4105
    %v4119 = vadd.f32 %v4118, %v4107
    %4120 = vadd.xlane.f32.xlu0 %v4119
    %v4121 = vpop.xlane.xlu0 %4120
    %v4122 = vadd.f32 %v4023, %v4025
    %v4123 = vadd.f32 %v4122, %v4109
    %v4124 = vadd.f32 %v4123, %v4111
    %4125 = vadd.xlane.f32.xlu0 %v4124
    %v4126 = vpop.xlane.xlu0 %4125
    %v4127 = vmul.f32 %v4019, %v4019
    %v4128 = vmul.f32 %v4021, %v4021
    %v4129 = vmul.f32 %v4105, %v4105
    %v4130 = vmul.f32 %v4107, %v4107
    %v4131 = vmul.f32 %v4023, %v4023
    %v4132 = vmul.f32 %v4025, %v4025
    %v4133 = vmul.f32 %v4109, %v4109
    %v4134 = vmul.f32 %v4111, %v4111
    %v4135 = vadd.f32 %v4127, %v4128
    %v4136 = vadd.f32 %v4135, %v4129
    %v4137 = vadd.f32 %v4136, %v4130
    %4138 = vadd.xlane.f32.xlu0 %v4137
    %v4139 = vpop.xlane.xlu0 %4138
    %v4140 = vadd.f32 %v4131, %v4132
    %v4141 = vadd.f32 %v4140, %v4133
    %v4142 = vadd.f32 %v4141, %v4134
    %4143 = vadd.xlane.f32.xlu0 %v4142
    %v4144 = vpop.xlane.xlu0 %4143
    %v4145 = vmul.f32 %v4121, 0.001953125
    %v4146 = vmul.f32 %v4126, 0.001953125
    %v4147 = vmul.f32 %v4139, 0.001953125
    %v4148 = vmul.f32 %v4144, 0.001953125
    %v4149 = vmul.f32 %v4145, %v4145
    %v4150 = vmul.f32 %v4146, %v4146
    %v4151 = vsub.f32 %v4147, %v4149
    %v4152 = vsub.f32 %v4148, %v4150
    %v4153 = vmax.f32 %v4151, 0.0
    %v4154 = vmax.f32 %v4152, 0.0
    %v4155 = vadd.f32 %v4153, 0.001
    %v4156 = vadd.f32 %v4154, 0.001
    %v4157 = vrsqrt.pop %v4155
    %v4158 = vrsqrt.pop %v4156
    %v4159 = vsub.f32 %v4019, %v4145
    %v4160 = vsub.f32 %v4021, %v4145
    %v4161 = vsub.f32 %v4105, %v4145
    %v4162 = vsub.f32 %v4107, %v4145
    %v4163 = vsub.f32 %v4023, %v4146
    %v4164 = vsub.f32 %v4025, %v4146
    %v4165 = vsub.f32 %v4109, %v4146
    %v4166 = vsub.f32 %v4111, %v4146
    %v4167 = vmul.f32 %v4159, %v4157
    %v4168 = vmul.f32 %v4160, %v4157
    %v4169 = vmul.f32 %v4161, %v4157
    %v4170 = vmul.f32 %v4162, %v4157
    %v4171 = vmul.f32 %v4163, %v4158
    %v4172 = vmul.f32 %v4164, %v4158
    %v4173 = vmul.f32 %v4165, %v4158
    %v4174 = vmul.f32 %v4166, %v4158
    %v4176 = vlaneseq
    %v4177 = vshrl.u32 %v4176, 7
    %v4178 = vsub.s32 0, %v4177
    %v4179 = vrot.slane %v4114, %v4178
    %v4180 = vlaneseq
    %v4181 = vshrl.u32 %v4180, 7
    %v4182 = vsub.s32 1, %v4181
    %v4183 = vrot.slane %v4114, %v4182
    %v4184 = vlaneseq
    %v4185 = vshrl.u32 %v4184, 7
    %v4186 = vsub.s32 2, %v4185
    %v4187 = vrot.slane %v4114, %v4186
    %v4188 = vlaneseq
    %v4189 = vshrl.u32 %v4188, 7
    %v4190 = vsub.s32 3, %v4189
    %v4191 = vrot.slane %v4114, %v4190
    %v4196 = vmul.f32 %v4167, %v4179
    %v4197 = vmul.f32 %v4168, %v4183
    %v4198 = vmul.f32 %v4169, %v4187
    %v4199 = vmul.f32 %v4170, %v4191
    %v4200 = vmul.f32 %v4171, %v4179
    %v4201 = vmul.f32 %v4172, %v4183
    %v4202 = vmul.f32 %v4173, %v4187
    %v4203 = vmul.f32 %v4174, %v4191
    %v4205 = vlaneseq
    %v4206 = vshrl.u32 %v4205, 7
    %v4207 = vsub.s32 0, %v4206
    %v4208 = vrot.slane %v4116, %v4207
    %v4209 = vlaneseq
    %v4210 = vshrl.u32 %v4209, 7
    %v4211 = vsub.s32 1, %v4210
    %v4212 = vrot.slane %v4116, %v4211
    %v4213 = vlaneseq
    %v4214 = vshrl.u32 %v4213, 7
    %v4215 = vsub.s32 2, %v4214
    %v4216 = vrot.slane %v4116, %v4215
    %v4217 = vlaneseq
    %v4218 = vshrl.u32 %v4217, 7
    %v4219 = vsub.s32 3, %v4218
    %v4220 = vrot.slane %v4116, %v4219
    %v4225 = vadd.f32 %v4196, %v4208
    %v4226 = vadd.f32 %v4197, %v4212
    %v4227 = vadd.f32 %v4198, %v4216
    %v4228 = vadd.f32 %v4199, %v4220
    %v4229 = vadd.f32 %v4200, %v4208
    %v4230 = vadd.f32 %v4201, %v4212
    %v4231 = vadd.f32 %v4202, %v4216
    %v4232 = vadd.f32 %v4203, %v4220
    %v4233 = vmul.f32 %v4225, 0.5
    %v4234 = vmul.f32 %v4226, 0.5
    %v4235 = vmul.f32 %v4227, 0.5
    %v4236 = vmul.f32 %v4228, 0.5
    %v4237 = vmul.f32 %v4229, 0.5
    %v4238 = vmul.f32 %v4230, 0.5
    %v4239 = vmul.f32 %v4231, 0.5
    %v4240 = vmul.f32 %v4232, 0.5
    %v4241 = vtanh.pop %v4233
    %v4242 = vtanh.pop %v4234
    %v4243 = vtanh.pop %v4235
    %v4244 = vtanh.pop %v4236
    %v4245 = vtanh.pop %v4237
    %v4246 = vtanh.pop %v4238
    %v4247 = vtanh.pop %v4239
    %v4248 = vtanh.pop %v4240
    %v4249 = vmul.f32 %v4241, 0.5
    %v4250 = vmul.f32 %v4242, 0.5
    %v4251 = vmul.f32 %v4243, 0.5
    %v4252 = vmul.f32 %v4244, 0.5
    %v4253 = vmul.f32 %v4245, 0.5
    %v4254 = vmul.f32 %v4246, 0.5
    %v4255 = vmul.f32 %v4247, 0.5
    %v4256 = vmul.f32 %v4248, 0.5
    %v4257 = vadd.f32 %v4249, 0.5
    %v4258 = vadd.f32 %v4250, 0.5
    %v4259 = vadd.f32 %v4251, 0.5
    %v4260 = vadd.f32 %v4252, 0.5
    %v4261 = vadd.f32 %v4253, 0.5
    %v4262 = vadd.f32 %v4254, 0.5
    %v4263 = vadd.f32 %v4255, 0.5
    %v4264 = vadd.f32 %v4256, 0.5
    %v4265 = vmul.f32 %v4225, %v4257
    %v4266 = vmul.f32 %v4226, %v4258
    %v4267 = vmul.f32 %v4227, %v4259
    %v4268 = vmul.f32 %v4228, %v4260
    %v4269 = vmul.f32 %v4229, %v4261
    %v4270 = vmul.f32 %v4230, %v4262
    %v4271 = vmul.f32 %v4231, %v4263
    %v4272 = vmul.f32 %v4232, %v4264
    %v4273 = vpack.c.bf16 %v4269, %v4265
    %v4274 = vpack.c.bf16 %v4270, %v4266
    %v4275 = vpack.c.bf16 %v4271, %v4267
    %v4276 = vpack.c.bf16 %v4272, %v4268
    %v4277 = vld [vmem:[#allocation10] sm:$0xff]
    %v4278 = vld [vmem:[#allocation10 + $0x8] sm:$0xff]
    %v4279 = vld [vmem:[#allocation10 + $0x10] sm:$0xff]
    %v4280 = vld [vmem:[#allocation10 + $0x18] sm:$0xff]
    %v4281 = vld [vmem:[#allocation10 + $0x20] sm:$0xff]
    %v4282 = vld [vmem:[#allocation10 + $0x28] sm:$0xff]
    %v4283 = vld [vmem:[#allocation10 + $0x30] sm:$0xff]
    %v4284 = vld [vmem:[#allocation10 + $0x38] sm:$0xff]
    %v4285 = vld [vmem:[#allocation10 + $0x40] sm:$0xff]
    %v4286 = vld [vmem:[#allocation10 + $0x48] sm:$0xff]
    %v4287 = vld [vmem:[#allocation10 + $0x50] sm:$0xff]
    %v4288 = vld [vmem:[#allocation10 + $0x58] sm:$0xff]
    %v4289 = vld [vmem:[#allocation10 + $0x60] sm:$0xff]
    %v4290 = vld [vmem:[#allocation10 + $0x68] sm:$0xff]
    %v4291 = vld [vmem:[#allocation10 + $0x70] sm:$0xff]
    %v4292 = vld [vmem:[#allocation10 + $0x78] sm:$0xff]
    %v4293 = vld [vmem:[#allocation10 + $0x80] sm:$0xff]
    %v4294 = vld [vmem:[#allocation10 + $0x88] sm:$0xff]
    %v4295 = vld [vmem:[#allocation10 + $0x90] sm:$0xff]
    %v4296 = vld [vmem:[#allocation10 + $0x98] sm:$0xff]
    %v4297 = vld [vmem:[#allocation10 + $0xa0] sm:$0xff]
    %v4298 = vld [vmem:[#allocation10 + $0xa8] sm:$0xff]
    %v4299 = vld [vmem:[#allocation10 + $0xb0] sm:$0xff]
    %v4300 = vld [vmem:[#allocation10 + $0xb8] sm:$0xff]
    %v4301 = vld [vmem:[#allocation10 + $0xc0] sm:$0xff]
    %v4302 = vld [vmem:[#allocation10 + $0xc8] sm:$0xff]
    %v4303 = vld [vmem:[#allocation10 + $0xd0] sm:$0xff]
    %v4304 = vld [vmem:[#allocation10 + $0xd8] sm:$0xff]
    %v4305 = vld [vmem:[#allocation10 + $0xe0] sm:$0xff]
    %v4306 = vld [vmem:[#allocation10 + $0xe8] sm:$0xff]
    %v4307 = vld [vmem:[#allocation10 + $0xf0] sm:$0xff]
    %v4308 = vld [vmem:[#allocation10 + $0xf8] sm:$0xff]
    %v4309 = vld [vmem:[#allocation10 + $0x100] sm:$0xff]
    %v4310 = vld [vmem:[#allocation10 + $0x108] sm:$0xff]
    %v4311 = vld [vmem:[#allocation10 + $0x110] sm:$0xff]
    %v4312 = vld [vmem:[#allocation10 + $0x118] sm:$0xff]
    %v4313 = vld [vmem:[#allocation10 + $0x120] sm:$0xff]
    %v4314 = vld [vmem:[#allocation10 + $0x128] sm:$0xff]
    %v4315 = vld [vmem:[#allocation10 + $0x130] sm:$0xff]
    %v4316 = vld [vmem:[#allocation10 + $0x138] sm:$0xff]
    %v4317 = vld [vmem:[#allocation10 + $0x140] sm:$0xff]
    %v4318 = vld [vmem:[#allocation10 + $0x148] sm:$0xff]
    %v4319 = vld [vmem:[#allocation10 + $0x150] sm:$0xff]
    %v4320 = vld [vmem:[#allocation10 + $0x158] sm:$0xff]
    %v4321 = vld [vmem:[#allocation10 + $0x160] sm:$0xff]
    %v4322 = vld [vmem:[#allocation10 + $0x168] sm:$0xff]
    %v4323 = vld [vmem:[#allocation10 + $0x170] sm:$0xff]
    %v4324 = vld [vmem:[#allocation10 + $0x178] sm:$0xff]
    %v4325 = vld [vmem:[#allocation10 + $0x180] sm:$0xff]
    %v4326 = vld [vmem:[#allocation10 + $0x188] sm:$0xff]
    %v4327 = vld [vmem:[#allocation10 + $0x190] sm:$0xff]
    %v4328 = vld [vmem:[#allocation10 + $0x198] sm:$0xff]
    %v4329 = vld [vmem:[#allocation10 + $0x1a0] sm:$0xff]
    %v4330 = vld [vmem:[#allocation10 + $0x1a8] sm:$0xff]
    %v4331 = vld [vmem:[#allocation10 + $0x1b0] sm:$0xff]
    %v4332 = vld [vmem:[#allocation10 + $0x1b8] sm:$0xff]
    %v4333 = vld [vmem:[#allocation10 + $0x1c0] sm:$0xff]
    %v4334 = vld [vmem:[#allocation10 + $0x1c8] sm:$0xff]
    %v4335 = vld [vmem:[#allocation10 + $0x1d0] sm:$0xff]
    %v4336 = vld [vmem:[#allocation10 + $0x1d8] sm:$0xff]
    %v4337 = vld [vmem:[#allocation10 + $0x1e0] sm:$0xff]
    %v4338 = vld [vmem:[#allocation10 + $0x1e8] sm:$0xff]
    %v4339 = vld [vmem:[#allocation10 + $0x1f0] sm:$0xff]
    %v4340 = vld [vmem:[#allocation10 + $0x1f8] sm:$0xff]
    %v4341 = vld [vmem:[#allocation13] sm:$0x3]
    %v4343 = vlaneseq
    %v4344 = vshrl.u32 %v4343, 7
    %v4345 = vsub.s32 0, %v4344
    %v4346 = vrot.slane %v4341, %v4345
    %v4347 = vlaneseq
    %v4348 = vshrl.u32 %v4347, 7
    %v4349 = vsub.s32 1, %v4348
    %v4350 = vrot.slane %v4341, %v4349
    %v4417 = vunpack.c.l.b16 %v4277
    %v4418 = vunpack.c.h.b16 %v4277
    %v4419 = vunpack.c.l.b16 %v4278
    %v4420 = vunpack.c.h.b16 %v4278
    %v4421 = vunpack.c.l.b16 %v4279
    %v4422 = vunpack.c.h.b16 %v4279
    %v4423 = vunpack.c.l.b16 %v4280
    %v4424 = vunpack.c.h.b16 %v4280
    %v4425 = vunpack.c.l.b16 %v4281
    %v4426 = vunpack.c.h.b16 %v4281
    %v4427 = vunpack.c.l.b16 %v4282
    %v4428 = vunpack.c.h.b16 %v4282
    %v4429 = vunpack.c.l.b16 %v4283
    %v4430 = vunpack.c.h.b16 %v4283
    %v4431 = vunpack.c.l.b16 %v4284
    %v4432 = vunpack.c.h.b16 %v4284
    %v4433 = vunpack.c.l.b16 %v4285
    %v4434 = vunpack.c.h.b16 %v4285
    %v4435 = vunpack.c.l.b16 %v4286
    %v4436 = vunpack.c.h.b16 %v4286
    %v4437 = vunpack.c.l.b16 %v4287
    %v4438 = vunpack.c.h.b16 %v4287
    %v4439 = vunpack.c.l.b16 %v4288
    %v4440 = vunpack.c.h.b16 %v4288
    %v4441 = vunpack.c.l.b16 %v4289
    %v4442 = vunpack.c.h.b16 %v4289
    %v4443 = vunpack.c.l.b16 %v4290
    %v4444 = vunpack.c.h.b16 %v4290
    %v4445 = vunpack.c.l.b16 %v4291
    %v4446 = vunpack.c.h.b16 %v4291
    %v4447 = vunpack.c.l.b16 %v4292
    %v4448 = vunpack.c.h.b16 %v4292
    %v4449 = vunpack.c.l.b16 %v4293
    %v4450 = vunpack.c.h.b16 %v4293
    %v4451 = vunpack.c.l.b16 %v4294
    %v4452 = vunpack.c.h.b16 %v4294
    %v4453 = vunpack.c.l.b16 %v4295
    %v4454 = vunpack.c.h.b16 %v4295
    %v4455 = vunpack.c.l.b16 %v4296
    %v4456 = vunpack.c.h.b16 %v4296
    %v4457 = vunpack.c.l.b16 %v4297
    %v4458 = vunpack.c.h.b16 %v4297
    %v4459 = vunpack.c.l.b16 %v4298
    %v4460 = vunpack.c.h.b16 %v4298
    %v4461 = vunpack.c.l.b16 %v4299
    %v4462 = vunpack.c.h.b16 %v4299
    %v4463 = vunpack.c.l.b16 %v4300
    %v4464 = vunpack.c.h.b16 %v4300
    %v4465 = vunpack.c.l.b16 %v4301
    %v4466 = vunpack.c.h.b16 %v4301
    %v4467 = vunpack.c.l.b16 %v4302
    %v4468 = vunpack.c.h.b16 %v4302
    %v4469 = vunpack.c.l.b16 %v4303
    %v4470 = vunpack.c.h.b16 %v4303
    %v4471 = vunpack.c.l.b16 %v4304
    %v4472 = vunpack.c.h.b16 %v4304
    %v4473 = vunpack.c.l.b16 %v4305
    %v4474 = vunpack.c.h.b16 %v4305
    %v4475 = vunpack.c.l.b16 %v4306
    %v4476 = vunpack.c.h.b16 %v4306
    %v4477 = vunpack.c.l.b16 %v4307
    %v4478 = vunpack.c.h.b16 %v4307
    %v4479 = vunpack.c.l.b16 %v4308
    %v4480 = vunpack.c.h.b16 %v4308
    %v4481 = vunpack.c.l.b16 %v4309
    %v4482 = vunpack.c.h.b16 %v4309
    %v4483 = vunpack.c.l.b16 %v4310
    %v4484 = vunpack.c.h.b16 %v4310
    %v4485 = vunpack.c.l.b16 %v4311
    %v4486 = vunpack.c.h.b16 %v4311
    %v4487 = vunpack.c.l.b16 %v4312
    %v4488 = vunpack.c.h.b16 %v4312
    %v4489 = vunpack.c.l.b16 %v4313
    %v4490 = vunpack.c.h.b16 %v4313
    %v4491 = vunpack.c.l.b16 %v4314
    %v4492 = vunpack.c.h.b16 %v4314
    %v4493 = vunpack.c.l.b16 %v4315
    %v4494 = vunpack.c.h.b16 %v4315
    %v4495 = vunpack.c.l.b16 %v4316
    %v4496 = vunpack.c.h.b16 %v4316
    %v4497 = vunpack.c.l.b16 %v4317
    %v4498 = vunpack.c.h.b16 %v4317
    %v4499 = vunpack.c.l.b16 %v4318
    %v4500 = vunpack.c.h.b16 %v4318
    %v4501 = vunpack.c.l.b16 %v4319
    %v4502 = vunpack.c.h.b16 %v4319
    %v4503 = vunpack.c.l.b16 %v4320
    %v4504 = vunpack.c.h.b16 %v4320
    %v4505 = vunpack.c.l.b16 %v4321
    %v4506 = vunpack.c.h.b16 %v4321
    %v4507 = vunpack.c.l.b16 %v4322
    %v4508 = vunpack.c.h.b16 %v4322
    %v4509 = vunpack.c.l.b16 %v4323
    %v4510 = vunpack.c.h.b16 %v4323
    %v4511 = vunpack.c.l.b16 %v4324
    %v4512 = vunpack.c.h.b16 %v4324
    %v4513 = vunpack.c.l.b16 %v4325
    %v4514 = vunpack.c.h.b16 %v4325
    %v4515 = vunpack.c.l.b16 %v4326
    %v4516 = vunpack.c.h.b16 %v4326
    %v4517 = vunpack.c.l.b16 %v4327
    %v4518 = vunpack.c.h.b16 %v4327
    %v4519 = vunpack.c.l.b16 %v4328
    %v4520 = vunpack.c.h.b16 %v4328
    %v4521 = vunpack.c.l.b16 %v4329
    %v4522 = vunpack.c.h.b16 %v4329
    %v4523 = vunpack.c.l.b16 %v4330
    %v4524 = vunpack.c.h.b16 %v4330
    %v4525 = vunpack.c.l.b16 %v4331
    %v4526 = vunpack.c.h.b16 %v4331
    %v4527 = vunpack.c.l.b16 %v4332
    %v4528 = vunpack.c.h.b16 %v4332
    %v4529 = vunpack.c.l.b16 %v4333
    %v4530 = vunpack.c.h.b16 %v4333
    %v4531 = vunpack.c.l.b16 %v4334
    %v4532 = vunpack.c.h.b16 %v4334
    %v4533 = vunpack.c.l.b16 %v4335
    %v4534 = vunpack.c.h.b16 %v4335
    %v4535 = vunpack.c.l.b16 %v4336
    %v4536 = vunpack.c.h.b16 %v4336
    %v4537 = vunpack.c.l.b16 %v4337
    %v4538 = vunpack.c.h.b16 %v4337
    %v4539 = vunpack.c.l.b16 %v4338
    %v4540 = vunpack.c.h.b16 %v4338
    %v4541 = vunpack.c.l.b16 %v4339
    %v4542 = vunpack.c.h.b16 %v4339
    %v4543 = vunpack.c.l.b16 %v4340
    %v4544 = vunpack.c.h.b16 %v4340
    %v4545 = vpack.c.b16 %v4419, %v4417
    %v4546 = vpack.c.b16 %v4420, %v4418
    %v4547 = vpack.c.b16 %v4423, %v4421
    %v4548 = vpack.c.b16 %v4424, %v4422
    %v4549 = vpack.c.b16 %v4427, %v4425
    %v4550 = vpack.c.b16 %v4428, %v4426
    %v4551 = vpack.c.b16 %v4431, %v4429
    %v4552 = vpack.c.b16 %v4432, %v4430
    %v4553 = vpack.c.b16 %v4435, %v4433
    %v4554 = vpack.c.b16 %v4436, %v4434
    %v4555 = vpack.c.b16 %v4439, %v4437
    %v4556 = vpack.c.b16 %v4440, %v4438
    %v4557 = vpack.c.b16 %v4443, %v4441
    %v4558 = vpack.c.b16 %v4444, %v4442
    %v4559 = vpack.c.b16 %v4447, %v4445
    %v4560 = vpack.c.b16 %v4448, %v4446
    %v4561 = vpack.c.b16 %v4451, %v4449
    %v4562 = vpack.c.b16 %v4452, %v4450
    %v4563 = vpack.c.b16 %v4455, %v4453
    %v4564 = vpack.c.b16 %v4456, %v4454
    %v4565 = vpack.c.b16 %v4459, %v4457
    %v4566 = vpack.c.b16 %v4460, %v4458
    %v4567 = vpack.c.b16 %v4463, %v4461
    %v4568 = vpack.c.b16 %v4464, %v4462
    %v4569 = vpack.c.b16 %v4467, %v4465
    %v4570 = vpack.c.b16 %v4468, %v4466
    %v4571 = vpack.c.b16 %v4471, %v4469
    %v4572 = vpack.c.b16 %v4472, %v4470
    %v4573 = vpack.c.b16 %v4475, %v4473
    %v4574 = vpack.c.b16 %v4476, %v4474
    %v4575 = vpack.c.b16 %v4479, %v4477
    %v4576 = vpack.c.b16 %v4480, %v4478
    %v4577 = vpack.c.b16 %v4483, %v4481
    %v4578 = vpack.c.b16 %v4484, %v4482
    %v4579 = vpack.c.b16 %v4487, %v4485
    %v4580 = vpack.c.b16 %v4488, %v4486
    %v4581 = vpack.c.b16 %v4491, %v4489
    %v4582 = vpack.c.b16 %v4492, %v4490
    %v4583 = vpack.c.b16 %v4495, %v4493
    %v4584 = vpack.c.b16 %v4496, %v4494
    %v4585 = vpack.c.b16 %v4499, %v4497
    %v4586 = vpack.c.b16 %v4500, %v4498
    %v4587 = vpack.c.b16 %v4503, %v4501
    %v4588 = vpack.c.b16 %v4504, %v4502
    %v4589 = vpack.c.b16 %v4507, %v4505
    %v4590 = vpack.c.b16 %v4508, %v4506
    %v4591 = vpack.c.b16 %v4511, %v4509
    %v4592 = vpack.c.b16 %v4512, %v4510
    %v4593 = vpack.c.b16 %v4515, %v4513
    %v4594 = vpack.c.b16 %v4516, %v4514
    %v4595 = vpack.c.b16 %v4519, %v4517
    %v4596 = vpack.c.b16 %v4520, %v4518
    %v4597 = vpack.c.b16 %v4523, %v4521
    %v4598 = vpack.c.b16 %v4524, %v4522
    %v4599 = vpack.c.b16 %v4527, %v4525
    %v4600 = vpack.c.b16 %v4528, %v4526
    %v4601 = vpack.c.b16 %v4531, %v4529
    %v4602 = vpack.c.b16 %v4532, %v4530
    %v4603 = vpack.c.b16 %v4535, %v4533
    %v4604 = vpack.c.b16 %v4536, %v4534
    %v4605 = vpack.c.b16 %v4539, %v4537
    %v4606 = vpack.c.b16 %v4540, %v4538
    %v4607 = vpack.c.b16 %v4543, %v4541
    %v4608 = vpack.c.b16 %v4544, %v4542
    %4673 = vmatprep.subr.bf16.mxu0 %v4546
    %4674 = vmatpush1.bf16.msra.mxu0 %v4545
    %4675 = vmatprep.subr.bf16.mxu0 %v4548
    %4676 = vmatpush1.bf16.msra.mxu0 %v4547
    %4677 = vmatprep.subr.bf16.mxu0 %v4550
    %4678 = vmatpush1.bf16.msra.mxu0 %v4549
    %4679 = vmatprep.subr.bf16.mxu0 %v4552
    %4680 = vmatpush1.bf16.msra.mxu0 %v4551
    %4681 = vmatprep.subr.bf16.mxu0 %v4554
    %4682 = vmatpush1.bf16.msra.mxu0 %v4553
    %4683 = vmatprep.subr.bf16.mxu0 %v4556
    %4684 = vmatpush1.bf16.msra.mxu0 %v4555
    %4685 = vmatprep.subr.bf16.mxu0 %v4558
    %4686 = vmatpush1.bf16.msra.mxu0 %v4557
    %4687 = vmatprep.subr.bf16.mxu0 %v4560
    %4688 = vmatpush1.bf16.msra.mxu0 %v4559
    %4689 = vmatprep.subr.bf16.mxu0 %v4562
    %4690 = vmatpush1.bf16.msra.mxu0 %v4561
    %4691 = vmatprep.subr.bf16.mxu0 %v4564
    %4692 = vmatpush1.bf16.msra.mxu0 %v4563
    %4693 = vmatprep.subr.bf16.mxu0 %v4566
    %4694 = vmatpush1.bf16.msra.mxu0 %v4565
    %4695 = vmatprep.subr.bf16.mxu0 %v4568
    %4696 = vmatpush1.bf16.msra.mxu0 %v4567
    %4697 = vmatprep.subr.bf16.mxu0 %v4570
    %4698 = vmatpush1.bf16.msra.mxu0 %v4569
    %4699 = vmatprep.subr.bf16.mxu0 %v4572
    %4700 = vmatpush1.bf16.msra.mxu0 %v4571
    %4701 = vmatprep.subr.bf16.mxu0 %v4574
    %4702 = vmatpush1.bf16.msra.mxu0 %v4573
    %4703 = vmatprep.subr.bf16.mxu0 %v4576
    %4704 = vmatpush1.bf16.msra.mxu0 %v4575
    %4705 = vmatprep.mubr.bf16.mxu0 %v4274
    %4706 = vmatmul.mubr.bf16.gmra.mrb[0].mxu0 %v4273
    %v4707 = vpop.f32.mrb[0].mxu0
    %v4708 = vadd.f32 %v4346, %v4707
    %v4709 = vpop.f32.mrb[0].mxu0
    %v4710 = vadd.f32 %v4350, %v4709
    %v4711 = vpop.f32.mrb[0].mxu0
    %v4712 = vadd.f32 %v4346, %v4711
    %v4713 = vpop.f32.mrb[0].mxu0
    %v4714 = vadd.f32 %v4350, %v4713
    %4715 = vdwg.mxu0
    %4716 = vmatprep.subr.bf16.mxu0 %v4578
    %4717 = vmatpush1.bf16.msra.mxu0 %v4577
    %4718 = vmatprep.subr.bf16.mxu0 %v4580
    %4719 = vmatpush1.bf16.msra.mxu0 %v4579
    %4720 = vmatprep.subr.bf16.mxu0 %v4582
    %4721 = vmatpush1.bf16.msra.mxu0 %v4581
    %4722 = vmatprep.subr.bf16.mxu0 %v4584
    %4723 = vmatpush1.bf16.msra.mxu0 %v4583
    %4724 = vmatprep.subr.bf16.mxu0 %v4586
    %4725 = vmatpush1.bf16.msra.mxu0 %v4585
    %4726 = vmatprep.subr.bf16.mxu0 %v4588
    %4727 = vmatpush1.bf16.msra.mxu0 %v4587
    %4728 = vmatprep.subr.bf16.mxu0 %v4590
    %4729 = vmatpush1.bf16.msra.mxu0 %v4589
    %4730 = vmatprep.subr.bf16.mxu0 %v4592
    %4731 = vmatpush1.bf16.msra.mxu0 %v4591
    %4732 = vmatprep.subr.bf16.mxu0 %v4594
    %4733 = vmatpush1.bf16.msra.mxu0 %v4593
    %4734 = vmatprep.subr.bf16.mxu0 %v4596
    %4735 = vmatpush1.bf16.msra.mxu0 %v4595
    %4736 = vmatprep.subr.bf16.mxu0 %v4598
    %4737 = vmatpush1.bf16.msra.mxu0 %v4597
    %4738 = vmatprep.subr.bf16.mxu0 %v4600
    %4739 = vmatpush1.bf16.msra.mxu0 %v4599
    %4740 = vmatprep.subr.bf16.mxu0 %v4602
    %4741 = vmatpush1.bf16.msra.mxu0 %v4601
    %4742 = vmatprep.subr.bf16.mxu0 %v4604
    %4743 = vmatpush1.bf16.msra.mxu0 %v4603
    %4744 = vmatprep.subr.bf16.mxu0 %v4606
    %4745 = vmatpush1.bf16.msra.mxu0 %v4605
    %4746 = vmatprep.subr.bf16.mxu0 %v4608
    %4747 = vmatpush1.bf16.msra.mxu0 %v4607
    %4748 = vmatprep.mubr.bf16.mxu0 %v4276
    %4749 = vmatmul.mubr.bf16.gmra.mrb[0].mxu0 %v4275
    %v4750 = vpop.f32.mrb[0].mxu0
    %v4751 = vadd.f32 %v4708, %v4750
    %v4752 = vpop.f32.mrb[0].mxu0
    %v4753 = vadd.f32 %v4710, %v4752
    %v4754 = vpop.f32.mrb[0].mxu0
    %v4755 = vadd.f32 %v4712, %v4754
    %v4756 = vpop.f32.mrb[0].mxu0
    %v4757 = vadd.f32 %v4714, %v4756
    %4758 = vdwg.mxu0
    %4759 = vst [vmem:[#allocation14] sm:$0xff] %v4751
    %4760 = vst [vmem:[#allocation14 + $0x8] sm:$0xff] %v4753
    %4761 = vst [vmem:[#allocation14 + $0x10] sm:$0xff] %v4755
    %4762 = vst [vmem:[#allocation14 + $0x18] sm:$0xff] %v4757
    // Predicated region
    $region58: #{tpu_custom_call.1} parent=1 // pred_check
      _
    $region59: #{tpu_custom_call.1} parent=1 // pred_check_branch
      %4764 = sbr.rel (0) target = $region61
    $region60: #{tpu_custom_call.1} parent=1 // pred_region
      %s4766 = ssub.s32 512, 512
      %4767 = vsyncadd [#allocation4], %s4766
      %s4768 = sshll.u32 [#allocation14], 4
      %s4769 = int_to_ptr.vmem [resolvable:$true] %s4768
      %4774 = dma.vmem_to_hbm [thread:$0]  %s4769, 512, %s7, [#allocation4], 256, 256, 16
    $region61: #{tpu_custom_call.1} parent=1 // pred_fallthru
      _
    // Predicated region
    $region62: #{tpu_custom_call.1} parent=1 // pred_check
      _
    $region63: #{tpu_custom_call.1} parent=1 // pred_check_branch
      %4776 = sbr.rel (0) target = $region65
    $region64: #{tpu_custom_call.1} parent=1 // pred_region
      %4777 = dma.done [#allocation4], 512
    $region65: #{tpu_custom_call.1} parent=1 // pred_fallthru
      _
    %4778 = vsyncpa [#allocation3], 1
    %4779 = vsyncpa [#allocation6], 1
    %4780 = vsyncpa [#allocation9], 1
    %4781 = vsyncpa [#allocation12], 1
    %4782 = vsyncpa [#allocation4], 1

</llo_original>
